<compile_context>
chip_gen: v5e
topology: v5e:2x2
jax: 0.10.0
libtpu: 0.0.40
codegen_flags: <defaults>
</compile_context>

<pallas_src>
import jax
import jax.numpy as jnp
from jax.experimental import pallas as pl
from jax.experimental.pallas import tpu as pltpu

INPUT_SIZE = 32 * 32 * 3          # 3072
NUM_CLASSES = 10
LAYER_SIZES = [INPUT_SIZE, 1024, 512, 256, 128, 64, NUM_CLASSES]

# Lane-padded layer widths used inside the kernel (zeros in the padded
# rows/columns, so the math is unchanged).
PADDED_IN = [3072, 1024, 512, 256, 128, 128]
PADDED_OUT = [1024, 512, 256, 128, 128, 128]

# Static, lane-aligned offsets of each bias inside the packed bias buffer.
BIAS_OFFSETS = []
_off = 0
for _w in PADDED_OUT:
    BIAS_OFFSETS.append(_off)
    _off += _w
BIAS_TOTAL = _off                 # 2176 = 17 * 128


def mlp_kernel(x_ref, w1, w2, w3, w4, w5, w6, b_ref, o_ref):
    """One batch tile: 6 matmuls (bf16 weights, f32 MXU accumulation) + bias + ReLU."""
    h = x_ref[...].astype(jnp.bfloat16)

    def layer(h, w_ref, idx, relu):
        off, width = BIAS_OFFSETS[idx], PADDED_OUT[idx]
        y = jnp.dot(h, w_ref[...], preferred_element_type=jnp.float32)
        y = y + b_ref[:, off:off + width]
        if relu:
            # Dropout(0.3) in eval mode is identity -> omitted.
            return jnp.maximum(y, 0.0).astype(jnp.bfloat16)
        return y

    h = layer(h, w1, 0, True)
    h = layer(h, w2, 1, True)
    h = layer(h, w3, 2, True)
    h = layer(h, w4, 3, True)
    h = layer(h, w5, 4, True)
    o_ref[...] = layer(h, w6, 5, False)   # final layer: no ReLU, no dropout


def init_params(key):
    """PyTorch-style init: U(-1/sqrt(fan_in)); weights stored as (in, out)."""
    params = []
    for i in range(len(LAYER_SIZES) - 1):
        fan_in, fan_out = LAYER_SIZES[i], LAYER_SIZES[i + 1]
        key, kw, kb = jax.random.split(key, 3)
        bound = 1.0 / (fan_in ** 0.5)
        w = jax.random.uniform(kw, (fan_in, fan_out), jnp.float32, -bound, bound)
        b = jax.random.uniform(kb, (fan_out,), jnp.float32, -bound, bound)
        params.append((w, b))
    return params


def prepare_params(params):
    """Pad narrow layers to 128 lanes, cast weights to bf16, pack biases (f32)."""
    weights = []
    bias = jnp.zeros((1, BIAS_TOTAL), jnp.float32)
    for i, (w, b) in enumerate(params):
        pin, pout = PADDED_IN[i], PADDED_OUT[i]
        wp = jnp.zeros((pin, pout), jnp.float32).at[:w.shape[0], :w.shape[1]].set(w)
        weights.append(wp.astype(jnp.bfloat16))
        bias = bias.at[0, BIAS_OFFSETS[i]:BIAS_OFFSETS[i] + b.shape[0]].set(b)
    return tuple(weights), bias


def _round_up(x, m):
    return (x + m - 1) // m * m


@jax.jit
def fully_connected_nn_forward(x, weights, bias):
    """Forward pass of FullyConnectedNN (eval mode)."""
    B = x.shape[0]
    # 256-row tiles fill the 256x256 MXU LHS on v6e/v7x; tiny batches just get
    # rounded up to one full 8-sublane vreg.
    tb = 256 if B >= 256 else _round_up(max(B, 8), 8)
    bp = _round_up(B, tb)
    if bp != B:
        x = jnp.pad(x, ((0, bp - B), (0, 0)))

    grid = (bp // tb,)

    # Weights / bias: constant index_map -> DMA'd once, VMEM-resident across
    # all batch tiles (~7.4 MiB bf16 total).
    weight_specs = [pl.BlockSpec(w.shape, lambda i: (0, 0)) for w in weights]
    bias_spec = pl.BlockSpec((1, BIAS_TOTAL), lambda i: (0, 0))

    out = pl.pallas_call(
        mlp_kernel,
        out_shape=jax.ShapeDtypeStruct((bp, PADDED_OUT[-1]), jnp.float32),
        grid=grid,
        in_specs=[pl.BlockSpec((tb, INPUT_SIZE), lambda i: (i, 0))]
                 + weight_specs
                 + [bias_spec],
        out_specs=pl.BlockSpec((tb, PADDED_OUT[-1]), lambda i: (i, 0)),
        compiler_params=pltpu.CompilerParams(
            dimension_semantics=("parallel",),   # shards batch across v7x's 2 TCs
            vmem_limit_bytes=48 << 20,           # fits v7x's 64 MiB physical VMEM
        ),
    )(x, *weights, bias)

    return out[:B, :NUM_CLASSES]


def reference_forward(x, weights, bias):
    """Same math (bf16 weights, f32 accumulation) without Pallas."""
    h = x.astype(jnp.bfloat16)
    y = None
    for i, w in enumerate(weights):
        y = jnp.dot(h, w, preferred_element_type=jnp.float32)
        y = y + bias[:, BIAS_OFFSETS[i]:BIAS_OFFSETS[i] + PADDED_OUT[i]]
        if i < len(weights) - 1:
            h = jnp.maximum(y, 0.0).astype(jnp.bfloat16)
    return y[:, :NUM_CLASSES]


if __name__ == "__main__":
    key = jax.random.PRNGKey(0)
    key, kx = jax.random.split(key)

    batch = 2
    # Input corresponds to flattened CIFAR-like images: (B, 3*32*32).
    x = jax.random.normal(kx, (batch, INPUT_SIZE), jnp.float32)

    params = init_params(key)
    weights, bias = prepare_params(params)

    out = fully_connected_nn_forward(x, weights, bias)
    out = jax.block_until_ready(out)

    ref = reference_forward(x, weights, bias)
    assert out.shape == (batch, NUM_CLASSES), out.shape
    max_err = jnp.max(jnp.abs(out - ref))
    assert jnp.allclose(out, ref, atol=1e-2, rtol=1e-2), f"max abs err {max_err}"

    print("KERNEL_OK")
</pallas_src>

<mosaic_0001>
module attributes {stable_mosaic.version = 11 : i64} {
  func.func @mlp_kernel(%arg0: i32, %arg1: memref<8x3072xf32, #tpu.memory_space<vmem>>, %arg2: memref<3072x1024xbf16, #tpu.memory_space<vmem>>, %arg3: memref<1024x512xbf16, #tpu.memory_space<vmem>>, %arg4: memref<512x256xbf16, #tpu.memory_space<vmem>>, %arg5: memref<256x128xbf16, #tpu.memory_space<vmem>>, %arg6: memref<128x128xbf16, #tpu.memory_space<vmem>>, %arg7: memref<128x128xbf16, #tpu.memory_space<vmem>>, %arg8: memref<1x2176xf32, #tpu.memory_space<vmem>>, %arg9: memref<8x128xf32, #tpu.memory_space<vmem>>) attributes {dimension_semantics = [#tpu.dimension_semantics<parallel>], iteration_bounds = array<i64: 1>, scalar_prefetch = 0 : i64, scratch_operands = 0 : i64, tpu.core_type = #tpu.core_type<tc>, window_params = [{transform_indices = @transform_0, window_bounds = array<i64: 8, 3072>}, {pipeline_mode = #tpu.pipeline_mode<synchronous>, transform_indices = @transform_1, window_bounds = array<i64: 3072, 1024>}, {pipeline_mode = #tpu.pipeline_mode<synchronous>, transform_indices = @transform_2, window_bounds = array<i64: 1024, 512>}, {pipeline_mode = #tpu.pipeline_mode<synchronous>, transform_indices = @transform_3, window_bounds = array<i64: 512, 256>}, {pipeline_mode = #tpu.pipeline_mode<synchronous>, transform_indices = @transform_4, window_bounds = array<i64: 256, 128>}, {pipeline_mode = #tpu.pipeline_mode<synchronous>, transform_indices = @transform_5, window_bounds = array<i64: 128, 128>}, {pipeline_mode = #tpu.pipeline_mode<synchronous>, transform_indices = @transform_6, window_bounds = array<i64: 128, 128>}, {pipeline_mode = #tpu.pipeline_mode<synchronous>, transform_indices = @transform_7, window_bounds = array<i64: 1, 2176>}, {transform_indices = @transform_8, window_bounds = array<i64: 8, 128>}]} {
    %c0 = arith.constant 0 : index
    %c0_0 = arith.constant 0 : index
    %0 = vector.load %arg1[%c0, %c0_0] : memref<8x3072xf32, #tpu.memory_space<vmem>>, vector<8x3072xf32>
    %1 = arith.truncf %0 : vector<8x3072xf32> to vector<8x3072xbf16>
    %c0_1 = arith.constant 0 : index
    %c0_2 = arith.constant 0 : index
    %2 = vector.load %arg2[%c0_1, %c0_2] : memref<3072x1024xbf16, #tpu.memory_space<vmem>>, vector<3072x1024xbf16>
    %cst = arith.constant dense<0.000000e+00> : vector<8x1024xf32>
    %3 = tpu.matmul %1, %2, %cst {dimension_numbers = #tpu.dot_dimension_numbers<[1], [0], [0], [1], [0, 0, 1, 1], [], []>} : vector<8x3072xbf16>, vector<3072x1024xbf16>, vector<8x1024xf32> -> vector<8x1024xf32>
    %c0_3 = arith.constant 0 : index
    %c0_4 = arith.constant 0 : index
    %4 = vector.load %arg8[%c0_3, %c0_4] : memref<1x2176xf32, #tpu.memory_space<vmem>>, vector<1x1024xf32>
    %5 = vector.broadcast %4 : vector<1x1024xf32> to vector<8x1024xf32>
    %6 = arith.addf %3, %5 : vector<8x1024xf32>
    %cst_5 = arith.constant 0.000000e+00 : f32
    %7 = vector.broadcast %cst_5 : f32 to vector<8x1024xf32>
    %8 = arith.maximumf %6, %7 : vector<8x1024xf32>
    %9 = arith.truncf %8 : vector<8x1024xf32> to vector<8x1024xbf16>
    %c0_6 = arith.constant 0 : index
    %c0_7 = arith.constant 0 : index
    %10 = vector.load %arg3[%c0_6, %c0_7] : memref<1024x512xbf16, #tpu.memory_space<vmem>>, vector<1024x512xbf16>
    %cst_8 = arith.constant dense<0.000000e+00> : vector<8x512xf32>
    %11 = tpu.matmul %9, %10, %cst_8 {dimension_numbers = #tpu.dot_dimension_numbers<[1], [0], [0], [1], [0, 0, 1, 1], [], []>} : vector<8x1024xbf16>, vector<1024x512xbf16>, vector<8x512xf32> -> vector<8x512xf32>
    %c0_9 = arith.constant 0 : index
    %c1024 = arith.constant 1024 : index
    %12 = vector.load %arg8[%c0_9, %c1024] : memref<1x2176xf32, #tpu.memory_space<vmem>>, vector<1x512xf32>
    %13 = vector.broadcast %12 : vector<1x512xf32> to vector<8x512xf32>
    %14 = arith.addf %11, %13 : vector<8x512xf32>
    %cst_10 = arith.constant 0.000000e+00 : f32
    %15 = vector.broadcast %cst_10 : f32 to vector<8x512xf32>
    %16 = arith.maximumf %14, %15 : vector<8x512xf32>
    %17 = arith.truncf %16 : vector<8x512xf32> to vector<8x512xbf16>
    %c0_11 = arith.constant 0 : index
    %c0_12 = arith.constant 0 : index
    %18 = vector.load %arg4[%c0_11, %c0_12] : memref<512x256xbf16, #tpu.memory_space<vmem>>, vector<512x256xbf16>
    %cst_13 = arith.constant dense<0.000000e+00> : vector<8x256xf32>
    %19 = tpu.matmul %17, %18, %cst_13 {dimension_numbers = #tpu.dot_dimension_numbers<[1], [0], [0], [1], [0, 0, 1, 1], [], []>} : vector<8x512xbf16>, vector<512x256xbf16>, vector<8x256xf32> -> vector<8x256xf32>
    %c0_14 = arith.constant 0 : index
    %c1536 = arith.constant 1536 : index
    %20 = vector.load %arg8[%c0_14, %c1536] : memref<1x2176xf32, #tpu.memory_space<vmem>>, vector<1x256xf32>
    %21 = vector.broadcast %20 : vector<1x256xf32> to vector<8x256xf32>
    %22 = arith.addf %19, %21 : vector<8x256xf32>
    %cst_15 = arith.constant 0.000000e+00 : f32
    %23 = vector.broadcast %cst_15 : f32 to vector<8x256xf32>
    %24 = arith.maximumf %22, %23 : vector<8x256xf32>
    %25 = arith.truncf %24 : vector<8x256xf32> to vector<8x256xbf16>
    %c0_16 = arith.constant 0 : index
    %c0_17 = arith.constant 0 : index
    %26 = vector.load %arg5[%c0_16, %c0_17] : memref<256x128xbf16, #tpu.memory_space<vmem>>, vector<256x128xbf16>
    %cst_18 = arith.constant dense<0.000000e+00> : vector<8x128xf32>
    %27 = tpu.matmul %25, %26, %cst_18 {dimension_numbers = #tpu.dot_dimension_numbers<[1], [0], [0], [1], [0, 0, 1, 1], [], []>} : vector<8x256xbf16>, vector<256x128xbf16>, vector<8x128xf32> -> vector<8x128xf32>
    %c0_19 = arith.constant 0 : index
    %c1792 = arith.constant 1792 : index
    %28 = vector.load %arg8[%c0_19, %c1792] : memref<1x2176xf32, #tpu.memory_space<vmem>>, vector<1x128xf32>
    %29 = vector.broadcast %28 : vector<1x128xf32> to vector<8x128xf32>
    %30 = arith.addf %27, %29 : vector<8x128xf32>
    %cst_20 = arith.constant 0.000000e+00 : f32
    %31 = vector.broadcast %cst_20 : f32 to vector<8x128xf32>
    %32 = arith.maximumf %30, %31 : vector<8x128xf32>
    %33 = arith.truncf %32 : vector<8x128xf32> to vector<8x128xbf16>
    %c0_21 = arith.constant 0 : index
    %c0_22 = arith.constant 0 : index
    %34 = vector.load %arg6[%c0_21, %c0_22] : memref<128x128xbf16, #tpu.memory_space<vmem>>, vector<128x128xbf16>
    %cst_23 = arith.constant dense<0.000000e+00> : vector<8x128xf32>
    %35 = tpu.matmul %33, %34, %cst_23 {dimension_numbers = #tpu.dot_dimension_numbers<[1], [0], [0], [1], [0, 0, 1, 1], [], []>} : vector<8x128xbf16>, vector<128x128xbf16>, vector<8x128xf32> -> vector<8x128xf32>
    %c0_24 = arith.constant 0 : index
    %c1920 = arith.constant 1920 : index
    %36 = vector.load %arg8[%c0_24, %c1920] : memref<1x2176xf32, #tpu.memory_space<vmem>>, vector<1x128xf32>
    %37 = vector.broadcast %36 : vector<1x128xf32> to vector<8x128xf32>
    %38 = arith.addf %35, %37 : vector<8x128xf32>
    %cst_25 = arith.constant 0.000000e+00 : f32
    %39 = vector.broadcast %cst_25 : f32 to vector<8x128xf32>
    %40 = arith.maximumf %38, %39 : vector<8x128xf32>
    %41 = arith.truncf %40 : vector<8x128xf32> to vector<8x128xbf16>
    %c0_26 = arith.constant 0 : index
    %c0_27 = arith.constant 0 : index
    %42 = vector.load %arg7[%c0_26, %c0_27] : memref<128x128xbf16, #tpu.memory_space<vmem>>, vector<128x128xbf16>
    %cst_28 = arith.constant dense<0.000000e+00> : vector<8x128xf32>
    %43 = tpu.matmul %41, %42, %cst_28 {dimension_numbers = #tpu.dot_dimension_numbers<[1], [0], [0], [1], [0, 0, 1, 1], [], []>} : vector<8x128xbf16>, vector<128x128xbf16>, vector<8x128xf32> -> vector<8x128xf32>
    %c0_29 = arith.constant 0 : index
    %c2048 = arith.constant 2048 : index
    %44 = vector.load %arg8[%c0_29, %c2048] : memref<1x2176xf32, #tpu.memory_space<vmem>>, vector<1x128xf32>
    %45 = vector.broadcast %44 : vector<1x128xf32> to vector<8x128xf32>
    %46 = arith.addf %43, %45 : vector<8x128xf32>
    %c0_30 = arith.constant 0 : index
    %c0_31 = arith.constant 0 : index
    %47 = vector.load %arg9[%c0_30, %c0_31] : memref<8x128xf32, #tpu.memory_space<vmem>>, vector<8x128xf32>
    tpu.vector_store %arg9[%c0_30, %c0_31], %46 {strides = array<i32>} : memref<8x128xf32, #tpu.memory_space<vmem>>, vector<8x128xf32>,
    return
  }
  func.func @transform_0(%arg0: i32) -> (i32, i32) {
    %c0_i32 = arith.constant 0 : i32
    %c0_i32_0 = arith.constant 0 : i32
    return %arg0, %c0_i32 : i32, i32
  }
  func.func @transform_1(%arg0: i32) -> (i32, i32) {
    %c0_i32 = arith.constant 0 : i32
    %c0_i32_0 = arith.constant 0 : i32
    %c0_i32_1 = arith.constant 0 : i32
    return %c0_i32, %c0_i32_0 : i32, i32
  }
  func.func @transform_2(%arg0: i32) -> (i32, i32) {
    %c0_i32 = arith.constant 0 : i32
    %c0_i32_0 = arith.constant 0 : i32
    %c0_i32_1 = arith.constant 0 : i32
    return %c0_i32, %c0_i32_0 : i32, i32
  }
  func.func @transform_3(%arg0: i32) -> (i32, i32) {
    %c0_i32 = arith.constant 0 : i32
    %c0_i32_0 = arith.constant 0 : i32
    %c0_i32_1 = arith.constant 0 : i32
    return %c0_i32, %c0_i32_0 : i32, i32
  }
  func.func @transform_4(%arg0: i32) -> (i32, i32) {
    %c0_i32 = arith.constant 0 : i32
    %c0_i32_0 = arith.constant 0 : i32
    %c0_i32_1 = arith.constant 0 : i32
    return %c0_i32, %c0_i32_0 : i32, i32
  }
  func.func @transform_5(%arg0: i32) -> (i32, i32) {
    %c0_i32 = arith.constant 0 : i32
    %c0_i32_0 = arith.constant 0 : i32
    %c0_i32_1 = arith.constant 0 : i32
    return %c0_i32, %c0_i32_0 : i32, i32
  }
  func.func @transform_6(%arg0: i32) -> (i32, i32) {
    %c0_i32 = arith.constant 0 : i32
    %c0_i32_0 = arith.constant 0 : i32
    %c0_i32_1 = arith.constant 0 : i32
    return %c0_i32, %c0_i32_0 : i32, i32
  }
  func.func @transform_7(%arg0: i32) -> (i32, i32) {
    %c0_i32 = arith.constant 0 : i32
    %c0_i32_0 = arith.constant 0 : i32
    %c0_i32_1 = arith.constant 0 : i32
    return %c0_i32, %c0_i32_0 : i32, i32
  }
  func.func @transform_8(%arg0: i32) -> (i32, i32) {
    %c0_i32 = arith.constant 0 : i32
    %c0_i32_0 = arith.constant 0 : i32
    return %arg0, %c0_i32 : i32, i32
  }
}

</mosaic_0001>

<llo_original>
// kernel: fully_connected_nn_forward.1
$region0: #{fully_connected_nn_forward.1}
  #allocation0 [shape = 'u32[]', space=smem, size = 0x4, offset = 0x4, fixed_abs, tag = 'smem constant byte address 0x4 - core index']
  #allocation1 [shape = 'u32[72,128]{1,0:T(1,128)}', space=vmem, size = 0x9000, scoped, tag = 'internal scratch']
  %s0 = inlined_call_operand.vmem [shape: f32[8,3072], index: 0, kind: input, shape index: {}]
  %s1 = inlined_call_operand.hbm [shape: bf16[3072,1024], index: 1, kind: input, shape index: {}]
  %s2 = inlined_call_operand.hbm [shape: bf16[1024,512], index: 2, kind: input, shape index: {}]
  %s3 = inlined_call_operand.hbm [shape: bf16[512,256], index: 3, kind: input, shape index: {}]
  %s4 = inlined_call_operand.hbm [shape: bf16[256,128], index: 4, kind: input, shape index: {}]
  %s5 = inlined_call_operand.hbm [shape: bf16[128,128], index: 5, kind: input, shape index: {}]
  %s6 = inlined_call_operand.hbm [shape: bf16[128,128], index: 6, kind: input, shape index: {}]
  %s7 = inlined_call_operand.hbm [shape: f32[1,2176], index: 7, kind: input, shape index: {}]
  %s8 = inlined_call_operand.vmem [shape: f32[8,128], index: 8, kind: output, shape index: {}]
  %s9 = sld [smem:[#allocation0]]
  $region70: #{fully_connected_nn_forward.1} parent=0
    _
  %s11 = ssub.s32 1, %s9
  %s12 = scalar_select 0, %s11, %s9
  $region1: #{fully_connected_nn_forward.1} parent=0
    #allocation2 [shape = 'u8[6291456]{0}', space=vmem, size = 0x600000, scoped, tag = 'input window, operand 1, single buffered']
    #allocation3 [shape = 's32[1]{0}', space=sflag, size = 0x4, scoped, tag = 'scoped memory for fully_connected_nn_forward.1']
    #allocation4 [shape = 'u8[1048576]{0}', space=vmem, size = 0x100000, scoped, tag = 'input window, operand 2, single buffered']
    #allocation5 [shape = 's32[1]{0}', space=sflag, size = 0x4, scoped, tag = 'scoped memory for fully_connected_nn_forward.1']
    #allocation6 [shape = 'u8[262144]{0}', space=vmem, size = 0x40000, scoped, tag = 'input window, operand 3, single buffered']
    #allocation7 [shape = 'u8[65536]{0}', space=vmem, size = 0x10000, scoped, tag = 'input window, operand 4, single buffered']
    #allocation8 [shape = 's32[1]{0}', space=sflag, size = 0x4, scoped, tag = 'scoped memory for fully_connected_nn_forward.1']
    #allocation9 [shape = 'u8[32768]{0}', space=vmem, size = 0x8000, scoped, tag = 'input window, operand 5, single buffered']
    #allocation10 [shape = 'u8[32768]{0}', space=vmem, size = 0x8000, scoped, tag = 'input window, operand 6, single buffered']
    #allocation11 [shape = 's32[1]{0}', space=sflag, size = 0x4, scoped, tag = 'scoped memory for fully_connected_nn_forward.1']
    #allocation12 [shape = 'u8[8704]{0}', space=vmem, size = 0x2400, scoped, tag = 'input window, operand 7, single buffered']
    %13 = vsyncpa [#allocation3], 0
    %14 = vsyncpa [#allocation5], 0
    %15 = vsyncpa [#allocation8], 0
    %16 = vsyncpa [#allocation11], 0
    // Predicated region
    $region2: #{fully_connected_nn_forward.1} parent=1 // pred_check
      _
    $region3: #{fully_connected_nn_forward.1} parent=1 // pred_check_branch
      %18 = sbr.rel (0) target = $region5
    $region4: #{fully_connected_nn_forward.1} parent=1 // pred_region
      _
    $region5: #{fully_connected_nn_forward.1} parent=1 // pred_fallthru
      _
    // Predicated region
    $region6: #{fully_connected_nn_forward.1} parent=1 // pred_check
      _
    $region7: #{fully_connected_nn_forward.1} parent=1 // pred_check_branch
      %20 = sbr.rel (0) target = $region9
    $region8: #{fully_connected_nn_forward.1} parent=1 // pred_region
      %22 = vsyncadd [#allocation3], 0
      %s23 = sshll.u32 %s1, 4
      %s24 = int_to_ptr.hbm [resolvable:$true] %s23
      %s25 = sshll.u32 [#allocation2], 4
      %s26 = int_to_ptr.vmem [resolvable:$true] %s25
      %31 = dma.hbm_to_vmem [thread:$0]  %s24, 196608, %s26, [#allocation3], 512, 512, 32
    $region9: #{fully_connected_nn_forward.1} parent=1 // pred_fallthru
      _
    // Predicated region
    $region10: #{fully_connected_nn_forward.1} parent=1 // pred_check
      _
    $region11: #{fully_connected_nn_forward.1} parent=1 // pred_check_branch
      %33 = sbr.rel (0) target = $region13
    $region12: #{fully_connected_nn_forward.1} parent=1 // pred_region
      %35 = vsyncadd [#allocation5], 0
      %s36 = sshll.u32 %s2, 4
      %s37 = int_to_ptr.hbm [resolvable:$true] %s36
      %s38 = sshll.u32 [#allocation4], 4
      %s39 = int_to_ptr.vmem [resolvable:$true] %s38
      %44 = dma.hbm_to_vmem [thread:$0]  %s37, 32768, %s39, [#allocation5], 256, 256, 16
    $region13: #{fully_connected_nn_forward.1} parent=1 // pred_fallthru
      _
    // Predicated region
    $region14: #{fully_connected_nn_forward.1} parent=1 // pred_check
      _
    $region15: #{fully_connected_nn_forward.1} parent=1 // pred_check_branch
      %46 = sbr.rel (0) target = $region17
    $region16: #{fully_connected_nn_forward.1} parent=1 // pred_region
      %48 = vsyncadd [#allocation5], 0
      %s49 = sshll.u32 %s3, 4
      %s50 = int_to_ptr.hbm [resolvable:$true] %s49
      %s51 = sshll.u32 [#allocation6], 4
      %s52 = int_to_ptr.vmem [resolvable:$true] %s51
      %57 = dma.hbm_to_vmem [thread:$0]  %s50, 8192, %s52, [#allocation5], 128, 128, 8
    $region17: #{fully_connected_nn_forward.1} parent=1 // pred_fallthru
      _
    // Predicated region
    $region18: #{fully_connected_nn_forward.1} parent=1 // pred_check
      _
    $region19: #{fully_connected_nn_forward.1} parent=1 // pred_check_branch
      %59 = sbr.rel (0) target = $region21
    $region20: #{fully_connected_nn_forward.1} parent=1 // pred_region
      %61 = vsyncadd [#allocation8], 0
      %s62 = sshll.u32 %s4, 4
      %s63 = int_to_ptr.hbm [resolvable:$true] %s62
      %s64 = sshll.u32 [#allocation7], 4
      %s65 = int_to_ptr.vmem [resolvable:$true] %s64
      %70 = dma.hbm_to_vmem [thread:$0]  %s63, 2048, %s65, [#allocation8], 64, 64, 4
    $region21: #{fully_connected_nn_forward.1} parent=1 // pred_fallthru
      _
    // Predicated region
    $region22: #{fully_connected_nn_forward.1} parent=1 // pred_check
      _
    $region23: #{fully_connected_nn_forward.1} parent=1 // pred_check_branch
      %72 = sbr.rel (0) target = $region25
    $region24: #{fully_connected_nn_forward.1} parent=1 // pred_region
      %74 = vsyncadd [#allocation8], 0
      %s75 = sshll.u32 %s5, 4
      %s76 = int_to_ptr.hbm [resolvable:$true] %s75
      %s77 = sshll.u32 [#allocation9], 4
      %s78 = int_to_ptr.vmem [resolvable:$true] %s77
      %83 = dma.hbm_to_vmem [thread:$0]  %s76, 1024, %s78, [#allocation8], 64, 64, 4
    $region25: #{fully_connected_nn_forward.1} parent=1 // pred_fallthru
      _
    // Predicated region
    $region26: #{fully_connected_nn_forward.1} parent=1 // pred_check
      _
    $region27: #{fully_connected_nn_forward.1} parent=1 // pred_check_branch
      %85 = sbr.rel (0) target = $region29
    $region28: #{fully_connected_nn_forward.1} parent=1 // pred_region
      %87 = vsyncadd [#allocation11], 0
      %s88 = sshll.u32 %s6, 4
      %s89 = int_to_ptr.hbm [resolvable:$true] %s88
      %s90 = sshll.u32 [#allocation10], 4
      %s91 = int_to_ptr.vmem [resolvable:$true] %s90
      %96 = dma.hbm_to_vmem [thread:$0]  %s89, 1024, %s91, [#allocation11], 64, 64, 4
    $region29: #{fully_connected_nn_forward.1} parent=1 // pred_fallthru
      _
    // Predicated region
    $region30: #{fully_connected_nn_forward.1} parent=1 // pred_check
      _
    $region31: #{fully_connected_nn_forward.1} parent=1 // pred_check_branch
      %98 = sbr.rel (0) target = $region33
    $region32: #{fully_connected_nn_forward.1} parent=1 // pred_region
      %100 = vsyncadd [#allocation11], 0
      %s102 = sshll.u32 %s7, 4
      %s103 = int_to_ptr.hbm [resolvable:$true] %s102
      %s104 = sshll.u32 [#allocation12], 4
      %s105 = int_to_ptr.vmem [resolvable:$true] %s104
      %107 = dma.hbm_to_vmem [thread:$0]  %s103, 272, %s105, [#allocation11]
    $region33: #{fully_connected_nn_forward.1} parent=1 // pred_fallthru
      _
    // Predicated region
    $region34: #{fully_connected_nn_forward.1} parent=1 // pred_check
      _
    $region35: #{fully_connected_nn_forward.1} parent=1 // pred_check_branch
      %109 = sbr.rel (0) target = $region37
    $region36: #{fully_connected_nn_forward.1} parent=1 // pred_region
      %111 = dma.done [#allocation3], 196608
    $region37: #{fully_connected_nn_forward.1} parent=1 // pred_fallthru
      _
    // Predicated region
    $region38: #{fully_connected_nn_forward.1} parent=1 // pred_check
      _
    $region39: #{fully_connected_nn_forward.1} parent=1 // pred_check_branch
      %113 = sbr.rel (0) target = $region41
    $region40: #{fully_connected_nn_forward.1} parent=1 // pred_region
      %115 = dma.done [#allocation5], 32768
    $region41: #{fully_connected_nn_forward.1} parent=1 // pred_fallthru
      _
    // Predicated region
    $region42: #{fully_connected_nn_forward.1} parent=1 // pred_check
      _
    $region43: #{fully_connected_nn_forward.1} parent=1 // pred_check_branch
      %117 = sbr.rel (0) target = $region45
    $region44: #{fully_connected_nn_forward.1} parent=1 // pred_region
      %119 = dma.done [#allocation5], 8192
    $region45: #{fully_connected_nn_forward.1} parent=1 // pred_fallthru
      _
    // Predicated region
    $region46: #{fully_connected_nn_forward.1} parent=1 // pred_check
      _
    $region47: #{fully_connected_nn_forward.1} parent=1 // pred_check_branch
      %121 = sbr.rel (0) target = $region49
    $region48: #{fully_connected_nn_forward.1} parent=1 // pred_region
      %123 = dma.done [#allocation8], 2048
    $region49: #{fully_connected_nn_forward.1} parent=1 // pred_fallthru
      _
    // Predicated region
    $region50: #{fully_connected_nn_forward.1} parent=1 // pred_check
      _
    $region51: #{fully_connected_nn_forward.1} parent=1 // pred_check_branch
      %125 = sbr.rel (0) target = $region53
    $region52: #{fully_connected_nn_forward.1} parent=1 // pred_region
      %127 = dma.done [#allocation8], 1024
    $region53: #{fully_connected_nn_forward.1} parent=1 // pred_fallthru
      _
    // Predicated region
    $region54: #{fully_connected_nn_forward.1} parent=1 // pred_check
      _
    $region55: #{fully_connected_nn_forward.1} parent=1 // pred_check_branch
      %129 = sbr.rel (0) target = $region57
    $region56: #{fully_connected_nn_forward.1} parent=1 // pred_region
      %131 = dma.done [#allocation11], 1024
    $region57: #{fully_connected_nn_forward.1} parent=1 // pred_fallthru
      _
    // Predicated region
    $region58: #{fully_connected_nn_forward.1} parent=1 // pred_check
      _
    $region59: #{fully_connected_nn_forward.1} parent=1 // pred_check_branch
      %133 = sbr.rel (0) target = $region61
    $region60: #{fully_connected_nn_forward.1} parent=1 // pred_region
      %135 = dma.done [#allocation11], 272
    $region61: #{fully_connected_nn_forward.1} parent=1 // pred_fallthru
      _
    %v136 = vld [vmem:[%s0] sm:$0xff]
    %v137 = vld [vmem:[%s0 + $0x8] sm:$0xff]
    %v138 = vld [vmem:[%s0 + $0x10] sm:$0xff]
    %v139 = vld [vmem:[%s0 + $0x18] sm:$0xff]
    %v140 = vld [vmem:[%s0 + $0x20] sm:$0xff]
    %v141 = vld [vmem:[%s0 + $0x28] sm:$0xff]
    %v142 = vld [vmem:[%s0 + $0x30] sm:$0xff]
    %v143 = vld [vmem:[%s0 + $0x38] sm:$0xff]
    %v144 = vld [vmem:[%s0 + $0x40] sm:$0xff]
    %v145 = vld [vmem:[%s0 + $0x48] sm:$0xff]
    %v146 = vld [vmem:[%s0 + $0x50] sm:$0xff]
    %v147 = vld [vmem:[%s0 + $0x58] sm:$0xff]
    %v148 = vld [vmem:[%s0 + $0x60] sm:$0xff]
    %v149 = vld [vmem:[%s0 + $0x68] sm:$0xff]
    %v150 = vld [vmem:[%s0 + $0x70] sm:$0xff]
    %v151 = vld [vmem:[%s0 + $0x78] sm:$0xff]
    %v152 = vld [vmem:[%s0 + $0x80] sm:$0xff]
    %v153 = vld [vmem:[%s0 + $0x88] sm:$0xff]
    %v154 = vld [vmem:[%s0 + $0x90] sm:$0xff]
    %v155 = vld [vmem:[%s0 + $0x98] sm:$0xff]
    %v156 = vld [vmem:[%s0 + $0xa0] sm:$0xff]
    %v157 = vld [vmem:[%s0 + $0xa8] sm:$0xff]
    %v158 = vld [vmem:[%s0 + $0xb0] sm:$0xff]
    %v159 = vld [vmem:[%s0 + $0xb8] sm:$0xff]
    %v160 = vpack.c.bf16 %v136, %v136
    %v161 = vpack.c.bf16 %v137, %v137
    %v162 = vpack.c.bf16 %v138, %v138
    %v163 = vpack.c.bf16 %v139, %v139
    %v164 = vpack.c.bf16 %v140, %v140
    %v165 = vpack.c.bf16 %v141, %v141
    %v166 = vpack.c.bf16 %v142, %v142
    %v167 = vpack.c.bf16 %v143, %v143
    %v168 = vpack.c.bf16 %v144, %v144
    %v169 = vpack.c.bf16 %v145, %v145
    %v170 = vpack.c.bf16 %v146, %v146
    %v171 = vpack.c.bf16 %v147, %v147
    %v172 = vpack.c.bf16 %v148, %v148
    %v173 = vpack.c.bf16 %v149, %v149
    %v174 = vpack.c.bf16 %v150, %v150
    %v175 = vpack.c.bf16 %v151, %v151
    %v176 = vpack.c.bf16 %v152, %v152
    %v177 = vpack.c.bf16 %v153, %v153
    %v178 = vpack.c.bf16 %v154, %v154
    %v179 = vpack.c.bf16 %v155, %v155
    %v180 = vpack.c.bf16 %v156, %v156
    %v181 = vpack.c.bf16 %v157, %v157
    %v182 = vpack.c.bf16 %v158, %v158
    %v183 = vpack.c.bf16 %v159, %v159
    %v184 = vld [vmem:[#allocation2] sm:$0xff]
    %v185 = vld [vmem:[#allocation2 + $0x8] sm:$0xff]
    %v186 = vld [vmem:[#allocation2 + $0x10] sm:$0xff]
    %v187 = vld [vmem:[#allocation2 + $0x18] sm:$0xff]
    %v188 = vld [vmem:[#allocation2 + $0x20] sm:$0xff]
    %v189 = vld [vmem:[#allocation2 + $0x28] sm:$0xff]
    %v190 = vld [vmem:[#allocation2 + $0x30] sm:$0xff]
    %v191 = vld [vmem:[#allocation2 + $0x38] sm:$0xff]
    %v192 = vld [vmem:[#allocation2 + $0x40] sm:$0xff]
    %v193 = vld [vmem:[#allocation2 + $0x48] sm:$0xff]
    %v194 = vld [vmem:[#allocation2 + $0x50] sm:$0xff]
    %v195 = vld [vmem:[#allocation2 + $0x58] sm:$0xff]
    %v196 = vld [vmem:[#allocation2 + $0x60] sm:$0xff]
    %v197 = vld [vmem:[#allocation2 + $0x68] sm:$0xff]
    %v198 = vld [vmem:[#allocation2 + $0x70] sm:$0xff]
    %v199 = vld [vmem:[#allocation2 + $0x78] sm:$0xff]
    %v200 = vld [vmem:[#allocation2 + $0x80] sm:$0xff]
    %v201 = vld [vmem:[#allocation2 + $0x88] sm:$0xff]
    %v202 = vld [vmem:[#allocation2 + $0x90] sm:$0xff]
    %v203 = vld [vmem:[#allocation2 + $0x98] sm:$0xff]
    %v204 = vld [vmem:[#allocation2 + $0xa0] sm:$0xff]
    %v205 = vld [vmem:[#allocation2 + $0xa8] sm:$0xff]
    %v206 = vld [vmem:[#allocation2 + $0xb0] sm:$0xff]
    %v207 = vld [vmem:[#allocation2 + $0xb8] sm:$0xff]
    %v208 = vld [vmem:[#allocation2 + $0xc0] sm:$0xff]
    %v209 = vld [vmem:[#allocation2 + $0xc8] sm:$0xff]
    %v210 = vld [vmem:[#allocation2 + $0xd0] sm:$0xff]
    %v211 = vld [vmem:[#allocation2 + $0xd8] sm:$0xff]
    %v212 = vld [vmem:[#allocation2 + $0xe0] sm:$0xff]
    %v213 = vld [vmem:[#allocation2 + $0xe8] sm:$0xff]
    %v214 = vld [vmem:[#allocation2 + $0xf0] sm:$0xff]
    %v215 = vld [vmem:[#allocation2 + $0xf8] sm:$0xff]
    %v216 = vld [vmem:[#allocation2 + $0x100] sm:$0xff]
    %v217 = vld [vmem:[#allocation2 + $0x108] sm:$0xff]
    %v218 = vld [vmem:[#allocation2 + $0x110] sm:$0xff]
    %v219 = vld [vmem:[#allocation2 + $0x118] sm:$0xff]
    %v220 = vld [vmem:[#allocation2 + $0x120] sm:$0xff]
    %v221 = vld [vmem:[#allocation2 + $0x128] sm:$0xff]
    %v222 = vld [vmem:[#allocation2 + $0x130] sm:$0xff]
    %v223 = vld [vmem:[#allocation2 + $0x138] sm:$0xff]
    %v224 = vld [vmem:[#allocation2 + $0x140] sm:$0xff]
    %v225 = vld [vmem:[#allocation2 + $0x148] sm:$0xff]
    %v226 = vld [vmem:[#allocation2 + $0x150] sm:$0xff]
    %v227 = vld [vmem:[#allocation2 + $0x158] sm:$0xff]
    %v228 = vld [vmem:[#allocation2 + $0x160] sm:$0xff]
    %v229 = vld [vmem:[#allocation2 + $0x168] sm:$0xff]
    %v230 = vld [vmem:[#allocation2 + $0x170] sm:$0xff]
    %v231 = vld [vmem:[#allocation2 + $0x178] sm:$0xff]
    %v232 = vld [vmem:[#allocation2 + $0x180] sm:$0xff]
    %v233 = vld [vmem:[#allocation2 + $0x188] sm:$0xff]
    %v234 = vld [vmem:[#allocation2 + $0x190] sm:$0xff]
    %v235 = vld [vmem:[#allocation2 + $0x198] sm:$0xff]
    %v236 = vld [vmem:[#allocation2 + $0x1a0] sm:$0xff]
    %v237 = vld [vmem:[#allocation2 + $0x1a8] sm:$0xff]
    %v238 = vld [vmem:[#allocation2 + $0x1b0] sm:$0xff]
    %v239 = vld [vmem:[#allocation2 + $0x1b8] sm:$0xff]
    %v240 = vld [vmem:[#allocation2 + $0x1c0] sm:$0xff]
    %v241 = vld [vmem:[#allocation2 + $0x1c8] sm:$0xff]
    %v242 = vld [vmem:[#allocation2 + $0x1d0] sm:$0xff]
    %v243 = vld [vmem:[#allocation2 + $0x1d8] sm:$0xff]
    %v244 = vld [vmem:[#allocation2 + $0x1e0] sm:$0xff]
    %v245 = vld [vmem:[#allocation2 + $0x1e8] sm:$0xff]
    %v246 = vld [vmem:[#allocation2 + $0x1f0] sm:$0xff]
    %v247 = vld [vmem:[#allocation2 + $0x1f8] sm:$0xff]
    %v248 = vld [vmem:[#allocation2 + $0x200] sm:$0xff]
    %v249 = vld [vmem:[#allocation2 + $0x208] sm:$0xff]
    %v250 = vld [vmem:[#allocation2 + $0x210] sm:$0xff]
    %v251 = vld [vmem:[#allocation2 + $0x218] sm:$0xff]
    %v252 = vld [vmem:[#allocation2 + $0x220] sm:$0xff]
    %v253 = vld [vmem:[#allocation2 + $0x228] sm:$0xff]
    %v254 = vld [vmem:[#allocation2 + $0x230] sm:$0xff]
    %v255 = vld [vmem:[#allocation2 + $0x238] sm:$0xff]
    %v256 = vld [vmem:[#allocation2 + $0x240] sm:$0xff]
    %v257 = vld [vmem:[#allocation2 + $0x248] sm:$0xff]
    %v258 = vld [vmem:[#allocation2 + $0x250] sm:$0xff]
    %v259 = vld [vmem:[#allocation2 + $0x258] sm:$0xff]
    %v260 = vld [vmem:[#allocation2 + $0x260] sm:$0xff]
    %v261 = vld [vmem:[#allocation2 + $0x268] sm:$0xff]
    %v262 = vld [vmem:[#allocation2 + $0x270] sm:$0xff]
    %v263 = vld [vmem:[#allocation2 + $0x278] sm:$0xff]
    %v264 = vld [vmem:[#allocation2 + $0x280] sm:$0xff]
    %v265 = vld [vmem:[#allocation2 + $0x288] sm:$0xff]
    %v266 = vld [vmem:[#allocation2 + $0x290] sm:$0xff]
    %v267 = vld [vmem:[#allocation2 + $0x298] sm:$0xff]
    %v268 = vld [vmem:[#allocation2 + $0x2a0] sm:$0xff]
    %v269 = vld [vmem:[#allocation2 + $0x2a8] sm:$0xff]
    %v270 = vld [vmem:[#allocation2 + $0x2b0] sm:$0xff]
    %v271 = vld [vmem:[#allocation2 + $0x2b8] sm:$0xff]
    %v272 = vld [vmem:[#allocation2 + $0x2c0] sm:$0xff]
    %v273 = vld [vmem:[#allocation2 + $0x2c8] sm:$0xff]
    %v274 = vld [vmem:[#allocation2 + $0x2d0] sm:$0xff]
    %v275 = vld [vmem:[#allocation2 + $0x2d8] sm:$0xff]
    %v276 = vld [vmem:[#allocation2 + $0x2e0] sm:$0xff]
    %v277 = vld [vmem:[#allocation2 + $0x2e8] sm:$0xff]
    %v278 = vld [vmem:[#allocation2 + $0x2f0] sm:$0xff]
    %v279 = vld [vmem:[#allocation2 + $0x2f8] sm:$0xff]
    %v280 = vld [vmem:[#allocation2 + $0x300] sm:$0xff]
    %v281 = vld [vmem:[#allocation2 + $0x308] sm:$0xff]
    %v282 = vld [vmem:[#allocation2 + $0x310] sm:$0xff]
    %v283 = vld [vmem:[#allocation2 + $0x318] sm:$0xff]
    %v284 = vld [vmem:[#allocation2 + $0x320] sm:$0xff]
    %v285 = vld [vmem:[#allocation2 + $0x328] sm:$0xff]
    %v286 = vld [vmem:[#allocation2 + $0x330] sm:$0xff]
    %v287 = vld [vmem:[#allocation2 + $0x338] sm:$0xff]
    %v288 = vld [vmem:[#allocation2 + $0x340] sm:$0xff]
    %v289 = vld [vmem:[#allocation2 + $0x348] sm:$0xff]
    %v290 = vld [vmem:[#allocation2 + $0x350] sm:$0xff]
    %v291 = vld [vmem:[#allocation2 + $0x358] sm:$0xff]
    %v292 = vld [vmem:[#allocation2 + $0x360] sm:$0xff]
    %v293 = vld [vmem:[#allocation2 + $0x368] sm:$0xff]
    %v294 = vld [vmem:[#allocation2 + $0x370] sm:$0xff]
    %v295 = vld [vmem:[#allocation2 + $0x378] sm:$0xff]
    %v296 = vld [vmem:[#allocation2 + $0x380] sm:$0xff]
    %v297 = vld [vmem:[#allocation2 + $0x388] sm:$0xff]
    %v298 = vld [vmem:[#allocation2 + $0x390] sm:$0xff]
    %v299 = vld [vmem:[#allocation2 + $0x398] sm:$0xff]
    %v300 = vld [vmem:[#allocation2 + $0x3a0] sm:$0xff]
    %v301 = vld [vmem:[#allocation2 + $0x3a8] sm:$0xff]
    %v302 = vld [vmem:[#allocation2 + $0x3b0] sm:$0xff]
    %v303 = vld [vmem:[#allocation2 + $0x3b8] sm:$0xff]
    %v304 = vld [vmem:[#allocation2 + $0x3c0] sm:$0xff]
    %v305 = vld [vmem:[#allocation2 + $0x3c8] sm:$0xff]
    %v306 = vld [vmem:[#allocation2 + $0x3d0] sm:$0xff]
    %v307 = vld [vmem:[#allocation2 + $0x3d8] sm:$0xff]
    %v308 = vld [vmem:[#allocation2 + $0x3e0] sm:$0xff]
    %v309 = vld [vmem:[#allocation2 + $0x3e8] sm:$0xff]
    %v310 = vld [vmem:[#allocation2 + $0x3f0] sm:$0xff]
    %v311 = vld [vmem:[#allocation2 + $0x3f8] sm:$0xff]
    %v312 = vld [vmem:[#allocation2 + $0x400] sm:$0xff]
    %v313 = vld [vmem:[#allocation2 + $0x408] sm:$0xff]
    %v314 = vld [vmem:[#allocation2 + $0x410] sm:$0xff]
    %v315 = vld [vmem:[#allocation2 + $0x418] sm:$0xff]
    %v316 = vld [vmem:[#allocation2 + $0x420] sm:$0xff]
    %v317 = vld [vmem:[#allocation2 + $0x428] sm:$0xff]
    %v318 = vld [vmem:[#allocation2 + $0x430] sm:$0xff]
    %v319 = vld [vmem:[#allocation2 + $0x438] sm:$0xff]
    %v320 = vld [vmem:[#allocation2 + $0x440] sm:$0xff]
    %v321 = vld [vmem:[#allocation2 + $0x448] sm:$0xff]
    %v322 = vld [vmem:[#allocation2 + $0x450] sm:$0xff]
    %v323 = vld [vmem:[#allocation2 + $0x458] sm:$0xff]
    %v324 = vld [vmem:[#allocation2 + $0x460] sm:$0xff]
    %v325 = vld [vmem:[#allocation2 + $0x468] sm:$0xff]
    %v326 = vld [vmem:[#allocation2 + $0x470] sm:$0xff]
    %v327 = vld [vmem:[#allocation2 + $0x478] sm:$0xff]
    %v328 = vld [vmem:[#allocation2 + $0x480] sm:$0xff]
    %v329 = vld [vmem:[#allocation2 + $0x488] sm:$0xff]
    %v330 = vld [vmem:[#allocation2 + $0x490] sm:$0xff]
    %v331 = vld [vmem:[#allocation2 + $0x498] sm:$0xff]
    %v332 = vld [vmem:[#allocation2 + $0x4a0] sm:$0xff]
    %v333 = vld [vmem:[#allocation2 + $0x4a8] sm:$0xff]
    %v334 = vld [vmem:[#allocation2 + $0x4b0] sm:$0xff]
    %v335 = vld [vmem:[#allocation2 + $0x4b8] sm:$0xff]
    %v336 = vld [vmem:[#allocation2 + $0x4c0] sm:$0xff]
    %v337 = vld [vmem:[#allocation2 + $0x4c8] sm:$0xff]
    %v338 = vld [vmem:[#allocation2 + $0x4d0] sm:$0xff]
    %v339 = vld [vmem:[#allocation2 + $0x4d8] sm:$0xff]
    %v340 = vld [vmem:[#allocation2 + $0x4e0] sm:$0xff]
    %v341 = vld [vmem:[#allocation2 + $0x4e8] sm:$0xff]
    %v342 = vld [vmem:[#allocation2 + $0x4f0] sm:$0xff]
    %v343 = vld [vmem:[#allocation2 + $0x4f8] sm:$0xff]
    %v344 = vld [vmem:[#allocation2 + $0x500] sm:$0xff]
    %v345 = vld [vmem:[#allocation2 + $0x508] sm:$0xff]
    %v346 = vld [vmem:[#allocation2 + $0x510] sm:$0xff]
    %v347 = vld [vmem:[#allocation2 + $0x518] sm:$0xff]
    %v348 = vld [vmem:[#allocation2 + $0x520] sm:$0xff]
    %v349 = vld [vmem:[#allocation2 + $0x528] sm:$0xff]
    %v350 = vld [vmem:[#allocation2 + $0x530] sm:$0xff]
    %v351 = vld [vmem:[#allocation2 + $0x538] sm:$0xff]
    %v352 = vld [vmem:[#allocation2 + $0x540] sm:$0xff]
    %v353 = vld [vmem:[#allocation2 + $0x548] sm:$0xff]
    %v354 = vld [vmem:[#allocation2 + $0x550] sm:$0xff]
    %v355 = vld [vmem:[#allocation2 + $0x558] sm:$0xff]
    %v356 = vld [vmem:[#allocation2 + $0x560] sm:$0xff]
    %v357 = vld [vmem:[#allocation2 + $0x568] sm:$0xff]
    %v358 = vld [vmem:[#allocation2 + $0x570] sm:$0xff]
    %v359 = vld [vmem:[#allocation2 + $0x578] sm:$0xff]
    %v360 = vld [vmem:[#allocation2 + $0x580] sm:$0xff]
    %v361 = vld [vmem:[#allocation2 + $0x588] sm:$0xff]
    %v362 = vld [vmem:[#allocation2 + $0x590] sm:$0xff]
    %v363 = vld [vmem:[#allocation2 + $0x598] sm:$0xff]
    %v364 = vld [vmem:[#allocation2 + $0x5a0] sm:$0xff]
    %v365 = vld [vmem:[#allocation2 + $0x5a8] sm:$0xff]
    %v366 = vld [vmem:[#allocation2 + $0x5b0] sm:$0xff]
    %v367 = vld [vmem:[#allocation2 + $0x5b8] sm:$0xff]
    %v368 = vld [vmem:[#allocation2 + $0x5c0] sm:$0xff]
    %v369 = vld [vmem:[#allocation2 + $0x5c8] sm:$0xff]
    %v370 = vld [vmem:[#allocation2 + $0x5d0] sm:$0xff]
    %v371 = vld [vmem:[#allocation2 + $0x5d8] sm:$0xff]
    %v372 = vld [vmem:[#allocation2 + $0x5e0] sm:$0xff]
    %v373 = vld [vmem:[#allocation2 + $0x5e8] sm:$0xff]
    %v374 = vld [vmem:[#allocation2 + $0x5f0] sm:$0xff]
    %v375 = vld [vmem:[#allocation2 + $0x5f8] sm:$0xff]
    %v376 = vld [vmem:[#allocation2 + $0x600] sm:$0xff]
    %v377 = vld [vmem:[#allocation2 + $0x608] sm:$0xff]
    %v378 = vld [vmem:[#allocation2 + $0x610] sm:$0xff]
    %v379 = vld [vmem:[#allocation2 + $0x618] sm:$0xff]
    %v380 = vld [vmem:[#allocation2 + $0x620] sm:$0xff]
    %v381 = vld [vmem:[#allocation2 + $0x628] sm:$0xff]
    %v382 = vld [vmem:[#allocation2 + $0x630] sm:$0xff]
    %v383 = vld [vmem:[#allocation2 + $0x638] sm:$0xff]
    %v384 = vld [vmem:[#allocation2 + $0x640] sm:$0xff]
    %v385 = vld [vmem:[#allocation2 + $0x648] sm:$0xff]
    %v386 = vld [vmem:[#allocation2 + $0x650] sm:$0xff]
    %v387 = vld [vmem:[#allocation2 + $0x658] sm:$0xff]
    %v388 = vld [vmem:[#allocation2 + $0x660] sm:$0xff]
    %v389 = vld [vmem:[#allocation2 + $0x668] sm:$0xff]
    %v390 = vld [vmem:[#allocation2 + $0x670] sm:$0xff]
    %v391 = vld [vmem:[#allocation2 + $0x678] sm:$0xff]
    %v392 = vld [vmem:[#allocation2 + $0x680] sm:$0xff]
    %v393 = vld [vmem:[#allocation2 + $0x688] sm:$0xff]
    %v394 = vld [vmem:[#allocation2 + $0x690] sm:$0xff]
    %v395 = vld [vmem:[#allocation2 + $0x698] sm:$0xff]
    %v396 = vld [vmem:[#allocation2 + $0x6a0] sm:$0xff]
    %v397 = vld [vmem:[#allocation2 + $0x6a8] sm:$0xff]
    %v398 = vld [vmem:[#allocation2 + $0x6b0] sm:$0xff]
    %v399 = vld [vmem:[#allocation2 + $0x6b8] sm:$0xff]
    %v400 = vld [vmem:[#allocation2 + $0x6c0] sm:$0xff]
    %v401 = vld [vmem:[#allocation2 + $0x6c8] sm:$0xff]
    %v402 = vld [vmem:[#allocation2 + $0x6d0] sm:$0xff]
    %v403 = vld [vmem:[#allocation2 + $0x6d8] sm:$0xff]
    %v404 = vld [vmem:[#allocation2 + $0x6e0] sm:$0xff]
    %v405 = vld [vmem:[#allocation2 + $0x6e8] sm:$0xff]
    %v406 = vld [vmem:[#allocation2 + $0x6f0] sm:$0xff]
    %v407 = vld [vmem:[#allocation2 + $0x6f8] sm:$0xff]
    %v408 = vld [vmem:[#allocation2 + $0x700] sm:$0xff]
    %v409 = vld [vmem:[#allocation2 + $0x708] sm:$0xff]
    %v410 = vld [vmem:[#allocation2 + $0x710] sm:$0xff]
    %v411 = vld [vmem:[#allocation2 + $0x718] sm:$0xff]
    %v412 = vld [vmem:[#allocation2 + $0x720] sm:$0xff]
    %v413 = vld [vmem:[#allocation2 + $0x728] sm:$0xff]
    %v414 = vld [vmem:[#allocation2 + $0x730] sm:$0xff]
    %v415 = vld [vmem:[#allocation2 + $0x738] sm:$0xff]
    %v416 = vld [vmem:[#allocation2 + $0x740] sm:$0xff]
    %v417 = vld [vmem:[#allocation2 + $0x748] sm:$0xff]
    %v418 = vld [vmem:[#allocation2 + $0x750] sm:$0xff]
    %v419 = vld [vmem:[#allocation2 + $0x758] sm:$0xff]
    %v420 = vld [vmem:[#allocation2 + $0x760] sm:$0xff]
    %v421 = vld [vmem:[#allocation2 + $0x768] sm:$0xff]
    %v422 = vld [vmem:[#allocation2 + $0x770] sm:$0xff]
    %v423 = vld [vmem:[#allocation2 + $0x778] sm:$0xff]
    %v424 = vld [vmem:[#allocation2 + $0x780] sm:$0xff]
    %v425 = vld [vmem:[#allocation2 + $0x788] sm:$0xff]
    %v426 = vld [vmem:[#allocation2 + $0x790] sm:$0xff]
    %v427 = vld [vmem:[#allocation2 + $0x798] sm:$0xff]
    %v428 = vld [vmem:[#allocation2 + $0x7a0] sm:$0xff]
    %v429 = vld [vmem:[#allocation2 + $0x7a8] sm:$0xff]
    %v430 = vld [vmem:[#allocation2 + $0x7b0] sm:$0xff]
    %v431 = vld [vmem:[#allocation2 + $0x7b8] sm:$0xff]
    %v432 = vld [vmem:[#allocation2 + $0x7c0] sm:$0xff]
    %v433 = vld [vmem:[#allocation2 + $0x7c8] sm:$0xff]
    %v434 = vld [vmem:[#allocation2 + $0x7d0] sm:$0xff]
    %v435 = vld [vmem:[#allocation2 + $0x7d8] sm:$0xff]
    %v436 = vld [vmem:[#allocation2 + $0x7e0] sm:$0xff]
    %v437 = vld [vmem:[#allocation2 + $0x7e8] sm:$0xff]
    %v438 = vld [vmem:[#allocation2 + $0x7f0] sm:$0xff]
    %v439 = vld [vmem:[#allocation2 + $0x7f8] sm:$0xff]
    %v440 = vld [vmem:[#allocation2 + $0x800] sm:$0xff]
    %v441 = vld [vmem:[#allocation2 + $0x808] sm:$0xff]
    %v442 = vld [vmem:[#allocation2 + $0x810] sm:$0xff]
    %v443 = vld [vmem:[#allocation2 + $0x818] sm:$0xff]
    %v444 = vld [vmem:[#allocation2 + $0x820] sm:$0xff]
    %v445 = vld [vmem:[#allocation2 + $0x828] sm:$0xff]
    %v446 = vld [vmem:[#allocation2 + $0x830] sm:$0xff]
    %v447 = vld [vmem:[#allocation2 + $0x838] sm:$0xff]
    %v448 = vld [vmem:[#allocation2 + $0x840] sm:$0xff]
    %v449 = vld [vmem:[#allocation2 + $0x848] sm:$0xff]
    %v450 = vld [vmem:[#allocation2 + $0x850] sm:$0xff]
    %v451 = vld [vmem:[#allocation2 + $0x858] sm:$0xff]
    %v452 = vld [vmem:[#allocation2 + $0x860] sm:$0xff]
    %v453 = vld [vmem:[#allocation2 + $0x868] sm:$0xff]
    %v454 = vld [vmem:[#allocation2 + $0x870] sm:$0xff]
    %v455 = vld [vmem:[#allocation2 + $0x878] sm:$0xff]
    %v456 = vld [vmem:[#allocation2 + $0x880] sm:$0xff]
    %v457 = vld [vmem:[#allocation2 + $0x888] sm:$0xff]
    %v458 = vld [vmem:[#allocation2 + $0x890] sm:$0xff]
    %v459 = vld [vmem:[#allocation2 + $0x898] sm:$0xff]
    %v460 = vld [vmem:[#allocation2 + $0x8a0] sm:$0xff]
    %v461 = vld [vmem:[#allocation2 + $0x8a8] sm:$0xff]
    %v462 = vld [vmem:[#allocation2 + $0x8b0] sm:$0xff]
    %v463 = vld [vmem:[#allocation2 + $0x8b8] sm:$0xff]
    %v464 = vld [vmem:[#allocation2 + $0x8c0] sm:$0xff]
    %v465 = vld [vmem:[#allocation2 + $0x8c8] sm:$0xff]
    %v466 = vld [vmem:[#allocation2 + $0x8d0] sm:$0xff]
    %v467 = vld [vmem:[#allocation2 + $0x8d8] sm:$0xff]
    %v468 = vld [vmem:[#allocation2 + $0x8e0] sm:$0xff]
    %v469 = vld [vmem:[#allocation2 + $0x8e8] sm:$0xff]
    %v470 = vld [vmem:[#allocation2 + $0x8f0] sm:$0xff]
    %v471 = vld [vmem:[#allocation2 + $0x8f8] sm:$0xff]
    %v472 = vld [vmem:[#allocation2 + $0x900] sm:$0xff]
    %v473 = vld [vmem:[#allocation2 + $0x908] sm:$0xff]
    %v474 = vld [vmem:[#allocation2 + $0x910] sm:$0xff]
    %v475 = vld [vmem:[#allocation2 + $0x918] sm:$0xff]
    %v476 = vld [vmem:[#allocation2 + $0x920] sm:$0xff]
    %v477 = vld [vmem:[#allocation2 + $0x928] sm:$0xff]
    %v478 = vld [vmem:[#allocation2 + $0x930] sm:$0xff]
    %v479 = vld [vmem:[#allocation2 + $0x938] sm:$0xff]
    %v480 = vld [vmem:[#allocation2 + $0x940] sm:$0xff]
    %v481 = vld [vmem:[#allocation2 + $0x948] sm:$0xff]
    %v482 = vld [vmem:[#allocation2 + $0x950] sm:$0xff]
    %v483 = vld [vmem:[#allocation2 + $0x958] sm:$0xff]
    %v484 = vld [vmem:[#allocation2 + $0x960] sm:$0xff]
    %v485 = vld [vmem:[#allocation2 + $0x968] sm:$0xff]
    %v486 = vld [vmem:[#allocation2 + $0x970] sm:$0xff]
    %v487 = vld [vmem:[#allocation2 + $0x978] sm:$0xff]
    %v488 = vld [vmem:[#allocation2 + $0x980] sm:$0xff]
    %v489 = vld [vmem:[#allocation2 + $0x988] sm:$0xff]
    %v490 = vld [vmem:[#allocation2 + $0x990] sm:$0xff]
    %v491 = vld [vmem:[#allocation2 + $0x998] sm:$0xff]
    %v492 = vld [vmem:[#allocation2 + $0x9a0] sm:$0xff]
    %v493 = vld [vmem:[#allocation2 + $0x9a8] sm:$0xff]
    %v494 = vld [vmem:[#allocation2 + $0x9b0] sm:$0xff]
    %v495 = vld [vmem:[#allocation2 + $0x9b8] sm:$0xff]
    %v496 = vld [vmem:[#allocation2 + $0x9c0] sm:$0xff]
    %v497 = vld [vmem:[#allocation2 + $0x9c8] sm:$0xff]
    %v498 = vld [vmem:[#allocation2 + $0x9d0] sm:$0xff]
    %v499 = vld [vmem:[#allocation2 + $0x9d8] sm:$0xff]
    %v500 = vld [vmem:[#allocation2 + $0x9e0] sm:$0xff]
    %v501 = vld [vmem:[#allocation2 + $0x9e8] sm:$0xff]
    %v502 = vld [vmem:[#allocation2 + $0x9f0] sm:$0xff]
    %v503 = vld [vmem:[#allocation2 + $0x9f8] sm:$0xff]
    %v504 = vld [vmem:[#allocation2 + $0xa00] sm:$0xff]
    %v505 = vld [vmem:[#allocation2 + $0xa08] sm:$0xff]
    %v506 = vld [vmem:[#allocation2 + $0xa10] sm:$0xff]
    %v507 = vld [vmem:[#allocation2 + $0xa18] sm:$0xff]
    %v508 = vld [vmem:[#allocation2 + $0xa20] sm:$0xff]
    %v509 = vld [vmem:[#allocation2 + $0xa28] sm:$0xff]
    %v510 = vld [vmem:[#allocation2 + $0xa30] sm:$0xff]
    %v511 = vld [vmem:[#allocation2 + $0xa38] sm:$0xff]
    %v512 = vld [vmem:[#allocation2 + $0xa40] sm:$0xff]
    %v513 = vld [vmem:[#allocation2 + $0xa48] sm:$0xff]
    %v514 = vld [vmem:[#allocation2 + $0xa50] sm:$0xff]
    %v515 = vld [vmem:[#allocation2 + $0xa58] sm:$0xff]
    %v516 = vld [vmem:[#allocation2 + $0xa60] sm:$0xff]
    %v517 = vld [vmem:[#allocation2 + $0xa68] sm:$0xff]
    %v518 = vld [vmem:[#allocation2 + $0xa70] sm:$0xff]
    %v519 = vld [vmem:[#allocation2 + $0xa78] sm:$0xff]
    %v520 = vld [vmem:[#allocation2 + $0xa80] sm:$0xff]
    %v521 = vld [vmem:[#allocation2 + $0xa88] sm:$0xff]
    %v522 = vld [vmem:[#allocation2 + $0xa90] sm:$0xff]
    %v523 = vld [vmem:[#allocation2 + $0xa98] sm:$0xff]
    %v524 = vld [vmem:[#allocation2 + $0xaa0] sm:$0xff]
    %v525 = vld [vmem:[#allocation2 + $0xaa8] sm:$0xff]
    %v526 = vld [vmem:[#allocation2 + $0xab0] sm:$0xff]
    %v527 = vld [vmem:[#allocation2 + $0xab8] sm:$0xff]
    %v528 = vld [vmem:[#allocation2 + $0xac0] sm:$0xff]
    %v529 = vld [vmem:[#allocation2 + $0xac8] sm:$0xff]
    %v530 = vld [vmem:[#allocation2 + $0xad0] sm:$0xff]
    %v531 = vld [vmem:[#allocation2 + $0xad8] sm:$0xff]
    %v532 = vld [vmem:[#allocation2 + $0xae0] sm:$0xff]
    %v533 = vld [vmem:[#allocation2 + $0xae8] sm:$0xff]
    %v534 = vld [vmem:[#allocation2 + $0xaf0] sm:$0xff]
    %v535 = vld [vmem:[#allocation2 + $0xaf8] sm:$0xff]
    %v536 = vld [vmem:[#allocation2 + $0xb00] sm:$0xff]
    %v537 = vld [vmem:[#allocation2 + $0xb08] sm:$0xff]
    %v538 = vld [vmem:[#allocation2 + $0xb10] sm:$0xff]
    %v539 = vld [vmem:[#allocation2 + $0xb18] sm:$0xff]
    %v540 = vld [vmem:[#allocation2 + $0xb20] sm:$0xff]
    %v541 = vld [vmem:[#allocation2 + $0xb28] sm:$0xff]
    %v542 = vld [vmem:[#allocation2 + $0xb30] sm:$0xff]
    %v543 = vld [vmem:[#allocation2 + $0xb38] sm:$0xff]
    %v544 = vld [vmem:[#allocation2 + $0xb40] sm:$0xff]
    %v545 = vld [vmem:[#allocation2 + $0xb48] sm:$0xff]
    %v546 = vld [vmem:[#allocation2 + $0xb50] sm:$0xff]
    %v547 = vld [vmem:[#allocation2 + $0xb58] sm:$0xff]
    %v548 = vld [vmem:[#allocation2 + $0xb60] sm:$0xff]
    %v549 = vld [vmem:[#allocation2 + $0xb68] sm:$0xff]
    %v550 = vld [vmem:[#allocation2 + $0xb70] sm:$0xff]
    %v551 = vld [vmem:[#allocation2 + $0xb78] sm:$0xff]
    %v552 = vld [vmem:[#allocation2 + $0xb80] sm:$0xff]
    %v553 = vld [vmem:[#allocation2 + $0xb88] sm:$0xff]
    %v554 = vld [vmem:[#allocation2 + $0xb90] sm:$0xff]
    %v555 = vld [vmem:[#allocation2 + $0xb98] sm:$0xff]
    %v556 = vld [vmem:[#allocation2 + $0xba0] sm:$0xff]
    %v557 = vld [vmem:[#allocation2 + $0xba8] sm:$0xff]
    %v558 = vld [vmem:[#allocation2 + $0xbb0] sm:$0xff]
    %v559 = vld [vmem:[#allocation2 + $0xbb8] sm:$0xff]
    %v560 = vld [vmem:[#allocation2 + $0xbc0] sm:$0xff]
    %v561 = vld [vmem:[#allocation2 + $0xbc8] sm:$0xff]
    %v562 = vld [vmem:[#allocation2 + $0xbd0] sm:$0xff]
    %v563 = vld [vmem:[#allocation2 + $0xbd8] sm:$0xff]
    %v564 = vld [vmem:[#allocation2 + $0xbe0] sm:$0xff]
    %v565 = vld [vmem:[#allocation2 + $0xbe8] sm:$0xff]
    %v566 = vld [vmem:[#allocation2 + $0xbf0] sm:$0xff]
    %v567 = vld [vmem:[#allocation2 + $0xbf8] sm:$0xff]
    %v568 = vld [vmem:[#allocation2 + $0xc00] sm:$0xff]
    %v569 = vld [vmem:[#allocation2 + $0xc08] sm:$0xff]
    %v570 = vld [vmem:[#allocation2 + $0xc10] sm:$0xff]
    %v571 = vld [vmem:[#allocation2 + $0xc18] sm:$0xff]
    %v572 = vld [vmem:[#allocation2 + $0xc20] sm:$0xff]
    %v573 = vld [vmem:[#allocation2 + $0xc28] sm:$0xff]
    %v574 = vld [vmem:[#allocation2 + $0xc30] sm:$0xff]
    %v575 = vld [vmem:[#allocation2 + $0xc38] sm:$0xff]
    %v576 = vld [vmem:[#allocation2 + $0xc40] sm:$0xff]
    %v577 = vld [vmem:[#allocation2 + $0xc48] sm:$0xff]
    %v578 = vld [vmem:[#allocation2 + $0xc50] sm:$0xff]
    %v579 = vld [vmem:[#allocation2 + $0xc58] sm:$0xff]
    %v580 = vld [vmem:[#allocation2 + $0xc60] sm:$0xff]
    %v581 = vld [vmem:[#allocation2 + $0xc68] sm:$0xff]
    %v582 = vld [vmem:[#allocation2 + $0xc70] sm:$0xff]
    %v583 = vld [vmem:[#allocation2 + $0xc78] sm:$0xff]
    %v584 = vld [vmem:[#allocation2 + $0xc80] sm:$0xff]
    %v585 = vld [vmem:[#allocation2 + $0xc88] sm:$0xff]
    %v586 = vld [vmem:[#allocation2 + $0xc90] sm:$0xff]
    %v587 = vld [vmem:[#allocation2 + $0xc98] sm:$0xff]
    %v588 = vld [vmem:[#allocation2 + $0xca0] sm:$0xff]
    %v589 = vld [vmem:[#allocation2 + $0xca8] sm:$0xff]
    %v590 = vld [vmem:[#allocation2 + $0xcb0] sm:$0xff]
    %v591 = vld [vmem:[#allocation2 + $0xcb8] sm:$0xff]
    %v592 = vld [vmem:[#allocation2 + $0xcc0] sm:$0xff]
    %v593 = vld [vmem:[#allocation2 + $0xcc8] sm:$0xff]
    %v594 = vld [vmem:[#allocation2 + $0xcd0] sm:$0xff]
    %v595 = vld [vmem:[#allocation2 + $0xcd8] sm:$0xff]
    %v596 = vld [vmem:[#allocation2 + $0xce0] sm:$0xff]
    %v597 = vld [vmem:[#allocation2 + $0xce8] sm:$0xff]
    %v598 = vld [vmem:[#allocation2 + $0xcf0] sm:$0xff]
    %v599 = vld [vmem:[#allocation2 + $0xcf8] sm:$0xff]
    %v600 = vld [vmem:[#allocation2 + $0xd00] sm:$0xff]
    %v601 = vld [vmem:[#allocation2 + $0xd08] sm:$0xff]
    %v602 = vld [vmem:[#allocation2 + $0xd10] sm:$0xff]
    %v603 = vld [vmem:[#allocation2 + $0xd18] sm:$0xff]
    %v604 = vld [vmem:[#allocation2 + $0xd20] sm:$0xff]
    %v605 = vld [vmem:[#allocation2 + $0xd28] sm:$0xff]
    %v606 = vld [vmem:[#allocation2 + $0xd30] sm:$0xff]
    %v607 = vld [vmem:[#allocation2 + $0xd38] sm:$0xff]
    %v608 = vld [vmem:[#allocation2 + $0xd40] sm:$0xff]
    %v609 = vld [vmem:[#allocation2 + $0xd48] sm:$0xff]
    %v610 = vld [vmem:[#allocation2 + $0xd50] sm:$0xff]
    %v611 = vld [vmem:[#allocation2 + $0xd58] sm:$0xff]
    %v612 = vld [vmem:[#allocation2 + $0xd60] sm:$0xff]
    %v613 = vld [vmem:[#allocation2 + $0xd68] sm:$0xff]
    %v614 = vld [vmem:[#allocation2 + $0xd70] sm:$0xff]
    %v615 = vld [vmem:[#allocation2 + $0xd78] sm:$0xff]
    %v616 = vld [vmem:[#allocation2 + $0xd80] sm:$0xff]
    %v617 = vld [vmem:[#allocation2 + $0xd88] sm:$0xff]
    %v618 = vld [vmem:[#allocation2 + $0xd90] sm:$0xff]
    %v619 = vld [vmem:[#allocation2 + $0xd98] sm:$0xff]
    %v620 = vld [vmem:[#allocation2 + $0xda0] sm:$0xff]
    %v621 = vld [vmem:[#allocation2 + $0xda8] sm:$0xff]
    %v622 = vld [vmem:[#allocation2 + $0xdb0] sm:$0xff]
    %v623 = vld [vmem:[#allocation2 + $0xdb8] sm:$0xff]
    %v624 = vld [vmem:[#allocation2 + $0xdc0] sm:$0xff]
    %v625 = vld [vmem:[#allocation2 + $0xdc8] sm:$0xff]
    %v626 = vld [vmem:[#allocation2 + $0xdd0] sm:$0xff]
    %v627 = vld [vmem:[#allocation2 + $0xdd8] sm:$0xff]
    %v628 = vld [vmem:[#allocation2 + $0xde0] sm:$0xff]
    %v629 = vld [vmem:[#allocation2 + $0xde8] sm:$0xff]
    %v630 = vld [vmem:[#allocation2 + $0xdf0] sm:$0xff]
    %v631 = vld [vmem:[#allocation2 + $0xdf8] sm:$0xff]
    %v632 = vld [vmem:[#allocation2 + $0xe00] sm:$0xff]
    %v633 = vld [vmem:[#allocation2 + $0xe08] sm:$0xff]
    %v634 = vld [vmem:[#allocation2 + $0xe10] sm:$0xff]
    %v635 = vld [vmem:[#allocation2 + $0xe18] sm:$0xff]
    %v636 = vld [vmem:[#allocation2 + $0xe20] sm:$0xff]
    %v637 = vld [vmem:[#allocation2 + $0xe28] sm:$0xff]
    %v638 = vld [vmem:[#allocation2 + $0xe30] sm:$0xff]
    %v639 = vld [vmem:[#allocation2 + $0xe38] sm:$0xff]
    %v640 = vld [vmem:[#allocation2 + $0xe40] sm:$0xff]
    %v641 = vld [vmem:[#allocation2 + $0xe48] sm:$0xff]
    %v642 = vld [vmem:[#allocation2 + $0xe50] sm:$0xff]
    %v643 = vld [vmem:[#allocation2 + $0xe58] sm:$0xff]
    %v644 = vld [vmem:[#allocation2 + $0xe60] sm:$0xff]
    %v645 = vld [vmem:[#allocation2 + $0xe68] sm:$0xff]
    %v646 = vld [vmem:[#allocation2 + $0xe70] sm:$0xff]
    %v647 = vld [vmem:[#allocation2 + $0xe78] sm:$0xff]
    %v648 = vld [vmem:[#allocation2 + $0xe80] sm:$0xff]
    %v649 = vld [vmem:[#allocation2 + $0xe88] sm:$0xff]
    %v650 = vld [vmem:[#allocation2 + $0xe90] sm:$0xff]
    %v651 = vld [vmem:[#allocation2 + $0xe98] sm:$0xff]
    %v652 = vld [vmem:[#allocation2 + $0xea0] sm:$0xff]
    %v653 = vld [vmem:[#allocation2 + $0xea8] sm:$0xff]
    %v654 = vld [vmem:[#allocation2 + $0xeb0] sm:$0xff]
    %v655 = vld [vmem:[#allocation2 + $0xeb8] sm:$0xff]
    %v656 = vld [vmem:[#allocation2 + $0xec0] sm:$0xff]
    %v657 = vld [vmem:[#allocation2 + $0xec8] sm:$0xff]
    %v658 = vld [vmem:[#allocation2 + $0xed0] sm:$0xff]
    %v659 = vld [vmem:[#allocation2 + $0xed8] sm:$0xff]
    %v660 = vld [vmem:[#allocation2 + $0xee0] sm:$0xff]
    %v661 = vld [vmem:[#allocation2 + $0xee8] sm:$0xff]
    %v662 = vld [vmem:[#allocation2 + $0xef0] sm:$0xff]
    %v663 = vld [vmem:[#allocation2 + $0xef8] sm:$0xff]
    %v664 = vld [vmem:[#allocation2 + $0xf00] sm:$0xff]
    %v665 = vld [vmem:[#allocation2 + $0xf08] sm:$0xff]
    %v666 = vld [vmem:[#allocation2 + $0xf10] sm:$0xff]
    %v667 = vld [vmem:[#allocation2 + $0xf18] sm:$0xff]
    %v668 = vld [vmem:[#allocation2 + $0xf20] sm:$0xff]
    %v669 = vld [vmem:[#allocation2 + $0xf28] sm:$0xff]
    %v670 = vld [vmem:[#allocation2 + $0xf30] sm:$0xff]
    %v671 = vld [vmem:[#allocation2 + $0xf38] sm:$0xff]
    %v672 = vld [vmem:[#allocation2 + $0xf40] sm:$0xff]
    %v673 = vld [vmem:[#allocation2 + $0xf48] sm:$0xff]
    %v674 = vld [vmem:[#allocation2 + $0xf50] sm:$0xff]
    %v675 = vld [vmem:[#allocation2 + $0xf58] sm:$0xff]
    %v676 = vld [vmem:[#allocation2 + $0xf60] sm:$0xff]
    %v677 = vld [vmem:[#allocation2 + $0xf68] sm:$0xff]
    %v678 = vld [vmem:[#allocation2 + $0xf70] sm:$0xff]
    %v679 = vld [vmem:[#allocation2 + $0xf78] sm:$0xff]
    %v680 = vld [vmem:[#allocation2 + $0xf80] sm:$0xff]
    %v681 = vld [vmem:[#allocation2 + $0xf88] sm:$0xff]
    %v682 = vld [vmem:[#allocation2 + $0xf90] sm:$0xff]
    %v683 = vld [vmem:[#allocation2 + $0xf98] sm:$0xff]
    %v684 = vld [vmem:[#allocation2 + $0xfa0] sm:$0xff]
    %v685 = vld [vmem:[#allocation2 + $0xfa8] sm:$0xff]
    %v686 = vld [vmem:[#allocation2 + $0xfb0] sm:$0xff]
    %v687 = vld [vmem:[#allocation2 + $0xfb8] sm:$0xff]
    %v688 = vld [vmem:[#allocation2 + $0xfc0] sm:$0xff]
    %v689 = vld [vmem:[#allocation2 + $0xfc8] sm:$0xff]
    %v690 = vld [vmem:[#allocation2 + $0xfd0] sm:$0xff]
    %v691 = vld [vmem:[#allocation2 + $0xfd8] sm:$0xff]
    %v692 = vld [vmem:[#allocation2 + $0xfe0] sm:$0xff]
    %v693 = vld [vmem:[#allocation2 + $0xfe8] sm:$0xff]
    %v694 = vld [vmem:[#allocation2 + $0xff0] sm:$0xff]
    %v695 = vld [vmem:[#allocation2 + $0xff8] sm:$0xff]
    %v696 = vld [vmem:[#allocation2 + $0x1000] sm:$0xff]
    %v697 = vld [vmem:[#allocation2 + $0x1008] sm:$0xff]
    %v698 = vld [vmem:[#allocation2 + $0x1010] sm:$0xff]
    %v699 = vld [vmem:[#allocation2 + $0x1018] sm:$0xff]
    %v700 = vld [vmem:[#allocation2 + $0x1020] sm:$0xff]
    %v701 = vld [vmem:[#allocation2 + $0x1028] sm:$0xff]
    %v702 = vld [vmem:[#allocation2 + $0x1030] sm:$0xff]
    %v703 = vld [vmem:[#allocation2 + $0x1038] sm:$0xff]
    %v704 = vld [vmem:[#allocation2 + $0x1040] sm:$0xff]
    %v705 = vld [vmem:[#allocation2 + $0x1048] sm:$0xff]
    %v706 = vld [vmem:[#allocation2 + $0x1050] sm:$0xff]
    %v707 = vld [vmem:[#allocation2 + $0x1058] sm:$0xff]
    %v708 = vld [vmem:[#allocation2 + $0x1060] sm:$0xff]
    %v709 = vld [vmem:[#allocation2 + $0x1068] sm:$0xff]
    %v710 = vld [vmem:[#allocation2 + $0x1070] sm:$0xff]
    %v711 = vld [vmem:[#allocation2 + $0x1078] sm:$0xff]
    %v712 = vld [vmem:[#allocation2 + $0x1080] sm:$0xff]
    %v713 = vld [vmem:[#allocation2 + $0x1088] sm:$0xff]
    %v714 = vld [vmem:[#allocation2 + $0x1090] sm:$0xff]
    %v715 = vld [vmem:[#allocation2 + $0x1098] sm:$0xff]
    %v716 = vld [vmem:[#allocation2 + $0x10a0] sm:$0xff]
    %v717 = vld [vmem:[#allocation2 + $0x10a8] sm:$0xff]
    %v718 = vld [vmem:[#allocation2 + $0x10b0] sm:$0xff]
    %v719 = vld [vmem:[#allocation2 + $0x10b8] sm:$0xff]
    %v720 = vld [vmem:[#allocation2 + $0x10c0] sm:$0xff]
    %v721 = vld [vmem:[#allocation2 + $0x10c8] sm:$0xff]
    %v722 = vld [vmem:[#allocation2 + $0x10d0] sm:$0xff]
    %v723 = vld [vmem:[#allocation2 + $0x10d8] sm:$0xff]
    %v724 = vld [vmem:[#allocation2 + $0x10e0] sm:$0xff]
    %v725 = vld [vmem:[#allocation2 + $0x10e8] sm:$0xff]
    %v726 = vld [vmem:[#allocation2 + $0x10f0] sm:$0xff]
    %v727 = vld [vmem:[#allocation2 + $0x10f8] sm:$0xff]
    %v728 = vld [vmem:[#allocation2 + $0x1100] sm:$0xff]
    %v729 = vld [vmem:[#allocation2 + $0x1108] sm:$0xff]
    %v730 = vld [vmem:[#allocation2 + $0x1110] sm:$0xff]
    %v731 = vld [vmem:[#allocation2 + $0x1118] sm:$0xff]
    %v732 = vld [vmem:[#allocation2 + $0x1120] sm:$0xff]
    %v733 = vld [vmem:[#allocation2 + $0x1128] sm:$0xff]
    %v734 = vld [vmem:[#allocation2 + $0x1130] sm:$0xff]
    %v735 = vld [vmem:[#allocation2 + $0x1138] sm:$0xff]
    %v736 = vld [vmem:[#allocation2 + $0x1140] sm:$0xff]
    %v737 = vld [vmem:[#allocation2 + $0x1148] sm:$0xff]
    %v738 = vld [vmem:[#allocation2 + $0x1150] sm:$0xff]
    %v739 = vld [vmem:[#allocation2 + $0x1158] sm:$0xff]
    %v740 = vld [vmem:[#allocation2 + $0x1160] sm:$0xff]
    %v741 = vld [vmem:[#allocation2 + $0x1168] sm:$0xff]
    %v742 = vld [vmem:[#allocation2 + $0x1170] sm:$0xff]
    %v743 = vld [vmem:[#allocation2 + $0x1178] sm:$0xff]
    %v744 = vld [vmem:[#allocation2 + $0x1180] sm:$0xff]
    %v745 = vld [vmem:[#allocation2 + $0x1188] sm:$0xff]
    %v746 = vld [vmem:[#allocation2 + $0x1190] sm:$0xff]
    %v747 = vld [vmem:[#allocation2 + $0x1198] sm:$0xff]
    %v748 = vld [vmem:[#allocation2 + $0x11a0] sm:$0xff]
    %v749 = vld [vmem:[#allocation2 + $0x11a8] sm:$0xff]
    %v750 = vld [vmem:[#allocation2 + $0x11b0] sm:$0xff]
    %v751 = vld [vmem:[#allocation2 + $0x11b8] sm:$0xff]
    %v752 = vld [vmem:[#allocation2 + $0x11c0] sm:$0xff]
    %v753 = vld [vmem:[#allocation2 + $0x11c8] sm:$0xff]
    %v754 = vld [vmem:[#allocation2 + $0x11d0] sm:$0xff]
    %v755 = vld [vmem:[#allocation2 + $0x11d8] sm:$0xff]
    %v756 = vld [vmem:[#allocation2 + $0x11e0] sm:$0xff]
    %v757 = vld [vmem:[#allocation2 + $0x11e8] sm:$0xff]
    %v758 = vld [vmem:[#allocation2 + $0x11f0] sm:$0xff]
    %v759 = vld [vmem:[#allocation2 + $0x11f8] sm:$0xff]
    %v760 = vld [vmem:[#allocation2 + $0x1200] sm:$0xff]
    %v761 = vld [vmem:[#allocation2 + $0x1208] sm:$0xff]
    %v762 = vld [vmem:[#allocation2 + $0x1210] sm:$0xff]
    %v763 = vld [vmem:[#allocation2 + $0x1218] sm:$0xff]
    %v764 = vld [vmem:[#allocation2 + $0x1220] sm:$0xff]
    %v765 = vld [vmem:[#allocation2 + $0x1228] sm:$0xff]
    %v766 = vld [vmem:[#allocation2 + $0x1230] sm:$0xff]
    %v767 = vld [vmem:[#allocation2 + $0x1238] sm:$0xff]
    %v768 = vld [vmem:[#allocation2 + $0x1240] sm:$0xff]
    %v769 = vld [vmem:[#allocation2 + $0x1248] sm:$0xff]
    %v770 = vld [vmem:[#allocation2 + $0x1250] sm:$0xff]
    %v771 = vld [vmem:[#allocation2 + $0x1258] sm:$0xff]
    %v772 = vld [vmem:[#allocation2 + $0x1260] sm:$0xff]
    %v773 = vld [vmem:[#allocation2 + $0x1268] sm:$0xff]
    %v774 = vld [vmem:[#allocation2 + $0x1270] sm:$0xff]
    %v775 = vld [vmem:[#allocation2 + $0x1278] sm:$0xff]
    %v776 = vld [vmem:[#allocation2 + $0x1280] sm:$0xff]
    %v777 = vld [vmem:[#allocation2 + $0x1288] sm:$0xff]
    %v778 = vld [vmem:[#allocation2 + $0x1290] sm:$0xff]
    %v779 = vld [vmem:[#allocation2 + $0x1298] sm:$0xff]
    %v780 = vld [vmem:[#allocation2 + $0x12a0] sm:$0xff]
    %v781 = vld [vmem:[#allocation2 + $0x12a8] sm:$0xff]
    %v782 = vld [vmem:[#allocation2 + $0x12b0] sm:$0xff]
    %v783 = vld [vmem:[#allocation2 + $0x12b8] sm:$0xff]
    %v784 = vld [vmem:[#allocation2 + $0x12c0] sm:$0xff]
    %v785 = vld [vmem:[#allocation2 + $0x12c8] sm:$0xff]
    %v786 = vld [vmem:[#allocation2 + $0x12d0] sm:$0xff]
    %v787 = vld [vmem:[#allocation2 + $0x12d8] sm:$0xff]
    %v788 = vld [vmem:[#allocation2 + $0x12e0] sm:$0xff]
    %v789 = vld [vmem:[#allocation2 + $0x12e8] sm:$0xff]
    %v790 = vld [vmem:[#allocation2 + $0x12f0] sm:$0xff]
    %v791 = vld [vmem:[#allocation2 + $0x12f8] sm:$0xff]
    %v792 = vld [vmem:[#allocation2 + $0x1300] sm:$0xff]
    %v793 = vld [vmem:[#allocation2 + $0x1308] sm:$0xff]
    %v794 = vld [vmem:[#allocation2 + $0x1310] sm:$0xff]
    %v795 = vld [vmem:[#allocation2 + $0x1318] sm:$0xff]
    %v796 = vld [vmem:[#allocation2 + $0x1320] sm:$0xff]
    %v797 = vld [vmem:[#allocation2 + $0x1328] sm:$0xff]
    %v798 = vld [vmem:[#allocation2 + $0x1330] sm:$0xff]
    %v799 = vld [vmem:[#allocation2 + $0x1338] sm:$0xff]
    %v800 = vld [vmem:[#allocation2 + $0x1340] sm:$0xff]
    %v801 = vld [vmem:[#allocation2 + $0x1348] sm:$0xff]
    %v802 = vld [vmem:[#allocation2 + $0x1350] sm:$0xff]
    %v803 = vld [vmem:[#allocation2 + $0x1358] sm:$0xff]
    %v804 = vld [vmem:[#allocation2 + $0x1360] sm:$0xff]
    %v805 = vld [vmem:[#allocation2 + $0x1368] sm:$0xff]
    %v806 = vld [vmem:[#allocation2 + $0x1370] sm:$0xff]
    %v807 = vld [vmem:[#allocation2 + $0x1378] sm:$0xff]
    %v808 = vld [vmem:[#allocation2 + $0x1380] sm:$0xff]
    %v809 = vld [vmem:[#allocation2 + $0x1388] sm:$0xff]
    %v810 = vld [vmem:[#allocation2 + $0x1390] sm:$0xff]
    %v811 = vld [vmem:[#allocation2 + $0x1398] sm:$0xff]
    %v812 = vld [vmem:[#allocation2 + $0x13a0] sm:$0xff]
    %v813 = vld [vmem:[#allocation2 + $0x13a8] sm:$0xff]
    %v814 = vld [vmem:[#allocation2 + $0x13b0] sm:$0xff]
    %v815 = vld [vmem:[#allocation2 + $0x13b8] sm:$0xff]
    %v816 = vld [vmem:[#allocation2 + $0x13c0] sm:$0xff]
    %v817 = vld [vmem:[#allocation2 + $0x13c8] sm:$0xff]
    %v818 = vld [vmem:[#allocation2 + $0x13d0] sm:$0xff]
    %v819 = vld [vmem:[#allocation2 + $0x13d8] sm:$0xff]
    %v820 = vld [vmem:[#allocation2 + $0x13e0] sm:$0xff]
    %v821 = vld [vmem:[#allocation2 + $0x13e8] sm:$0xff]
    %v822 = vld [vmem:[#allocation2 + $0x13f0] sm:$0xff]
    %v823 = vld [vmem:[#allocation2 + $0x13f8] sm:$0xff]
    %v824 = vld [vmem:[#allocation2 + $0x1400] sm:$0xff]
    %v825 = vld [vmem:[#allocation2 + $0x1408] sm:$0xff]
    %v826 = vld [vmem:[#allocation2 + $0x1410] sm:$0xff]
    %v827 = vld [vmem:[#allocation2 + $0x1418] sm:$0xff]
    %v828 = vld [vmem:[#allocation2 + $0x1420] sm:$0xff]
    %v829 = vld [vmem:[#allocation2 + $0x1428] sm:$0xff]
    %v830 = vld [vmem:[#allocation2 + $0x1430] sm:$0xff]
    %v831 = vld [vmem:[#allocation2 + $0x1438] sm:$0xff]
    %v832 = vld [vmem:[#allocation2 + $0x1440] sm:$0xff]
    %v833 = vld [vmem:[#allocation2 + $0x1448] sm:$0xff]
    %v834 = vld [vmem:[#allocation2 + $0x1450] sm:$0xff]
    %v835 = vld [vmem:[#allocation2 + $0x1458] sm:$0xff]
    %v836 = vld [vmem:[#allocation2 + $0x1460] sm:$0xff]
    %v837 = vld [vmem:[#allocation2 + $0x1468] sm:$0xff]
    %v838 = vld [vmem:[#allocation2 + $0x1470] sm:$0xff]
    %v839 = vld [vmem:[#allocation2 + $0x1478] sm:$0xff]
    %v840 = vld [vmem:[#allocation2 + $0x1480] sm:$0xff]
    %v841 = vld [vmem:[#allocation2 + $0x1488] sm:$0xff]
    %v842 = vld [vmem:[#allocation2 + $0x1490] sm:$0xff]
    %v843 = vld [vmem:[#allocation2 + $0x1498] sm:$0xff]
    %v844 = vld [vmem:[#allocation2 + $0x14a0] sm:$0xff]
    %v845 = vld [vmem:[#allocation2 + $0x14a8] sm:$0xff]
    %v846 = vld [vmem:[#allocation2 + $0x14b0] sm:$0xff]
    %v847 = vld [vmem:[#allocation2 + $0x14b8] sm:$0xff]
    %v848 = vld [vmem:[#allocation2 + $0x14c0] sm:$0xff]
    %v849 = vld [vmem:[#allocation2 + $0x14c8] sm:$0xff]
    %v850 = vld [vmem:[#allocation2 + $0x14d0] sm:$0xff]
    %v851 = vld [vmem:[#allocation2 + $0x14d8] sm:$0xff]
    %v852 = vld [vmem:[#allocation2 + $0x14e0] sm:$0xff]
    %v853 = vld [vmem:[#allocation2 + $0x14e8] sm:$0xff]
    %v854 = vld [vmem:[#allocation2 + $0x14f0] sm:$0xff]
    %v855 = vld [vmem:[#allocation2 + $0x14f8] sm:$0xff]
    %v856 = vld [vmem:[#allocation2 + $0x1500] sm:$0xff]
    %v857 = vld [vmem:[#allocation2 + $0x1508] sm:$0xff]
    %v858 = vld [vmem:[#allocation2 + $0x1510] sm:$0xff]
    %v859 = vld [vmem:[#allocation2 + $0x1518] sm:$0xff]
    %v860 = vld [vmem:[#allocation2 + $0x1520] sm:$0xff]
    %v861 = vld [vmem:[#allocation2 + $0x1528] sm:$0xff]
    %v862 = vld [vmem:[#allocation2 + $0x1530] sm:$0xff]
    %v863 = vld [vmem:[#allocation2 + $0x1538] sm:$0xff]
    %v864 = vld [vmem:[#allocation2 + $0x1540] sm:$0xff]
    %v865 = vld [vmem:[#allocation2 + $0x1548] sm:$0xff]
    %v866 = vld [vmem:[#allocation2 + $0x1550] sm:$0xff]
    %v867 = vld [vmem:[#allocation2 + $0x1558] sm:$0xff]
    %v868 = vld [vmem:[#allocation2 + $0x1560] sm:$0xff]
    %v869 = vld [vmem:[#allocation2 + $0x1568] sm:$0xff]
    %v870 = vld [vmem:[#allocation2 + $0x1570] sm:$0xff]
    %v871 = vld [vmem:[#allocation2 + $0x1578] sm:$0xff]
    %v872 = vld [vmem:[#allocation2 + $0x1580] sm:$0xff]
    %v873 = vld [vmem:[#allocation2 + $0x1588] sm:$0xff]
    %v874 = vld [vmem:[#allocation2 + $0x1590] sm:$0xff]
    %v875 = vld [vmem:[#allocation2 + $0x1598] sm:$0xff]
    %v876 = vld [vmem:[#allocation2 + $0x15a0] sm:$0xff]
    %v877 = vld [vmem:[#allocation2 + $0x15a8] sm:$0xff]
    %v878 = vld [vmem:[#allocation2 + $0x15b0] sm:$0xff]
    %v879 = vld [vmem:[#allocation2 + $0x15b8] sm:$0xff]
    %v880 = vld [vmem:[#allocation2 + $0x15c0] sm:$0xff]
    %v881 = vld [vmem:[#allocation2 + $0x15c8] sm:$0xff]
    %v882 = vld [vmem:[#allocation2 + $0x15d0] sm:$0xff]
    %v883 = vld [vmem:[#allocation2 + $0x15d8] sm:$0xff]
    %v884 = vld [vmem:[#allocation2 + $0x15e0] sm:$0xff]
    %v885 = vld [vmem:[#allocation2 + $0x15e8] sm:$0xff]
    %v886 = vld [vmem:[#allocation2 + $0x15f0] sm:$0xff]
    %v887 = vld [vmem:[#allocation2 + $0x15f8] sm:$0xff]
    %v888 = vld [vmem:[#allocation2 + $0x1600] sm:$0xff]
    %v889 = vld [vmem:[#allocation2 + $0x1608] sm:$0xff]
    %v890 = vld [vmem:[#allocation2 + $0x1610] sm:$0xff]
    %v891 = vld [vmem:[#allocation2 + $0x1618] sm:$0xff]
    %v892 = vld [vmem:[#allocation2 + $0x1620] sm:$0xff]
    %v893 = vld [vmem:[#allocation2 + $0x1628] sm:$0xff]
    %v894 = vld [vmem:[#allocation2 + $0x1630] sm:$0xff]
    %v895 = vld [vmem:[#allocation2 + $0x1638] sm:$0xff]
    %v896 = vld [vmem:[#allocation2 + $0x1640] sm:$0xff]
    %v897 = vld [vmem:[#allocation2 + $0x1648] sm:$0xff]
    %v898 = vld [vmem:[#allocation2 + $0x1650] sm:$0xff]
    %v899 = vld [vmem:[#allocation2 + $0x1658] sm:$0xff]
    %v900 = vld [vmem:[#allocation2 + $0x1660] sm:$0xff]
    %v901 = vld [vmem:[#allocation2 + $0x1668] sm:$0xff]
    %v902 = vld [vmem:[#allocation2 + $0x1670] sm:$0xff]
    %v903 = vld [vmem:[#allocation2 + $0x1678] sm:$0xff]
    %v904 = vld [vmem:[#allocation2 + $0x1680] sm:$0xff]
    %v905 = vld [vmem:[#allocation2 + $0x1688] sm:$0xff]
    %v906 = vld [vmem:[#allocation2 + $0x1690] sm:$0xff]
    %v907 = vld [vmem:[#allocation2 + $0x1698] sm:$0xff]
    %v908 = vld [vmem:[#allocation2 + $0x16a0] sm:$0xff]
    %v909 = vld [vmem:[#allocation2 + $0x16a8] sm:$0xff]
    %v910 = vld [vmem:[#allocation2 + $0x16b0] sm:$0xff]
    %v911 = vld [vmem:[#allocation2 + $0x16b8] sm:$0xff]
    %v912 = vld [vmem:[#allocation2 + $0x16c0] sm:$0xff]
    %v913 = vld [vmem:[#allocation2 + $0x16c8] sm:$0xff]
    %v914 = vld [vmem:[#allocation2 + $0x16d0] sm:$0xff]
    %v915 = vld [vmem:[#allocation2 + $0x16d8] sm:$0xff]
    %v916 = vld [vmem:[#allocation2 + $0x16e0] sm:$0xff]
    %v917 = vld [vmem:[#allocation2 + $0x16e8] sm:$0xff]
    %v918 = vld [vmem:[#allocation2 + $0x16f0] sm:$0xff]
    %v919 = vld [vmem:[#allocation2 + $0x16f8] sm:$0xff]
    %v920 = vld [vmem:[#allocation2 + $0x1700] sm:$0xff]
    %v921 = vld [vmem:[#allocation2 + $0x1708] sm:$0xff]
    %v922 = vld [vmem:[#allocation2 + $0x1710] sm:$0xff]
    %v923 = vld [vmem:[#allocation2 + $0x1718] sm:$0xff]
    %v924 = vld [vmem:[#allocation2 + $0x1720] sm:$0xff]
    %v925 = vld [vmem:[#allocation2 + $0x1728] sm:$0xff]
    %v926 = vld [vmem:[#allocation2 + $0x1730] sm:$0xff]
    %v927 = vld [vmem:[#allocation2 + $0x1738] sm:$0xff]
    %v928 = vld [vmem:[#allocation2 + $0x1740] sm:$0xff]
    %v929 = vld [vmem:[#allocation2 + $0x1748] sm:$0xff]
    %v930 = vld [vmem:[#allocation2 + $0x1750] sm:$0xff]
    %v931 = vld [vmem:[#allocation2 + $0x1758] sm:$0xff]
    %v932 = vld [vmem:[#allocation2 + $0x1760] sm:$0xff]
    %v933 = vld [vmem:[#allocation2 + $0x1768] sm:$0xff]
    %v934 = vld [vmem:[#allocation2 + $0x1770] sm:$0xff]
    %v935 = vld [vmem:[#allocation2 + $0x1778] sm:$0xff]
    %v936 = vld [vmem:[#allocation2 + $0x1780] sm:$0xff]
    %v937 = vld [vmem:[#allocation2 + $0x1788] sm:$0xff]
    %v938 = vld [vmem:[#allocation2 + $0x1790] sm:$0xff]
    %v939 = vld [vmem:[#allocation2 + $0x1798] sm:$0xff]
    %v940 = vld [vmem:[#allocation2 + $0x17a0] sm:$0xff]
    %v941 = vld [vmem:[#allocation2 + $0x17a8] sm:$0xff]
    %v942 = vld [vmem:[#allocation2 + $0x17b0] sm:$0xff]
    %v943 = vld [vmem:[#allocation2 + $0x17b8] sm:$0xff]
    %v944 = vld [vmem:[#allocation2 + $0x17c0] sm:$0xff]
    %v945 = vld [vmem:[#allocation2 + $0x17c8] sm:$0xff]
    %v946 = vld [vmem:[#allocation2 + $0x17d0] sm:$0xff]
    %v947 = vld [vmem:[#allocation2 + $0x17d8] sm:$0xff]
    %v948 = vld [vmem:[#allocation2 + $0x17e0] sm:$0xff]
    %v949 = vld [vmem:[#allocation2 + $0x17e8] sm:$0xff]
    %v950 = vld [vmem:[#allocation2 + $0x17f0] sm:$0xff]
    %v951 = vld [vmem:[#allocation2 + $0x17f8] sm:$0xff]
    %v952 = vld [vmem:[#allocation2 + $0x1800] sm:$0xff]
    %v953 = vld [vmem:[#allocation2 + $0x1808] sm:$0xff]
    %v954 = vld [vmem:[#allocation2 + $0x1810] sm:$0xff]
    %v955 = vld [vmem:[#allocation2 + $0x1818] sm:$0xff]
    %v956 = vld [vmem:[#allocation2 + $0x1820] sm:$0xff]
    %v957 = vld [vmem:[#allocation2 + $0x1828] sm:$0xff]
    %v958 = vld [vmem:[#allocation2 + $0x1830] sm:$0xff]
    %v959 = vld [vmem:[#allocation2 + $0x1838] sm:$0xff]
    %v960 = vld [vmem:[#allocation2 + $0x1840] sm:$0xff]
    %v961 = vld [vmem:[#allocation2 + $0x1848] sm:$0xff]
    %v962 = vld [vmem:[#allocation2 + $0x1850] sm:$0xff]
    %v963 = vld [vmem:[#allocation2 + $0x1858] sm:$0xff]
    %v964 = vld [vmem:[#allocation2 + $0x1860] sm:$0xff]
    %v965 = vld [vmem:[#allocation2 + $0x1868] sm:$0xff]
    %v966 = vld [vmem:[#allocation2 + $0x1870] sm:$0xff]
    %v967 = vld [vmem:[#allocation2 + $0x1878] sm:$0xff]
    %v968 = vld [vmem:[#allocation2 + $0x1880] sm:$0xff]
    %v969 = vld [vmem:[#allocation2 + $0x1888] sm:$0xff]
    %v970 = vld [vmem:[#allocation2 + $0x1890] sm:$0xff]
    %v971 = vld [vmem:[#allocation2 + $0x1898] sm:$0xff]
    %v972 = vld [vmem:[#allocation2 + $0x18a0] sm:$0xff]
    %v973 = vld [vmem:[#allocation2 + $0x18a8] sm:$0xff]
    %v974 = vld [vmem:[#allocation2 + $0x18b0] sm:$0xff]
    %v975 = vld [vmem:[#allocation2 + $0x18b8] sm:$0xff]
    %v976 = vld [vmem:[#allocation2 + $0x18c0] sm:$0xff]
    %v977 = vld [vmem:[#allocation2 + $0x18c8] sm:$0xff]
    %v978 = vld [vmem:[#allocation2 + $0x18d0] sm:$0xff]
    %v979 = vld [vmem:[#allocation2 + $0x18d8] sm:$0xff]
    %v980 = vld [vmem:[#allocation2 + $0x18e0] sm:$0xff]
    %v981 = vld [vmem:[#allocation2 + $0x18e8] sm:$0xff]
    %v982 = vld [vmem:[#allocation2 + $0x18f0] sm:$0xff]
    %v983 = vld [vmem:[#allocation2 + $0x18f8] sm:$0xff]
    %v984 = vld [vmem:[#allocation2 + $0x1900] sm:$0xff]
    %v985 = vld [vmem:[#allocation2 + $0x1908] sm:$0xff]
    %v986 = vld [vmem:[#allocation2 + $0x1910] sm:$0xff]
    %v987 = vld [vmem:[#allocation2 + $0x1918] sm:$0xff]
    %v988 = vld [vmem:[#allocation2 + $0x1920] sm:$0xff]
    %v989 = vld [vmem:[#allocation2 + $0x1928] sm:$0xff]
    %v990 = vld [vmem:[#allocation2 + $0x1930] sm:$0xff]
    %v991 = vld [vmem:[#allocation2 + $0x1938] sm:$0xff]
    %v992 = vld [vmem:[#allocation2 + $0x1940] sm:$0xff]
    %v993 = vld [vmem:[#allocation2 + $0x1948] sm:$0xff]
    %v994 = vld [vmem:[#allocation2 + $0x1950] sm:$0xff]
    %v995 = vld [vmem:[#allocation2 + $0x1958] sm:$0xff]
    %v996 = vld [vmem:[#allocation2 + $0x1960] sm:$0xff]
    %v997 = vld [vmem:[#allocation2 + $0x1968] sm:$0xff]
    %v998 = vld [vmem:[#allocation2 + $0x1970] sm:$0xff]
    %v999 = vld [vmem:[#allocation2 + $0x1978] sm:$0xff]
    %v1000 = vld [vmem:[#allocation2 + $0x1980] sm:$0xff]
    %v1001 = vld [vmem:[#allocation2 + $0x1988] sm:$0xff]
    %v1002 = vld [vmem:[#allocation2 + $0x1990] sm:$0xff]
    %v1003 = vld [vmem:[#allocation2 + $0x1998] sm:$0xff]
    %v1004 = vld [vmem:[#allocation2 + $0x19a0] sm:$0xff]
    %v1005 = vld [vmem:[#allocation2 + $0x19a8] sm:$0xff]
    %v1006 = vld [vmem:[#allocation2 + $0x19b0] sm:$0xff]
    %v1007 = vld [vmem:[#allocation2 + $0x19b8] sm:$0xff]
    %v1008 = vld [vmem:[#allocation2 + $0x19c0] sm:$0xff]
    %v1009 = vld [vmem:[#allocation2 + $0x19c8] sm:$0xff]
    %v1010 = vld [vmem:[#allocation2 + $0x19d0] sm:$0xff]
    %v1011 = vld [vmem:[#allocation2 + $0x19d8] sm:$0xff]
    %v1012 = vld [vmem:[#allocation2 + $0x19e0] sm:$0xff]
    %v1013 = vld [vmem:[#allocation2 + $0x19e8] sm:$0xff]
    %v1014 = vld [vmem:[#allocation2 + $0x19f0] sm:$0xff]
    %v1015 = vld [vmem:[#allocation2 + $0x19f8] sm:$0xff]
    %v1016 = vld [vmem:[#allocation2 + $0x1a00] sm:$0xff]
    %v1017 = vld [vmem:[#allocation2 + $0x1a08] sm:$0xff]
    %v1018 = vld [vmem:[#allocation2 + $0x1a10] sm:$0xff]
    %v1019 = vld [vmem:[#allocation2 + $0x1a18] sm:$0xff]
    %v1020 = vld [vmem:[#allocation2 + $0x1a20] sm:$0xff]
    %v1021 = vld [vmem:[#allocation2 + $0x1a28] sm:$0xff]
    %v1022 = vld [vmem:[#allocation2 + $0x1a30] sm:$0xff]
    %v1023 = vld [vmem:[#allocation2 + $0x1a38] sm:$0xff]
    %v1024 = vld [vmem:[#allocation2 + $0x1a40] sm:$0xff]
    %v1025 = vld [vmem:[#allocation2 + $0x1a48] sm:$0xff]
    %v1026 = vld [vmem:[#allocation2 + $0x1a50] sm:$0xff]
    %v1027 = vld [vmem:[#allocation2 + $0x1a58] sm:$0xff]
    %v1028 = vld [vmem:[#allocation2 + $0x1a60] sm:$0xff]
    %v1029 = vld [vmem:[#allocation2 + $0x1a68] sm:$0xff]
    %v1030 = vld [vmem:[#allocation2 + $0x1a70] sm:$0xff]
    %v1031 = vld [vmem:[#allocation2 + $0x1a78] sm:$0xff]
    %v1032 = vld [vmem:[#allocation2 + $0x1a80] sm:$0xff]
    %v1033 = vld [vmem:[#allocation2 + $0x1a88] sm:$0xff]
    %v1034 = vld [vmem:[#allocation2 + $0x1a90] sm:$0xff]
    %v1035 = vld [vmem:[#allocation2 + $0x1a98] sm:$0xff]
    %v1036 = vld [vmem:[#allocation2 + $0x1aa0] sm:$0xff]
    %v1037 = vld [vmem:[#allocation2 + $0x1aa8] sm:$0xff]
    %v1038 = vld [vmem:[#allocation2 + $0x1ab0] sm:$0xff]
    %v1039 = vld [vmem:[#allocation2 + $0x1ab8] sm:$0xff]
    %v1040 = vld [vmem:[#allocation2 + $0x1ac0] sm:$0xff]
    %v1041 = vld [vmem:[#allocation2 + $0x1ac8] sm:$0xff]
    %v1042 = vld [vmem:[#allocation2 + $0x1ad0] sm:$0xff]
    %v1043 = vld [vmem:[#allocation2 + $0x1ad8] sm:$0xff]
    %v1044 = vld [vmem:[#allocation2 + $0x1ae0] sm:$0xff]
    %v1045 = vld [vmem:[#allocation2 + $0x1ae8] sm:$0xff]
    %v1046 = vld [vmem:[#allocation2 + $0x1af0] sm:$0xff]
    %v1047 = vld [vmem:[#allocation2 + $0x1af8] sm:$0xff]
    %v1048 = vld [vmem:[#allocation2 + $0x1b00] sm:$0xff]
    %v1049 = vld [vmem:[#allocation2 + $0x1b08] sm:$0xff]
    %v1050 = vld [vmem:[#allocation2 + $0x1b10] sm:$0xff]
    %v1051 = vld [vmem:[#allocation2 + $0x1b18] sm:$0xff]
    %v1052 = vld [vmem:[#allocation2 + $0x1b20] sm:$0xff]
    %v1053 = vld [vmem:[#allocation2 + $0x1b28] sm:$0xff]
    %v1054 = vld [vmem:[#allocation2 + $0x1b30] sm:$0xff]
    %v1055 = vld [vmem:[#allocation2 + $0x1b38] sm:$0xff]
    %v1056 = vld [vmem:[#allocation2 + $0x1b40] sm:$0xff]
    %v1057 = vld [vmem:[#allocation2 + $0x1b48] sm:$0xff]
    %v1058 = vld [vmem:[#allocation2 + $0x1b50] sm:$0xff]
    %v1059 = vld [vmem:[#allocation2 + $0x1b58] sm:$0xff]
    %v1060 = vld [vmem:[#allocation2 + $0x1b60] sm:$0xff]
    %v1061 = vld [vmem:[#allocation2 + $0x1b68] sm:$0xff]
    %v1062 = vld [vmem:[#allocation2 + $0x1b70] sm:$0xff]
    %v1063 = vld [vmem:[#allocation2 + $0x1b78] sm:$0xff]
    %v1064 = vld [vmem:[#allocation2 + $0x1b80] sm:$0xff]
    %v1065 = vld [vmem:[#allocation2 + $0x1b88] sm:$0xff]
    %v1066 = vld [vmem:[#allocation2 + $0x1b90] sm:$0xff]
    %v1067 = vld [vmem:[#allocation2 + $0x1b98] sm:$0xff]
    %v1068 = vld [vmem:[#allocation2 + $0x1ba0] sm:$0xff]
    %v1069 = vld [vmem:[#allocation2 + $0x1ba8] sm:$0xff]
    %v1070 = vld [vmem:[#allocation2 + $0x1bb0] sm:$0xff]
    %v1071 = vld [vmem:[#allocation2 + $0x1bb8] sm:$0xff]
    %v1072 = vld [vmem:[#allocation2 + $0x1bc0] sm:$0xff]
    %v1073 = vld [vmem:[#allocation2 + $0x1bc8] sm:$0xff]
    %v1074 = vld [vmem:[#allocation2 + $0x1bd0] sm:$0xff]
    %v1075 = vld [vmem:[#allocation2 + $0x1bd8] sm:$0xff]
    %v1076 = vld [vmem:[#allocation2 + $0x1be0] sm:$0xff]
    %v1077 = vld [vmem:[#allocation2 + $0x1be8] sm:$0xff]
    %v1078 = vld [vmem:[#allocation2 + $0x1bf0] sm:$0xff]
    %v1079 = vld [vmem:[#allocation2 + $0x1bf8] sm:$0xff]
    %v1080 = vld [vmem:[#allocation2 + $0x1c00] sm:$0xff]
    %v1081 = vld [vmem:[#allocation2 + $0x1c08] sm:$0xff]
    %v1082 = vld [vmem:[#allocation2 + $0x1c10] sm:$0xff]
    %v1083 = vld [vmem:[#allocation2 + $0x1c18] sm:$0xff]
    %v1084 = vld [vmem:[#allocation2 + $0x1c20] sm:$0xff]
    %v1085 = vld [vmem:[#allocation2 + $0x1c28] sm:$0xff]
    %v1086 = vld [vmem:[#allocation2 + $0x1c30] sm:$0xff]
    %v1087 = vld [vmem:[#allocation2 + $0x1c38] sm:$0xff]
    %v1088 = vld [vmem:[#allocation2 + $0x1c40] sm:$0xff]
    %v1089 = vld [vmem:[#allocation2 + $0x1c48] sm:$0xff]
    %v1090 = vld [vmem:[#allocation2 + $0x1c50] sm:$0xff]
    %v1091 = vld [vmem:[#allocation2 + $0x1c58] sm:$0xff]
    %v1092 = vld [vmem:[#allocation2 + $0x1c60] sm:$0xff]
    %v1093 = vld [vmem:[#allocation2 + $0x1c68] sm:$0xff]
    %v1094 = vld [vmem:[#allocation2 + $0x1c70] sm:$0xff]
    %v1095 = vld [vmem:[#allocation2 + $0x1c78] sm:$0xff]
    %v1096 = vld [vmem:[#allocation2 + $0x1c80] sm:$0xff]
    %v1097 = vld [vmem:[#allocation2 + $0x1c88] sm:$0xff]
    %v1098 = vld [vmem:[#allocation2 + $0x1c90] sm:$0xff]
    %v1099 = vld [vmem:[#allocation2 + $0x1c98] sm:$0xff]
    %v1100 = vld [vmem:[#allocation2 + $0x1ca0] sm:$0xff]
    %v1101 = vld [vmem:[#allocation2 + $0x1ca8] sm:$0xff]
    %v1102 = vld [vmem:[#allocation2 + $0x1cb0] sm:$0xff]
    %v1103 = vld [vmem:[#allocation2 + $0x1cb8] sm:$0xff]
    %v1104 = vld [vmem:[#allocation2 + $0x1cc0] sm:$0xff]
    %v1105 = vld [vmem:[#allocation2 + $0x1cc8] sm:$0xff]
    %v1106 = vld [vmem:[#allocation2 + $0x1cd0] sm:$0xff]
    %v1107 = vld [vmem:[#allocation2 + $0x1cd8] sm:$0xff]
    %v1108 = vld [vmem:[#allocation2 + $0x1ce0] sm:$0xff]
    %v1109 = vld [vmem:[#allocation2 + $0x1ce8] sm:$0xff]
    %v1110 = vld [vmem:[#allocation2 + $0x1cf0] sm:$0xff]
    %v1111 = vld [vmem:[#allocation2 + $0x1cf8] sm:$0xff]
    %v1112 = vld [vmem:[#allocation2 + $0x1d00] sm:$0xff]
    %v1113 = vld [vmem:[#allocation2 + $0x1d08] sm:$0xff]
    %v1114 = vld [vmem:[#allocation2 + $0x1d10] sm:$0xff]
    %v1115 = vld [vmem:[#allocation2 + $0x1d18] sm:$0xff]
    %v1116 = vld [vmem:[#allocation2 + $0x1d20] sm:$0xff]
    %v1117 = vld [vmem:[#allocation2 + $0x1d28] sm:$0xff]
    %v1118 = vld [vmem:[#allocation2 + $0x1d30] sm:$0xff]
    %v1119 = vld [vmem:[#allocation2 + $0x1d38] sm:$0xff]
    %v1120 = vld [vmem:[#allocation2 + $0x1d40] sm:$0xff]
    %v1121 = vld [vmem:[#allocation2 + $0x1d48] sm:$0xff]
    %v1122 = vld [vmem:[#allocation2 + $0x1d50] sm:$0xff]
    %v1123 = vld [vmem:[#allocation2 + $0x1d58] sm:$0xff]
    %v1124 = vld [vmem:[#allocation2 + $0x1d60] sm:$0xff]
    %v1125 = vld [vmem:[#allocation2 + $0x1d68] sm:$0xff]
    %v1126 = vld [vmem:[#allocation2 + $0x1d70] sm:$0xff]
    %v1127 = vld [vmem:[#allocation2 + $0x1d78] sm:$0xff]
    %v1128 = vld [vmem:[#allocation2 + $0x1d80] sm:$0xff]
    %v1129 = vld [vmem:[#allocation2 + $0x1d88] sm:$0xff]
    %v1130 = vld [vmem:[#allocation2 + $0x1d90] sm:$0xff]
    %v1131 = vld [vmem:[#allocation2 + $0x1d98] sm:$0xff]
    %v1132 = vld [vmem:[#allocation2 + $0x1da0] sm:$0xff]
    %v1133 = vld [vmem:[#allocation2 + $0x1da8] sm:$0xff]
    %v1134 = vld [vmem:[#allocation2 + $0x1db0] sm:$0xff]
    %v1135 = vld [vmem:[#allocation2 + $0x1db8] sm:$0xff]
    %v1136 = vld [vmem:[#allocation2 + $0x1dc0] sm:$0xff]
    %v1137 = vld [vmem:[#allocation2 + $0x1dc8] sm:$0xff]
    %v1138 = vld [vmem:[#allocation2 + $0x1dd0] sm:$0xff]
    %v1139 = vld [vmem:[#allocation2 + $0x1dd8] sm:$0xff]
    %v1140 = vld [vmem:[#allocation2 + $0x1de0] sm:$0xff]
    %v1141 = vld [vmem:[#allocation2 + $0x1de8] sm:$0xff]
    %v1142 = vld [vmem:[#allocation2 + $0x1df0] sm:$0xff]
    %v1143 = vld [vmem:[#allocation2 + $0x1df8] sm:$0xff]
    %v1144 = vld [vmem:[#allocation2 + $0x1e00] sm:$0xff]
    %v1145 = vld [vmem:[#allocation2 + $0x1e08] sm:$0xff]
    %v1146 = vld [vmem:[#allocation2 + $0x1e10] sm:$0xff]
    %v1147 = vld [vmem:[#allocation2 + $0x1e18] sm:$0xff]
    %v1148 = vld [vmem:[#allocation2 + $0x1e20] sm:$0xff]
    %v1149 = vld [vmem:[#allocation2 + $0x1e28] sm:$0xff]
    %v1150 = vld [vmem:[#allocation2 + $0x1e30] sm:$0xff]
    %v1151 = vld [vmem:[#allocation2 + $0x1e38] sm:$0xff]
    %v1152 = vld [vmem:[#allocation2 + $0x1e40] sm:$0xff]
    %v1153 = vld [vmem:[#allocation2 + $0x1e48] sm:$0xff]
    %v1154 = vld [vmem:[#allocation2 + $0x1e50] sm:$0xff]
    %v1155 = vld [vmem:[#allocation2 + $0x1e58] sm:$0xff]
    %v1156 = vld [vmem:[#allocation2 + $0x1e60] sm:$0xff]
    %v1157 = vld [vmem:[#allocation2 + $0x1e68] sm:$0xff]
    %v1158 = vld [vmem:[#allocation2 + $0x1e70] sm:$0xff]
    %v1159 = vld [vmem:[#allocation2 + $0x1e78] sm:$0xff]
    %v1160 = vld [vmem:[#allocation2 + $0x1e80] sm:$0xff]
    %v1161 = vld [vmem:[#allocation2 + $0x1e88] sm:$0xff]
    %v1162 = vld [vmem:[#allocation2 + $0x1e90] sm:$0xff]
    %v1163 = vld [vmem:[#allocation2 + $0x1e98] sm:$0xff]
    %v1164 = vld [vmem:[#allocation2 + $0x1ea0] sm:$0xff]
    %v1165 = vld [vmem:[#allocation2 + $0x1ea8] sm:$0xff]
    %v1166 = vld [vmem:[#allocation2 + $0x1eb0] sm:$0xff]
    %v1167 = vld [vmem:[#allocation2 + $0x1eb8] sm:$0xff]
    %v1168 = vld [vmem:[#allocation2 + $0x1ec0] sm:$0xff]
    %v1169 = vld [vmem:[#allocation2 + $0x1ec8] sm:$0xff]
    %v1170 = vld [vmem:[#allocation2 + $0x1ed0] sm:$0xff]
    %v1171 = vld [vmem:[#allocation2 + $0x1ed8] sm:$0xff]
    %v1172 = vld [vmem:[#allocation2 + $0x1ee0] sm:$0xff]
    %v1173 = vld [vmem:[#allocation2 + $0x1ee8] sm:$0xff]
    %v1174 = vld [vmem:[#allocation2 + $0x1ef0] sm:$0xff]
    %v1175 = vld [vmem:[#allocation2 + $0x1ef8] sm:$0xff]
    %v1176 = vld [vmem:[#allocation2 + $0x1f00] sm:$0xff]
    %v1177 = vld [vmem:[#allocation2 + $0x1f08] sm:$0xff]
    %v1178 = vld [vmem:[#allocation2 + $0x1f10] sm:$0xff]
    %v1179 = vld [vmem:[#allocation2 + $0x1f18] sm:$0xff]
    %v1180 = vld [vmem:[#allocation2 + $0x1f20] sm:$0xff]
    %v1181 = vld [vmem:[#allocation2 + $0x1f28] sm:$0xff]
    %v1182 = vld [vmem:[#allocation2 + $0x1f30] sm:$0xff]
    %v1183 = vld [vmem:[#allocation2 + $0x1f38] sm:$0xff]
    %v1184 = vld [vmem:[#allocation2 + $0x1f40] sm:$0xff]
    %v1185 = vld [vmem:[#allocation2 + $0x1f48] sm:$0xff]
    %v1186 = vld [vmem:[#allocation2 + $0x1f50] sm:$0xff]
    %v1187 = vld [vmem:[#allocation2 + $0x1f58] sm:$0xff]
    %v1188 = vld [vmem:[#allocation2 + $0x1f60] sm:$0xff]
    %v1189 = vld [vmem:[#allocation2 + $0x1f68] sm:$0xff]
    %v1190 = vld [vmem:[#allocation2 + $0x1f70] sm:$0xff]
    %v1191 = vld [vmem:[#allocation2 + $0x1f78] sm:$0xff]
    %v1192 = vld [vmem:[#allocation2 + $0x1f80] sm:$0xff]
    %v1193 = vld [vmem:[#allocation2 + $0x1f88] sm:$0xff]
    %v1194 = vld [vmem:[#allocation2 + $0x1f90] sm:$0xff]
    %v1195 = vld [vmem:[#allocation2 + $0x1f98] sm:$0xff]
    %v1196 = vld [vmem:[#allocation2 + $0x1fa0] sm:$0xff]
    %v1197 = vld [vmem:[#allocation2 + $0x1fa8] sm:$0xff]
    %v1198 = vld [vmem:[#allocation2 + $0x1fb0] sm:$0xff]
    %v1199 = vld [vmem:[#allocation2 + $0x1fb8] sm:$0xff]
    %v1200 = vld [vmem:[#allocation2 + $0x1fc0] sm:$0xff]
    %v1201 = vld [vmem:[#allocation2 + $0x1fc8] sm:$0xff]
    %v1202 = vld [vmem:[#allocation2 + $0x1fd0] sm:$0xff]
    %v1203 = vld [vmem:[#allocation2 + $0x1fd8] sm:$0xff]
    %v1204 = vld [vmem:[#allocation2 + $0x1fe0] sm:$0xff]
    %v1205 = vld [vmem:[#allocation2 + $0x1fe8] sm:$0xff]
    %v1206 = vld [vmem:[#allocation2 + $0x1ff0] sm:$0xff]
    %v1207 = vld [vmem:[#allocation2 + $0x1ff8] sm:$0xff]
    %v1208 = vld [vmem:[#allocation2 + $0x2000] sm:$0xff]
    %v1209 = vld [vmem:[#allocation2 + $0x2008] sm:$0xff]
    %v1210 = vld [vmem:[#allocation2 + $0x2010] sm:$0xff]
    %v1211 = vld [vmem:[#allocation2 + $0x2018] sm:$0xff]
    %v1212 = vld [vmem:[#allocation2 + $0x2020] sm:$0xff]
    %v1213 = vld [vmem:[#allocation2 + $0x2028] sm:$0xff]
    %v1214 = vld [vmem:[#allocation2 + $0x2030] sm:$0xff]
    %v1215 = vld [vmem:[#allocation2 + $0x2038] sm:$0xff]
    %v1216 = vld [vmem:[#allocation2 + $0x2040] sm:$0xff]
    %v1217 = vld [vmem:[#allocation2 + $0x2048] sm:$0xff]
    %v1218 = vld [vmem:[#allocation2 + $0x2050] sm:$0xff]
    %v1219 = vld [vmem:[#allocation2 + $0x2058] sm:$0xff]
    %v1220 = vld [vmem:[#allocation2 + $0x2060] sm:$0xff]
    %v1221 = vld [vmem:[#allocation2 + $0x2068] sm:$0xff]
    %v1222 = vld [vmem:[#allocation2 + $0x2070] sm:$0xff]
    %v1223 = vld [vmem:[#allocation2 + $0x2078] sm:$0xff]
    %v1224 = vld [vmem:[#allocation2 + $0x2080] sm:$0xff]
    %v1225 = vld [vmem:[#allocation2 + $0x2088] sm:$0xff]
    %v1226 = vld [vmem:[#allocation2 + $0x2090] sm:$0xff]
    %v1227 = vld [vmem:[#allocation2 + $0x2098] sm:$0xff]
    %v1228 = vld [vmem:[#allocation2 + $0x20a0] sm:$0xff]
    %v1229 = vld [vmem:[#allocation2 + $0x20a8] sm:$0xff]
    %v1230 = vld [vmem:[#allocation2 + $0x20b0] sm:$0xff]
    %v1231 = vld [vmem:[#allocation2 + $0x20b8] sm:$0xff]
    %v1232 = vld [vmem:[#allocation2 + $0x20c0] sm:$0xff]
    %v1233 = vld [vmem:[#allocation2 + $0x20c8] sm:$0xff]
    %v1234 = vld [vmem:[#allocation2 + $0x20d0] sm:$0xff]
    %v1235 = vld [vmem:[#allocation2 + $0x20d8] sm:$0xff]
    %v1236 = vld [vmem:[#allocation2 + $0x20e0] sm:$0xff]
    %v1237 = vld [vmem:[#allocation2 + $0x20e8] sm:$0xff]
    %v1238 = vld [vmem:[#allocation2 + $0x20f0] sm:$0xff]
    %v1239 = vld [vmem:[#allocation2 + $0x20f8] sm:$0xff]
    %v1240 = vld [vmem:[#allocation2 + $0x2100] sm:$0xff]
    %v1241 = vld [vmem:[#allocation2 + $0x2108] sm:$0xff]
    %v1242 = vld [vmem:[#allocation2 + $0x2110] sm:$0xff]
    %v1243 = vld [vmem:[#allocation2 + $0x2118] sm:$0xff]
    %v1244 = vld [vmem:[#allocation2 + $0x2120] sm:$0xff]
    %v1245 = vld [vmem:[#allocation2 + $0x2128] sm:$0xff]
    %v1246 = vld [vmem:[#allocation2 + $0x2130] sm:$0xff]
    %v1247 = vld [vmem:[#allocation2 + $0x2138] sm:$0xff]
    %v1248 = vld [vmem:[#allocation2 + $0x2140] sm:$0xff]
    %v1249 = vld [vmem:[#allocation2 + $0x2148] sm:$0xff]
    %v1250 = vld [vmem:[#allocation2 + $0x2150] sm:$0xff]
    %v1251 = vld [vmem:[#allocation2 + $0x2158] sm:$0xff]
    %v1252 = vld [vmem:[#allocation2 + $0x2160] sm:$0xff]
    %v1253 = vld [vmem:[#allocation2 + $0x2168] sm:$0xff]
    %v1254 = vld [vmem:[#allocation2 + $0x2170] sm:$0xff]
    %v1255 = vld [vmem:[#allocation2 + $0x2178] sm:$0xff]
    %v1256 = vld [vmem:[#allocation2 + $0x2180] sm:$0xff]
    %v1257 = vld [vmem:[#allocation2 + $0x2188] sm:$0xff]
    %v1258 = vld [vmem:[#allocation2 + $0x2190] sm:$0xff]
    %v1259 = vld [vmem:[#allocation2 + $0x2198] sm:$0xff]
    %v1260 = vld [vmem:[#allocation2 + $0x21a0] sm:$0xff]
    %v1261 = vld [vmem:[#allocation2 + $0x21a8] sm:$0xff]
    %v1262 = vld [vmem:[#allocation2 + $0x21b0] sm:$0xff]
    %v1263 = vld [vmem:[#allocation2 + $0x21b8] sm:$0xff]
    %v1264 = vld [vmem:[#allocation2 + $0x21c0] sm:$0xff]
    %v1265 = vld [vmem:[#allocation2 + $0x21c8] sm:$0xff]
    %v1266 = vld [vmem:[#allocation2 + $0x21d0] sm:$0xff]
    %v1267 = vld [vmem:[#allocation2 + $0x21d8] sm:$0xff]
    %v1268 = vld [vmem:[#allocation2 + $0x21e0] sm:$0xff]
    %v1269 = vld [vmem:[#allocation2 + $0x21e8] sm:$0xff]
    %v1270 = vld [vmem:[#allocation2 + $0x21f0] sm:$0xff]
    %v1271 = vld [vmem:[#allocation2 + $0x21f8] sm:$0xff]
    %v1272 = vld [vmem:[#allocation2 + $0x2200] sm:$0xff]
    %v1273 = vld [vmem:[#allocation2 + $0x2208] sm:$0xff]
    %v1274 = vld [vmem:[#allocation2 + $0x2210] sm:$0xff]
    %v1275 = vld [vmem:[#allocation2 + $0x2218] sm:$0xff]
    %v1276 = vld [vmem:[#allocation2 + $0x2220] sm:$0xff]
    %v1277 = vld [vmem:[#allocation2 + $0x2228] sm:$0xff]
    %v1278 = vld [vmem:[#allocation2 + $0x2230] sm:$0xff]
    %v1279 = vld [vmem:[#allocation2 + $0x2238] sm:$0xff]
    %v1280 = vld [vmem:[#allocation2 + $0x2240] sm:$0xff]
    %v1281 = vld [vmem:[#allocation2 + $0x2248] sm:$0xff]
    %v1282 = vld [vmem:[#allocation2 + $0x2250] sm:$0xff]
    %v1283 = vld [vmem:[#allocation2 + $0x2258] sm:$0xff]
    %v1284 = vld [vmem:[#allocation2 + $0x2260] sm:$0xff]
    %v1285 = vld [vmem:[#allocation2 + $0x2268] sm:$0xff]
    %v1286 = vld [vmem:[#allocation2 + $0x2270] sm:$0xff]
    %v1287 = vld [vmem:[#allocation2 + $0x2278] sm:$0xff]
    %v1288 = vld [vmem:[#allocation2 + $0x2280] sm:$0xff]
    %v1289 = vld [vmem:[#allocation2 + $0x2288] sm:$0xff]
    %v1290 = vld [vmem:[#allocation2 + $0x2290] sm:$0xff]
    %v1291 = vld [vmem:[#allocation2 + $0x2298] sm:$0xff]
    %v1292 = vld [vmem:[#allocation2 + $0x22a0] sm:$0xff]
    %v1293 = vld [vmem:[#allocation2 + $0x22a8] sm:$0xff]
    %v1294 = vld [vmem:[#allocation2 + $0x22b0] sm:$0xff]
    %v1295 = vld [vmem:[#allocation2 + $0x22b8] sm:$0xff]
    %v1296 = vld [vmem:[#allocation2 + $0x22c0] sm:$0xff]
    %v1297 = vld [vmem:[#allocation2 + $0x22c8] sm:$0xff]
    %v1298 = vld [vmem:[#allocation2 + $0x22d0] sm:$0xff]
    %v1299 = vld [vmem:[#allocation2 + $0x22d8] sm:$0xff]
    %v1300 = vld [vmem:[#allocation2 + $0x22e0] sm:$0xff]
    %v1301 = vld [vmem:[#allocation2 + $0x22e8] sm:$0xff]
    %v1302 = vld [vmem:[#allocation2 + $0x22f0] sm:$0xff]
    %v1303 = vld [vmem:[#allocation2 + $0x22f8] sm:$0xff]
    %v1304 = vld [vmem:[#allocation2 + $0x2300] sm:$0xff]
    %v1305 = vld [vmem:[#allocation2 + $0x2308] sm:$0xff]
    %v1306 = vld [vmem:[#allocation2 + $0x2310] sm:$0xff]
    %v1307 = vld [vmem:[#allocation2 + $0x2318] sm:$0xff]
    %v1308 = vld [vmem:[#allocation2 + $0x2320] sm:$0xff]
    %v1309 = vld [vmem:[#allocation2 + $0x2328] sm:$0xff]
    %v1310 = vld [vmem:[#allocation2 + $0x2330] sm:$0xff]
    %v1311 = vld [vmem:[#allocation2 + $0x2338] sm:$0xff]
    %v1312 = vld [vmem:[#allocation2 + $0x2340] sm:$0xff]
    %v1313 = vld [vmem:[#allocation2 + $0x2348] sm:$0xff]
    %v1314 = vld [vmem:[#allocation2 + $0x2350] sm:$0xff]
    %v1315 = vld [vmem:[#allocation2 + $0x2358] sm:$0xff]
    %v1316 = vld [vmem:[#allocation2 + $0x2360] sm:$0xff]
    %v1317 = vld [vmem:[#allocation2 + $0x2368] sm:$0xff]
    %v1318 = vld [vmem:[#allocation2 + $0x2370] sm:$0xff]
    %v1319 = vld [vmem:[#allocation2 + $0x2378] sm:$0xff]
    %v1320 = vld [vmem:[#allocation2 + $0x2380] sm:$0xff]
    %v1321 = vld [vmem:[#allocation2 + $0x2388] sm:$0xff]
    %v1322 = vld [vmem:[#allocation2 + $0x2390] sm:$0xff]
    %v1323 = vld [vmem:[#allocation2 + $0x2398] sm:$0xff]
    %v1324 = vld [vmem:[#allocation2 + $0x23a0] sm:$0xff]
    %v1325 = vld [vmem:[#allocation2 + $0x23a8] sm:$0xff]
    %v1326 = vld [vmem:[#allocation2 + $0x23b0] sm:$0xff]
    %v1327 = vld [vmem:[#allocation2 + $0x23b8] sm:$0xff]
    %v1328 = vld [vmem:[#allocation2 + $0x23c0] sm:$0xff]
    %v1329 = vld [vmem:[#allocation2 + $0x23c8] sm:$0xff]
    %v1330 = vld [vmem:[#allocation2 + $0x23d0] sm:$0xff]
    %v1331 = vld [vmem:[#allocation2 + $0x23d8] sm:$0xff]
    %v1332 = vld [vmem:[#allocation2 + $0x23e0] sm:$0xff]
    %v1333 = vld [vmem:[#allocation2 + $0x23e8] sm:$0xff]
    %v1334 = vld [vmem:[#allocation2 + $0x23f0] sm:$0xff]
    %v1335 = vld [vmem:[#allocation2 + $0x23f8] sm:$0xff]
    %v1336 = vld [vmem:[#allocation2 + $0x2400] sm:$0xff]
    %v1337 = vld [vmem:[#allocation2 + $0x2408] sm:$0xff]
    %v1338 = vld [vmem:[#allocation2 + $0x2410] sm:$0xff]
    %v1339 = vld [vmem:[#allocation2 + $0x2418] sm:$0xff]
    %v1340 = vld [vmem:[#allocation2 + $0x2420] sm:$0xff]
    %v1341 = vld [vmem:[#allocation2 + $0x2428] sm:$0xff]
    %v1342 = vld [vmem:[#allocation2 + $0x2430] sm:$0xff]
    %v1343 = vld [vmem:[#allocation2 + $0x2438] sm:$0xff]
    %v1344 = vld [vmem:[#allocation2 + $0x2440] sm:$0xff]
    %v1345 = vld [vmem:[#allocation2 + $0x2448] sm:$0xff]
    %v1346 = vld [vmem:[#allocation2 + $0x2450] sm:$0xff]
    %v1347 = vld [vmem:[#allocation2 + $0x2458] sm:$0xff]
    %v1348 = vld [vmem:[#allocation2 + $0x2460] sm:$0xff]
    %v1349 = vld [vmem:[#allocation2 + $0x2468] sm:$0xff]
    %v1350 = vld [vmem:[#allocation2 + $0x2470] sm:$0xff]
    %v1351 = vld [vmem:[#allocation2 + $0x2478] sm:$0xff]
    %v1352 = vld [vmem:[#allocation2 + $0x2480] sm:$0xff]
    %v1353 = vld [vmem:[#allocation2 + $0x2488] sm:$0xff]
    %v1354 = vld [vmem:[#allocation2 + $0x2490] sm:$0xff]
    %v1355 = vld [vmem:[#allocation2 + $0x2498] sm:$0xff]
    %v1356 = vld [vmem:[#allocation2 + $0x24a0] sm:$0xff]
    %v1357 = vld [vmem:[#allocation2 + $0x24a8] sm:$0xff]
    %v1358 = vld [vmem:[#allocation2 + $0x24b0] sm:$0xff]
    %v1359 = vld [vmem:[#allocation2 + $0x24b8] sm:$0xff]
    %v1360 = vld [vmem:[#allocation2 + $0x24c0] sm:$0xff]
    %v1361 = vld [vmem:[#allocation2 + $0x24c8] sm:$0xff]
    %v1362 = vld [vmem:[#allocation2 + $0x24d0] sm:$0xff]
    %v1363 = vld [vmem:[#allocation2 + $0x24d8] sm:$0xff]
    %v1364 = vld [vmem:[#allocation2 + $0x24e0] sm:$0xff]
    %v1365 = vld [vmem:[#allocation2 + $0x24e8] sm:$0xff]
    %v1366 = vld [vmem:[#allocation2 + $0x24f0] sm:$0xff]
    %v1367 = vld [vmem:[#allocation2 + $0x24f8] sm:$0xff]
    %v1368 = vld [vmem:[#allocation2 + $0x2500] sm:$0xff]
    %v1369 = vld [vmem:[#allocation2 + $0x2508] sm:$0xff]
    %v1370 = vld [vmem:[#allocation2 + $0x2510] sm:$0xff]
    %v1371 = vld [vmem:[#allocation2 + $0x2518] sm:$0xff]
    %v1372 = vld [vmem:[#allocation2 + $0x2520] sm:$0xff]
    %v1373 = vld [vmem:[#allocation2 + $0x2528] sm:$0xff]
    %v1374 = vld [vmem:[#allocation2 + $0x2530] sm:$0xff]
    %v1375 = vld [vmem:[#allocation2 + $0x2538] sm:$0xff]
    %v1376 = vld [vmem:[#allocation2 + $0x2540] sm:$0xff]
    %v1377 = vld [vmem:[#allocation2 + $0x2548] sm:$0xff]
    %v1378 = vld [vmem:[#allocation2 + $0x2550] sm:$0xff]
    %v1379 = vld [vmem:[#allocation2 + $0x2558] sm:$0xff]
    %v1380 = vld [vmem:[#allocation2 + $0x2560] sm:$0xff]
    %v1381 = vld [vmem:[#allocation2 + $0x2568] sm:$0xff]
    %v1382 = vld [vmem:[#allocation2 + $0x2570] sm:$0xff]
    %v1383 = vld [vmem:[#allocation2 + $0x2578] sm:$0xff]
    %v1384 = vld [vmem:[#allocation2 + $0x2580] sm:$0xff]
    %v1385 = vld [vmem:[#allocation2 + $0x2588] sm:$0xff]
    %v1386 = vld [vmem:[#allocation2 + $0x2590] sm:$0xff]
    %v1387 = vld [vmem:[#allocation2 + $0x2598] sm:$0xff]
    %v1388 = vld [vmem:[#allocation2 + $0x25a0] sm:$0xff]
    %v1389 = vld [vmem:[#allocation2 + $0x25a8] sm:$0xff]
    %v1390 = vld [vmem:[#allocation2 + $0x25b0] sm:$0xff]
    %v1391 = vld [vmem:[#allocation2 + $0x25b8] sm:$0xff]
    %v1392 = vld [vmem:[#allocation2 + $0x25c0] sm:$0xff]
    %v1393 = vld [vmem:[#allocation2 + $0x25c8] sm:$0xff]
    %v1394 = vld [vmem:[#allocation2 + $0x25d0] sm:$0xff]
    %v1395 = vld [vmem:[#allocation2 + $0x25d8] sm:$0xff]
    %v1396 = vld [vmem:[#allocation2 + $0x25e0] sm:$0xff]
    %v1397 = vld [vmem:[#allocation2 + $0x25e8] sm:$0xff]
    %v1398 = vld [vmem:[#allocation2 + $0x25f0] sm:$0xff]
    %v1399 = vld [vmem:[#allocation2 + $0x25f8] sm:$0xff]
    %v1400 = vld [vmem:[#allocation2 + $0x2600] sm:$0xff]
    %v1401 = vld [vmem:[#allocation2 + $0x2608] sm:$0xff]
    %v1402 = vld [vmem:[#allocation2 + $0x2610] sm:$0xff]
    %v1403 = vld [vmem:[#allocation2 + $0x2618] sm:$0xff]
    %v1404 = vld [vmem:[#allocation2 + $0x2620] sm:$0xff]
    %v1405 = vld [vmem:[#allocation2 + $0x2628] sm:$0xff]
    %v1406 = vld [vmem:[#allocation2 + $0x2630] sm:$0xff]
    %v1407 = vld [vmem:[#allocation2 + $0x2638] sm:$0xff]
    %v1408 = vld [vmem:[#allocation2 + $0x2640] sm:$0xff]
    %v1409 = vld [vmem:[#allocation2 + $0x2648] sm:$0xff]
    %v1410 = vld [vmem:[#allocation2 + $0x2650] sm:$0xff]
    %v1411 = vld [vmem:[#allocation2 + $0x2658] sm:$0xff]
    %v1412 = vld [vmem:[#allocation2 + $0x2660] sm:$0xff]
    %v1413 = vld [vmem:[#allocation2 + $0x2668] sm:$0xff]
    %v1414 = vld [vmem:[#allocation2 + $0x2670] sm:$0xff]
    %v1415 = vld [vmem:[#allocation2 + $0x2678] sm:$0xff]
    %v1416 = vld [vmem:[#allocation2 + $0x2680] sm:$0xff]
    %v1417 = vld [vmem:[#allocation2 + $0x2688] sm:$0xff]
    %v1418 = vld [vmem:[#allocation2 + $0x2690] sm:$0xff]
    %v1419 = vld [vmem:[#allocation2 + $0x2698] sm:$0xff]
    %v1420 = vld [vmem:[#allocation2 + $0x26a0] sm:$0xff]
    %v1421 = vld [vmem:[#allocation2 + $0x26a8] sm:$0xff]
    %v1422 = vld [vmem:[#allocation2 + $0x26b0] sm:$0xff]
    %v1423 = vld [vmem:[#allocation2 + $0x26b8] sm:$0xff]
    %v1424 = vld [vmem:[#allocation2 + $0x26c0] sm:$0xff]
    %v1425 = vld [vmem:[#allocation2 + $0x26c8] sm:$0xff]
    %v1426 = vld [vmem:[#allocation2 + $0x26d0] sm:$0xff]
    %v1427 = vld [vmem:[#allocation2 + $0x26d8] sm:$0xff]
    %v1428 = vld [vmem:[#allocation2 + $0x26e0] sm:$0xff]
    %v1429 = vld [vmem:[#allocation2 + $0x26e8] sm:$0xff]
    %v1430 = vld [vmem:[#allocation2 + $0x26f0] sm:$0xff]
    %v1431 = vld [vmem:[#allocation2 + $0x26f8] sm:$0xff]
    %v1432 = vld [vmem:[#allocation2 + $0x2700] sm:$0xff]
    %v1433 = vld [vmem:[#allocation2 + $0x2708] sm:$0xff]
    %v1434 = vld [vmem:[#allocation2 + $0x2710] sm:$0xff]
    %v1435 = vld [vmem:[#allocation2 + $0x2718] sm:$0xff]
    %v1436 = vld [vmem:[#allocation2 + $0x2720] sm:$0xff]
    %v1437 = vld [vmem:[#allocation2 + $0x2728] sm:$0xff]
    %v1438 = vld [vmem:[#allocation2 + $0x2730] sm:$0xff]
    %v1439 = vld [vmem:[#allocation2 + $0x2738] sm:$0xff]
    %v1440 = vld [vmem:[#allocation2 + $0x2740] sm:$0xff]
    %v1441 = vld [vmem:[#allocation2 + $0x2748] sm:$0xff]
    %v1442 = vld [vmem:[#allocation2 + $0x2750] sm:$0xff]
    %v1443 = vld [vmem:[#allocation2 + $0x2758] sm:$0xff]
    %v1444 = vld [vmem:[#allocation2 + $0x2760] sm:$0xff]
    %v1445 = vld [vmem:[#allocation2 + $0x2768] sm:$0xff]
    %v1446 = vld [vmem:[#allocation2 + $0x2770] sm:$0xff]
    %v1447 = vld [vmem:[#allocation2 + $0x2778] sm:$0xff]
    %v1448 = vld [vmem:[#allocation2 + $0x2780] sm:$0xff]
    %v1449 = vld [vmem:[#allocation2 + $0x2788] sm:$0xff]
    %v1450 = vld [vmem:[#allocation2 + $0x2790] sm:$0xff]
    %v1451 = vld [vmem:[#allocation2 + $0x2798] sm:$0xff]
    %v1452 = vld [vmem:[#allocation2 + $0x27a0] sm:$0xff]
    %v1453 = vld [vmem:[#allocation2 + $0x27a8] sm:$0xff]
    %v1454 = vld [vmem:[#allocation2 + $0x27b0] sm:$0xff]
    %v1455 = vld [vmem:[#allocation2 + $0x27b8] sm:$0xff]
    %v1456 = vld [vmem:[#allocation2 + $0x27c0] sm:$0xff]
    %v1457 = vld [vmem:[#allocation2 + $0x27c8] sm:$0xff]
    %v1458 = vld [vmem:[#allocation2 + $0x27d0] sm:$0xff]
    %v1459 = vld [vmem:[#allocation2 + $0x27d8] sm:$0xff]
    %v1460 = vld [vmem:[#allocation2 + $0x27e0] sm:$0xff]
    %v1461 = vld [vmem:[#allocation2 + $0x27e8] sm:$0xff]
    %v1462 = vld [vmem:[#allocation2 + $0x27f0] sm:$0xff]
    %v1463 = vld [vmem:[#allocation2 + $0x27f8] sm:$0xff]
    %v1464 = vld [vmem:[#allocation2 + $0x2800] sm:$0xff]
    %v1465 = vld [vmem:[#allocation2 + $0x2808] sm:$0xff]
    %v1466 = vld [vmem:[#allocation2 + $0x2810] sm:$0xff]
    %v1467 = vld [vmem:[#allocation2 + $0x2818] sm:$0xff]
    %v1468 = vld [vmem:[#allocation2 + $0x2820] sm:$0xff]
    %v1469 = vld [vmem:[#allocation2 + $0x2828] sm:$0xff]
    %v1470 = vld [vmem:[#allocation2 + $0x2830] sm:$0xff]
    %v1471 = vld [vmem:[#allocation2 + $0x2838] sm:$0xff]
    %v1472 = vld [vmem:[#allocation2 + $0x2840] sm:$0xff]
    %v1473 = vld [vmem:[#allocation2 + $0x2848] sm:$0xff]
    %v1474 = vld [vmem:[#allocation2 + $0x2850] sm:$0xff]
    %v1475 = vld [vmem:[#allocation2 + $0x2858] sm:$0xff]
    %v1476 = vld [vmem:[#allocation2 + $0x2860] sm:$0xff]
    %v1477 = vld [vmem:[#allocation2 + $0x2868] sm:$0xff]
    %v1478 = vld [vmem:[#allocation2 + $0x2870] sm:$0xff]
    %v1479 = vld [vmem:[#allocation2 + $0x2878] sm:$0xff]
    %v1480 = vld [vmem:[#allocation2 + $0x2880] sm:$0xff]
    %v1481 = vld [vmem:[#allocation2 + $0x2888] sm:$0xff]
    %v1482 = vld [vmem:[#allocation2 + $0x2890] sm:$0xff]
    %v1483 = vld [vmem:[#allocation2 + $0x2898] sm:$0xff]
    %v1484 = vld [vmem:[#allocation2 + $0x28a0] sm:$0xff]
    %v1485 = vld [vmem:[#allocation2 + $0x28a8] sm:$0xff]
    %v1486 = vld [vmem:[#allocation2 + $0x28b0] sm:$0xff]
    %v1487 = vld [vmem:[#allocation2 + $0x28b8] sm:$0xff]
    %v1488 = vld [vmem:[#allocation2 + $0x28c0] sm:$0xff]
    %v1489 = vld [vmem:[#allocation2 + $0x28c8] sm:$0xff]
    %v1490 = vld [vmem:[#allocation2 + $0x28d0] sm:$0xff]
    %v1491 = vld [vmem:[#allocation2 + $0x28d8] sm:$0xff]
    %v1492 = vld [vmem:[#allocation2 + $0x28e0] sm:$0xff]
    %v1493 = vld [vmem:[#allocation2 + $0x28e8] sm:$0xff]
    %v1494 = vld [vmem:[#allocation2 + $0x28f0] sm:$0xff]
    %v1495 = vld [vmem:[#allocation2 + $0x28f8] sm:$0xff]
    %v1496 = vld [vmem:[#allocation2 + $0x2900] sm:$0xff]
    %v1497 = vld [vmem:[#allocation2 + $0x2908] sm:$0xff]
    %v1498 = vld [vmem:[#allocation2 + $0x2910] sm:$0xff]
    %v1499 = vld [vmem:[#allocation2 + $0x2918] sm:$0xff]
    %v1500 = vld [vmem:[#allocation2 + $0x2920] sm:$0xff]
    %v1501 = vld [vmem:[#allocation2 + $0x2928] sm:$0xff]
    %v1502 = vld [vmem:[#allocation2 + $0x2930] sm:$0xff]
    %v1503 = vld [vmem:[#allocation2 + $0x2938] sm:$0xff]
    %v1504 = vld [vmem:[#allocation2 + $0x2940] sm:$0xff]
    %v1505 = vld [vmem:[#allocation2 + $0x2948] sm:$0xff]
    %v1506 = vld [vmem:[#allocation2 + $0x2950] sm:$0xff]
    %v1507 = vld [vmem:[#allocation2 + $0x2958] sm:$0xff]
    %v1508 = vld [vmem:[#allocation2 + $0x2960] sm:$0xff]
    %v1509 = vld [vmem:[#allocation2 + $0x2968] sm:$0xff]
    %v1510 = vld [vmem:[#allocation2 + $0x2970] sm:$0xff]
    %v1511 = vld [vmem:[#allocation2 + $0x2978] sm:$0xff]
    %v1512 = vld [vmem:[#allocation2 + $0x2980] sm:$0xff]
    %v1513 = vld [vmem:[#allocation2 + $0x2988] sm:$0xff]
    %v1514 = vld [vmem:[#allocation2 + $0x2990] sm:$0xff]
    %v1515 = vld [vmem:[#allocation2 + $0x2998] sm:$0xff]
    %v1516 = vld [vmem:[#allocation2 + $0x29a0] sm:$0xff]
    %v1517 = vld [vmem:[#allocation2 + $0x29a8] sm:$0xff]
    %v1518 = vld [vmem:[#allocation2 + $0x29b0] sm:$0xff]
    %v1519 = vld [vmem:[#allocation2 + $0x29b8] sm:$0xff]
    %v1520 = vld [vmem:[#allocation2 + $0x29c0] sm:$0xff]
    %v1521 = vld [vmem:[#allocation2 + $0x29c8] sm:$0xff]
    %v1522 = vld [vmem:[#allocation2 + $0x29d0] sm:$0xff]
    %v1523 = vld [vmem:[#allocation2 + $0x29d8] sm:$0xff]
    %v1524 = vld [vmem:[#allocation2 + $0x29e0] sm:$0xff]
    %v1525 = vld [vmem:[#allocation2 + $0x29e8] sm:$0xff]
    %v1526 = vld [vmem:[#allocation2 + $0x29f0] sm:$0xff]
    %v1527 = vld [vmem:[#allocation2 + $0x29f8] sm:$0xff]
    %v1528 = vld [vmem:[#allocation2 + $0x2a00] sm:$0xff]
    %v1529 = vld [vmem:[#allocation2 + $0x2a08] sm:$0xff]
    %v1530 = vld [vmem:[#allocation2 + $0x2a10] sm:$0xff]
    %v1531 = vld [vmem:[#allocation2 + $0x2a18] sm:$0xff]
    %v1532 = vld [vmem:[#allocation2 + $0x2a20] sm:$0xff]
    %v1533 = vld [vmem:[#allocation2 + $0x2a28] sm:$0xff]
    %v1534 = vld [vmem:[#allocation2 + $0x2a30] sm:$0xff]
    %v1535 = vld [vmem:[#allocation2 + $0x2a38] sm:$0xff]
    %v1536 = vld [vmem:[#allocation2 + $0x2a40] sm:$0xff]
    %v1537 = vld [vmem:[#allocation2 + $0x2a48] sm:$0xff]
    %v1538 = vld [vmem:[#allocation2 + $0x2a50] sm:$0xff]
    %v1539 = vld [vmem:[#allocation2 + $0x2a58] sm:$0xff]
    %v1540 = vld [vmem:[#allocation2 + $0x2a60] sm:$0xff]
    %v1541 = vld [vmem:[#allocation2 + $0x2a68] sm:$0xff]
    %v1542 = vld [vmem:[#allocation2 + $0x2a70] sm:$0xff]
    %v1543 = vld [vmem:[#allocation2 + $0x2a78] sm:$0xff]
    %v1544 = vld [vmem:[#allocation2 + $0x2a80] sm:$0xff]
    %v1545 = vld [vmem:[#allocation2 + $0x2a88] sm:$0xff]
    %v1546 = vld [vmem:[#allocation2 + $0x2a90] sm:$0xff]
    %v1547 = vld [vmem:[#allocation2 + $0x2a98] sm:$0xff]
    %v1548 = vld [vmem:[#allocation2 + $0x2aa0] sm:$0xff]
    %v1549 = vld [vmem:[#allocation2 + $0x2aa8] sm:$0xff]
    %v1550 = vld [vmem:[#allocation2 + $0x2ab0] sm:$0xff]
    %v1551 = vld [vmem:[#allocation2 + $0x2ab8] sm:$0xff]
    %v1552 = vld [vmem:[#allocation2 + $0x2ac0] sm:$0xff]
    %v1553 = vld [vmem:[#allocation2 + $0x2ac8] sm:$0xff]
    %v1554 = vld [vmem:[#allocation2 + $0x2ad0] sm:$0xff]
    %v1555 = vld [vmem:[#allocation2 + $0x2ad8] sm:$0xff]
    %v1556 = vld [vmem:[#allocation2 + $0x2ae0] sm:$0xff]
    %v1557 = vld [vmem:[#allocation2 + $0x2ae8] sm:$0xff]
    %v1558 = vld [vmem:[#allocation2 + $0x2af0] sm:$0xff]
    %v1559 = vld [vmem:[#allocation2 + $0x2af8] sm:$0xff]
    %v1560 = vld [vmem:[#allocation2 + $0x2b00] sm:$0xff]
    %v1561 = vld [vmem:[#allocation2 + $0x2b08] sm:$0xff]
    %v1562 = vld [vmem:[#allocation2 + $0x2b10] sm:$0xff]
    %v1563 = vld [vmem:[#allocation2 + $0x2b18] sm:$0xff]
    %v1564 = vld [vmem:[#allocation2 + $0x2b20] sm:$0xff]
    %v1565 = vld [vmem:[#allocation2 + $0x2b28] sm:$0xff]
    %v1566 = vld [vmem:[#allocation2 + $0x2b30] sm:$0xff]
    %v1567 = vld [vmem:[#allocation2 + $0x2b38] sm:$0xff]
    %v1568 = vld [vmem:[#allocation2 + $0x2b40] sm:$0xff]
    %v1569 = vld [vmem:[#allocation2 + $0x2b48] sm:$0xff]
    %v1570 = vld [vmem:[#allocation2 + $0x2b50] sm:$0xff]
    %v1571 = vld [vmem:[#allocation2 + $0x2b58] sm:$0xff]
    %v1572 = vld [vmem:[#allocation2 + $0x2b60] sm:$0xff]
    %v1573 = vld [vmem:[#allocation2 + $0x2b68] sm:$0xff]
    %v1574 = vld [vmem:[#allocation2 + $0x2b70] sm:$0xff]
    %v1575 = vld [vmem:[#allocation2 + $0x2b78] sm:$0xff]
    %v1576 = vld [vmem:[#allocation2 + $0x2b80] sm:$0xff]
    %v1577 = vld [vmem:[#allocation2 + $0x2b88] sm:$0xff]
    %v1578 = vld [vmem:[#allocation2 + $0x2b90] sm:$0xff]
    %v1579 = vld [vmem:[#allocation2 + $0x2b98] sm:$0xff]
    %v1580 = vld [vmem:[#allocation2 + $0x2ba0] sm:$0xff]
    %v1581 = vld [vmem:[#allocation2 + $0x2ba8] sm:$0xff]
    %v1582 = vld [vmem:[#allocation2 + $0x2bb0] sm:$0xff]
    %v1583 = vld [vmem:[#allocation2 + $0x2bb8] sm:$0xff]
    %v1584 = vld [vmem:[#allocation2 + $0x2bc0] sm:$0xff]
    %v1585 = vld [vmem:[#allocation2 + $0x2bc8] sm:$0xff]
    %v1586 = vld [vmem:[#allocation2 + $0x2bd0] sm:$0xff]
    %v1587 = vld [vmem:[#allocation2 + $0x2bd8] sm:$0xff]
    %v1588 = vld [vmem:[#allocation2 + $0x2be0] sm:$0xff]
    %v1589 = vld [vmem:[#allocation2 + $0x2be8] sm:$0xff]
    %v1590 = vld [vmem:[#allocation2 + $0x2bf0] sm:$0xff]
    %v1591 = vld [vmem:[#allocation2 + $0x2bf8] sm:$0xff]
    %v1592 = vld [vmem:[#allocation2 + $0x2c00] sm:$0xff]
    %v1593 = vld [vmem:[#allocation2 + $0x2c08] sm:$0xff]
    %v1594 = vld [vmem:[#allocation2 + $0x2c10] sm:$0xff]
    %v1595 = vld [vmem:[#allocation2 + $0x2c18] sm:$0xff]
    %v1596 = vld [vmem:[#allocation2 + $0x2c20] sm:$0xff]
    %v1597 = vld [vmem:[#allocation2 + $0x2c28] sm:$0xff]
    %v1598 = vld [vmem:[#allocation2 + $0x2c30] sm:$0xff]
    %v1599 = vld [vmem:[#allocation2 + $0x2c38] sm:$0xff]
    %v1600 = vld [vmem:[#allocation2 + $0x2c40] sm:$0xff]
    %v1601 = vld [vmem:[#allocation2 + $0x2c48] sm:$0xff]
    %v1602 = vld [vmem:[#allocation2 + $0x2c50] sm:$0xff]
    %v1603 = vld [vmem:[#allocation2 + $0x2c58] sm:$0xff]
    %v1604 = vld [vmem:[#allocation2 + $0x2c60] sm:$0xff]
    %v1605 = vld [vmem:[#allocation2 + $0x2c68] sm:$0xff]
    %v1606 = vld [vmem:[#allocation2 + $0x2c70] sm:$0xff]
    %v1607 = vld [vmem:[#allocation2 + $0x2c78] sm:$0xff]
    %v1608 = vld [vmem:[#allocation2 + $0x2c80] sm:$0xff]
    %v1609 = vld [vmem:[#allocation2 + $0x2c88] sm:$0xff]
    %v1610 = vld [vmem:[#allocation2 + $0x2c90] sm:$0xff]
    %v1611 = vld [vmem:[#allocation2 + $0x2c98] sm:$0xff]
    %v1612 = vld [vmem:[#allocation2 + $0x2ca0] sm:$0xff]
    %v1613 = vld [vmem:[#allocation2 + $0x2ca8] sm:$0xff]
    %v1614 = vld [vmem:[#allocation2 + $0x2cb0] sm:$0xff]
    %v1615 = vld [vmem:[#allocation2 + $0x2cb8] sm:$0xff]
    %v1616 = vld [vmem:[#allocation2 + $0x2cc0] sm:$0xff]
    %v1617 = vld [vmem:[#allocation2 + $0x2cc8] sm:$0xff]
    %v1618 = vld [vmem:[#allocation2 + $0x2cd0] sm:$0xff]
    %v1619 = vld [vmem:[#allocation2 + $0x2cd8] sm:$0xff]
    %v1620 = vld [vmem:[#allocation2 + $0x2ce0] sm:$0xff]
    %v1621 = vld [vmem:[#allocation2 + $0x2ce8] sm:$0xff]
    %v1622 = vld [vmem:[#allocation2 + $0x2cf0] sm:$0xff]
    %v1623 = vld [vmem:[#allocation2 + $0x2cf8] sm:$0xff]
    %v1624 = vld [vmem:[#allocation2 + $0x2d00] sm:$0xff]
    %v1625 = vld [vmem:[#allocation2 + $0x2d08] sm:$0xff]
    %v1626 = vld [vmem:[#allocation2 + $0x2d10] sm:$0xff]
    %v1627 = vld [vmem:[#allocation2 + $0x2d18] sm:$0xff]
    %v1628 = vld [vmem:[#allocation2 + $0x2d20] sm:$0xff]
    %v1629 = vld [vmem:[#allocation2 + $0x2d28] sm:$0xff]
    %v1630 = vld [vmem:[#allocation2 + $0x2d30] sm:$0xff]
    %v1631 = vld [vmem:[#allocation2 + $0x2d38] sm:$0xff]
    %v1632 = vld [vmem:[#allocation2 + $0x2d40] sm:$0xff]
    %v1633 = vld [vmem:[#allocation2 + $0x2d48] sm:$0xff]
    %v1634 = vld [vmem:[#allocation2 + $0x2d50] sm:$0xff]
    %v1635 = vld [vmem:[#allocation2 + $0x2d58] sm:$0xff]
    %v1636 = vld [vmem:[#allocation2 + $0x2d60] sm:$0xff]
    %v1637 = vld [vmem:[#allocation2 + $0x2d68] sm:$0xff]
    %v1638 = vld [vmem:[#allocation2 + $0x2d70] sm:$0xff]
    %v1639 = vld [vmem:[#allocation2 + $0x2d78] sm:$0xff]
    %v1640 = vld [vmem:[#allocation2 + $0x2d80] sm:$0xff]
    %v1641 = vld [vmem:[#allocation2 + $0x2d88] sm:$0xff]
    %v1642 = vld [vmem:[#allocation2 + $0x2d90] sm:$0xff]
    %v1643 = vld [vmem:[#allocation2 + $0x2d98] sm:$0xff]
    %v1644 = vld [vmem:[#allocation2 + $0x2da0] sm:$0xff]
    %v1645 = vld [vmem:[#allocation2 + $0x2da8] sm:$0xff]
    %v1646 = vld [vmem:[#allocation2 + $0x2db0] sm:$0xff]
    %v1647 = vld [vmem:[#allocation2 + $0x2db8] sm:$0xff]
    %v1648 = vld [vmem:[#allocation2 + $0x2dc0] sm:$0xff]
    %v1649 = vld [vmem:[#allocation2 + $0x2dc8] sm:$0xff]
    %v1650 = vld [vmem:[#allocation2 + $0x2dd0] sm:$0xff]
    %v1651 = vld [vmem:[#allocation2 + $0x2dd8] sm:$0xff]
    %v1652 = vld [vmem:[#allocation2 + $0x2de0] sm:$0xff]
    %v1653 = vld [vmem:[#allocation2 + $0x2de8] sm:$0xff]
    %v1654 = vld [vmem:[#allocation2 + $0x2df0] sm:$0xff]
    %v1655 = vld [vmem:[#allocation2 + $0x2df8] sm:$0xff]
    %v1656 = vld [vmem:[#allocation2 + $0x2e00] sm:$0xff]
    %v1657 = vld [vmem:[#allocation2 + $0x2e08] sm:$0xff]
    %v1658 = vld [vmem:[#allocation2 + $0x2e10] sm:$0xff]
    %v1659 = vld [vmem:[#allocation2 + $0x2e18] sm:$0xff]
    %v1660 = vld [vmem:[#allocation2 + $0x2e20] sm:$0xff]
    %v1661 = vld [vmem:[#allocation2 + $0x2e28] sm:$0xff]
    %v1662 = vld [vmem:[#allocation2 + $0x2e30] sm:$0xff]
    %v1663 = vld [vmem:[#allocation2 + $0x2e38] sm:$0xff]
    %v1664 = vld [vmem:[#allocation2 + $0x2e40] sm:$0xff]
    %v1665 = vld [vmem:[#allocation2 + $0x2e48] sm:$0xff]
    %v1666 = vld [vmem:[#allocation2 + $0x2e50] sm:$0xff]
    %v1667 = vld [vmem:[#allocation2 + $0x2e58] sm:$0xff]
    %v1668 = vld [vmem:[#allocation2 + $0x2e60] sm:$0xff]
    %v1669 = vld [vmem:[#allocation2 + $0x2e68] sm:$0xff]
    %v1670 = vld [vmem:[#allocation2 + $0x2e70] sm:$0xff]
    %v1671 = vld [vmem:[#allocation2 + $0x2e78] sm:$0xff]
    %v1672 = vld [vmem:[#allocation2 + $0x2e80] sm:$0xff]
    %v1673 = vld [vmem:[#allocation2 + $0x2e88] sm:$0xff]
    %v1674 = vld [vmem:[#allocation2 + $0x2e90] sm:$0xff]
    %v1675 = vld [vmem:[#allocation2 + $0x2e98] sm:$0xff]
    %v1676 = vld [vmem:[#allocation2 + $0x2ea0] sm:$0xff]
    %v1677 = vld [vmem:[#allocation2 + $0x2ea8] sm:$0xff]
    %v1678 = vld [vmem:[#allocation2 + $0x2eb0] sm:$0xff]
    %v1679 = vld [vmem:[#allocation2 + $0x2eb8] sm:$0xff]
    %v1680 = vld [vmem:[#allocation2 + $0x2ec0] sm:$0xff]
    %v1681 = vld [vmem:[#allocation2 + $0x2ec8] sm:$0xff]
    %v1682 = vld [vmem:[#allocation2 + $0x2ed0] sm:$0xff]
    %v1683 = vld [vmem:[#allocation2 + $0x2ed8] sm:$0xff]
    %v1684 = vld [vmem:[#allocation2 + $0x2ee0] sm:$0xff]
    %v1685 = vld [vmem:[#allocation2 + $0x2ee8] sm:$0xff]
    %v1686 = vld [vmem:[#allocation2 + $0x2ef0] sm:$0xff]
    %v1687 = vld [vmem:[#allocation2 + $0x2ef8] sm:$0xff]
    %v1688 = vld [vmem:[#allocation2 + $0x2f00] sm:$0xff]
    %v1689 = vld [vmem:[#allocation2 + $0x2f08] sm:$0xff]
    %v1690 = vld [vmem:[#allocation2 + $0x2f10] sm:$0xff]
    %v1691 = vld [vmem:[#allocation2 + $0x2f18] sm:$0xff]
    %v1692 = vld [vmem:[#allocation2 + $0x2f20] sm:$0xff]
    %v1693 = vld [vmem:[#allocation2 + $0x2f28] sm:$0xff]
    %v1694 = vld [vmem:[#allocation2 + $0x2f30] sm:$0xff]
    %v1695 = vld [vmem:[#allocation2 + $0x2f38] sm:$0xff]
    %v1696 = vld [vmem:[#allocation2 + $0x2f40] sm:$0xff]
    %v1697 = vld [vmem:[#allocation2 + $0x2f48] sm:$0xff]
    %v1698 = vld [vmem:[#allocation2 + $0x2f50] sm:$0xff]
    %v1699 = vld [vmem:[#allocation2 + $0x2f58] sm:$0xff]
    %v1700 = vld [vmem:[#allocation2 + $0x2f60] sm:$0xff]
    %v1701 = vld [vmem:[#allocation2 + $0x2f68] sm:$0xff]
    %v1702 = vld [vmem:[#allocation2 + $0x2f70] sm:$0xff]
    %v1703 = vld [vmem:[#allocation2 + $0x2f78] sm:$0xff]
    %v1704 = vld [vmem:[#allocation2 + $0x2f80] sm:$0xff]
    %v1705 = vld [vmem:[#allocation2 + $0x2f88] sm:$0xff]
    %v1706 = vld [vmem:[#allocation2 + $0x2f90] sm:$0xff]
    %v1707 = vld [vmem:[#allocation2 + $0x2f98] sm:$0xff]
    %v1708 = vld [vmem:[#allocation2 + $0x2fa0] sm:$0xff]
    %v1709 = vld [vmem:[#allocation2 + $0x2fa8] sm:$0xff]
    %v1710 = vld [vmem:[#allocation2 + $0x2fb0] sm:$0xff]
    %v1711 = vld [vmem:[#allocation2 + $0x2fb8] sm:$0xff]
    %v1712 = vld [vmem:[#allocation2 + $0x2fc0] sm:$0xff]
    %v1713 = vld [vmem:[#allocation2 + $0x2fc8] sm:$0xff]
    %v1714 = vld [vmem:[#allocation2 + $0x2fd0] sm:$0xff]
    %v1715 = vld [vmem:[#allocation2 + $0x2fd8] sm:$0xff]
    %v1716 = vld [vmem:[#allocation2 + $0x2fe0] sm:$0xff]
    %v1717 = vld [vmem:[#allocation2 + $0x2fe8] sm:$0xff]
    %v1718 = vld [vmem:[#allocation2 + $0x2ff0] sm:$0xff]
    %v1719 = vld [vmem:[#allocation2 + $0x2ff8] sm:$0xff]
    %v1720 = vld [vmem:[#allocation12] sm:$0xff]
    %v1722 = vperm.slane %v1720, 0
    %v1723 = vperm.slane %v1720, 1
    %v1724 = vperm.slane %v1720, 2
    %v1725 = vperm.slane %v1720, 3
    %v1726 = vperm.slane %v1720, 4
    %v1727 = vperm.slane %v1720, 5
    %v1728 = vperm.slane %v1720, 6
    %v1729 = vperm.slane %v1720, 7
    %v3274 = vunpack.c.l.b16 %v184
    %v3275 = vunpack.c.h.b16 %v184
    %v3276 = vunpack.c.l.b16 %v185
    %v3277 = vunpack.c.h.b16 %v185
    %v3278 = vunpack.c.l.b16 %v186
    %v3279 = vunpack.c.h.b16 %v186
    %v3280 = vunpack.c.l.b16 %v187
    %v3281 = vunpack.c.h.b16 %v187
    %v3282 = vunpack.c.l.b16 %v188
    %v3283 = vunpack.c.h.b16 %v188
    %v3284 = vunpack.c.l.b16 %v189
    %v3285 = vunpack.c.h.b16 %v189
    %v3286 = vunpack.c.l.b16 %v190
    %v3287 = vunpack.c.h.b16 %v190
    %v3288 = vunpack.c.l.b16 %v191
    %v3289 = vunpack.c.h.b16 %v191
    %v3290 = vunpack.c.l.b16 %v192
    %v3291 = vunpack.c.h.b16 %v192
    %v3292 = vunpack.c.l.b16 %v193
    %v3293 = vunpack.c.h.b16 %v193
    %v3294 = vunpack.c.l.b16 %v194
    %v3295 = vunpack.c.h.b16 %v194
    %v3296 = vunpack.c.l.b16 %v195
    %v3297 = vunpack.c.h.b16 %v195
    %v3298 = vunpack.c.l.b16 %v196
    %v3299 = vunpack.c.h.b16 %v196
    %v3300 = vunpack.c.l.b16 %v197
    %v3301 = vunpack.c.h.b16 %v197
    %v3302 = vunpack.c.l.b16 %v198
    %v3303 = vunpack.c.h.b16 %v198
    %v3304 = vunpack.c.l.b16 %v199
    %v3305 = vunpack.c.h.b16 %v199
    %v3306 = vunpack.c.l.b16 %v200
    %v3307 = vunpack.c.h.b16 %v200
    %v3308 = vunpack.c.l.b16 %v201
    %v3309 = vunpack.c.h.b16 %v201
    %v3310 = vunpack.c.l.b16 %v202
    %v3311 = vunpack.c.h.b16 %v202
    %v3312 = vunpack.c.l.b16 %v203
    %v3313 = vunpack.c.h.b16 %v203
    %v3314 = vunpack.c.l.b16 %v204
    %v3315 = vunpack.c.h.b16 %v204
    %v3316 = vunpack.c.l.b16 %v205
    %v3317 = vunpack.c.h.b16 %v205
    %v3318 = vunpack.c.l.b16 %v206
    %v3319 = vunpack.c.h.b16 %v206
    %v3320 = vunpack.c.l.b16 %v207
    %v3321 = vunpack.c.h.b16 %v207
    %v3322 = vunpack.c.l.b16 %v208
    %v3323 = vunpack.c.h.b16 %v208
    %v3324 = vunpack.c.l.b16 %v209
    %v3325 = vunpack.c.h.b16 %v209
    %v3326 = vunpack.c.l.b16 %v210
    %v3327 = vunpack.c.h.b16 %v210
    %v3328 = vunpack.c.l.b16 %v211
    %v3329 = vunpack.c.h.b16 %v211
    %v3330 = vunpack.c.l.b16 %v212
    %v3331 = vunpack.c.h.b16 %v212
    %v3332 = vunpack.c.l.b16 %v213
    %v3333 = vunpack.c.h.b16 %v213
    %v3334 = vunpack.c.l.b16 %v214
    %v3335 = vunpack.c.h.b16 %v214
    %v3336 = vunpack.c.l.b16 %v215
    %v3337 = vunpack.c.h.b16 %v215
    %v3338 = vunpack.c.l.b16 %v216
    %v3339 = vunpack.c.h.b16 %v216
    %v3340 = vunpack.c.l.b16 %v217
    %v3341 = vunpack.c.h.b16 %v217
    %v3342 = vunpack.c.l.b16 %v218
    %v3343 = vunpack.c.h.b16 %v218
    %v3344 = vunpack.c.l.b16 %v219
    %v3345 = vunpack.c.h.b16 %v219
    %v3346 = vunpack.c.l.b16 %v220
    %v3347 = vunpack.c.h.b16 %v220
    %v3348 = vunpack.c.l.b16 %v221
    %v3349 = vunpack.c.h.b16 %v221
    %v3350 = vunpack.c.l.b16 %v222
    %v3351 = vunpack.c.h.b16 %v222
    %v3352 = vunpack.c.l.b16 %v223
    %v3353 = vunpack.c.h.b16 %v223
    %v3354 = vunpack.c.l.b16 %v224
    %v3355 = vunpack.c.h.b16 %v224
    %v3356 = vunpack.c.l.b16 %v225
    %v3357 = vunpack.c.h.b16 %v225
    %v3358 = vunpack.c.l.b16 %v226
    %v3359 = vunpack.c.h.b16 %v226
    %v3360 = vunpack.c.l.b16 %v227
    %v3361 = vunpack.c.h.b16 %v227
    %v3362 = vunpack.c.l.b16 %v228
    %v3363 = vunpack.c.h.b16 %v228
    %v3364 = vunpack.c.l.b16 %v229
    %v3365 = vunpack.c.h.b16 %v229
    %v3366 = vunpack.c.l.b16 %v230
    %v3367 = vunpack.c.h.b16 %v230
    %v3368 = vunpack.c.l.b16 %v231
    %v3369 = vunpack.c.h.b16 %v231
    %v3370 = vunpack.c.l.b16 %v232
    %v3371 = vunpack.c.h.b16 %v232
    %v3372 = vunpack.c.l.b16 %v233
    %v3373 = vunpack.c.h.b16 %v233
    %v3374 = vunpack.c.l.b16 %v234
    %v3375 = vunpack.c.h.b16 %v234
    %v3376 = vunpack.c.l.b16 %v235
    %v3377 = vunpack.c.h.b16 %v235
    %v3378 = vunpack.c.l.b16 %v236
    %v3379 = vunpack.c.h.b16 %v236
    %v3380 = vunpack.c.l.b16 %v237
    %v3381 = vunpack.c.h.b16 %v237
    %v3382 = vunpack.c.l.b16 %v238
    %v3383 = vunpack.c.h.b16 %v238
    %v3384 = vunpack.c.l.b16 %v239
    %v3385 = vunpack.c.h.b16 %v239
    %v3386 = vunpack.c.l.b16 %v240
    %v3387 = vunpack.c.h.b16 %v240
    %v3388 = vunpack.c.l.b16 %v241
    %v3389 = vunpack.c.h.b16 %v241
    %v3390 = vunpack.c.l.b16 %v242
    %v3391 = vunpack.c.h.b16 %v242
    %v3392 = vunpack.c.l.b16 %v243
    %v3393 = vunpack.c.h.b16 %v243
    %v3394 = vunpack.c.l.b16 %v244
    %v3395 = vunpack.c.h.b16 %v244
    %v3396 = vunpack.c.l.b16 %v245
    %v3397 = vunpack.c.h.b16 %v245
    %v3398 = vunpack.c.l.b16 %v246
    %v3399 = vunpack.c.h.b16 %v246
    %v3400 = vunpack.c.l.b16 %v247
    %v3401 = vunpack.c.h.b16 %v247
    %v3402 = vunpack.c.l.b16 %v248
    %v3403 = vunpack.c.h.b16 %v248
    %v3404 = vunpack.c.l.b16 %v249
    %v3405 = vunpack.c.h.b16 %v249
    %v3406 = vunpack.c.l.b16 %v250
    %v3407 = vunpack.c.h.b16 %v250
    %v3408 = vunpack.c.l.b16 %v251
    %v3409 = vunpack.c.h.b16 %v251
    %v3410 = vunpack.c.l.b16 %v252
    %v3411 = vunpack.c.h.b16 %v252
    %v3412 = vunpack.c.l.b16 %v253
    %v3413 = vunpack.c.h.b16 %v253
    %v3414 = vunpack.c.l.b16 %v254
    %v3415 = vunpack.c.h.b16 %v254
    %v3416 = vunpack.c.l.b16 %v255
    %v3417 = vunpack.c.h.b16 %v255
    %v3418 = vunpack.c.l.b16 %v256
    %v3419 = vunpack.c.h.b16 %v256
    %v3420 = vunpack.c.l.b16 %v257
    %v3421 = vunpack.c.h.b16 %v257
    %v3422 = vunpack.c.l.b16 %v258
    %v3423 = vunpack.c.h.b16 %v258
    %v3424 = vunpack.c.l.b16 %v259
    %v3425 = vunpack.c.h.b16 %v259
    %v3426 = vunpack.c.l.b16 %v260
    %v3427 = vunpack.c.h.b16 %v260
    %v3428 = vunpack.c.l.b16 %v261
    %v3429 = vunpack.c.h.b16 %v261
    %v3430 = vunpack.c.l.b16 %v262
    %v3431 = vunpack.c.h.b16 %v262
    %v3432 = vunpack.c.l.b16 %v263
    %v3433 = vunpack.c.h.b16 %v263
    %v3434 = vunpack.c.l.b16 %v264
    %v3435 = vunpack.c.h.b16 %v264
    %v3436 = vunpack.c.l.b16 %v265
    %v3437 = vunpack.c.h.b16 %v265
    %v3438 = vunpack.c.l.b16 %v266
    %v3439 = vunpack.c.h.b16 %v266
    %v3440 = vunpack.c.l.b16 %v267
    %v3441 = vunpack.c.h.b16 %v267
    %v3442 = vunpack.c.l.b16 %v268
    %v3443 = vunpack.c.h.b16 %v268
    %v3444 = vunpack.c.l.b16 %v269
    %v3445 = vunpack.c.h.b16 %v269
    %v3446 = vunpack.c.l.b16 %v270
    %v3447 = vunpack.c.h.b16 %v270
    %v3448 = vunpack.c.l.b16 %v271
    %v3449 = vunpack.c.h.b16 %v271
    %v3450 = vunpack.c.l.b16 %v272
    %v3451 = vunpack.c.h.b16 %v272
    %v3452 = vunpack.c.l.b16 %v273
    %v3453 = vunpack.c.h.b16 %v273
    %v3454 = vunpack.c.l.b16 %v274
    %v3455 = vunpack.c.h.b16 %v274
    %v3456 = vunpack.c.l.b16 %v275
    %v3457 = vunpack.c.h.b16 %v275
    %v3458 = vunpack.c.l.b16 %v276
    %v3459 = vunpack.c.h.b16 %v276
    %v3460 = vunpack.c.l.b16 %v277
    %v3461 = vunpack.c.h.b16 %v277
    %v3462 = vunpack.c.l.b16 %v278
    %v3463 = vunpack.c.h.b16 %v278
    %v3464 = vunpack.c.l.b16 %v279
    %v3465 = vunpack.c.h.b16 %v279
    %v3466 = vunpack.c.l.b16 %v280
    %v3467 = vunpack.c.h.b16 %v280
    %v3468 = vunpack.c.l.b16 %v281
    %v3469 = vunpack.c.h.b16 %v281
    %v3470 = vunpack.c.l.b16 %v282
    %v3471 = vunpack.c.h.b16 %v282
    %v3472 = vunpack.c.l.b16 %v283
    %v3473 = vunpack.c.h.b16 %v283
    %v3474 = vunpack.c.l.b16 %v284
    %v3475 = vunpack.c.h.b16 %v284
    %v3476 = vunpack.c.l.b16 %v285
    %v3477 = vunpack.c.h.b16 %v285
    %v3478 = vunpack.c.l.b16 %v286
    %v3479 = vunpack.c.h.b16 %v286
    %v3480 = vunpack.c.l.b16 %v287
    %v3481 = vunpack.c.h.b16 %v287
    %v3482 = vunpack.c.l.b16 %v288
    %v3483 = vunpack.c.h.b16 %v288
    %v3484 = vunpack.c.l.b16 %v289
    %v3485 = vunpack.c.h.b16 %v289
    %v3486 = vunpack.c.l.b16 %v290
    %v3487 = vunpack.c.h.b16 %v290
    %v3488 = vunpack.c.l.b16 %v291
    %v3489 = vunpack.c.h.b16 %v291
    %v3490 = vunpack.c.l.b16 %v292
    %v3491 = vunpack.c.h.b16 %v292
    %v3492 = vunpack.c.l.b16 %v293
    %v3493 = vunpack.c.h.b16 %v293
    %v3494 = vunpack.c.l.b16 %v294
    %v3495 = vunpack.c.h.b16 %v294
    %v3496 = vunpack.c.l.b16 %v295
    %v3497 = vunpack.c.h.b16 %v295
    %v3498 = vunpack.c.l.b16 %v296
    %v3499 = vunpack.c.h.b16 %v296
    %v3500 = vunpack.c.l.b16 %v297
    %v3501 = vunpack.c.h.b16 %v297
    %v3502 = vunpack.c.l.b16 %v298
    %v3503 = vunpack.c.h.b16 %v298
    %v3504 = vunpack.c.l.b16 %v299
    %v3505 = vunpack.c.h.b16 %v299
    %v3506 = vunpack.c.l.b16 %v300
    %v3507 = vunpack.c.h.b16 %v300
    %v3508 = vunpack.c.l.b16 %v301
    %v3509 = vunpack.c.h.b16 %v301
    %v3510 = vunpack.c.l.b16 %v302
    %v3511 = vunpack.c.h.b16 %v302
    %v3512 = vunpack.c.l.b16 %v303
    %v3513 = vunpack.c.h.b16 %v303
    %v3514 = vunpack.c.l.b16 %v304
    %v3515 = vunpack.c.h.b16 %v304
    %v3516 = vunpack.c.l.b16 %v305
    %v3517 = vunpack.c.h.b16 %v305
    %v3518 = vunpack.c.l.b16 %v306
    %v3519 = vunpack.c.h.b16 %v306
    %v3520 = vunpack.c.l.b16 %v307
    %v3521 = vunpack.c.h.b16 %v307
    %v3522 = vunpack.c.l.b16 %v308
    %v3523 = vunpack.c.h.b16 %v308
    %v3524 = vunpack.c.l.b16 %v309
    %v3525 = vunpack.c.h.b16 %v309
    %v3526 = vunpack.c.l.b16 %v310
    %v3527 = vunpack.c.h.b16 %v310
    %v3528 = vunpack.c.l.b16 %v311
    %v3529 = vunpack.c.h.b16 %v311
    %v3530 = vunpack.c.l.b16 %v312
    %v3531 = vunpack.c.h.b16 %v312
    %v3532 = vunpack.c.l.b16 %v313
    %v3533 = vunpack.c.h.b16 %v313
    %v3534 = vunpack.c.l.b16 %v314
    %v3535 = vunpack.c.h.b16 %v314
    %v3536 = vunpack.c.l.b16 %v315
    %v3537 = vunpack.c.h.b16 %v315
    %v3538 = vunpack.c.l.b16 %v316
    %v3539 = vunpack.c.h.b16 %v316
    %v3540 = vunpack.c.l.b16 %v317
    %v3541 = vunpack.c.h.b16 %v317
    %v3542 = vunpack.c.l.b16 %v318
    %v3543 = vunpack.c.h.b16 %v318
    %v3544 = vunpack.c.l.b16 %v319
    %v3545 = vunpack.c.h.b16 %v319
    %v3546 = vunpack.c.l.b16 %v320
    %v3547 = vunpack.c.h.b16 %v320
    %v3548 = vunpack.c.l.b16 %v321
    %v3549 = vunpack.c.h.b16 %v321
    %v3550 = vunpack.c.l.b16 %v322
    %v3551 = vunpack.c.h.b16 %v322
    %v3552 = vunpack.c.l.b16 %v323
    %v3553 = vunpack.c.h.b16 %v323
    %v3554 = vunpack.c.l.b16 %v324
    %v3555 = vunpack.c.h.b16 %v324
    %v3556 = vunpack.c.l.b16 %v325
    %v3557 = vunpack.c.h.b16 %v325
    %v3558 = vunpack.c.l.b16 %v326
    %v3559 = vunpack.c.h.b16 %v326
    %v3560 = vunpack.c.l.b16 %v327
    %v3561 = vunpack.c.h.b16 %v327
    %v3562 = vunpack.c.l.b16 %v328
    %v3563 = vunpack.c.h.b16 %v328
    %v3564 = vunpack.c.l.b16 %v329
    %v3565 = vunpack.c.h.b16 %v329
    %v3566 = vunpack.c.l.b16 %v330
    %v3567 = vunpack.c.h.b16 %v330
    %v3568 = vunpack.c.l.b16 %v331
    %v3569 = vunpack.c.h.b16 %v331
    %v3570 = vunpack.c.l.b16 %v332
    %v3571 = vunpack.c.h.b16 %v332
    %v3572 = vunpack.c.l.b16 %v333
    %v3573 = vunpack.c.h.b16 %v333
    %v3574 = vunpack.c.l.b16 %v334
    %v3575 = vunpack.c.h.b16 %v334
    %v3576 = vunpack.c.l.b16 %v335
    %v3577 = vunpack.c.h.b16 %v335
    %v3578 = vunpack.c.l.b16 %v336
    %v3579 = vunpack.c.h.b16 %v336
    %v3580 = vunpack.c.l.b16 %v337
    %v3581 = vunpack.c.h.b16 %v337
    %v3582 = vunpack.c.l.b16 %v338
    %v3583 = vunpack.c.h.b16 %v338
    %v3584 = vunpack.c.l.b16 %v339
    %v3585 = vunpack.c.h.b16 %v339
    %v3586 = vunpack.c.l.b16 %v340
    %v3587 = vunpack.c.h.b16 %v340
    %v3588 = vunpack.c.l.b16 %v341
    %v3589 = vunpack.c.h.b16 %v341
    %v3590 = vunpack.c.l.b16 %v342
    %v3591 = vunpack.c.h.b16 %v342
    %v3592 = vunpack.c.l.b16 %v343
    %v3593 = vunpack.c.h.b16 %v343
    %v3594 = vunpack.c.l.b16 %v344
    %v3595 = vunpack.c.h.b16 %v344
    %v3596 = vunpack.c.l.b16 %v345
    %v3597 = vunpack.c.h.b16 %v345
    %v3598 = vunpack.c.l.b16 %v346
    %v3599 = vunpack.c.h.b16 %v346
    %v3600 = vunpack.c.l.b16 %v347
    %v3601 = vunpack.c.h.b16 %v347
    %v3602 = vunpack.c.l.b16 %v348
    %v3603 = vunpack.c.h.b16 %v348
    %v3604 = vunpack.c.l.b16 %v349
    %v3605 = vunpack.c.h.b16 %v349
    %v3606 = vunpack.c.l.b16 %v350
    %v3607 = vunpack.c.h.b16 %v350
    %v3608 = vunpack.c.l.b16 %v351
    %v3609 = vunpack.c.h.b16 %v351
    %v3610 = vunpack.c.l.b16 %v352
    %v3611 = vunpack.c.h.b16 %v352
    %v3612 = vunpack.c.l.b16 %v353
    %v3613 = vunpack.c.h.b16 %v353
    %v3614 = vunpack.c.l.b16 %v354
    %v3615 = vunpack.c.h.b16 %v354
    %v3616 = vunpack.c.l.b16 %v355
    %v3617 = vunpack.c.h.b16 %v355
    %v3618 = vunpack.c.l.b16 %v356
    %v3619 = vunpack.c.h.b16 %v356
    %v3620 = vunpack.c.l.b16 %v357
    %v3621 = vunpack.c.h.b16 %v357
    %v3622 = vunpack.c.l.b16 %v358
    %v3623 = vunpack.c.h.b16 %v358
    %v3624 = vunpack.c.l.b16 %v359
    %v3625 = vunpack.c.h.b16 %v359
    %v3626 = vunpack.c.l.b16 %v360
    %v3627 = vunpack.c.h.b16 %v360
    %v3628 = vunpack.c.l.b16 %v361
    %v3629 = vunpack.c.h.b16 %v361
    %v3630 = vunpack.c.l.b16 %v362
    %v3631 = vunpack.c.h.b16 %v362
    %v3632 = vunpack.c.l.b16 %v363
    %v3633 = vunpack.c.h.b16 %v363
    %v3634 = vunpack.c.l.b16 %v364
    %v3635 = vunpack.c.h.b16 %v364
    %v3636 = vunpack.c.l.b16 %v365
    %v3637 = vunpack.c.h.b16 %v365
    %v3638 = vunpack.c.l.b16 %v366
    %v3639 = vunpack.c.h.b16 %v366
    %v3640 = vunpack.c.l.b16 %v367
    %v3641 = vunpack.c.h.b16 %v367
    %v3642 = vunpack.c.l.b16 %v368
    %v3643 = vunpack.c.h.b16 %v368
    %v3644 = vunpack.c.l.b16 %v369
    %v3645 = vunpack.c.h.b16 %v369
    %v3646 = vunpack.c.l.b16 %v370
    %v3647 = vunpack.c.h.b16 %v370
    %v3648 = vunpack.c.l.b16 %v371
    %v3649 = vunpack.c.h.b16 %v371
    %v3650 = vunpack.c.l.b16 %v372
    %v3651 = vunpack.c.h.b16 %v372
    %v3652 = vunpack.c.l.b16 %v373
    %v3653 = vunpack.c.h.b16 %v373
    %v3654 = vunpack.c.l.b16 %v374
    %v3655 = vunpack.c.h.b16 %v374
    %v3656 = vunpack.c.l.b16 %v375
    %v3657 = vunpack.c.h.b16 %v375
    %v3658 = vunpack.c.l.b16 %v376
    %v3659 = vunpack.c.h.b16 %v376
    %v3660 = vunpack.c.l.b16 %v377
    %v3661 = vunpack.c.h.b16 %v377
    %v3662 = vunpack.c.l.b16 %v378
    %v3663 = vunpack.c.h.b16 %v378
    %v3664 = vunpack.c.l.b16 %v379
    %v3665 = vunpack.c.h.b16 %v379
    %v3666 = vunpack.c.l.b16 %v380
    %v3667 = vunpack.c.h.b16 %v380
    %v3668 = vunpack.c.l.b16 %v381
    %v3669 = vunpack.c.h.b16 %v381
    %v3670 = vunpack.c.l.b16 %v382
    %v3671 = vunpack.c.h.b16 %v382
    %v3672 = vunpack.c.l.b16 %v383
    %v3673 = vunpack.c.h.b16 %v383
    %v3674 = vunpack.c.l.b16 %v384
    %v3675 = vunpack.c.h.b16 %v384
    %v3676 = vunpack.c.l.b16 %v385
    %v3677 = vunpack.c.h.b16 %v385
    %v3678 = vunpack.c.l.b16 %v386
    %v3679 = vunpack.c.h.b16 %v386
    %v3680 = vunpack.c.l.b16 %v387
    %v3681 = vunpack.c.h.b16 %v387
    %v3682 = vunpack.c.l.b16 %v388
    %v3683 = vunpack.c.h.b16 %v388
    %v3684 = vunpack.c.l.b16 %v389
    %v3685 = vunpack.c.h.b16 %v389
    %v3686 = vunpack.c.l.b16 %v390
    %v3687 = vunpack.c.h.b16 %v390
    %v3688 = vunpack.c.l.b16 %v391
    %v3689 = vunpack.c.h.b16 %v391
    %v3690 = vunpack.c.l.b16 %v392
    %v3691 = vunpack.c.h.b16 %v392
    %v3692 = vunpack.c.l.b16 %v393
    %v3693 = vunpack.c.h.b16 %v393
    %v3694 = vunpack.c.l.b16 %v394
    %v3695 = vunpack.c.h.b16 %v394
    %v3696 = vunpack.c.l.b16 %v395
    %v3697 = vunpack.c.h.b16 %v395
    %v3698 = vunpack.c.l.b16 %v396
    %v3699 = vunpack.c.h.b16 %v396
    %v3700 = vunpack.c.l.b16 %v397
    %v3701 = vunpack.c.h.b16 %v397
    %v3702 = vunpack.c.l.b16 %v398
    %v3703 = vunpack.c.h.b16 %v398
    %v3704 = vunpack.c.l.b16 %v399
    %v3705 = vunpack.c.h.b16 %v399
    %v3706 = vunpack.c.l.b16 %v400
    %v3707 = vunpack.c.h.b16 %v400
    %v3708 = vunpack.c.l.b16 %v401
    %v3709 = vunpack.c.h.b16 %v401
    %v3710 = vunpack.c.l.b16 %v402
    %v3711 = vunpack.c.h.b16 %v402
    %v3712 = vunpack.c.l.b16 %v403
    %v3713 = vunpack.c.h.b16 %v403
    %v3714 = vunpack.c.l.b16 %v404
    %v3715 = vunpack.c.h.b16 %v404
    %v3716 = vunpack.c.l.b16 %v405
    %v3717 = vunpack.c.h.b16 %v405
    %v3718 = vunpack.c.l.b16 %v406
    %v3719 = vunpack.c.h.b16 %v406
    %v3720 = vunpack.c.l.b16 %v407
    %v3721 = vunpack.c.h.b16 %v407
    %v3722 = vunpack.c.l.b16 %v408
    %v3723 = vunpack.c.h.b16 %v408
    %v3724 = vunpack.c.l.b16 %v409
    %v3725 = vunpack.c.h.b16 %v409
    %v3726 = vunpack.c.l.b16 %v410
    %v3727 = vunpack.c.h.b16 %v410
    %v3728 = vunpack.c.l.b16 %v411
    %v3729 = vunpack.c.h.b16 %v411
    %v3730 = vunpack.c.l.b16 %v412
    %v3731 = vunpack.c.h.b16 %v412
    %v3732 = vunpack.c.l.b16 %v413
    %v3733 = vunpack.c.h.b16 %v413
    %v3734 = vunpack.c.l.b16 %v414
    %v3735 = vunpack.c.h.b16 %v414
    %v3736 = vunpack.c.l.b16 %v415
    %v3737 = vunpack.c.h.b16 %v415
    %v3738 = vunpack.c.l.b16 %v416
    %v3739 = vunpack.c.h.b16 %v416
    %v3740 = vunpack.c.l.b16 %v417
    %v3741 = vunpack.c.h.b16 %v417
    %v3742 = vunpack.c.l.b16 %v418
    %v3743 = vunpack.c.h.b16 %v418
    %v3744 = vunpack.c.l.b16 %v419
    %v3745 = vunpack.c.h.b16 %v419
    %v3746 = vunpack.c.l.b16 %v420
    %v3747 = vunpack.c.h.b16 %v420
    %v3748 = vunpack.c.l.b16 %v421
    %v3749 = vunpack.c.h.b16 %v421
    %v3750 = vunpack.c.l.b16 %v422
    %v3751 = vunpack.c.h.b16 %v422
    %v3752 = vunpack.c.l.b16 %v423
    %v3753 = vunpack.c.h.b16 %v423
    %v3754 = vunpack.c.l.b16 %v424
    %v3755 = vunpack.c.h.b16 %v424
    %v3756 = vunpack.c.l.b16 %v425
    %v3757 = vunpack.c.h.b16 %v425
    %v3758 = vunpack.c.l.b16 %v426
    %v3759 = vunpack.c.h.b16 %v426
    %v3760 = vunpack.c.l.b16 %v427
    %v3761 = vunpack.c.h.b16 %v427
    %v3762 = vunpack.c.l.b16 %v428
    %v3763 = vunpack.c.h.b16 %v428
    %v3764 = vunpack.c.l.b16 %v429
    %v3765 = vunpack.c.h.b16 %v429
    %v3766 = vunpack.c.l.b16 %v430
    %v3767 = vunpack.c.h.b16 %v430
    %v3768 = vunpack.c.l.b16 %v431
    %v3769 = vunpack.c.h.b16 %v431
    %v3770 = vunpack.c.l.b16 %v432
    %v3771 = vunpack.c.h.b16 %v432
    %v3772 = vunpack.c.l.b16 %v433
    %v3773 = vunpack.c.h.b16 %v433
    %v3774 = vunpack.c.l.b16 %v434
    %v3775 = vunpack.c.h.b16 %v434
    %v3776 = vunpack.c.l.b16 %v435
    %v3777 = vunpack.c.h.b16 %v435
    %v3778 = vunpack.c.l.b16 %v436
    %v3779 = vunpack.c.h.b16 %v436
    %v3780 = vunpack.c.l.b16 %v437
    %v3781 = vunpack.c.h.b16 %v437
    %v3782 = vunpack.c.l.b16 %v438
    %v3783 = vunpack.c.h.b16 %v438
    %v3784 = vunpack.c.l.b16 %v439
    %v3785 = vunpack.c.h.b16 %v439
    %v3786 = vunpack.c.l.b16 %v440
    %v3787 = vunpack.c.h.b16 %v440
    %v3788 = vunpack.c.l.b16 %v441
    %v3789 = vunpack.c.h.b16 %v441
    %v3790 = vunpack.c.l.b16 %v442
    %v3791 = vunpack.c.h.b16 %v442
    %v3792 = vunpack.c.l.b16 %v443
    %v3793 = vunpack.c.h.b16 %v443
    %v3794 = vunpack.c.l.b16 %v444
    %v3795 = vunpack.c.h.b16 %v444
    %v3796 = vunpack.c.l.b16 %v445
    %v3797 = vunpack.c.h.b16 %v445
    %v3798 = vunpack.c.l.b16 %v446
    %v3799 = vunpack.c.h.b16 %v446
    %v3800 = vunpack.c.l.b16 %v447
    %v3801 = vunpack.c.h.b16 %v447
    %v3802 = vunpack.c.l.b16 %v448
    %v3803 = vunpack.c.h.b16 %v448
    %v3804 = vunpack.c.l.b16 %v449
    %v3805 = vunpack.c.h.b16 %v449
    %v3806 = vunpack.c.l.b16 %v450
    %v3807 = vunpack.c.h.b16 %v450
    %v3808 = vunpack.c.l.b16 %v451
    %v3809 = vunpack.c.h.b16 %v451
    %v3810 = vunpack.c.l.b16 %v452
    %v3811 = vunpack.c.h.b16 %v452
    %v3812 = vunpack.c.l.b16 %v453
    %v3813 = vunpack.c.h.b16 %v453
    %v3814 = vunpack.c.l.b16 %v454
    %v3815 = vunpack.c.h.b16 %v454
    %v3816 = vunpack.c.l.b16 %v455
    %v3817 = vunpack.c.h.b16 %v455
    %v3818 = vunpack.c.l.b16 %v456
    %v3819 = vunpack.c.h.b16 %v456
    %v3820 = vunpack.c.l.b16 %v457
    %v3821 = vunpack.c.h.b16 %v457
    %v3822 = vunpack.c.l.b16 %v458
    %v3823 = vunpack.c.h.b16 %v458
    %v3824 = vunpack.c.l.b16 %v459
    %v3825 = vunpack.c.h.b16 %v459
    %v3826 = vunpack.c.l.b16 %v460
    %v3827 = vunpack.c.h.b16 %v460
    %v3828 = vunpack.c.l.b16 %v461
    %v3829 = vunpack.c.h.b16 %v461
    %v3830 = vunpack.c.l.b16 %v462
    %v3831 = vunpack.c.h.b16 %v462
    %v3832 = vunpack.c.l.b16 %v463
    %v3833 = vunpack.c.h.b16 %v463
    %v3834 = vunpack.c.l.b16 %v464
    %v3835 = vunpack.c.h.b16 %v464
    %v3836 = vunpack.c.l.b16 %v465
    %v3837 = vunpack.c.h.b16 %v465
    %v3838 = vunpack.c.l.b16 %v466
    %v3839 = vunpack.c.h.b16 %v466
    %v3840 = vunpack.c.l.b16 %v467
    %v3841 = vunpack.c.h.b16 %v467
    %v3842 = vunpack.c.l.b16 %v468
    %v3843 = vunpack.c.h.b16 %v468
    %v3844 = vunpack.c.l.b16 %v469
    %v3845 = vunpack.c.h.b16 %v469
    %v3846 = vunpack.c.l.b16 %v470
    %v3847 = vunpack.c.h.b16 %v470
    %v3848 = vunpack.c.l.b16 %v471
    %v3849 = vunpack.c.h.b16 %v471
    %v3850 = vunpack.c.l.b16 %v472
    %v3851 = vunpack.c.h.b16 %v472
    %v3852 = vunpack.c.l.b16 %v473
    %v3853 = vunpack.c.h.b16 %v473
    %v3854 = vunpack.c.l.b16 %v474
    %v3855 = vunpack.c.h.b16 %v474
    %v3856 = vunpack.c.l.b16 %v475
    %v3857 = vunpack.c.h.b16 %v475
    %v3858 = vunpack.c.l.b16 %v476
    %v3859 = vunpack.c.h.b16 %v476
    %v3860 = vunpack.c.l.b16 %v477
    %v3861 = vunpack.c.h.b16 %v477
    %v3862 = vunpack.c.l.b16 %v478
    %v3863 = vunpack.c.h.b16 %v478
    %v3864 = vunpack.c.l.b16 %v479
    %v3865 = vunpack.c.h.b16 %v479
    %v3866 = vunpack.c.l.b16 %v480
    %v3867 = vunpack.c.h.b16 %v480
    %v3868 = vunpack.c.l.b16 %v481
    %v3869 = vunpack.c.h.b16 %v481
    %v3870 = vunpack.c.l.b16 %v482
    %v3871 = vunpack.c.h.b16 %v482
    %v3872 = vunpack.c.l.b16 %v483
    %v3873 = vunpack.c.h.b16 %v483
    %v3874 = vunpack.c.l.b16 %v484
    %v3875 = vunpack.c.h.b16 %v484
    %v3876 = vunpack.c.l.b16 %v485
    %v3877 = vunpack.c.h.b16 %v485
    %v3878 = vunpack.c.l.b16 %v486
    %v3879 = vunpack.c.h.b16 %v486
    %v3880 = vunpack.c.l.b16 %v487
    %v3881 = vunpack.c.h.b16 %v487
    %v3882 = vunpack.c.l.b16 %v488
    %v3883 = vunpack.c.h.b16 %v488
    %v3884 = vunpack.c.l.b16 %v489
    %v3885 = vunpack.c.h.b16 %v489
    %v3886 = vunpack.c.l.b16 %v490
    %v3887 = vunpack.c.h.b16 %v490
    %v3888 = vunpack.c.l.b16 %v491
    %v3889 = vunpack.c.h.b16 %v491
    %v3890 = vunpack.c.l.b16 %v492
    %v3891 = vunpack.c.h.b16 %v492
    %v3892 = vunpack.c.l.b16 %v493
    %v3893 = vunpack.c.h.b16 %v493
    %v3894 = vunpack.c.l.b16 %v494
    %v3895 = vunpack.c.h.b16 %v494
    %v3896 = vunpack.c.l.b16 %v495
    %v3897 = vunpack.c.h.b16 %v495
    %v3898 = vunpack.c.l.b16 %v496
    %v3899 = vunpack.c.h.b16 %v496
    %v3900 = vunpack.c.l.b16 %v497
    %v3901 = vunpack.c.h.b16 %v497
    %v3902 = vunpack.c.l.b16 %v498
    %v3903 = vunpack.c.h.b16 %v498
    %v3904 = vunpack.c.l.b16 %v499
    %v3905 = vunpack.c.h.b16 %v499
    %v3906 = vunpack.c.l.b16 %v500
    %v3907 = vunpack.c.h.b16 %v500
    %v3908 = vunpack.c.l.b16 %v501
    %v3909 = vunpack.c.h.b16 %v501
    %v3910 = vunpack.c.l.b16 %v502
    %v3911 = vunpack.c.h.b16 %v502
    %v3912 = vunpack.c.l.b16 %v503
    %v3913 = vunpack.c.h.b16 %v503
    %v3914 = vunpack.c.l.b16 %v504
    %v3915 = vunpack.c.h.b16 %v504
    %v3916 = vunpack.c.l.b16 %v505
    %v3917 = vunpack.c.h.b16 %v505
    %v3918 = vunpack.c.l.b16 %v506
    %v3919 = vunpack.c.h.b16 %v506
    %v3920 = vunpack.c.l.b16 %v507
    %v3921 = vunpack.c.h.b16 %v507
    %v3922 = vunpack.c.l.b16 %v508
    %v3923 = vunpack.c.h.b16 %v508
    %v3924 = vunpack.c.l.b16 %v509
    %v3925 = vunpack.c.h.b16 %v509
    %v3926 = vunpack.c.l.b16 %v510
    %v3927 = vunpack.c.h.b16 %v510
    %v3928 = vunpack.c.l.b16 %v511
    %v3929 = vunpack.c.h.b16 %v511
    %v3930 = vunpack.c.l.b16 %v512
    %v3931 = vunpack.c.h.b16 %v512
    %v3932 = vunpack.c.l.b16 %v513
    %v3933 = vunpack.c.h.b16 %v513
    %v3934 = vunpack.c.l.b16 %v514
    %v3935 = vunpack.c.h.b16 %v514
    %v3936 = vunpack.c.l.b16 %v515
    %v3937 = vunpack.c.h.b16 %v515
    %v3938 = vunpack.c.l.b16 %v516
    %v3939 = vunpack.c.h.b16 %v516
    %v3940 = vunpack.c.l.b16 %v517
    %v3941 = vunpack.c.h.b16 %v517
    %v3942 = vunpack.c.l.b16 %v518
    %v3943 = vunpack.c.h.b16 %v518
    %v3944 = vunpack.c.l.b16 %v519
    %v3945 = vunpack.c.h.b16 %v519
    %v3946 = vunpack.c.l.b16 %v520
    %v3947 = vunpack.c.h.b16 %v520
    %v3948 = vunpack.c.l.b16 %v521
    %v3949 = vunpack.c.h.b16 %v521
    %v3950 = vunpack.c.l.b16 %v522
    %v3951 = vunpack.c.h.b16 %v522
    %v3952 = vunpack.c.l.b16 %v523
    %v3953 = vunpack.c.h.b16 %v523
    %v3954 = vunpack.c.l.b16 %v524
    %v3955 = vunpack.c.h.b16 %v524
    %v3956 = vunpack.c.l.b16 %v525
    %v3957 = vunpack.c.h.b16 %v525
    %v3958 = vunpack.c.l.b16 %v526
    %v3959 = vunpack.c.h.b16 %v526
    %v3960 = vunpack.c.l.b16 %v527
    %v3961 = vunpack.c.h.b16 %v527
    %v3962 = vunpack.c.l.b16 %v528
    %v3963 = vunpack.c.h.b16 %v528
    %v3964 = vunpack.c.l.b16 %v529
    %v3965 = vunpack.c.h.b16 %v529
    %v3966 = vunpack.c.l.b16 %v530
    %v3967 = vunpack.c.h.b16 %v530
    %v3968 = vunpack.c.l.b16 %v531
    %v3969 = vunpack.c.h.b16 %v531
    %v3970 = vunpack.c.l.b16 %v532
    %v3971 = vunpack.c.h.b16 %v532
    %v3972 = vunpack.c.l.b16 %v533
    %v3973 = vunpack.c.h.b16 %v533
    %v3974 = vunpack.c.l.b16 %v534
    %v3975 = vunpack.c.h.b16 %v534
    %v3976 = vunpack.c.l.b16 %v535
    %v3977 = vunpack.c.h.b16 %v535
    %v3978 = vunpack.c.l.b16 %v536
    %v3979 = vunpack.c.h.b16 %v536
    %v3980 = vunpack.c.l.b16 %v537
    %v3981 = vunpack.c.h.b16 %v537
    %v3982 = vunpack.c.l.b16 %v538
    %v3983 = vunpack.c.h.b16 %v538
    %v3984 = vunpack.c.l.b16 %v539
    %v3985 = vunpack.c.h.b16 %v539
    %v3986 = vunpack.c.l.b16 %v540
    %v3987 = vunpack.c.h.b16 %v540
    %v3988 = vunpack.c.l.b16 %v541
    %v3989 = vunpack.c.h.b16 %v541
    %v3990 = vunpack.c.l.b16 %v542
    %v3991 = vunpack.c.h.b16 %v542
    %v3992 = vunpack.c.l.b16 %v543
    %v3993 = vunpack.c.h.b16 %v543
    %v3994 = vunpack.c.l.b16 %v544
    %v3995 = vunpack.c.h.b16 %v544
    %v3996 = vunpack.c.l.b16 %v545
    %v3997 = vunpack.c.h.b16 %v545
    %v3998 = vunpack.c.l.b16 %v546
    %v3999 = vunpack.c.h.b16 %v546
    %v4000 = vunpack.c.l.b16 %v547
    %v4001 = vunpack.c.h.b16 %v547
    %v4002 = vunpack.c.l.b16 %v548
    %v4003 = vunpack.c.h.b16 %v548
    %v4004 = vunpack.c.l.b16 %v549
    %v4005 = vunpack.c.h.b16 %v549
    %v4006 = vunpack.c.l.b16 %v550
    %v4007 = vunpack.c.h.b16 %v550
    %v4008 = vunpack.c.l.b16 %v551
    %v4009 = vunpack.c.h.b16 %v551
    %v4010 = vunpack.c.l.b16 %v552
    %v4011 = vunpack.c.h.b16 %v552
    %v4012 = vunpack.c.l.b16 %v553
    %v4013 = vunpack.c.h.b16 %v553
    %v4014 = vunpack.c.l.b16 %v554
    %v4015 = vunpack.c.h.b16 %v554
    %v4016 = vunpack.c.l.b16 %v555
    %v4017 = vunpack.c.h.b16 %v555
    %v4018 = vunpack.c.l.b16 %v556
    %v4019 = vunpack.c.h.b16 %v556
    %v4020 = vunpack.c.l.b16 %v557
    %v4021 = vunpack.c.h.b16 %v557
    %v4022 = vunpack.c.l.b16 %v558
    %v4023 = vunpack.c.h.b16 %v558
    %v4024 = vunpack.c.l.b16 %v559
    %v4025 = vunpack.c.h.b16 %v559
    %v4026 = vunpack.c.l.b16 %v560
    %v4027 = vunpack.c.h.b16 %v560
    %v4028 = vunpack.c.l.b16 %v561
    %v4029 = vunpack.c.h.b16 %v561
    %v4030 = vunpack.c.l.b16 %v562
    %v4031 = vunpack.c.h.b16 %v562
    %v4032 = vunpack.c.l.b16 %v563
    %v4033 = vunpack.c.h.b16 %v563
    %v4034 = vunpack.c.l.b16 %v564
    %v4035 = vunpack.c.h.b16 %v564
    %v4036 = vunpack.c.l.b16 %v565
    %v4037 = vunpack.c.h.b16 %v565
    %v4038 = vunpack.c.l.b16 %v566
    %v4039 = vunpack.c.h.b16 %v566
    %v4040 = vunpack.c.l.b16 %v567
    %v4041 = vunpack.c.h.b16 %v567
    %v4042 = vunpack.c.l.b16 %v568
    %v4043 = vunpack.c.h.b16 %v568
    %v4044 = vunpack.c.l.b16 %v569
    %v4045 = vunpack.c.h.b16 %v569
    %v4046 = vunpack.c.l.b16 %v570
    %v4047 = vunpack.c.h.b16 %v570
    %v4048 = vunpack.c.l.b16 %v571
    %v4049 = vunpack.c.h.b16 %v571
    %v4050 = vunpack.c.l.b16 %v572
    %v4051 = vunpack.c.h.b16 %v572
    %v4052 = vunpack.c.l.b16 %v573
    %v4053 = vunpack.c.h.b16 %v573
    %v4054 = vunpack.c.l.b16 %v574
    %v4055 = vunpack.c.h.b16 %v574
    %v4056 = vunpack.c.l.b16 %v575
    %v4057 = vunpack.c.h.b16 %v575
    %v4058 = vunpack.c.l.b16 %v576
    %v4059 = vunpack.c.h.b16 %v576
    %v4060 = vunpack.c.l.b16 %v577
    %v4061 = vunpack.c.h.b16 %v577
    %v4062 = vunpack.c.l.b16 %v578
    %v4063 = vunpack.c.h.b16 %v578
    %v4064 = vunpack.c.l.b16 %v579
    %v4065 = vunpack.c.h.b16 %v579
    %v4066 = vunpack.c.l.b16 %v580
    %v4067 = vunpack.c.h.b16 %v580
    %v4068 = vunpack.c.l.b16 %v581
    %v4069 = vunpack.c.h.b16 %v581
    %v4070 = vunpack.c.l.b16 %v582
    %v4071 = vunpack.c.h.b16 %v582
    %v4072 = vunpack.c.l.b16 %v583
    %v4073 = vunpack.c.h.b16 %v583
    %v4074 = vunpack.c.l.b16 %v584
    %v4075 = vunpack.c.h.b16 %v584
    %v4076 = vunpack.c.l.b16 %v585
    %v4077 = vunpack.c.h.b16 %v585
    %v4078 = vunpack.c.l.b16 %v586
    %v4079 = vunpack.c.h.b16 %v586
    %v4080 = vunpack.c.l.b16 %v587
    %v4081 = vunpack.c.h.b16 %v587
    %v4082 = vunpack.c.l.b16 %v588
    %v4083 = vunpack.c.h.b16 %v588
    %v4084 = vunpack.c.l.b16 %v589
    %v4085 = vunpack.c.h.b16 %v589
    %v4086 = vunpack.c.l.b16 %v590
    %v4087 = vunpack.c.h.b16 %v590
    %v4088 = vunpack.c.l.b16 %v591
    %v4089 = vunpack.c.h.b16 %v591
    %v4090 = vunpack.c.l.b16 %v592
    %v4091 = vunpack.c.h.b16 %v592
    %v4092 = vunpack.c.l.b16 %v593
    %v4093 = vunpack.c.h.b16 %v593
    %v4094 = vunpack.c.l.b16 %v594
    %v4095 = vunpack.c.h.b16 %v594
    %v4096 = vunpack.c.l.b16 %v595
    %v4097 = vunpack.c.h.b16 %v595
    %v4098 = vunpack.c.l.b16 %v596
    %v4099 = vunpack.c.h.b16 %v596
    %v4100 = vunpack.c.l.b16 %v597
    %v4101 = vunpack.c.h.b16 %v597
    %v4102 = vunpack.c.l.b16 %v598
    %v4103 = vunpack.c.h.b16 %v598
    %v4104 = vunpack.c.l.b16 %v599
    %v4105 = vunpack.c.h.b16 %v599
    %v4106 = vunpack.c.l.b16 %v600
    %v4107 = vunpack.c.h.b16 %v600
    %v4108 = vunpack.c.l.b16 %v601
    %v4109 = vunpack.c.h.b16 %v601
    %v4110 = vunpack.c.l.b16 %v602
    %v4111 = vunpack.c.h.b16 %v602
    %v4112 = vunpack.c.l.b16 %v603
    %v4113 = vunpack.c.h.b16 %v603
    %v4114 = vunpack.c.l.b16 %v604
    %v4115 = vunpack.c.h.b16 %v604
    %v4116 = vunpack.c.l.b16 %v605
    %v4117 = vunpack.c.h.b16 %v605
    %v4118 = vunpack.c.l.b16 %v606
    %v4119 = vunpack.c.h.b16 %v606
    %v4120 = vunpack.c.l.b16 %v607
    %v4121 = vunpack.c.h.b16 %v607
    %v4122 = vunpack.c.l.b16 %v608
    %v4123 = vunpack.c.h.b16 %v608
    %v4124 = vunpack.c.l.b16 %v609
    %v4125 = vunpack.c.h.b16 %v609
    %v4126 = vunpack.c.l.b16 %v610
    %v4127 = vunpack.c.h.b16 %v610
    %v4128 = vunpack.c.l.b16 %v611
    %v4129 = vunpack.c.h.b16 %v611
    %v4130 = vunpack.c.l.b16 %v612
    %v4131 = vunpack.c.h.b16 %v612
    %v4132 = vunpack.c.l.b16 %v613
    %v4133 = vunpack.c.h.b16 %v613
    %v4134 = vunpack.c.l.b16 %v614
    %v4135 = vunpack.c.h.b16 %v614
    %v4136 = vunpack.c.l.b16 %v615
    %v4137 = vunpack.c.h.b16 %v615
    %v4138 = vunpack.c.l.b16 %v616
    %v4139 = vunpack.c.h.b16 %v616
    %v4140 = vunpack.c.l.b16 %v617
    %v4141 = vunpack.c.h.b16 %v617
    %v4142 = vunpack.c.l.b16 %v618
    %v4143 = vunpack.c.h.b16 %v618
    %v4144 = vunpack.c.l.b16 %v619
    %v4145 = vunpack.c.h.b16 %v619
    %v4146 = vunpack.c.l.b16 %v620
    %v4147 = vunpack.c.h.b16 %v620
    %v4148 = vunpack.c.l.b16 %v621
    %v4149 = vunpack.c.h.b16 %v621
    %v4150 = vunpack.c.l.b16 %v622
    %v4151 = vunpack.c.h.b16 %v622
    %v4152 = vunpack.c.l.b16 %v623
    %v4153 = vunpack.c.h.b16 %v623
    %v4154 = vunpack.c.l.b16 %v624
    %v4155 = vunpack.c.h.b16 %v624
    %v4156 = vunpack.c.l.b16 %v625
    %v4157 = vunpack.c.h.b16 %v625
    %v4158 = vunpack.c.l.b16 %v626
    %v4159 = vunpack.c.h.b16 %v626
    %v4160 = vunpack.c.l.b16 %v627
    %v4161 = vunpack.c.h.b16 %v627
    %v4162 = vunpack.c.l.b16 %v628
    %v4163 = vunpack.c.h.b16 %v628
    %v4164 = vunpack.c.l.b16 %v629
    %v4165 = vunpack.c.h.b16 %v629
    %v4166 = vunpack.c.l.b16 %v630
    %v4167 = vunpack.c.h.b16 %v630
    %v4168 = vunpack.c.l.b16 %v631
    %v4169 = vunpack.c.h.b16 %v631
    %v4170 = vunpack.c.l.b16 %v632
    %v4171 = vunpack.c.h.b16 %v632
    %v4172 = vunpack.c.l.b16 %v633
    %v4173 = vunpack.c.h.b16 %v633
    %v4174 = vunpack.c.l.b16 %v634
    %v4175 = vunpack.c.h.b16 %v634
    %v4176 = vunpack.c.l.b16 %v635
    %v4177 = vunpack.c.h.b16 %v635
    %v4178 = vunpack.c.l.b16 %v636
    %v4179 = vunpack.c.h.b16 %v636
    %v4180 = vunpack.c.l.b16 %v637
    %v4181 = vunpack.c.h.b16 %v637
    %v4182 = vunpack.c.l.b16 %v638
    %v4183 = vunpack.c.h.b16 %v638
    %v4184 = vunpack.c.l.b16 %v639
    %v4185 = vunpack.c.h.b16 %v639
    %v4186 = vunpack.c.l.b16 %v640
    %v4187 = vunpack.c.h.b16 %v640
    %v4188 = vunpack.c.l.b16 %v641
    %v4189 = vunpack.c.h.b16 %v641
    %v4190 = vunpack.c.l.b16 %v642
    %v4191 = vunpack.c.h.b16 %v642
    %v4192 = vunpack.c.l.b16 %v643
    %v4193 = vunpack.c.h.b16 %v643
    %v4194 = vunpack.c.l.b16 %v644
    %v4195 = vunpack.c.h.b16 %v644
    %v4196 = vunpack.c.l.b16 %v645
    %v4197 = vunpack.c.h.b16 %v645
    %v4198 = vunpack.c.l.b16 %v646
    %v4199 = vunpack.c.h.b16 %v646
    %v4200 = vunpack.c.l.b16 %v647
    %v4201 = vunpack.c.h.b16 %v647
    %v4202 = vunpack.c.l.b16 %v648
    %v4203 = vunpack.c.h.b16 %v648
    %v4204 = vunpack.c.l.b16 %v649
    %v4205 = vunpack.c.h.b16 %v649
    %v4206 = vunpack.c.l.b16 %v650
    %v4207 = vunpack.c.h.b16 %v650
    %v4208 = vunpack.c.l.b16 %v651
    %v4209 = vunpack.c.h.b16 %v651
    %v4210 = vunpack.c.l.b16 %v652
    %v4211 = vunpack.c.h.b16 %v652
    %v4212 = vunpack.c.l.b16 %v653
    %v4213 = vunpack.c.h.b16 %v653
    %v4214 = vunpack.c.l.b16 %v654
    %v4215 = vunpack.c.h.b16 %v654
    %v4216 = vunpack.c.l.b16 %v655
    %v4217 = vunpack.c.h.b16 %v655
    %v4218 = vunpack.c.l.b16 %v656
    %v4219 = vunpack.c.h.b16 %v656
    %v4220 = vunpack.c.l.b16 %v657
    %v4221 = vunpack.c.h.b16 %v657
    %v4222 = vunpack.c.l.b16 %v658
    %v4223 = vunpack.c.h.b16 %v658
    %v4224 = vunpack.c.l.b16 %v659
    %v4225 = vunpack.c.h.b16 %v659
    %v4226 = vunpack.c.l.b16 %v660
    %v4227 = vunpack.c.h.b16 %v660
    %v4228 = vunpack.c.l.b16 %v661
    %v4229 = vunpack.c.h.b16 %v661
    %v4230 = vunpack.c.l.b16 %v662
    %v4231 = vunpack.c.h.b16 %v662
    %v4232 = vunpack.c.l.b16 %v663
    %v4233 = vunpack.c.h.b16 %v663
    %v4234 = vunpack.c.l.b16 %v664
    %v4235 = vunpack.c.h.b16 %v664
    %v4236 = vunpack.c.l.b16 %v665
    %v4237 = vunpack.c.h.b16 %v665
    %v4238 = vunpack.c.l.b16 %v666
    %v4239 = vunpack.c.h.b16 %v666
    %v4240 = vunpack.c.l.b16 %v667
    %v4241 = vunpack.c.h.b16 %v667
    %v4242 = vunpack.c.l.b16 %v668
    %v4243 = vunpack.c.h.b16 %v668
    %v4244 = vunpack.c.l.b16 %v669
    %v4245 = vunpack.c.h.b16 %v669
    %v4246 = vunpack.c.l.b16 %v670
    %v4247 = vunpack.c.h.b16 %v670
    %v4248 = vunpack.c.l.b16 %v671
    %v4249 = vunpack.c.h.b16 %v671
    %v4250 = vunpack.c.l.b16 %v672
    %v4251 = vunpack.c.h.b16 %v672
    %v4252 = vunpack.c.l.b16 %v673
    %v4253 = vunpack.c.h.b16 %v673
    %v4254 = vunpack.c.l.b16 %v674
    %v4255 = vunpack.c.h.b16 %v674
    %v4256 = vunpack.c.l.b16 %v675
    %v4257 = vunpack.c.h.b16 %v675
    %v4258 = vunpack.c.l.b16 %v676
    %v4259 = vunpack.c.h.b16 %v676
    %v4260 = vunpack.c.l.b16 %v677
    %v4261 = vunpack.c.h.b16 %v677
    %v4262 = vunpack.c.l.b16 %v678
    %v4263 = vunpack.c.h.b16 %v678
    %v4264 = vunpack.c.l.b16 %v679
    %v4265 = vunpack.c.h.b16 %v679
    %v4266 = vunpack.c.l.b16 %v680
    %v4267 = vunpack.c.h.b16 %v680
    %v4268 = vunpack.c.l.b16 %v681
    %v4269 = vunpack.c.h.b16 %v681
    %v4270 = vunpack.c.l.b16 %v682
    %v4271 = vunpack.c.h.b16 %v682
    %v4272 = vunpack.c.l.b16 %v683
    %v4273 = vunpack.c.h.b16 %v683
    %v4274 = vunpack.c.l.b16 %v684
    %v4275 = vunpack.c.h.b16 %v684
    %v4276 = vunpack.c.l.b16 %v685
    %v4277 = vunpack.c.h.b16 %v685
    %v4278 = vunpack.c.l.b16 %v686
    %v4279 = vunpack.c.h.b16 %v686
    %v4280 = vunpack.c.l.b16 %v687
    %v4281 = vunpack.c.h.b16 %v687
    %v4282 = vunpack.c.l.b16 %v688
    %v4283 = vunpack.c.h.b16 %v688
    %v4284 = vunpack.c.l.b16 %v689
    %v4285 = vunpack.c.h.b16 %v689
    %v4286 = vunpack.c.l.b16 %v690
    %v4287 = vunpack.c.h.b16 %v690
    %v4288 = vunpack.c.l.b16 %v691
    %v4289 = vunpack.c.h.b16 %v691
    %v4290 = vunpack.c.l.b16 %v692
    %v4291 = vunpack.c.h.b16 %v692
    %v4292 = vunpack.c.l.b16 %v693
    %v4293 = vunpack.c.h.b16 %v693
    %v4294 = vunpack.c.l.b16 %v694
    %v4295 = vunpack.c.h.b16 %v694
    %v4296 = vunpack.c.l.b16 %v695
    %v4297 = vunpack.c.h.b16 %v695
    %v4298 = vunpack.c.l.b16 %v696
    %v4299 = vunpack.c.h.b16 %v696
    %v4300 = vunpack.c.l.b16 %v697
    %v4301 = vunpack.c.h.b16 %v697
    %v4302 = vunpack.c.l.b16 %v698
    %v4303 = vunpack.c.h.b16 %v698
    %v4304 = vunpack.c.l.b16 %v699
    %v4305 = vunpack.c.h.b16 %v699
    %v4306 = vunpack.c.l.b16 %v700
    %v4307 = vunpack.c.h.b16 %v700
    %v4308 = vunpack.c.l.b16 %v701
    %v4309 = vunpack.c.h.b16 %v701
    %v4310 = vunpack.c.l.b16 %v702
    %v4311 = vunpack.c.h.b16 %v702
    %v4312 = vunpack.c.l.b16 %v703
    %v4313 = vunpack.c.h.b16 %v703
    %v4314 = vunpack.c.l.b16 %v704
    %v4315 = vunpack.c.h.b16 %v704
    %v4316 = vunpack.c.l.b16 %v705
    %v4317 = vunpack.c.h.b16 %v705
    %v4318 = vunpack.c.l.b16 %v706
    %v4319 = vunpack.c.h.b16 %v706
    %v4320 = vunpack.c.l.b16 %v707
    %v4321 = vunpack.c.h.b16 %v707
    %v4322 = vunpack.c.l.b16 %v708
    %v4323 = vunpack.c.h.b16 %v708
    %v4324 = vunpack.c.l.b16 %v709
    %v4325 = vunpack.c.h.b16 %v709
    %v4326 = vunpack.c.l.b16 %v710
    %v4327 = vunpack.c.h.b16 %v710
    %v4328 = vunpack.c.l.b16 %v711
    %v4329 = vunpack.c.h.b16 %v711
    %v4330 = vunpack.c.l.b16 %v712
    %v4331 = vunpack.c.h.b16 %v712
    %v4332 = vunpack.c.l.b16 %v713
    %v4333 = vunpack.c.h.b16 %v713
    %v4334 = vunpack.c.l.b16 %v714
    %v4335 = vunpack.c.h.b16 %v714
    %v4336 = vunpack.c.l.b16 %v715
    %v4337 = vunpack.c.h.b16 %v715
    %v4338 = vunpack.c.l.b16 %v716
    %v4339 = vunpack.c.h.b16 %v716
    %v4340 = vunpack.c.l.b16 %v717
    %v4341 = vunpack.c.h.b16 %v717
    %v4342 = vunpack.c.l.b16 %v718
    %v4343 = vunpack.c.h.b16 %v718
    %v4344 = vunpack.c.l.b16 %v719
    %v4345 = vunpack.c.h.b16 %v719
    %v4346 = vunpack.c.l.b16 %v720
    %v4347 = vunpack.c.h.b16 %v720
    %v4348 = vunpack.c.l.b16 %v721
    %v4349 = vunpack.c.h.b16 %v721
    %v4350 = vunpack.c.l.b16 %v722
    %v4351 = vunpack.c.h.b16 %v722
    %v4352 = vunpack.c.l.b16 %v723
    %v4353 = vunpack.c.h.b16 %v723
    %v4354 = vunpack.c.l.b16 %v724
    %v4355 = vunpack.c.h.b16 %v724
    %v4356 = vunpack.c.l.b16 %v725
    %v4357 = vunpack.c.h.b16 %v725
    %v4358 = vunpack.c.l.b16 %v726
    %v4359 = vunpack.c.h.b16 %v726
    %v4360 = vunpack.c.l.b16 %v727
    %v4361 = vunpack.c.h.b16 %v727
    %v4362 = vunpack.c.l.b16 %v728
    %v4363 = vunpack.c.h.b16 %v728
    %v4364 = vunpack.c.l.b16 %v729
    %v4365 = vunpack.c.h.b16 %v729
    %v4366 = vunpack.c.l.b16 %v730
    %v4367 = vunpack.c.h.b16 %v730
    %v4368 = vunpack.c.l.b16 %v731
    %v4369 = vunpack.c.h.b16 %v731
    %v4370 = vunpack.c.l.b16 %v732
    %v4371 = vunpack.c.h.b16 %v732
    %v4372 = vunpack.c.l.b16 %v733
    %v4373 = vunpack.c.h.b16 %v733
    %v4374 = vunpack.c.l.b16 %v734
    %v4375 = vunpack.c.h.b16 %v734
    %v4376 = vunpack.c.l.b16 %v735
    %v4377 = vunpack.c.h.b16 %v735
    %v4378 = vunpack.c.l.b16 %v736
    %v4379 = vunpack.c.h.b16 %v736
    %v4380 = vunpack.c.l.b16 %v737
    %v4381 = vunpack.c.h.b16 %v737
    %v4382 = vunpack.c.l.b16 %v738
    %v4383 = vunpack.c.h.b16 %v738
    %v4384 = vunpack.c.l.b16 %v739
    %v4385 = vunpack.c.h.b16 %v739
    %v4386 = vunpack.c.l.b16 %v740
    %v4387 = vunpack.c.h.b16 %v740
    %v4388 = vunpack.c.l.b16 %v741
    %v4389 = vunpack.c.h.b16 %v741
    %v4390 = vunpack.c.l.b16 %v742
    %v4391 = vunpack.c.h.b16 %v742
    %v4392 = vunpack.c.l.b16 %v743
    %v4393 = vunpack.c.h.b16 %v743
    %v4394 = vunpack.c.l.b16 %v744
    %v4395 = vunpack.c.h.b16 %v744
    %v4396 = vunpack.c.l.b16 %v745
    %v4397 = vunpack.c.h.b16 %v745
    %v4398 = vunpack.c.l.b16 %v746
    %v4399 = vunpack.c.h.b16 %v746
    %v4400 = vunpack.c.l.b16 %v747
    %v4401 = vunpack.c.h.b16 %v747
    %v4402 = vunpack.c.l.b16 %v748
    %v4403 = vunpack.c.h.b16 %v748
    %v4404 = vunpack.c.l.b16 %v749
    %v4405 = vunpack.c.h.b16 %v749
    %v4406 = vunpack.c.l.b16 %v750
    %v4407 = vunpack.c.h.b16 %v750
    %v4408 = vunpack.c.l.b16 %v751
    %v4409 = vunpack.c.h.b16 %v751
    %v4410 = vunpack.c.l.b16 %v752
    %v4411 = vunpack.c.h.b16 %v752
    %v4412 = vunpack.c.l.b16 %v753
    %v4413 = vunpack.c.h.b16 %v753
    %v4414 = vunpack.c.l.b16 %v754
    %v4415 = vunpack.c.h.b16 %v754
    %v4416 = vunpack.c.l.b16 %v755
    %v4417 = vunpack.c.h.b16 %v755
    %v4418 = vunpack.c.l.b16 %v756
    %v4419 = vunpack.c.h.b16 %v756
    %v4420 = vunpack.c.l.b16 %v757
    %v4421 = vunpack.c.h.b16 %v757
    %v4422 = vunpack.c.l.b16 %v758
    %v4423 = vunpack.c.h.b16 %v758
    %v4424 = vunpack.c.l.b16 %v759
    %v4425 = vunpack.c.h.b16 %v759
    %v4426 = vunpack.c.l.b16 %v760
    %v4427 = vunpack.c.h.b16 %v760
    %v4428 = vunpack.c.l.b16 %v761
    %v4429 = vunpack.c.h.b16 %v761
    %v4430 = vunpack.c.l.b16 %v762
    %v4431 = vunpack.c.h.b16 %v762
    %v4432 = vunpack.c.l.b16 %v763
    %v4433 = vunpack.c.h.b16 %v763
    %v4434 = vunpack.c.l.b16 %v764
    %v4435 = vunpack.c.h.b16 %v764
    %v4436 = vunpack.c.l.b16 %v765
    %v4437 = vunpack.c.h.b16 %v765
    %v4438 = vunpack.c.l.b16 %v766
    %v4439 = vunpack.c.h.b16 %v766
    %v4440 = vunpack.c.l.b16 %v767
    %v4441 = vunpack.c.h.b16 %v767
    %v4442 = vunpack.c.l.b16 %v768
    %v4443 = vunpack.c.h.b16 %v768
    %v4444 = vunpack.c.l.b16 %v769
    %v4445 = vunpack.c.h.b16 %v769
    %v4446 = vunpack.c.l.b16 %v770
    %v4447 = vunpack.c.h.b16 %v770
    %v4448 = vunpack.c.l.b16 %v771
    %v4449 = vunpack.c.h.b16 %v771
    %v4450 = vunpack.c.l.b16 %v772
    %v4451 = vunpack.c.h.b16 %v772
    %v4452 = vunpack.c.l.b16 %v773
    %v4453 = vunpack.c.h.b16 %v773
    %v4454 = vunpack.c.l.b16 %v774
    %v4455 = vunpack.c.h.b16 %v774
    %v4456 = vunpack.c.l.b16 %v775
    %v4457 = vunpack.c.h.b16 %v775
    %v4458 = vunpack.c.l.b16 %v776
    %v4459 = vunpack.c.h.b16 %v776
    %v4460 = vunpack.c.l.b16 %v777
    %v4461 = vunpack.c.h.b16 %v777
    %v4462 = vunpack.c.l.b16 %v778
    %v4463 = vunpack.c.h.b16 %v778
    %v4464 = vunpack.c.l.b16 %v779
    %v4465 = vunpack.c.h.b16 %v779
    %v4466 = vunpack.c.l.b16 %v780
    %v4467 = vunpack.c.h.b16 %v780
    %v4468 = vunpack.c.l.b16 %v781
    %v4469 = vunpack.c.h.b16 %v781
    %v4470 = vunpack.c.l.b16 %v782
    %v4471 = vunpack.c.h.b16 %v782
    %v4472 = vunpack.c.l.b16 %v783
    %v4473 = vunpack.c.h.b16 %v783
    %v4474 = vunpack.c.l.b16 %v784
    %v4475 = vunpack.c.h.b16 %v784
    %v4476 = vunpack.c.l.b16 %v785
    %v4477 = vunpack.c.h.b16 %v785
    %v4478 = vunpack.c.l.b16 %v786
    %v4479 = vunpack.c.h.b16 %v786
    %v4480 = vunpack.c.l.b16 %v787
    %v4481 = vunpack.c.h.b16 %v787
    %v4482 = vunpack.c.l.b16 %v788
    %v4483 = vunpack.c.h.b16 %v788
    %v4484 = vunpack.c.l.b16 %v789
    %v4485 = vunpack.c.h.b16 %v789
    %v4486 = vunpack.c.l.b16 %v790
    %v4487 = vunpack.c.h.b16 %v790
    %v4488 = vunpack.c.l.b16 %v791
    %v4489 = vunpack.c.h.b16 %v791
    %v4490 = vunpack.c.l.b16 %v792
    %v4491 = vunpack.c.h.b16 %v792
    %v4492 = vunpack.c.l.b16 %v793
    %v4493 = vunpack.c.h.b16 %v793
    %v4494 = vunpack.c.l.b16 %v794
    %v4495 = vunpack.c.h.b16 %v794
    %v4496 = vunpack.c.l.b16 %v795
    %v4497 = vunpack.c.h.b16 %v795
    %v4498 = vunpack.c.l.b16 %v796
    %v4499 = vunpack.c.h.b16 %v796
    %v4500 = vunpack.c.l.b16 %v797
    %v4501 = vunpack.c.h.b16 %v797
    %v4502 = vunpack.c.l.b16 %v798
    %v4503 = vunpack.c.h.b16 %v798
    %v4504 = vunpack.c.l.b16 %v799
    %v4505 = vunpack.c.h.b16 %v799
    %v4506 = vunpack.c.l.b16 %v800
    %v4507 = vunpack.c.h.b16 %v800
    %v4508 = vunpack.c.l.b16 %v801
    %v4509 = vunpack.c.h.b16 %v801
    %v4510 = vunpack.c.l.b16 %v802
    %v4511 = vunpack.c.h.b16 %v802
    %v4512 = vunpack.c.l.b16 %v803
    %v4513 = vunpack.c.h.b16 %v803
    %v4514 = vunpack.c.l.b16 %v804
    %v4515 = vunpack.c.h.b16 %v804
    %v4516 = vunpack.c.l.b16 %v805
    %v4517 = vunpack.c.h.b16 %v805
    %v4518 = vunpack.c.l.b16 %v806
    %v4519 = vunpack.c.h.b16 %v806
    %v4520 = vunpack.c.l.b16 %v807
    %v4521 = vunpack.c.h.b16 %v807
    %v4522 = vunpack.c.l.b16 %v808
    %v4523 = vunpack.c.h.b16 %v808
    %v4524 = vunpack.c.l.b16 %v809
    %v4525 = vunpack.c.h.b16 %v809
    %v4526 = vunpack.c.l.b16 %v810
    %v4527 = vunpack.c.h.b16 %v810
    %v4528 = vunpack.c.l.b16 %v811
    %v4529 = vunpack.c.h.b16 %v811
    %v4530 = vunpack.c.l.b16 %v812
    %v4531 = vunpack.c.h.b16 %v812
    %v4532 = vunpack.c.l.b16 %v813
    %v4533 = vunpack.c.h.b16 %v813
    %v4534 = vunpack.c.l.b16 %v814
    %v4535 = vunpack.c.h.b16 %v814
    %v4536 = vunpack.c.l.b16 %v815
    %v4537 = vunpack.c.h.b16 %v815
    %v4538 = vunpack.c.l.b16 %v816
    %v4539 = vunpack.c.h.b16 %v816
    %v4540 = vunpack.c.l.b16 %v817
    %v4541 = vunpack.c.h.b16 %v817
    %v4542 = vunpack.c.l.b16 %v818
    %v4543 = vunpack.c.h.b16 %v818
    %v4544 = vunpack.c.l.b16 %v819
    %v4545 = vunpack.c.h.b16 %v819
    %v4546 = vunpack.c.l.b16 %v820
    %v4547 = vunpack.c.h.b16 %v820
    %v4548 = vunpack.c.l.b16 %v821
    %v4549 = vunpack.c.h.b16 %v821
    %v4550 = vunpack.c.l.b16 %v822
    %v4551 = vunpack.c.h.b16 %v822
    %v4552 = vunpack.c.l.b16 %v823
    %v4553 = vunpack.c.h.b16 %v823
    %v4554 = vunpack.c.l.b16 %v824
    %v4555 = vunpack.c.h.b16 %v824
    %v4556 = vunpack.c.l.b16 %v825
    %v4557 = vunpack.c.h.b16 %v825
    %v4558 = vunpack.c.l.b16 %v826
    %v4559 = vunpack.c.h.b16 %v826
    %v4560 = vunpack.c.l.b16 %v827
    %v4561 = vunpack.c.h.b16 %v827
    %v4562 = vunpack.c.l.b16 %v828
    %v4563 = vunpack.c.h.b16 %v828
    %v4564 = vunpack.c.l.b16 %v829
    %v4565 = vunpack.c.h.b16 %v829
    %v4566 = vunpack.c.l.b16 %v830
    %v4567 = vunpack.c.h.b16 %v830
    %v4568 = vunpack.c.l.b16 %v831
    %v4569 = vunpack.c.h.b16 %v831
    %v4570 = vunpack.c.l.b16 %v832
    %v4571 = vunpack.c.h.b16 %v832
    %v4572 = vunpack.c.l.b16 %v833
    %v4573 = vunpack.c.h.b16 %v833
    %v4574 = vunpack.c.l.b16 %v834
    %v4575 = vunpack.c.h.b16 %v834
    %v4576 = vunpack.c.l.b16 %v835
    %v4577 = vunpack.c.h.b16 %v835
    %v4578 = vunpack.c.l.b16 %v836
    %v4579 = vunpack.c.h.b16 %v836
    %v4580 = vunpack.c.l.b16 %v837
    %v4581 = vunpack.c.h.b16 %v837
    %v4582 = vunpack.c.l.b16 %v838
    %v4583 = vunpack.c.h.b16 %v838
    %v4584 = vunpack.c.l.b16 %v839
    %v4585 = vunpack.c.h.b16 %v839
    %v4586 = vunpack.c.l.b16 %v840
    %v4587 = vunpack.c.h.b16 %v840
    %v4588 = vunpack.c.l.b16 %v841
    %v4589 = vunpack.c.h.b16 %v841
    %v4590 = vunpack.c.l.b16 %v842
    %v4591 = vunpack.c.h.b16 %v842
    %v4592 = vunpack.c.l.b16 %v843
    %v4593 = vunpack.c.h.b16 %v843
    %v4594 = vunpack.c.l.b16 %v844
    %v4595 = vunpack.c.h.b16 %v844
    %v4596 = vunpack.c.l.b16 %v845
    %v4597 = vunpack.c.h.b16 %v845
    %v4598 = vunpack.c.l.b16 %v846
    %v4599 = vunpack.c.h.b16 %v846
    %v4600 = vunpack.c.l.b16 %v847
    %v4601 = vunpack.c.h.b16 %v847
    %v4602 = vunpack.c.l.b16 %v848
    %v4603 = vunpack.c.h.b16 %v848
    %v4604 = vunpack.c.l.b16 %v849
    %v4605 = vunpack.c.h.b16 %v849
    %v4606 = vunpack.c.l.b16 %v850
    %v4607 = vunpack.c.h.b16 %v850
    %v4608 = vunpack.c.l.b16 %v851
    %v4609 = vunpack.c.h.b16 %v851
    %v4610 = vunpack.c.l.b16 %v852
    %v4611 = vunpack.c.h.b16 %v852
    %v4612 = vunpack.c.l.b16 %v853
    %v4613 = vunpack.c.h.b16 %v853
    %v4614 = vunpack.c.l.b16 %v854
    %v4615 = vunpack.c.h.b16 %v854
    %v4616 = vunpack.c.l.b16 %v855
    %v4617 = vunpack.c.h.b16 %v855
    %v4618 = vunpack.c.l.b16 %v856
    %v4619 = vunpack.c.h.b16 %v856
    %v4620 = vunpack.c.l.b16 %v857
    %v4621 = vunpack.c.h.b16 %v857
    %v4622 = vunpack.c.l.b16 %v858
    %v4623 = vunpack.c.h.b16 %v858
    %v4624 = vunpack.c.l.b16 %v859
    %v4625 = vunpack.c.h.b16 %v859
    %v4626 = vunpack.c.l.b16 %v860
    %v4627 = vunpack.c.h.b16 %v860
    %v4628 = vunpack.c.l.b16 %v861
    %v4629 = vunpack.c.h.b16 %v861
    %v4630 = vunpack.c.l.b16 %v862
    %v4631 = vunpack.c.h.b16 %v862
    %v4632 = vunpack.c.l.b16 %v863
    %v4633 = vunpack.c.h.b16 %v863
    %v4634 = vunpack.c.l.b16 %v864
    %v4635 = vunpack.c.h.b16 %v864
    %v4636 = vunpack.c.l.b16 %v865
    %v4637 = vunpack.c.h.b16 %v865
    %v4638 = vunpack.c.l.b16 %v866
    %v4639 = vunpack.c.h.b16 %v866
    %v4640 = vunpack.c.l.b16 %v867
    %v4641 = vunpack.c.h.b16 %v867
    %v4642 = vunpack.c.l.b16 %v868
    %v4643 = vunpack.c.h.b16 %v868
    %v4644 = vunpack.c.l.b16 %v869
    %v4645 = vunpack.c.h.b16 %v869
    %v4646 = vunpack.c.l.b16 %v870
    %v4647 = vunpack.c.h.b16 %v870
    %v4648 = vunpack.c.l.b16 %v871
    %v4649 = vunpack.c.h.b16 %v871
    %v4650 = vunpack.c.l.b16 %v872
    %v4651 = vunpack.c.h.b16 %v872
    %v4652 = vunpack.c.l.b16 %v873
    %v4653 = vunpack.c.h.b16 %v873
    %v4654 = vunpack.c.l.b16 %v874
    %v4655 = vunpack.c.h.b16 %v874
    %v4656 = vunpack.c.l.b16 %v875
    %v4657 = vunpack.c.h.b16 %v875
    %v4658 = vunpack.c.l.b16 %v876
    %v4659 = vunpack.c.h.b16 %v876
    %v4660 = vunpack.c.l.b16 %v877
    %v4661 = vunpack.c.h.b16 %v877
    %v4662 = vunpack.c.l.b16 %v878
    %v4663 = vunpack.c.h.b16 %v878
    %v4664 = vunpack.c.l.b16 %v879
    %v4665 = vunpack.c.h.b16 %v879
    %v4666 = vunpack.c.l.b16 %v880
    %v4667 = vunpack.c.h.b16 %v880
    %v4668 = vunpack.c.l.b16 %v881
    %v4669 = vunpack.c.h.b16 %v881
    %v4670 = vunpack.c.l.b16 %v882
    %v4671 = vunpack.c.h.b16 %v882
    %v4672 = vunpack.c.l.b16 %v883
    %v4673 = vunpack.c.h.b16 %v883
    %v4674 = vunpack.c.l.b16 %v884
    %v4675 = vunpack.c.h.b16 %v884
    %v4676 = vunpack.c.l.b16 %v885
    %v4677 = vunpack.c.h.b16 %v885
    %v4678 = vunpack.c.l.b16 %v886
    %v4679 = vunpack.c.h.b16 %v886
    %v4680 = vunpack.c.l.b16 %v887
    %v4681 = vunpack.c.h.b16 %v887
    %v4682 = vunpack.c.l.b16 %v888
    %v4683 = vunpack.c.h.b16 %v888
    %v4684 = vunpack.c.l.b16 %v889
    %v4685 = vunpack.c.h.b16 %v889
    %v4686 = vunpack.c.l.b16 %v890
    %v4687 = vunpack.c.h.b16 %v890
    %v4688 = vunpack.c.l.b16 %v891
    %v4689 = vunpack.c.h.b16 %v891
    %v4690 = vunpack.c.l.b16 %v892
    %v4691 = vunpack.c.h.b16 %v892
    %v4692 = vunpack.c.l.b16 %v893
    %v4693 = vunpack.c.h.b16 %v893
    %v4694 = vunpack.c.l.b16 %v894
    %v4695 = vunpack.c.h.b16 %v894
    %v4696 = vunpack.c.l.b16 %v895
    %v4697 = vunpack.c.h.b16 %v895
    %v4698 = vunpack.c.l.b16 %v896
    %v4699 = vunpack.c.h.b16 %v896
    %v4700 = vunpack.c.l.b16 %v897
    %v4701 = vunpack.c.h.b16 %v897
    %v4702 = vunpack.c.l.b16 %v898
    %v4703 = vunpack.c.h.b16 %v898
    %v4704 = vunpack.c.l.b16 %v899
    %v4705 = vunpack.c.h.b16 %v899
    %v4706 = vunpack.c.l.b16 %v900
    %v4707 = vunpack.c.h.b16 %v900
    %v4708 = vunpack.c.l.b16 %v901
    %v4709 = vunpack.c.h.b16 %v901
    %v4710 = vunpack.c.l.b16 %v902
    %v4711 = vunpack.c.h.b16 %v902
    %v4712 = vunpack.c.l.b16 %v903
    %v4713 = vunpack.c.h.b16 %v903
    %v4714 = vunpack.c.l.b16 %v904
    %v4715 = vunpack.c.h.b16 %v904
    %v4716 = vunpack.c.l.b16 %v905
    %v4717 = vunpack.c.h.b16 %v905
    %v4718 = vunpack.c.l.b16 %v906
    %v4719 = vunpack.c.h.b16 %v906
    %v4720 = vunpack.c.l.b16 %v907
    %v4721 = vunpack.c.h.b16 %v907
    %v4722 = vunpack.c.l.b16 %v908
    %v4723 = vunpack.c.h.b16 %v908
    %v4724 = vunpack.c.l.b16 %v909
    %v4725 = vunpack.c.h.b16 %v909
    %v4726 = vunpack.c.l.b16 %v910
    %v4727 = vunpack.c.h.b16 %v910
    %v4728 = vunpack.c.l.b16 %v911
    %v4729 = vunpack.c.h.b16 %v911
    %v4730 = vunpack.c.l.b16 %v912
    %v4731 = vunpack.c.h.b16 %v912
    %v4732 = vunpack.c.l.b16 %v913
    %v4733 = vunpack.c.h.b16 %v913
    %v4734 = vunpack.c.l.b16 %v914
    %v4735 = vunpack.c.h.b16 %v914
    %v4736 = vunpack.c.l.b16 %v915
    %v4737 = vunpack.c.h.b16 %v915
    %v4738 = vunpack.c.l.b16 %v916
    %v4739 = vunpack.c.h.b16 %v916
    %v4740 = vunpack.c.l.b16 %v917
    %v4741 = vunpack.c.h.b16 %v917
    %v4742 = vunpack.c.l.b16 %v918
    %v4743 = vunpack.c.h.b16 %v918
    %v4744 = vunpack.c.l.b16 %v919
    %v4745 = vunpack.c.h.b16 %v919
    %v4746 = vunpack.c.l.b16 %v920
    %v4747 = vunpack.c.h.b16 %v920
    %v4748 = vunpack.c.l.b16 %v921
    %v4749 = vunpack.c.h.b16 %v921
    %v4750 = vunpack.c.l.b16 %v922
    %v4751 = vunpack.c.h.b16 %v922
    %v4752 = vunpack.c.l.b16 %v923
    %v4753 = vunpack.c.h.b16 %v923
    %v4754 = vunpack.c.l.b16 %v924
    %v4755 = vunpack.c.h.b16 %v924
    %v4756 = vunpack.c.l.b16 %v925
    %v4757 = vunpack.c.h.b16 %v925
    %v4758 = vunpack.c.l.b16 %v926
    %v4759 = vunpack.c.h.b16 %v926
    %v4760 = vunpack.c.l.b16 %v927
    %v4761 = vunpack.c.h.b16 %v927
    %v4762 = vunpack.c.l.b16 %v928
    %v4763 = vunpack.c.h.b16 %v928
    %v4764 = vunpack.c.l.b16 %v929
    %v4765 = vunpack.c.h.b16 %v929
    %v4766 = vunpack.c.l.b16 %v930
    %v4767 = vunpack.c.h.b16 %v930
    %v4768 = vunpack.c.l.b16 %v931
    %v4769 = vunpack.c.h.b16 %v931
    %v4770 = vunpack.c.l.b16 %v932
    %v4771 = vunpack.c.h.b16 %v932
    %v4772 = vunpack.c.l.b16 %v933
    %v4773 = vunpack.c.h.b16 %v933
    %v4774 = vunpack.c.l.b16 %v934
    %v4775 = vunpack.c.h.b16 %v934
    %v4776 = vunpack.c.l.b16 %v935
    %v4777 = vunpack.c.h.b16 %v935
    %v4778 = vunpack.c.l.b16 %v936
    %v4779 = vunpack.c.h.b16 %v936
    %v4780 = vunpack.c.l.b16 %v937
    %v4781 = vunpack.c.h.b16 %v937
    %v4782 = vunpack.c.l.b16 %v938
    %v4783 = vunpack.c.h.b16 %v938
    %v4784 = vunpack.c.l.b16 %v939
    %v4785 = vunpack.c.h.b16 %v939
    %v4786 = vunpack.c.l.b16 %v940
    %v4787 = vunpack.c.h.b16 %v940
    %v4788 = vunpack.c.l.b16 %v941
    %v4789 = vunpack.c.h.b16 %v941
    %v4790 = vunpack.c.l.b16 %v942
    %v4791 = vunpack.c.h.b16 %v942
    %v4792 = vunpack.c.l.b16 %v943
    %v4793 = vunpack.c.h.b16 %v943
    %v4794 = vunpack.c.l.b16 %v944
    %v4795 = vunpack.c.h.b16 %v944
    %v4796 = vunpack.c.l.b16 %v945
    %v4797 = vunpack.c.h.b16 %v945
    %v4798 = vunpack.c.l.b16 %v946
    %v4799 = vunpack.c.h.b16 %v946
    %v4800 = vunpack.c.l.b16 %v947
    %v4801 = vunpack.c.h.b16 %v947
    %v4802 = vunpack.c.l.b16 %v948
    %v4803 = vunpack.c.h.b16 %v948
    %v4804 = vunpack.c.l.b16 %v949
    %v4805 = vunpack.c.h.b16 %v949
    %v4806 = vunpack.c.l.b16 %v950
    %v4807 = vunpack.c.h.b16 %v950
    %v4808 = vunpack.c.l.b16 %v951
    %v4809 = vunpack.c.h.b16 %v951
    %v4810 = vunpack.c.l.b16 %v952
    %v4811 = vunpack.c.h.b16 %v952
    %v4812 = vunpack.c.l.b16 %v953
    %v4813 = vunpack.c.h.b16 %v953
    %v4814 = vunpack.c.l.b16 %v954
    %v4815 = vunpack.c.h.b16 %v954
    %v4816 = vunpack.c.l.b16 %v955
    %v4817 = vunpack.c.h.b16 %v955
    %v4818 = vunpack.c.l.b16 %v956
    %v4819 = vunpack.c.h.b16 %v956
    %v4820 = vunpack.c.l.b16 %v957
    %v4821 = vunpack.c.h.b16 %v957
    %v4822 = vunpack.c.l.b16 %v958
    %v4823 = vunpack.c.h.b16 %v958
    %v4824 = vunpack.c.l.b16 %v959
    %v4825 = vunpack.c.h.b16 %v959
    %v4826 = vunpack.c.l.b16 %v960
    %v4827 = vunpack.c.h.b16 %v960
    %v4828 = vunpack.c.l.b16 %v961
    %v4829 = vunpack.c.h.b16 %v961
    %v4830 = vunpack.c.l.b16 %v962
    %v4831 = vunpack.c.h.b16 %v962
    %v4832 = vunpack.c.l.b16 %v963
    %v4833 = vunpack.c.h.b16 %v963
    %v4834 = vunpack.c.l.b16 %v964
    %v4835 = vunpack.c.h.b16 %v964
    %v4836 = vunpack.c.l.b16 %v965
    %v4837 = vunpack.c.h.b16 %v965
    %v4838 = vunpack.c.l.b16 %v966
    %v4839 = vunpack.c.h.b16 %v966
    %v4840 = vunpack.c.l.b16 %v967
    %v4841 = vunpack.c.h.b16 %v967
    %v4842 = vunpack.c.l.b16 %v968
    %v4843 = vunpack.c.h.b16 %v968
    %v4844 = vunpack.c.l.b16 %v969
    %v4845 = vunpack.c.h.b16 %v969
    %v4846 = vunpack.c.l.b16 %v970
    %v4847 = vunpack.c.h.b16 %v970
    %v4848 = vunpack.c.l.b16 %v971
    %v4849 = vunpack.c.h.b16 %v971
    %v4850 = vunpack.c.l.b16 %v972
    %v4851 = vunpack.c.h.b16 %v972
    %v4852 = vunpack.c.l.b16 %v973
    %v4853 = vunpack.c.h.b16 %v973
    %v4854 = vunpack.c.l.b16 %v974
    %v4855 = vunpack.c.h.b16 %v974
    %v4856 = vunpack.c.l.b16 %v975
    %v4857 = vunpack.c.h.b16 %v975
    %v4858 = vunpack.c.l.b16 %v976
    %v4859 = vunpack.c.h.b16 %v976
    %v4860 = vunpack.c.l.b16 %v977
    %v4861 = vunpack.c.h.b16 %v977
    %v4862 = vunpack.c.l.b16 %v978
    %v4863 = vunpack.c.h.b16 %v978
    %v4864 = vunpack.c.l.b16 %v979
    %v4865 = vunpack.c.h.b16 %v979
    %v4866 = vunpack.c.l.b16 %v980
    %v4867 = vunpack.c.h.b16 %v980
    %v4868 = vunpack.c.l.b16 %v981
    %v4869 = vunpack.c.h.b16 %v981
    %v4870 = vunpack.c.l.b16 %v982
    %v4871 = vunpack.c.h.b16 %v982
    %v4872 = vunpack.c.l.b16 %v983
    %v4873 = vunpack.c.h.b16 %v983
    %v4874 = vunpack.c.l.b16 %v984
    %v4875 = vunpack.c.h.b16 %v984
    %v4876 = vunpack.c.l.b16 %v985
    %v4877 = vunpack.c.h.b16 %v985
    %v4878 = vunpack.c.l.b16 %v986
    %v4879 = vunpack.c.h.b16 %v986
    %v4880 = vunpack.c.l.b16 %v987
    %v4881 = vunpack.c.h.b16 %v987
    %v4882 = vunpack.c.l.b16 %v988
    %v4883 = vunpack.c.h.b16 %v988
    %v4884 = vunpack.c.l.b16 %v989
    %v4885 = vunpack.c.h.b16 %v989
    %v4886 = vunpack.c.l.b16 %v990
    %v4887 = vunpack.c.h.b16 %v990
    %v4888 = vunpack.c.l.b16 %v991
    %v4889 = vunpack.c.h.b16 %v991
    %v4890 = vunpack.c.l.b16 %v992
    %v4891 = vunpack.c.h.b16 %v992
    %v4892 = vunpack.c.l.b16 %v993
    %v4893 = vunpack.c.h.b16 %v993
    %v4894 = vunpack.c.l.b16 %v994
    %v4895 = vunpack.c.h.b16 %v994
    %v4896 = vunpack.c.l.b16 %v995
    %v4897 = vunpack.c.h.b16 %v995
    %v4898 = vunpack.c.l.b16 %v996
    %v4899 = vunpack.c.h.b16 %v996
    %v4900 = vunpack.c.l.b16 %v997
    %v4901 = vunpack.c.h.b16 %v997
    %v4902 = vunpack.c.l.b16 %v998
    %v4903 = vunpack.c.h.b16 %v998
    %v4904 = vunpack.c.l.b16 %v999
    %v4905 = vunpack.c.h.b16 %v999
    %v4906 = vunpack.c.l.b16 %v1000
    %v4907 = vunpack.c.h.b16 %v1000
    %v4908 = vunpack.c.l.b16 %v1001
    %v4909 = vunpack.c.h.b16 %v1001
    %v4910 = vunpack.c.l.b16 %v1002
    %v4911 = vunpack.c.h.b16 %v1002
    %v4912 = vunpack.c.l.b16 %v1003
    %v4913 = vunpack.c.h.b16 %v1003
    %v4914 = vunpack.c.l.b16 %v1004
    %v4915 = vunpack.c.h.b16 %v1004
    %v4916 = vunpack.c.l.b16 %v1005
    %v4917 = vunpack.c.h.b16 %v1005
    %v4918 = vunpack.c.l.b16 %v1006
    %v4919 = vunpack.c.h.b16 %v1006
    %v4920 = vunpack.c.l.b16 %v1007
    %v4921 = vunpack.c.h.b16 %v1007
    %v4922 = vunpack.c.l.b16 %v1008
    %v4923 = vunpack.c.h.b16 %v1008
    %v4924 = vunpack.c.l.b16 %v1009
    %v4925 = vunpack.c.h.b16 %v1009
    %v4926 = vunpack.c.l.b16 %v1010
    %v4927 = vunpack.c.h.b16 %v1010
    %v4928 = vunpack.c.l.b16 %v1011
    %v4929 = vunpack.c.h.b16 %v1011
    %v4930 = vunpack.c.l.b16 %v1012
    %v4931 = vunpack.c.h.b16 %v1012
    %v4932 = vunpack.c.l.b16 %v1013
    %v4933 = vunpack.c.h.b16 %v1013
    %v4934 = vunpack.c.l.b16 %v1014
    %v4935 = vunpack.c.h.b16 %v1014
    %v4936 = vunpack.c.l.b16 %v1015
    %v4937 = vunpack.c.h.b16 %v1015
    %v4938 = vunpack.c.l.b16 %v1016
    %v4939 = vunpack.c.h.b16 %v1016
    %v4940 = vunpack.c.l.b16 %v1017
    %v4941 = vunpack.c.h.b16 %v1017
    %v4942 = vunpack.c.l.b16 %v1018
    %v4943 = vunpack.c.h.b16 %v1018
    %v4944 = vunpack.c.l.b16 %v1019
    %v4945 = vunpack.c.h.b16 %v1019
    %v4946 = vunpack.c.l.b16 %v1020
    %v4947 = vunpack.c.h.b16 %v1020
    %v4948 = vunpack.c.l.b16 %v1021
    %v4949 = vunpack.c.h.b16 %v1021
    %v4950 = vunpack.c.l.b16 %v1022
    %v4951 = vunpack.c.h.b16 %v1022
    %v4952 = vunpack.c.l.b16 %v1023
    %v4953 = vunpack.c.h.b16 %v1023
    %v4954 = vunpack.c.l.b16 %v1024
    %v4955 = vunpack.c.h.b16 %v1024
    %v4956 = vunpack.c.l.b16 %v1025
    %v4957 = vunpack.c.h.b16 %v1025
    %v4958 = vunpack.c.l.b16 %v1026
    %v4959 = vunpack.c.h.b16 %v1026
    %v4960 = vunpack.c.l.b16 %v1027
    %v4961 = vunpack.c.h.b16 %v1027
    %v4962 = vunpack.c.l.b16 %v1028
    %v4963 = vunpack.c.h.b16 %v1028
    %v4964 = vunpack.c.l.b16 %v1029
    %v4965 = vunpack.c.h.b16 %v1029
    %v4966 = vunpack.c.l.b16 %v1030
    %v4967 = vunpack.c.h.b16 %v1030
    %v4968 = vunpack.c.l.b16 %v1031
    %v4969 = vunpack.c.h.b16 %v1031
    %v4970 = vunpack.c.l.b16 %v1032
    %v4971 = vunpack.c.h.b16 %v1032
    %v4972 = vunpack.c.l.b16 %v1033
    %v4973 = vunpack.c.h.b16 %v1033
    %v4974 = vunpack.c.l.b16 %v1034
    %v4975 = vunpack.c.h.b16 %v1034
    %v4976 = vunpack.c.l.b16 %v1035
    %v4977 = vunpack.c.h.b16 %v1035
    %v4978 = vunpack.c.l.b16 %v1036
    %v4979 = vunpack.c.h.b16 %v1036
    %v4980 = vunpack.c.l.b16 %v1037
    %v4981 = vunpack.c.h.b16 %v1037
    %v4982 = vunpack.c.l.b16 %v1038
    %v4983 = vunpack.c.h.b16 %v1038
    %v4984 = vunpack.c.l.b16 %v1039
    %v4985 = vunpack.c.h.b16 %v1039
    %v4986 = vunpack.c.l.b16 %v1040
    %v4987 = vunpack.c.h.b16 %v1040
    %v4988 = vunpack.c.l.b16 %v1041
    %v4989 = vunpack.c.h.b16 %v1041
    %v4990 = vunpack.c.l.b16 %v1042
    %v4991 = vunpack.c.h.b16 %v1042
    %v4992 = vunpack.c.l.b16 %v1043
    %v4993 = vunpack.c.h.b16 %v1043
    %v4994 = vunpack.c.l.b16 %v1044
    %v4995 = vunpack.c.h.b16 %v1044
    %v4996 = vunpack.c.l.b16 %v1045
    %v4997 = vunpack.c.h.b16 %v1045
    %v4998 = vunpack.c.l.b16 %v1046
    %v4999 = vunpack.c.h.b16 %v1046
    %v5000 = vunpack.c.l.b16 %v1047
    %v5001 = vunpack.c.h.b16 %v1047
    %v5002 = vunpack.c.l.b16 %v1048
    %v5003 = vunpack.c.h.b16 %v1048
    %v5004 = vunpack.c.l.b16 %v1049
    %v5005 = vunpack.c.h.b16 %v1049
    %v5006 = vunpack.c.l.b16 %v1050
    %v5007 = vunpack.c.h.b16 %v1050
    %v5008 = vunpack.c.l.b16 %v1051
    %v5009 = vunpack.c.h.b16 %v1051
    %v5010 = vunpack.c.l.b16 %v1052
    %v5011 = vunpack.c.h.b16 %v1052
    %v5012 = vunpack.c.l.b16 %v1053
    %v5013 = vunpack.c.h.b16 %v1053
    %v5014 = vunpack.c.l.b16 %v1054
    %v5015 = vunpack.c.h.b16 %v1054
    %v5016 = vunpack.c.l.b16 %v1055
    %v5017 = vunpack.c.h.b16 %v1055
    %v5018 = vunpack.c.l.b16 %v1056
    %v5019 = vunpack.c.h.b16 %v1056
    %v5020 = vunpack.c.l.b16 %v1057
    %v5021 = vunpack.c.h.b16 %v1057
    %v5022 = vunpack.c.l.b16 %v1058
    %v5023 = vunpack.c.h.b16 %v1058
    %v5024 = vunpack.c.l.b16 %v1059
    %v5025 = vunpack.c.h.b16 %v1059
    %v5026 = vunpack.c.l.b16 %v1060
    %v5027 = vunpack.c.h.b16 %v1060
    %v5028 = vunpack.c.l.b16 %v1061
    %v5029 = vunpack.c.h.b16 %v1061
    %v5030 = vunpack.c.l.b16 %v1062
    %v5031 = vunpack.c.h.b16 %v1062
    %v5032 = vunpack.c.l.b16 %v1063
    %v5033 = vunpack.c.h.b16 %v1063
    %v5034 = vunpack.c.l.b16 %v1064
    %v5035 = vunpack.c.h.b16 %v1064
    %v5036 = vunpack.c.l.b16 %v1065
    %v5037 = vunpack.c.h.b16 %v1065
    %v5038 = vunpack.c.l.b16 %v1066
    %v5039 = vunpack.c.h.b16 %v1066
    %v5040 = vunpack.c.l.b16 %v1067
    %v5041 = vunpack.c.h.b16 %v1067
    %v5042 = vunpack.c.l.b16 %v1068
    %v5043 = vunpack.c.h.b16 %v1068
    %v5044 = vunpack.c.l.b16 %v1069
    %v5045 = vunpack.c.h.b16 %v1069
    %v5046 = vunpack.c.l.b16 %v1070
    %v5047 = vunpack.c.h.b16 %v1070
    %v5048 = vunpack.c.l.b16 %v1071
    %v5049 = vunpack.c.h.b16 %v1071
    %v5050 = vunpack.c.l.b16 %v1072
    %v5051 = vunpack.c.h.b16 %v1072
    %v5052 = vunpack.c.l.b16 %v1073
    %v5053 = vunpack.c.h.b16 %v1073
    %v5054 = vunpack.c.l.b16 %v1074
    %v5055 = vunpack.c.h.b16 %v1074
    %v5056 = vunpack.c.l.b16 %v1075
    %v5057 = vunpack.c.h.b16 %v1075
    %v5058 = vunpack.c.l.b16 %v1076
    %v5059 = vunpack.c.h.b16 %v1076
    %v5060 = vunpack.c.l.b16 %v1077
    %v5061 = vunpack.c.h.b16 %v1077
    %v5062 = vunpack.c.l.b16 %v1078
    %v5063 = vunpack.c.h.b16 %v1078
    %v5064 = vunpack.c.l.b16 %v1079
    %v5065 = vunpack.c.h.b16 %v1079
    %v5066 = vunpack.c.l.b16 %v1080
    %v5067 = vunpack.c.h.b16 %v1080
    %v5068 = vunpack.c.l.b16 %v1081
    %v5069 = vunpack.c.h.b16 %v1081
    %v5070 = vunpack.c.l.b16 %v1082
    %v5071 = vunpack.c.h.b16 %v1082
    %v5072 = vunpack.c.l.b16 %v1083
    %v5073 = vunpack.c.h.b16 %v1083
    %v5074 = vunpack.c.l.b16 %v1084
    %v5075 = vunpack.c.h.b16 %v1084
    %v5076 = vunpack.c.l.b16 %v1085
    %v5077 = vunpack.c.h.b16 %v1085
    %v5078 = vunpack.c.l.b16 %v1086
    %v5079 = vunpack.c.h.b16 %v1086
    %v5080 = vunpack.c.l.b16 %v1087
    %v5081 = vunpack.c.h.b16 %v1087
    %v5082 = vunpack.c.l.b16 %v1088
    %v5083 = vunpack.c.h.b16 %v1088
    %v5084 = vunpack.c.l.b16 %v1089
    %v5085 = vunpack.c.h.b16 %v1089
    %v5086 = vunpack.c.l.b16 %v1090
    %v5087 = vunpack.c.h.b16 %v1090
    %v5088 = vunpack.c.l.b16 %v1091
    %v5089 = vunpack.c.h.b16 %v1091
    %v5090 = vunpack.c.l.b16 %v1092
    %v5091 = vunpack.c.h.b16 %v1092
    %v5092 = vunpack.c.l.b16 %v1093
    %v5093 = vunpack.c.h.b16 %v1093
    %v5094 = vunpack.c.l.b16 %v1094
    %v5095 = vunpack.c.h.b16 %v1094
    %v5096 = vunpack.c.l.b16 %v1095
    %v5097 = vunpack.c.h.b16 %v1095
    %v5098 = vunpack.c.l.b16 %v1096
    %v5099 = vunpack.c.h.b16 %v1096
    %v5100 = vunpack.c.l.b16 %v1097
    %v5101 = vunpack.c.h.b16 %v1097
    %v5102 = vunpack.c.l.b16 %v1098
    %v5103 = vunpack.c.h.b16 %v1098
    %v5104 = vunpack.c.l.b16 %v1099
    %v5105 = vunpack.c.h.b16 %v1099
    %v5106 = vunpack.c.l.b16 %v1100
    %v5107 = vunpack.c.h.b16 %v1100
    %v5108 = vunpack.c.l.b16 %v1101
    %v5109 = vunpack.c.h.b16 %v1101
    %v5110 = vunpack.c.l.b16 %v1102
    %v5111 = vunpack.c.h.b16 %v1102
    %v5112 = vunpack.c.l.b16 %v1103
    %v5113 = vunpack.c.h.b16 %v1103
    %v5114 = vunpack.c.l.b16 %v1104
    %v5115 = vunpack.c.h.b16 %v1104
    %v5116 = vunpack.c.l.b16 %v1105
    %v5117 = vunpack.c.h.b16 %v1105
    %v5118 = vunpack.c.l.b16 %v1106
    %v5119 = vunpack.c.h.b16 %v1106
    %v5120 = vunpack.c.l.b16 %v1107
    %v5121 = vunpack.c.h.b16 %v1107
    %v5122 = vunpack.c.l.b16 %v1108
    %v5123 = vunpack.c.h.b16 %v1108
    %v5124 = vunpack.c.l.b16 %v1109
    %v5125 = vunpack.c.h.b16 %v1109
    %v5126 = vunpack.c.l.b16 %v1110
    %v5127 = vunpack.c.h.b16 %v1110
    %v5128 = vunpack.c.l.b16 %v1111
    %v5129 = vunpack.c.h.b16 %v1111
    %v5130 = vunpack.c.l.b16 %v1112
    %v5131 = vunpack.c.h.b16 %v1112
    %v5132 = vunpack.c.l.b16 %v1113
    %v5133 = vunpack.c.h.b16 %v1113
    %v5134 = vunpack.c.l.b16 %v1114
    %v5135 = vunpack.c.h.b16 %v1114
    %v5136 = vunpack.c.l.b16 %v1115
    %v5137 = vunpack.c.h.b16 %v1115
    %v5138 = vunpack.c.l.b16 %v1116
    %v5139 = vunpack.c.h.b16 %v1116
    %v5140 = vunpack.c.l.b16 %v1117
    %v5141 = vunpack.c.h.b16 %v1117
    %v5142 = vunpack.c.l.b16 %v1118
    %v5143 = vunpack.c.h.b16 %v1118
    %v5144 = vunpack.c.l.b16 %v1119
    %v5145 = vunpack.c.h.b16 %v1119
    %v5146 = vunpack.c.l.b16 %v1120
    %v5147 = vunpack.c.h.b16 %v1120
    %v5148 = vunpack.c.l.b16 %v1121
    %v5149 = vunpack.c.h.b16 %v1121
    %v5150 = vunpack.c.l.b16 %v1122
    %v5151 = vunpack.c.h.b16 %v1122
    %v5152 = vunpack.c.l.b16 %v1123
    %v5153 = vunpack.c.h.b16 %v1123
    %v5154 = vunpack.c.l.b16 %v1124
    %v5155 = vunpack.c.h.b16 %v1124
    %v5156 = vunpack.c.l.b16 %v1125
    %v5157 = vunpack.c.h.b16 %v1125
    %v5158 = vunpack.c.l.b16 %v1126
    %v5159 = vunpack.c.h.b16 %v1126
    %v5160 = vunpack.c.l.b16 %v1127
    %v5161 = vunpack.c.h.b16 %v1127
    %v5162 = vunpack.c.l.b16 %v1128
    %v5163 = vunpack.c.h.b16 %v1128
    %v5164 = vunpack.c.l.b16 %v1129
    %v5165 = vunpack.c.h.b16 %v1129
    %v5166 = vunpack.c.l.b16 %v1130
    %v5167 = vunpack.c.h.b16 %v1130
    %v5168 = vunpack.c.l.b16 %v1131
    %v5169 = vunpack.c.h.b16 %v1131
    %v5170 = vunpack.c.l.b16 %v1132
    %v5171 = vunpack.c.h.b16 %v1132
    %v5172 = vunpack.c.l.b16 %v1133
    %v5173 = vunpack.c.h.b16 %v1133
    %v5174 = vunpack.c.l.b16 %v1134
    %v5175 = vunpack.c.h.b16 %v1134
    %v5176 = vunpack.c.l.b16 %v1135
    %v5177 = vunpack.c.h.b16 %v1135
    %v5178 = vunpack.c.l.b16 %v1136
    %v5179 = vunpack.c.h.b16 %v1136
    %v5180 = vunpack.c.l.b16 %v1137
    %v5181 = vunpack.c.h.b16 %v1137
    %v5182 = vunpack.c.l.b16 %v1138
    %v5183 = vunpack.c.h.b16 %v1138
    %v5184 = vunpack.c.l.b16 %v1139
    %v5185 = vunpack.c.h.b16 %v1139
    %v5186 = vunpack.c.l.b16 %v1140
    %v5187 = vunpack.c.h.b16 %v1140
    %v5188 = vunpack.c.l.b16 %v1141
    %v5189 = vunpack.c.h.b16 %v1141
    %v5190 = vunpack.c.l.b16 %v1142
    %v5191 = vunpack.c.h.b16 %v1142
    %v5192 = vunpack.c.l.b16 %v1143
    %v5193 = vunpack.c.h.b16 %v1143
    %v5194 = vunpack.c.l.b16 %v1144
    %v5195 = vunpack.c.h.b16 %v1144
    %v5196 = vunpack.c.l.b16 %v1145
    %v5197 = vunpack.c.h.b16 %v1145
    %v5198 = vunpack.c.l.b16 %v1146
    %v5199 = vunpack.c.h.b16 %v1146
    %v5200 = vunpack.c.l.b16 %v1147
    %v5201 = vunpack.c.h.b16 %v1147
    %v5202 = vunpack.c.l.b16 %v1148
    %v5203 = vunpack.c.h.b16 %v1148
    %v5204 = vunpack.c.l.b16 %v1149
    %v5205 = vunpack.c.h.b16 %v1149
    %v5206 = vunpack.c.l.b16 %v1150
    %v5207 = vunpack.c.h.b16 %v1150
    %v5208 = vunpack.c.l.b16 %v1151
    %v5209 = vunpack.c.h.b16 %v1151
    %v5210 = vunpack.c.l.b16 %v1152
    %v5211 = vunpack.c.h.b16 %v1152
    %v5212 = vunpack.c.l.b16 %v1153
    %v5213 = vunpack.c.h.b16 %v1153
    %v5214 = vunpack.c.l.b16 %v1154
    %v5215 = vunpack.c.h.b16 %v1154
    %v5216 = vunpack.c.l.b16 %v1155
    %v5217 = vunpack.c.h.b16 %v1155
    %v5218 = vunpack.c.l.b16 %v1156
    %v5219 = vunpack.c.h.b16 %v1156
    %v5220 = vunpack.c.l.b16 %v1157
    %v5221 = vunpack.c.h.b16 %v1157
    %v5222 = vunpack.c.l.b16 %v1158
    %v5223 = vunpack.c.h.b16 %v1158
    %v5224 = vunpack.c.l.b16 %v1159
    %v5225 = vunpack.c.h.b16 %v1159
    %v5226 = vunpack.c.l.b16 %v1160
    %v5227 = vunpack.c.h.b16 %v1160
    %v5228 = vunpack.c.l.b16 %v1161
    %v5229 = vunpack.c.h.b16 %v1161
    %v5230 = vunpack.c.l.b16 %v1162
    %v5231 = vunpack.c.h.b16 %v1162
    %v5232 = vunpack.c.l.b16 %v1163
    %v5233 = vunpack.c.h.b16 %v1163
    %v5234 = vunpack.c.l.b16 %v1164
    %v5235 = vunpack.c.h.b16 %v1164
    %v5236 = vunpack.c.l.b16 %v1165
    %v5237 = vunpack.c.h.b16 %v1165
    %v5238 = vunpack.c.l.b16 %v1166
    %v5239 = vunpack.c.h.b16 %v1166
    %v5240 = vunpack.c.l.b16 %v1167
    %v5241 = vunpack.c.h.b16 %v1167
    %v5242 = vunpack.c.l.b16 %v1168
    %v5243 = vunpack.c.h.b16 %v1168
    %v5244 = vunpack.c.l.b16 %v1169
    %v5245 = vunpack.c.h.b16 %v1169
    %v5246 = vunpack.c.l.b16 %v1170
    %v5247 = vunpack.c.h.b16 %v1170
    %v5248 = vunpack.c.l.b16 %v1171
    %v5249 = vunpack.c.h.b16 %v1171
    %v5250 = vunpack.c.l.b16 %v1172
    %v5251 = vunpack.c.h.b16 %v1172
    %v5252 = vunpack.c.l.b16 %v1173
    %v5253 = vunpack.c.h.b16 %v1173
    %v5254 = vunpack.c.l.b16 %v1174
    %v5255 = vunpack.c.h.b16 %v1174
    %v5256 = vunpack.c.l.b16 %v1175
    %v5257 = vunpack.c.h.b16 %v1175
    %v5258 = vunpack.c.l.b16 %v1176
    %v5259 = vunpack.c.h.b16 %v1176
    %v5260 = vunpack.c.l.b16 %v1177
    %v5261 = vunpack.c.h.b16 %v1177
    %v5262 = vunpack.c.l.b16 %v1178
    %v5263 = vunpack.c.h.b16 %v1178
    %v5264 = vunpack.c.l.b16 %v1179
    %v5265 = vunpack.c.h.b16 %v1179
    %v5266 = vunpack.c.l.b16 %v1180
    %v5267 = vunpack.c.h.b16 %v1180
    %v5268 = vunpack.c.l.b16 %v1181
    %v5269 = vunpack.c.h.b16 %v1181
    %v5270 = vunpack.c.l.b16 %v1182
    %v5271 = vunpack.c.h.b16 %v1182
    %v5272 = vunpack.c.l.b16 %v1183
    %v5273 = vunpack.c.h.b16 %v1183
    %v5274 = vunpack.c.l.b16 %v1184
    %v5275 = vunpack.c.h.b16 %v1184
    %v5276 = vunpack.c.l.b16 %v1185
    %v5277 = vunpack.c.h.b16 %v1185
    %v5278 = vunpack.c.l.b16 %v1186
    %v5279 = vunpack.c.h.b16 %v1186
    %v5280 = vunpack.c.l.b16 %v1187
    %v5281 = vunpack.c.h.b16 %v1187
    %v5282 = vunpack.c.l.b16 %v1188
    %v5283 = vunpack.c.h.b16 %v1188
    %v5284 = vunpack.c.l.b16 %v1189
    %v5285 = vunpack.c.h.b16 %v1189
    %v5286 = vunpack.c.l.b16 %v1190
    %v5287 = vunpack.c.h.b16 %v1190
    %v5288 = vunpack.c.l.b16 %v1191
    %v5289 = vunpack.c.h.b16 %v1191
    %v5290 = vunpack.c.l.b16 %v1192
    %v5291 = vunpack.c.h.b16 %v1192
    %v5292 = vunpack.c.l.b16 %v1193
    %v5293 = vunpack.c.h.b16 %v1193
    %v5294 = vunpack.c.l.b16 %v1194
    %v5295 = vunpack.c.h.b16 %v1194
    %v5296 = vunpack.c.l.b16 %v1195
    %v5297 = vunpack.c.h.b16 %v1195
    %v5298 = vunpack.c.l.b16 %v1196
    %v5299 = vunpack.c.h.b16 %v1196
    %v5300 = vunpack.c.l.b16 %v1197
    %v5301 = vunpack.c.h.b16 %v1197
    %v5302 = vunpack.c.l.b16 %v1198
    %v5303 = vunpack.c.h.b16 %v1198
    %v5304 = vunpack.c.l.b16 %v1199
    %v5305 = vunpack.c.h.b16 %v1199
    %v5306 = vunpack.c.l.b16 %v1200
    %v5307 = vunpack.c.h.b16 %v1200
    %v5308 = vunpack.c.l.b16 %v1201
    %v5309 = vunpack.c.h.b16 %v1201
    %v5310 = vunpack.c.l.b16 %v1202
    %v5311 = vunpack.c.h.b16 %v1202
    %v5312 = vunpack.c.l.b16 %v1203
    %v5313 = vunpack.c.h.b16 %v1203
    %v5314 = vunpack.c.l.b16 %v1204
    %v5315 = vunpack.c.h.b16 %v1204
    %v5316 = vunpack.c.l.b16 %v1205
    %v5317 = vunpack.c.h.b16 %v1205
    %v5318 = vunpack.c.l.b16 %v1206
    %v5319 = vunpack.c.h.b16 %v1206
    %v5320 = vunpack.c.l.b16 %v1207
    %v5321 = vunpack.c.h.b16 %v1207
    %v5322 = vunpack.c.l.b16 %v1208
    %v5323 = vunpack.c.h.b16 %v1208
    %v5324 = vunpack.c.l.b16 %v1209
    %v5325 = vunpack.c.h.b16 %v1209
    %v5326 = vunpack.c.l.b16 %v1210
    %v5327 = vunpack.c.h.b16 %v1210
    %v5328 = vunpack.c.l.b16 %v1211
    %v5329 = vunpack.c.h.b16 %v1211
    %v5330 = vunpack.c.l.b16 %v1212
    %v5331 = vunpack.c.h.b16 %v1212
    %v5332 = vunpack.c.l.b16 %v1213
    %v5333 = vunpack.c.h.b16 %v1213
    %v5334 = vunpack.c.l.b16 %v1214
    %v5335 = vunpack.c.h.b16 %v1214
    %v5336 = vunpack.c.l.b16 %v1215
    %v5337 = vunpack.c.h.b16 %v1215
    %v5338 = vunpack.c.l.b16 %v1216
    %v5339 = vunpack.c.h.b16 %v1216
    %v5340 = vunpack.c.l.b16 %v1217
    %v5341 = vunpack.c.h.b16 %v1217
    %v5342 = vunpack.c.l.b16 %v1218
    %v5343 = vunpack.c.h.b16 %v1218
    %v5344 = vunpack.c.l.b16 %v1219
    %v5345 = vunpack.c.h.b16 %v1219
    %v5346 = vunpack.c.l.b16 %v1220
    %v5347 = vunpack.c.h.b16 %v1220
    %v5348 = vunpack.c.l.b16 %v1221
    %v5349 = vunpack.c.h.b16 %v1221
    %v5350 = vunpack.c.l.b16 %v1222
    %v5351 = vunpack.c.h.b16 %v1222
    %v5352 = vunpack.c.l.b16 %v1223
    %v5353 = vunpack.c.h.b16 %v1223
    %v5354 = vunpack.c.l.b16 %v1224
    %v5355 = vunpack.c.h.b16 %v1224
    %v5356 = vunpack.c.l.b16 %v1225
    %v5357 = vunpack.c.h.b16 %v1225
    %v5358 = vunpack.c.l.b16 %v1226
    %v5359 = vunpack.c.h.b16 %v1226
    %v5360 = vunpack.c.l.b16 %v1227
    %v5361 = vunpack.c.h.b16 %v1227
    %v5362 = vunpack.c.l.b16 %v1228
    %v5363 = vunpack.c.h.b16 %v1228
    %v5364 = vunpack.c.l.b16 %v1229
    %v5365 = vunpack.c.h.b16 %v1229
    %v5366 = vunpack.c.l.b16 %v1230
    %v5367 = vunpack.c.h.b16 %v1230
    %v5368 = vunpack.c.l.b16 %v1231
    %v5369 = vunpack.c.h.b16 %v1231
    %v5370 = vunpack.c.l.b16 %v1232
    %v5371 = vunpack.c.h.b16 %v1232
    %v5372 = vunpack.c.l.b16 %v1233
    %v5373 = vunpack.c.h.b16 %v1233
    %v5374 = vunpack.c.l.b16 %v1234
    %v5375 = vunpack.c.h.b16 %v1234
    %v5376 = vunpack.c.l.b16 %v1235
    %v5377 = vunpack.c.h.b16 %v1235
    %v5378 = vunpack.c.l.b16 %v1236
    %v5379 = vunpack.c.h.b16 %v1236
    %v5380 = vunpack.c.l.b16 %v1237
    %v5381 = vunpack.c.h.b16 %v1237
    %v5382 = vunpack.c.l.b16 %v1238
    %v5383 = vunpack.c.h.b16 %v1238
    %v5384 = vunpack.c.l.b16 %v1239
    %v5385 = vunpack.c.h.b16 %v1239
    %v5386 = vunpack.c.l.b16 %v1240
    %v5387 = vunpack.c.h.b16 %v1240
    %v5388 = vunpack.c.l.b16 %v1241
    %v5389 = vunpack.c.h.b16 %v1241
    %v5390 = vunpack.c.l.b16 %v1242
    %v5391 = vunpack.c.h.b16 %v1242
    %v5392 = vunpack.c.l.b16 %v1243
    %v5393 = vunpack.c.h.b16 %v1243
    %v5394 = vunpack.c.l.b16 %v1244
    %v5395 = vunpack.c.h.b16 %v1244
    %v5396 = vunpack.c.l.b16 %v1245
    %v5397 = vunpack.c.h.b16 %v1245
    %v5398 = vunpack.c.l.b16 %v1246
    %v5399 = vunpack.c.h.b16 %v1246
    %v5400 = vunpack.c.l.b16 %v1247
    %v5401 = vunpack.c.h.b16 %v1247
    %v5402 = vunpack.c.l.b16 %v1248
    %v5403 = vunpack.c.h.b16 %v1248
    %v5404 = vunpack.c.l.b16 %v1249
    %v5405 = vunpack.c.h.b16 %v1249
    %v5406 = vunpack.c.l.b16 %v1250
    %v5407 = vunpack.c.h.b16 %v1250
    %v5408 = vunpack.c.l.b16 %v1251
    %v5409 = vunpack.c.h.b16 %v1251
    %v5410 = vunpack.c.l.b16 %v1252
    %v5411 = vunpack.c.h.b16 %v1252
    %v5412 = vunpack.c.l.b16 %v1253
    %v5413 = vunpack.c.h.b16 %v1253
    %v5414 = vunpack.c.l.b16 %v1254
    %v5415 = vunpack.c.h.b16 %v1254
    %v5416 = vunpack.c.l.b16 %v1255
    %v5417 = vunpack.c.h.b16 %v1255
    %v5418 = vunpack.c.l.b16 %v1256
    %v5419 = vunpack.c.h.b16 %v1256
    %v5420 = vunpack.c.l.b16 %v1257
    %v5421 = vunpack.c.h.b16 %v1257
    %v5422 = vunpack.c.l.b16 %v1258
    %v5423 = vunpack.c.h.b16 %v1258
    %v5424 = vunpack.c.l.b16 %v1259
    %v5425 = vunpack.c.h.b16 %v1259
    %v5426 = vunpack.c.l.b16 %v1260
    %v5427 = vunpack.c.h.b16 %v1260
    %v5428 = vunpack.c.l.b16 %v1261
    %v5429 = vunpack.c.h.b16 %v1261
    %v5430 = vunpack.c.l.b16 %v1262
    %v5431 = vunpack.c.h.b16 %v1262
    %v5432 = vunpack.c.l.b16 %v1263
    %v5433 = vunpack.c.h.b16 %v1263
    %v5434 = vunpack.c.l.b16 %v1264
    %v5435 = vunpack.c.h.b16 %v1264
    %v5436 = vunpack.c.l.b16 %v1265
    %v5437 = vunpack.c.h.b16 %v1265
    %v5438 = vunpack.c.l.b16 %v1266
    %v5439 = vunpack.c.h.b16 %v1266
    %v5440 = vunpack.c.l.b16 %v1267
    %v5441 = vunpack.c.h.b16 %v1267
    %v5442 = vunpack.c.l.b16 %v1268
    %v5443 = vunpack.c.h.b16 %v1268
    %v5444 = vunpack.c.l.b16 %v1269
    %v5445 = vunpack.c.h.b16 %v1269
    %v5446 = vunpack.c.l.b16 %v1270
    %v5447 = vunpack.c.h.b16 %v1270
    %v5448 = vunpack.c.l.b16 %v1271
    %v5449 = vunpack.c.h.b16 %v1271
    %v5450 = vunpack.c.l.b16 %v1272
    %v5451 = vunpack.c.h.b16 %v1272
    %v5452 = vunpack.c.l.b16 %v1273
    %v5453 = vunpack.c.h.b16 %v1273
    %v5454 = vunpack.c.l.b16 %v1274
    %v5455 = vunpack.c.h.b16 %v1274
    %v5456 = vunpack.c.l.b16 %v1275
    %v5457 = vunpack.c.h.b16 %v1275
    %v5458 = vunpack.c.l.b16 %v1276
    %v5459 = vunpack.c.h.b16 %v1276
    %v5460 = vunpack.c.l.b16 %v1277
    %v5461 = vunpack.c.h.b16 %v1277
    %v5462 = vunpack.c.l.b16 %v1278
    %v5463 = vunpack.c.h.b16 %v1278
    %v5464 = vunpack.c.l.b16 %v1279
    %v5465 = vunpack.c.h.b16 %v1279
    %v5466 = vunpack.c.l.b16 %v1280
    %v5467 = vunpack.c.h.b16 %v1280
    %v5468 = vunpack.c.l.b16 %v1281
    %v5469 = vunpack.c.h.b16 %v1281
    %v5470 = vunpack.c.l.b16 %v1282
    %v5471 = vunpack.c.h.b16 %v1282
    %v5472 = vunpack.c.l.b16 %v1283
    %v5473 = vunpack.c.h.b16 %v1283
    %v5474 = vunpack.c.l.b16 %v1284
    %v5475 = vunpack.c.h.b16 %v1284
    %v5476 = vunpack.c.l.b16 %v1285
    %v5477 = vunpack.c.h.b16 %v1285
    %v5478 = vunpack.c.l.b16 %v1286
    %v5479 = vunpack.c.h.b16 %v1286
    %v5480 = vunpack.c.l.b16 %v1287
    %v5481 = vunpack.c.h.b16 %v1287
    %v5482 = vunpack.c.l.b16 %v1288
    %v5483 = vunpack.c.h.b16 %v1288
    %v5484 = vunpack.c.l.b16 %v1289
    %v5485 = vunpack.c.h.b16 %v1289
    %v5486 = vunpack.c.l.b16 %v1290
    %v5487 = vunpack.c.h.b16 %v1290
    %v5488 = vunpack.c.l.b16 %v1291
    %v5489 = vunpack.c.h.b16 %v1291
    %v5490 = vunpack.c.l.b16 %v1292
    %v5491 = vunpack.c.h.b16 %v1292
    %v5492 = vunpack.c.l.b16 %v1293
    %v5493 = vunpack.c.h.b16 %v1293
    %v5494 = vunpack.c.l.b16 %v1294
    %v5495 = vunpack.c.h.b16 %v1294
    %v5496 = vunpack.c.l.b16 %v1295
    %v5497 = vunpack.c.h.b16 %v1295
    %v5498 = vunpack.c.l.b16 %v1296
    %v5499 = vunpack.c.h.b16 %v1296
    %v5500 = vunpack.c.l.b16 %v1297
    %v5501 = vunpack.c.h.b16 %v1297
    %v5502 = vunpack.c.l.b16 %v1298
    %v5503 = vunpack.c.h.b16 %v1298
    %v5504 = vunpack.c.l.b16 %v1299
    %v5505 = vunpack.c.h.b16 %v1299
    %v5506 = vunpack.c.l.b16 %v1300
    %v5507 = vunpack.c.h.b16 %v1300
    %v5508 = vunpack.c.l.b16 %v1301
    %v5509 = vunpack.c.h.b16 %v1301
    %v5510 = vunpack.c.l.b16 %v1302
    %v5511 = vunpack.c.h.b16 %v1302
    %v5512 = vunpack.c.l.b16 %v1303
    %v5513 = vunpack.c.h.b16 %v1303
    %v5514 = vunpack.c.l.b16 %v1304
    %v5515 = vunpack.c.h.b16 %v1304
    %v5516 = vunpack.c.l.b16 %v1305
    %v5517 = vunpack.c.h.b16 %v1305
    %v5518 = vunpack.c.l.b16 %v1306
    %v5519 = vunpack.c.h.b16 %v1306
    %v5520 = vunpack.c.l.b16 %v1307
    %v5521 = vunpack.c.h.b16 %v1307
    %v5522 = vunpack.c.l.b16 %v1308
    %v5523 = vunpack.c.h.b16 %v1308
    %v5524 = vunpack.c.l.b16 %v1309
    %v5525 = vunpack.c.h.b16 %v1309
    %v5526 = vunpack.c.l.b16 %v1310
    %v5527 = vunpack.c.h.b16 %v1310
    %v5528 = vunpack.c.l.b16 %v1311
    %v5529 = vunpack.c.h.b16 %v1311
    %v5530 = vunpack.c.l.b16 %v1312
    %v5531 = vunpack.c.h.b16 %v1312
    %v5532 = vunpack.c.l.b16 %v1313
    %v5533 = vunpack.c.h.b16 %v1313
    %v5534 = vunpack.c.l.b16 %v1314
    %v5535 = vunpack.c.h.b16 %v1314
    %v5536 = vunpack.c.l.b16 %v1315
    %v5537 = vunpack.c.h.b16 %v1315
    %v5538 = vunpack.c.l.b16 %v1316
    %v5539 = vunpack.c.h.b16 %v1316
    %v5540 = vunpack.c.l.b16 %v1317
    %v5541 = vunpack.c.h.b16 %v1317
    %v5542 = vunpack.c.l.b16 %v1318
    %v5543 = vunpack.c.h.b16 %v1318
    %v5544 = vunpack.c.l.b16 %v1319
    %v5545 = vunpack.c.h.b16 %v1319
    %v5546 = vunpack.c.l.b16 %v1320
    %v5547 = vunpack.c.h.b16 %v1320
    %v5548 = vunpack.c.l.b16 %v1321
    %v5549 = vunpack.c.h.b16 %v1321
    %v5550 = vunpack.c.l.b16 %v1322
    %v5551 = vunpack.c.h.b16 %v1322
    %v5552 = vunpack.c.l.b16 %v1323
    %v5553 = vunpack.c.h.b16 %v1323
    %v5554 = vunpack.c.l.b16 %v1324
    %v5555 = vunpack.c.h.b16 %v1324
    %v5556 = vunpack.c.l.b16 %v1325
    %v5557 = vunpack.c.h.b16 %v1325
    %v5558 = vunpack.c.l.b16 %v1326
    %v5559 = vunpack.c.h.b16 %v1326
    %v5560 = vunpack.c.l.b16 %v1327
    %v5561 = vunpack.c.h.b16 %v1327
    %v5562 = vunpack.c.l.b16 %v1328
    %v5563 = vunpack.c.h.b16 %v1328
    %v5564 = vunpack.c.l.b16 %v1329
    %v5565 = vunpack.c.h.b16 %v1329
    %v5566 = vunpack.c.l.b16 %v1330
    %v5567 = vunpack.c.h.b16 %v1330
    %v5568 = vunpack.c.l.b16 %v1331
    %v5569 = vunpack.c.h.b16 %v1331
    %v5570 = vunpack.c.l.b16 %v1332
    %v5571 = vunpack.c.h.b16 %v1332
    %v5572 = vunpack.c.l.b16 %v1333
    %v5573 = vunpack.c.h.b16 %v1333
    %v5574 = vunpack.c.l.b16 %v1334
    %v5575 = vunpack.c.h.b16 %v1334
    %v5576 = vunpack.c.l.b16 %v1335
    %v5577 = vunpack.c.h.b16 %v1335
    %v5578 = vunpack.c.l.b16 %v1336
    %v5579 = vunpack.c.h.b16 %v1336
    %v5580 = vunpack.c.l.b16 %v1337
    %v5581 = vunpack.c.h.b16 %v1337
    %v5582 = vunpack.c.l.b16 %v1338
    %v5583 = vunpack.c.h.b16 %v1338
    %v5584 = vunpack.c.l.b16 %v1339
    %v5585 = vunpack.c.h.b16 %v1339
    %v5586 = vunpack.c.l.b16 %v1340
    %v5587 = vunpack.c.h.b16 %v1340
    %v5588 = vunpack.c.l.b16 %v1341
    %v5589 = vunpack.c.h.b16 %v1341
    %v5590 = vunpack.c.l.b16 %v1342
    %v5591 = vunpack.c.h.b16 %v1342
    %v5592 = vunpack.c.l.b16 %v1343
    %v5593 = vunpack.c.h.b16 %v1343
    %v5594 = vunpack.c.l.b16 %v1344
    %v5595 = vunpack.c.h.b16 %v1344
    %v5596 = vunpack.c.l.b16 %v1345
    %v5597 = vunpack.c.h.b16 %v1345
    %v5598 = vunpack.c.l.b16 %v1346
    %v5599 = vunpack.c.h.b16 %v1346
    %v5600 = vunpack.c.l.b16 %v1347
    %v5601 = vunpack.c.h.b16 %v1347
    %v5602 = vunpack.c.l.b16 %v1348
    %v5603 = vunpack.c.h.b16 %v1348
    %v5604 = vunpack.c.l.b16 %v1349
    %v5605 = vunpack.c.h.b16 %v1349
    %v5606 = vunpack.c.l.b16 %v1350
    %v5607 = vunpack.c.h.b16 %v1350
    %v5608 = vunpack.c.l.b16 %v1351
    %v5609 = vunpack.c.h.b16 %v1351
    %v5610 = vunpack.c.l.b16 %v1352
    %v5611 = vunpack.c.h.b16 %v1352
    %v5612 = vunpack.c.l.b16 %v1353
    %v5613 = vunpack.c.h.b16 %v1353
    %v5614 = vunpack.c.l.b16 %v1354
    %v5615 = vunpack.c.h.b16 %v1354
    %v5616 = vunpack.c.l.b16 %v1355
    %v5617 = vunpack.c.h.b16 %v1355
    %v5618 = vunpack.c.l.b16 %v1356
    %v5619 = vunpack.c.h.b16 %v1356
    %v5620 = vunpack.c.l.b16 %v1357
    %v5621 = vunpack.c.h.b16 %v1357
    %v5622 = vunpack.c.l.b16 %v1358
    %v5623 = vunpack.c.h.b16 %v1358
    %v5624 = vunpack.c.l.b16 %v1359
    %v5625 = vunpack.c.h.b16 %v1359
    %v5626 = vunpack.c.l.b16 %v1360
    %v5627 = vunpack.c.h.b16 %v1360
    %v5628 = vunpack.c.l.b16 %v1361
    %v5629 = vunpack.c.h.b16 %v1361
    %v5630 = vunpack.c.l.b16 %v1362
    %v5631 = vunpack.c.h.b16 %v1362
    %v5632 = vunpack.c.l.b16 %v1363
    %v5633 = vunpack.c.h.b16 %v1363
    %v5634 = vunpack.c.l.b16 %v1364
    %v5635 = vunpack.c.h.b16 %v1364
    %v5636 = vunpack.c.l.b16 %v1365
    %v5637 = vunpack.c.h.b16 %v1365
    %v5638 = vunpack.c.l.b16 %v1366
    %v5639 = vunpack.c.h.b16 %v1366
    %v5640 = vunpack.c.l.b16 %v1367
    %v5641 = vunpack.c.h.b16 %v1367
    %v5642 = vunpack.c.l.b16 %v1368
    %v5643 = vunpack.c.h.b16 %v1368
    %v5644 = vunpack.c.l.b16 %v1369
    %v5645 = vunpack.c.h.b16 %v1369
    %v5646 = vunpack.c.l.b16 %v1370
    %v5647 = vunpack.c.h.b16 %v1370
    %v5648 = vunpack.c.l.b16 %v1371
    %v5649 = vunpack.c.h.b16 %v1371
    %v5650 = vunpack.c.l.b16 %v1372
    %v5651 = vunpack.c.h.b16 %v1372
    %v5652 = vunpack.c.l.b16 %v1373
    %v5653 = vunpack.c.h.b16 %v1373
    %v5654 = vunpack.c.l.b16 %v1374
    %v5655 = vunpack.c.h.b16 %v1374
    %v5656 = vunpack.c.l.b16 %v1375
    %v5657 = vunpack.c.h.b16 %v1375
    %v5658 = vunpack.c.l.b16 %v1376
    %v5659 = vunpack.c.h.b16 %v1376
    %v5660 = vunpack.c.l.b16 %v1377
    %v5661 = vunpack.c.h.b16 %v1377
    %v5662 = vunpack.c.l.b16 %v1378
    %v5663 = vunpack.c.h.b16 %v1378
    %v5664 = vunpack.c.l.b16 %v1379
    %v5665 = vunpack.c.h.b16 %v1379
    %v5666 = vunpack.c.l.b16 %v1380
    %v5667 = vunpack.c.h.b16 %v1380
    %v5668 = vunpack.c.l.b16 %v1381
    %v5669 = vunpack.c.h.b16 %v1381
    %v5670 = vunpack.c.l.b16 %v1382
    %v5671 = vunpack.c.h.b16 %v1382
    %v5672 = vunpack.c.l.b16 %v1383
    %v5673 = vunpack.c.h.b16 %v1383
    %v5674 = vunpack.c.l.b16 %v1384
    %v5675 = vunpack.c.h.b16 %v1384
    %v5676 = vunpack.c.l.b16 %v1385
    %v5677 = vunpack.c.h.b16 %v1385
    %v5678 = vunpack.c.l.b16 %v1386
    %v5679 = vunpack.c.h.b16 %v1386
    %v5680 = vunpack.c.l.b16 %v1387
    %v5681 = vunpack.c.h.b16 %v1387
    %v5682 = vunpack.c.l.b16 %v1388
    %v5683 = vunpack.c.h.b16 %v1388
    %v5684 = vunpack.c.l.b16 %v1389
    %v5685 = vunpack.c.h.b16 %v1389
    %v5686 = vunpack.c.l.b16 %v1390
    %v5687 = vunpack.c.h.b16 %v1390
    %v5688 = vunpack.c.l.b16 %v1391
    %v5689 = vunpack.c.h.b16 %v1391
    %v5690 = vunpack.c.l.b16 %v1392
    %v5691 = vunpack.c.h.b16 %v1392
    %v5692 = vunpack.c.l.b16 %v1393
    %v5693 = vunpack.c.h.b16 %v1393
    %v5694 = vunpack.c.l.b16 %v1394
    %v5695 = vunpack.c.h.b16 %v1394
    %v5696 = vunpack.c.l.b16 %v1395
    %v5697 = vunpack.c.h.b16 %v1395
    %v5698 = vunpack.c.l.b16 %v1396
    %v5699 = vunpack.c.h.b16 %v1396
    %v5700 = vunpack.c.l.b16 %v1397
    %v5701 = vunpack.c.h.b16 %v1397
    %v5702 = vunpack.c.l.b16 %v1398
    %v5703 = vunpack.c.h.b16 %v1398
    %v5704 = vunpack.c.l.b16 %v1399
    %v5705 = vunpack.c.h.b16 %v1399
    %v5706 = vunpack.c.l.b16 %v1400
    %v5707 = vunpack.c.h.b16 %v1400
    %v5708 = vunpack.c.l.b16 %v1401
    %v5709 = vunpack.c.h.b16 %v1401
    %v5710 = vunpack.c.l.b16 %v1402
    %v5711 = vunpack.c.h.b16 %v1402
    %v5712 = vunpack.c.l.b16 %v1403
    %v5713 = vunpack.c.h.b16 %v1403
    %v5714 = vunpack.c.l.b16 %v1404
    %v5715 = vunpack.c.h.b16 %v1404
    %v5716 = vunpack.c.l.b16 %v1405
    %v5717 = vunpack.c.h.b16 %v1405
    %v5718 = vunpack.c.l.b16 %v1406
    %v5719 = vunpack.c.h.b16 %v1406
    %v5720 = vunpack.c.l.b16 %v1407
    %v5721 = vunpack.c.h.b16 %v1407
    %v5722 = vunpack.c.l.b16 %v1408
    %v5723 = vunpack.c.h.b16 %v1408
    %v5724 = vunpack.c.l.b16 %v1409
    %v5725 = vunpack.c.h.b16 %v1409
    %v5726 = vunpack.c.l.b16 %v1410
    %v5727 = vunpack.c.h.b16 %v1410
    %v5728 = vunpack.c.l.b16 %v1411
    %v5729 = vunpack.c.h.b16 %v1411
    %v5730 = vunpack.c.l.b16 %v1412
    %v5731 = vunpack.c.h.b16 %v1412
    %v5732 = vunpack.c.l.b16 %v1413
    %v5733 = vunpack.c.h.b16 %v1413
    %v5734 = vunpack.c.l.b16 %v1414
    %v5735 = vunpack.c.h.b16 %v1414
    %v5736 = vunpack.c.l.b16 %v1415
    %v5737 = vunpack.c.h.b16 %v1415
    %v5738 = vunpack.c.l.b16 %v1416
    %v5739 = vunpack.c.h.b16 %v1416
    %v5740 = vunpack.c.l.b16 %v1417
    %v5741 = vunpack.c.h.b16 %v1417
    %v5742 = vunpack.c.l.b16 %v1418
    %v5743 = vunpack.c.h.b16 %v1418
    %v5744 = vunpack.c.l.b16 %v1419
    %v5745 = vunpack.c.h.b16 %v1419
    %v5746 = vunpack.c.l.b16 %v1420
    %v5747 = vunpack.c.h.b16 %v1420
    %v5748 = vunpack.c.l.b16 %v1421
    %v5749 = vunpack.c.h.b16 %v1421
    %v5750 = vunpack.c.l.b16 %v1422
    %v5751 = vunpack.c.h.b16 %v1422
    %v5752 = vunpack.c.l.b16 %v1423
    %v5753 = vunpack.c.h.b16 %v1423
    %v5754 = vunpack.c.l.b16 %v1424
    %v5755 = vunpack.c.h.b16 %v1424
    %v5756 = vunpack.c.l.b16 %v1425
    %v5757 = vunpack.c.h.b16 %v1425
    %v5758 = vunpack.c.l.b16 %v1426
    %v5759 = vunpack.c.h.b16 %v1426
    %v5760 = vunpack.c.l.b16 %v1427
    %v5761 = vunpack.c.h.b16 %v1427
    %v5762 = vunpack.c.l.b16 %v1428
    %v5763 = vunpack.c.h.b16 %v1428
    %v5764 = vunpack.c.l.b16 %v1429
    %v5765 = vunpack.c.h.b16 %v1429
    %v5766 = vunpack.c.l.b16 %v1430
    %v5767 = vunpack.c.h.b16 %v1430
    %v5768 = vunpack.c.l.b16 %v1431
    %v5769 = vunpack.c.h.b16 %v1431
    %v5770 = vunpack.c.l.b16 %v1432
    %v5771 = vunpack.c.h.b16 %v1432
    %v5772 = vunpack.c.l.b16 %v1433
    %v5773 = vunpack.c.h.b16 %v1433
    %v5774 = vunpack.c.l.b16 %v1434
    %v5775 = vunpack.c.h.b16 %v1434
    %v5776 = vunpack.c.l.b16 %v1435
    %v5777 = vunpack.c.h.b16 %v1435
    %v5778 = vunpack.c.l.b16 %v1436
    %v5779 = vunpack.c.h.b16 %v1436
    %v5780 = vunpack.c.l.b16 %v1437
    %v5781 = vunpack.c.h.b16 %v1437
    %v5782 = vunpack.c.l.b16 %v1438
    %v5783 = vunpack.c.h.b16 %v1438
    %v5784 = vunpack.c.l.b16 %v1439
    %v5785 = vunpack.c.h.b16 %v1439
    %v5786 = vunpack.c.l.b16 %v1440
    %v5787 = vunpack.c.h.b16 %v1440
    %v5788 = vunpack.c.l.b16 %v1441
    %v5789 = vunpack.c.h.b16 %v1441
    %v5790 = vunpack.c.l.b16 %v1442
    %v5791 = vunpack.c.h.b16 %v1442
    %v5792 = vunpack.c.l.b16 %v1443
    %v5793 = vunpack.c.h.b16 %v1443
    %v5794 = vunpack.c.l.b16 %v1444
    %v5795 = vunpack.c.h.b16 %v1444
    %v5796 = vunpack.c.l.b16 %v1445
    %v5797 = vunpack.c.h.b16 %v1445
    %v5798 = vunpack.c.l.b16 %v1446
    %v5799 = vunpack.c.h.b16 %v1446
    %v5800 = vunpack.c.l.b16 %v1447
    %v5801 = vunpack.c.h.b16 %v1447
    %v5802 = vunpack.c.l.b16 %v1448
    %v5803 = vunpack.c.h.b16 %v1448
    %v5804 = vunpack.c.l.b16 %v1449
    %v5805 = vunpack.c.h.b16 %v1449
    %v5806 = vunpack.c.l.b16 %v1450
    %v5807 = vunpack.c.h.b16 %v1450
    %v5808 = vunpack.c.l.b16 %v1451
    %v5809 = vunpack.c.h.b16 %v1451
    %v5810 = vunpack.c.l.b16 %v1452
    %v5811 = vunpack.c.h.b16 %v1452
    %v5812 = vunpack.c.l.b16 %v1453
    %v5813 = vunpack.c.h.b16 %v1453
    %v5814 = vunpack.c.l.b16 %v1454
    %v5815 = vunpack.c.h.b16 %v1454
    %v5816 = vunpack.c.l.b16 %v1455
    %v5817 = vunpack.c.h.b16 %v1455
    %v5818 = vunpack.c.l.b16 %v1456
    %v5819 = vunpack.c.h.b16 %v1456
    %v5820 = vunpack.c.l.b16 %v1457
    %v5821 = vunpack.c.h.b16 %v1457
    %v5822 = vunpack.c.l.b16 %v1458
    %v5823 = vunpack.c.h.b16 %v1458
    %v5824 = vunpack.c.l.b16 %v1459
    %v5825 = vunpack.c.h.b16 %v1459
    %v5826 = vunpack.c.l.b16 %v1460
    %v5827 = vunpack.c.h.b16 %v1460
    %v5828 = vunpack.c.l.b16 %v1461
    %v5829 = vunpack.c.h.b16 %v1461
    %v5830 = vunpack.c.l.b16 %v1462
    %v5831 = vunpack.c.h.b16 %v1462
    %v5832 = vunpack.c.l.b16 %v1463
    %v5833 = vunpack.c.h.b16 %v1463
    %v5834 = vunpack.c.l.b16 %v1464
    %v5835 = vunpack.c.h.b16 %v1464
    %v5836 = vunpack.c.l.b16 %v1465
    %v5837 = vunpack.c.h.b16 %v1465
    %v5838 = vunpack.c.l.b16 %v1466
    %v5839 = vunpack.c.h.b16 %v1466
    %v5840 = vunpack.c.l.b16 %v1467
    %v5841 = vunpack.c.h.b16 %v1467
    %v5842 = vunpack.c.l.b16 %v1468
    %v5843 = vunpack.c.h.b16 %v1468
    %v5844 = vunpack.c.l.b16 %v1469
    %v5845 = vunpack.c.h.b16 %v1469
    %v5846 = vunpack.c.l.b16 %v1470
    %v5847 = vunpack.c.h.b16 %v1470
    %v5848 = vunpack.c.l.b16 %v1471
    %v5849 = vunpack.c.h.b16 %v1471
    %v5850 = vunpack.c.l.b16 %v1472
    %v5851 = vunpack.c.h.b16 %v1472
    %v5852 = vunpack.c.l.b16 %v1473
    %v5853 = vunpack.c.h.b16 %v1473
    %v5854 = vunpack.c.l.b16 %v1474
    %v5855 = vunpack.c.h.b16 %v1474
    %v5856 = vunpack.c.l.b16 %v1475
    %v5857 = vunpack.c.h.b16 %v1475
    %v5858 = vunpack.c.l.b16 %v1476
    %v5859 = vunpack.c.h.b16 %v1476
    %v5860 = vunpack.c.l.b16 %v1477
    %v5861 = vunpack.c.h.b16 %v1477
    %v5862 = vunpack.c.l.b16 %v1478
    %v5863 = vunpack.c.h.b16 %v1478
    %v5864 = vunpack.c.l.b16 %v1479
    %v5865 = vunpack.c.h.b16 %v1479
    %v5866 = vunpack.c.l.b16 %v1480
    %v5867 = vunpack.c.h.b16 %v1480
    %v5868 = vunpack.c.l.b16 %v1481
    %v5869 = vunpack.c.h.b16 %v1481
    %v5870 = vunpack.c.l.b16 %v1482
    %v5871 = vunpack.c.h.b16 %v1482
    %v5872 = vunpack.c.l.b16 %v1483
    %v5873 = vunpack.c.h.b16 %v1483
    %v5874 = vunpack.c.l.b16 %v1484
    %v5875 = vunpack.c.h.b16 %v1484
    %v5876 = vunpack.c.l.b16 %v1485
    %v5877 = vunpack.c.h.b16 %v1485
    %v5878 = vunpack.c.l.b16 %v1486
    %v5879 = vunpack.c.h.b16 %v1486
    %v5880 = vunpack.c.l.b16 %v1487
    %v5881 = vunpack.c.h.b16 %v1487
    %v5882 = vunpack.c.l.b16 %v1488
    %v5883 = vunpack.c.h.b16 %v1488
    %v5884 = vunpack.c.l.b16 %v1489
    %v5885 = vunpack.c.h.b16 %v1489
    %v5886 = vunpack.c.l.b16 %v1490
    %v5887 = vunpack.c.h.b16 %v1490
    %v5888 = vunpack.c.l.b16 %v1491
    %v5889 = vunpack.c.h.b16 %v1491
    %v5890 = vunpack.c.l.b16 %v1492
    %v5891 = vunpack.c.h.b16 %v1492
    %v5892 = vunpack.c.l.b16 %v1493
    %v5893 = vunpack.c.h.b16 %v1493
    %v5894 = vunpack.c.l.b16 %v1494
    %v5895 = vunpack.c.h.b16 %v1494
    %v5896 = vunpack.c.l.b16 %v1495
    %v5897 = vunpack.c.h.b16 %v1495
    %v5898 = vunpack.c.l.b16 %v1496
    %v5899 = vunpack.c.h.b16 %v1496
    %v5900 = vunpack.c.l.b16 %v1497
    %v5901 = vunpack.c.h.b16 %v1497
    %v5902 = vunpack.c.l.b16 %v1498
    %v5903 = vunpack.c.h.b16 %v1498
    %v5904 = vunpack.c.l.b16 %v1499
    %v5905 = vunpack.c.h.b16 %v1499
    %v5906 = vunpack.c.l.b16 %v1500
    %v5907 = vunpack.c.h.b16 %v1500
    %v5908 = vunpack.c.l.b16 %v1501
    %v5909 = vunpack.c.h.b16 %v1501
    %v5910 = vunpack.c.l.b16 %v1502
    %v5911 = vunpack.c.h.b16 %v1502
    %v5912 = vunpack.c.l.b16 %v1503
    %v5913 = vunpack.c.h.b16 %v1503
    %v5914 = vunpack.c.l.b16 %v1504
    %v5915 = vunpack.c.h.b16 %v1504
    %v5916 = vunpack.c.l.b16 %v1505
    %v5917 = vunpack.c.h.b16 %v1505
    %v5918 = vunpack.c.l.b16 %v1506
    %v5919 = vunpack.c.h.b16 %v1506
    %v5920 = vunpack.c.l.b16 %v1507
    %v5921 = vunpack.c.h.b16 %v1507
    %v5922 = vunpack.c.l.b16 %v1508
    %v5923 = vunpack.c.h.b16 %v1508
    %v5924 = vunpack.c.l.b16 %v1509
    %v5925 = vunpack.c.h.b16 %v1509
    %v5926 = vunpack.c.l.b16 %v1510
    %v5927 = vunpack.c.h.b16 %v1510
    %v5928 = vunpack.c.l.b16 %v1511
    %v5929 = vunpack.c.h.b16 %v1511
    %v5930 = vunpack.c.l.b16 %v1512
    %v5931 = vunpack.c.h.b16 %v1512
    %v5932 = vunpack.c.l.b16 %v1513
    %v5933 = vunpack.c.h.b16 %v1513
    %v5934 = vunpack.c.l.b16 %v1514
    %v5935 = vunpack.c.h.b16 %v1514
    %v5936 = vunpack.c.l.b16 %v1515
    %v5937 = vunpack.c.h.b16 %v1515
    %v5938 = vunpack.c.l.b16 %v1516
    %v5939 = vunpack.c.h.b16 %v1516
    %v5940 = vunpack.c.l.b16 %v1517
    %v5941 = vunpack.c.h.b16 %v1517
    %v5942 = vunpack.c.l.b16 %v1518
    %v5943 = vunpack.c.h.b16 %v1518
    %v5944 = vunpack.c.l.b16 %v1519
    %v5945 = vunpack.c.h.b16 %v1519
    %v5946 = vunpack.c.l.b16 %v1520
    %v5947 = vunpack.c.h.b16 %v1520
    %v5948 = vunpack.c.l.b16 %v1521
    %v5949 = vunpack.c.h.b16 %v1521
    %v5950 = vunpack.c.l.b16 %v1522
    %v5951 = vunpack.c.h.b16 %v1522
    %v5952 = vunpack.c.l.b16 %v1523
    %v5953 = vunpack.c.h.b16 %v1523
    %v5954 = vunpack.c.l.b16 %v1524
    %v5955 = vunpack.c.h.b16 %v1524
    %v5956 = vunpack.c.l.b16 %v1525
    %v5957 = vunpack.c.h.b16 %v1525
    %v5958 = vunpack.c.l.b16 %v1526
    %v5959 = vunpack.c.h.b16 %v1526
    %v5960 = vunpack.c.l.b16 %v1527
    %v5961 = vunpack.c.h.b16 %v1527
    %v5962 = vunpack.c.l.b16 %v1528
    %v5963 = vunpack.c.h.b16 %v1528
    %v5964 = vunpack.c.l.b16 %v1529
    %v5965 = vunpack.c.h.b16 %v1529
    %v5966 = vunpack.c.l.b16 %v1530
    %v5967 = vunpack.c.h.b16 %v1530
    %v5968 = vunpack.c.l.b16 %v1531
    %v5969 = vunpack.c.h.b16 %v1531
    %v5970 = vunpack.c.l.b16 %v1532
    %v5971 = vunpack.c.h.b16 %v1532
    %v5972 = vunpack.c.l.b16 %v1533
    %v5973 = vunpack.c.h.b16 %v1533
    %v5974 = vunpack.c.l.b16 %v1534
    %v5975 = vunpack.c.h.b16 %v1534
    %v5976 = vunpack.c.l.b16 %v1535
    %v5977 = vunpack.c.h.b16 %v1535
    %v5978 = vunpack.c.l.b16 %v1536
    %v5979 = vunpack.c.h.b16 %v1536
    %v5980 = vunpack.c.l.b16 %v1537
    %v5981 = vunpack.c.h.b16 %v1537
    %v5982 = vunpack.c.l.b16 %v1538
    %v5983 = vunpack.c.h.b16 %v1538
    %v5984 = vunpack.c.l.b16 %v1539
    %v5985 = vunpack.c.h.b16 %v1539
    %v5986 = vunpack.c.l.b16 %v1540
    %v5987 = vunpack.c.h.b16 %v1540
    %v5988 = vunpack.c.l.b16 %v1541
    %v5989 = vunpack.c.h.b16 %v1541
    %v5990 = vunpack.c.l.b16 %v1542
    %v5991 = vunpack.c.h.b16 %v1542
    %v5992 = vunpack.c.l.b16 %v1543
    %v5993 = vunpack.c.h.b16 %v1543
    %v5994 = vunpack.c.l.b16 %v1544
    %v5995 = vunpack.c.h.b16 %v1544
    %v5996 = vunpack.c.l.b16 %v1545
    %v5997 = vunpack.c.h.b16 %v1545
    %v5998 = vunpack.c.l.b16 %v1546
    %v5999 = vunpack.c.h.b16 %v1546
    %v6000 = vunpack.c.l.b16 %v1547
    %v6001 = vunpack.c.h.b16 %v1547
    %v6002 = vunpack.c.l.b16 %v1548
    %v6003 = vunpack.c.h.b16 %v1548
    %v6004 = vunpack.c.l.b16 %v1549
    %v6005 = vunpack.c.h.b16 %v1549
    %v6006 = vunpack.c.l.b16 %v1550
    %v6007 = vunpack.c.h.b16 %v1550
    %v6008 = vunpack.c.l.b16 %v1551
    %v6009 = vunpack.c.h.b16 %v1551
    %v6010 = vunpack.c.l.b16 %v1552
    %v6011 = vunpack.c.h.b16 %v1552
    %v6012 = vunpack.c.l.b16 %v1553
    %v6013 = vunpack.c.h.b16 %v1553
    %v6014 = vunpack.c.l.b16 %v1554
    %v6015 = vunpack.c.h.b16 %v1554
    %v6016 = vunpack.c.l.b16 %v1555
    %v6017 = vunpack.c.h.b16 %v1555
    %v6018 = vunpack.c.l.b16 %v1556
    %v6019 = vunpack.c.h.b16 %v1556
    %v6020 = vunpack.c.l.b16 %v1557
    %v6021 = vunpack.c.h.b16 %v1557
    %v6022 = vunpack.c.l.b16 %v1558
    %v6023 = vunpack.c.h.b16 %v1558
    %v6024 = vunpack.c.l.b16 %v1559
    %v6025 = vunpack.c.h.b16 %v1559
    %v6026 = vunpack.c.l.b16 %v1560
    %v6027 = vunpack.c.h.b16 %v1560
    %v6028 = vunpack.c.l.b16 %v1561
    %v6029 = vunpack.c.h.b16 %v1561
    %v6030 = vunpack.c.l.b16 %v1562
    %v6031 = vunpack.c.h.b16 %v1562
    %v6032 = vunpack.c.l.b16 %v1563
    %v6033 = vunpack.c.h.b16 %v1563
    %v6034 = vunpack.c.l.b16 %v1564
    %v6035 = vunpack.c.h.b16 %v1564
    %v6036 = vunpack.c.l.b16 %v1565
    %v6037 = vunpack.c.h.b16 %v1565
    %v6038 = vunpack.c.l.b16 %v1566
    %v6039 = vunpack.c.h.b16 %v1566
    %v6040 = vunpack.c.l.b16 %v1567
    %v6041 = vunpack.c.h.b16 %v1567
    %v6042 = vunpack.c.l.b16 %v1568
    %v6043 = vunpack.c.h.b16 %v1568
    %v6044 = vunpack.c.l.b16 %v1569
    %v6045 = vunpack.c.h.b16 %v1569
    %v6046 = vunpack.c.l.b16 %v1570
    %v6047 = vunpack.c.h.b16 %v1570
    %v6048 = vunpack.c.l.b16 %v1571
    %v6049 = vunpack.c.h.b16 %v1571
    %v6050 = vunpack.c.l.b16 %v1572
    %v6051 = vunpack.c.h.b16 %v1572
    %v6052 = vunpack.c.l.b16 %v1573
    %v6053 = vunpack.c.h.b16 %v1573
    %v6054 = vunpack.c.l.b16 %v1574
    %v6055 = vunpack.c.h.b16 %v1574
    %v6056 = vunpack.c.l.b16 %v1575
    %v6057 = vunpack.c.h.b16 %v1575
    %v6058 = vunpack.c.l.b16 %v1576
    %v6059 = vunpack.c.h.b16 %v1576
    %v6060 = vunpack.c.l.b16 %v1577
    %v6061 = vunpack.c.h.b16 %v1577
    %v6062 = vunpack.c.l.b16 %v1578
    %v6063 = vunpack.c.h.b16 %v1578
    %v6064 = vunpack.c.l.b16 %v1579
    %v6065 = vunpack.c.h.b16 %v1579
    %v6066 = vunpack.c.l.b16 %v1580
    %v6067 = vunpack.c.h.b16 %v1580
    %v6068 = vunpack.c.l.b16 %v1581
    %v6069 = vunpack.c.h.b16 %v1581
    %v6070 = vunpack.c.l.b16 %v1582
    %v6071 = vunpack.c.h.b16 %v1582
    %v6072 = vunpack.c.l.b16 %v1583
    %v6073 = vunpack.c.h.b16 %v1583
    %v6074 = vunpack.c.l.b16 %v1584
    %v6075 = vunpack.c.h.b16 %v1584
    %v6076 = vunpack.c.l.b16 %v1585
    %v6077 = vunpack.c.h.b16 %v1585
    %v6078 = vunpack.c.l.b16 %v1586
    %v6079 = vunpack.c.h.b16 %v1586
    %v6080 = vunpack.c.l.b16 %v1587
    %v6081 = vunpack.c.h.b16 %v1587
    %v6082 = vunpack.c.l.b16 %v1588
    %v6083 = vunpack.c.h.b16 %v1588
    %v6084 = vunpack.c.l.b16 %v1589
    %v6085 = vunpack.c.h.b16 %v1589
    %v6086 = vunpack.c.l.b16 %v1590
    %v6087 = vunpack.c.h.b16 %v1590
    %v6088 = vunpack.c.l.b16 %v1591
    %v6089 = vunpack.c.h.b16 %v1591
    %v6090 = vunpack.c.l.b16 %v1592
    %v6091 = vunpack.c.h.b16 %v1592
    %v6092 = vunpack.c.l.b16 %v1593
    %v6093 = vunpack.c.h.b16 %v1593
    %v6094 = vunpack.c.l.b16 %v1594
    %v6095 = vunpack.c.h.b16 %v1594
    %v6096 = vunpack.c.l.b16 %v1595
    %v6097 = vunpack.c.h.b16 %v1595
    %v6098 = vunpack.c.l.b16 %v1596
    %v6099 = vunpack.c.h.b16 %v1596
    %v6100 = vunpack.c.l.b16 %v1597
    %v6101 = vunpack.c.h.b16 %v1597
    %v6102 = vunpack.c.l.b16 %v1598
    %v6103 = vunpack.c.h.b16 %v1598
    %v6104 = vunpack.c.l.b16 %v1599
    %v6105 = vunpack.c.h.b16 %v1599
    %v6106 = vunpack.c.l.b16 %v1600
    %v6107 = vunpack.c.h.b16 %v1600
    %v6108 = vunpack.c.l.b16 %v1601
    %v6109 = vunpack.c.h.b16 %v1601
    %v6110 = vunpack.c.l.b16 %v1602
    %v6111 = vunpack.c.h.b16 %v1602
    %v6112 = vunpack.c.l.b16 %v1603
    %v6113 = vunpack.c.h.b16 %v1603
    %v6114 = vunpack.c.l.b16 %v1604
    %v6115 = vunpack.c.h.b16 %v1604
    %v6116 = vunpack.c.l.b16 %v1605
    %v6117 = vunpack.c.h.b16 %v1605
    %v6118 = vunpack.c.l.b16 %v1606
    %v6119 = vunpack.c.h.b16 %v1606
    %v6120 = vunpack.c.l.b16 %v1607
    %v6121 = vunpack.c.h.b16 %v1607
    %v6122 = vunpack.c.l.b16 %v1608
    %v6123 = vunpack.c.h.b16 %v1608
    %v6124 = vunpack.c.l.b16 %v1609
    %v6125 = vunpack.c.h.b16 %v1609
    %v6126 = vunpack.c.l.b16 %v1610
    %v6127 = vunpack.c.h.b16 %v1610
    %v6128 = vunpack.c.l.b16 %v1611
    %v6129 = vunpack.c.h.b16 %v1611
    %v6130 = vunpack.c.l.b16 %v1612
    %v6131 = vunpack.c.h.b16 %v1612
    %v6132 = vunpack.c.l.b16 %v1613
    %v6133 = vunpack.c.h.b16 %v1613
    %v6134 = vunpack.c.l.b16 %v1614
    %v6135 = vunpack.c.h.b16 %v1614
    %v6136 = vunpack.c.l.b16 %v1615
    %v6137 = vunpack.c.h.b16 %v1615
    %v6138 = vunpack.c.l.b16 %v1616
    %v6139 = vunpack.c.h.b16 %v1616
    %v6140 = vunpack.c.l.b16 %v1617
    %v6141 = vunpack.c.h.b16 %v1617
    %v6142 = vunpack.c.l.b16 %v1618
    %v6143 = vunpack.c.h.b16 %v1618
    %v6144 = vunpack.c.l.b16 %v1619
    %v6145 = vunpack.c.h.b16 %v1619
    %v6146 = vunpack.c.l.b16 %v1620
    %v6147 = vunpack.c.h.b16 %v1620
    %v6148 = vunpack.c.l.b16 %v1621
    %v6149 = vunpack.c.h.b16 %v1621
    %v6150 = vunpack.c.l.b16 %v1622
    %v6151 = vunpack.c.h.b16 %v1622
    %v6152 = vunpack.c.l.b16 %v1623
    %v6153 = vunpack.c.h.b16 %v1623
    %v6154 = vunpack.c.l.b16 %v1624
    %v6155 = vunpack.c.h.b16 %v1624
    %v6156 = vunpack.c.l.b16 %v1625
    %v6157 = vunpack.c.h.b16 %v1625
    %v6158 = vunpack.c.l.b16 %v1626
    %v6159 = vunpack.c.h.b16 %v1626
    %v6160 = vunpack.c.l.b16 %v1627
    %v6161 = vunpack.c.h.b16 %v1627
    %v6162 = vunpack.c.l.b16 %v1628
    %v6163 = vunpack.c.h.b16 %v1628
    %v6164 = vunpack.c.l.b16 %v1629
    %v6165 = vunpack.c.h.b16 %v1629
    %v6166 = vunpack.c.l.b16 %v1630
    %v6167 = vunpack.c.h.b16 %v1630
    %v6168 = vunpack.c.l.b16 %v1631
    %v6169 = vunpack.c.h.b16 %v1631
    %v6170 = vunpack.c.l.b16 %v1632
    %v6171 = vunpack.c.h.b16 %v1632
    %v6172 = vunpack.c.l.b16 %v1633
    %v6173 = vunpack.c.h.b16 %v1633
    %v6174 = vunpack.c.l.b16 %v1634
    %v6175 = vunpack.c.h.b16 %v1634
    %v6176 = vunpack.c.l.b16 %v1635
    %v6177 = vunpack.c.h.b16 %v1635
    %v6178 = vunpack.c.l.b16 %v1636
    %v6179 = vunpack.c.h.b16 %v1636
    %v6180 = vunpack.c.l.b16 %v1637
    %v6181 = vunpack.c.h.b16 %v1637
    %v6182 = vunpack.c.l.b16 %v1638
    %v6183 = vunpack.c.h.b16 %v1638
    %v6184 = vunpack.c.l.b16 %v1639
    %v6185 = vunpack.c.h.b16 %v1639
    %v6186 = vunpack.c.l.b16 %v1640
    %v6187 = vunpack.c.h.b16 %v1640
    %v6188 = vunpack.c.l.b16 %v1641
    %v6189 = vunpack.c.h.b16 %v1641
    %v6190 = vunpack.c.l.b16 %v1642
    %v6191 = vunpack.c.h.b16 %v1642
    %v6192 = vunpack.c.l.b16 %v1643
    %v6193 = vunpack.c.h.b16 %v1643
    %v6194 = vunpack.c.l.b16 %v1644
    %v6195 = vunpack.c.h.b16 %v1644
    %v6196 = vunpack.c.l.b16 %v1645
    %v6197 = vunpack.c.h.b16 %v1645
    %v6198 = vunpack.c.l.b16 %v1646
    %v6199 = vunpack.c.h.b16 %v1646
    %v6200 = vunpack.c.l.b16 %v1647
    %v6201 = vunpack.c.h.b16 %v1647
    %v6202 = vunpack.c.l.b16 %v1648
    %v6203 = vunpack.c.h.b16 %v1648
    %v6204 = vunpack.c.l.b16 %v1649
    %v6205 = vunpack.c.h.b16 %v1649
    %v6206 = vunpack.c.l.b16 %v1650
    %v6207 = vunpack.c.h.b16 %v1650
    %v6208 = vunpack.c.l.b16 %v1651
    %v6209 = vunpack.c.h.b16 %v1651
    %v6210 = vunpack.c.l.b16 %v1652
    %v6211 = vunpack.c.h.b16 %v1652
    %v6212 = vunpack.c.l.b16 %v1653
    %v6213 = vunpack.c.h.b16 %v1653
    %v6214 = vunpack.c.l.b16 %v1654
    %v6215 = vunpack.c.h.b16 %v1654
    %v6216 = vunpack.c.l.b16 %v1655
    %v6217 = vunpack.c.h.b16 %v1655
    %v6218 = vunpack.c.l.b16 %v1656
    %v6219 = vunpack.c.h.b16 %v1656
    %v6220 = vunpack.c.l.b16 %v1657
    %v6221 = vunpack.c.h.b16 %v1657
    %v6222 = vunpack.c.l.b16 %v1658
    %v6223 = vunpack.c.h.b16 %v1658
    %v6224 = vunpack.c.l.b16 %v1659
    %v6225 = vunpack.c.h.b16 %v1659
    %v6226 = vunpack.c.l.b16 %v1660
    %v6227 = vunpack.c.h.b16 %v1660
    %v6228 = vunpack.c.l.b16 %v1661
    %v6229 = vunpack.c.h.b16 %v1661
    %v6230 = vunpack.c.l.b16 %v1662
    %v6231 = vunpack.c.h.b16 %v1662
    %v6232 = vunpack.c.l.b16 %v1663
    %v6233 = vunpack.c.h.b16 %v1663
    %v6234 = vunpack.c.l.b16 %v1664
    %v6235 = vunpack.c.h.b16 %v1664
    %v6236 = vunpack.c.l.b16 %v1665
    %v6237 = vunpack.c.h.b16 %v1665
    %v6238 = vunpack.c.l.b16 %v1666
    %v6239 = vunpack.c.h.b16 %v1666
    %v6240 = vunpack.c.l.b16 %v1667
    %v6241 = vunpack.c.h.b16 %v1667
    %v6242 = vunpack.c.l.b16 %v1668
    %v6243 = vunpack.c.h.b16 %v1668
    %v6244 = vunpack.c.l.b16 %v1669
    %v6245 = vunpack.c.h.b16 %v1669
    %v6246 = vunpack.c.l.b16 %v1670
    %v6247 = vunpack.c.h.b16 %v1670
    %v6248 = vunpack.c.l.b16 %v1671
    %v6249 = vunpack.c.h.b16 %v1671
    %v6250 = vunpack.c.l.b16 %v1672
    %v6251 = vunpack.c.h.b16 %v1672
    %v6252 = vunpack.c.l.b16 %v1673
    %v6253 = vunpack.c.h.b16 %v1673
    %v6254 = vunpack.c.l.b16 %v1674
    %v6255 = vunpack.c.h.b16 %v1674
    %v6256 = vunpack.c.l.b16 %v1675
    %v6257 = vunpack.c.h.b16 %v1675
    %v6258 = vunpack.c.l.b16 %v1676
    %v6259 = vunpack.c.h.b16 %v1676
    %v6260 = vunpack.c.l.b16 %v1677
    %v6261 = vunpack.c.h.b16 %v1677
    %v6262 = vunpack.c.l.b16 %v1678
    %v6263 = vunpack.c.h.b16 %v1678
    %v6264 = vunpack.c.l.b16 %v1679
    %v6265 = vunpack.c.h.b16 %v1679
    %v6266 = vunpack.c.l.b16 %v1680
    %v6267 = vunpack.c.h.b16 %v1680
    %v6268 = vunpack.c.l.b16 %v1681
    %v6269 = vunpack.c.h.b16 %v1681
    %v6270 = vunpack.c.l.b16 %v1682
    %v6271 = vunpack.c.h.b16 %v1682
    %v6272 = vunpack.c.l.b16 %v1683
    %v6273 = vunpack.c.h.b16 %v1683
    %v6274 = vunpack.c.l.b16 %v1684
    %v6275 = vunpack.c.h.b16 %v1684
    %v6276 = vunpack.c.l.b16 %v1685
    %v6277 = vunpack.c.h.b16 %v1685
    %v6278 = vunpack.c.l.b16 %v1686
    %v6279 = vunpack.c.h.b16 %v1686
    %v6280 = vunpack.c.l.b16 %v1687
    %v6281 = vunpack.c.h.b16 %v1687
    %v6282 = vunpack.c.l.b16 %v1688
    %v6283 = vunpack.c.h.b16 %v1688
    %v6284 = vunpack.c.l.b16 %v1689
    %v6285 = vunpack.c.h.b16 %v1689
    %v6286 = vunpack.c.l.b16 %v1690
    %v6287 = vunpack.c.h.b16 %v1690
    %v6288 = vunpack.c.l.b16 %v1691
    %v6289 = vunpack.c.h.b16 %v1691
    %v6290 = vunpack.c.l.b16 %v1692
    %v6291 = vunpack.c.h.b16 %v1692
    %v6292 = vunpack.c.l.b16 %v1693
    %v6293 = vunpack.c.h.b16 %v1693
    %v6294 = vunpack.c.l.b16 %v1694
    %v6295 = vunpack.c.h.b16 %v1694
    %v6296 = vunpack.c.l.b16 %v1695
    %v6297 = vunpack.c.h.b16 %v1695
    %v6298 = vunpack.c.l.b16 %v1696
    %v6299 = vunpack.c.h.b16 %v1696
    %v6300 = vunpack.c.l.b16 %v1697
    %v6301 = vunpack.c.h.b16 %v1697
    %v6302 = vunpack.c.l.b16 %v1698
    %v6303 = vunpack.c.h.b16 %v1698
    %v6304 = vunpack.c.l.b16 %v1699
    %v6305 = vunpack.c.h.b16 %v1699
    %v6306 = vunpack.c.l.b16 %v1700
    %v6307 = vunpack.c.h.b16 %v1700
    %v6308 = vunpack.c.l.b16 %v1701
    %v6309 = vunpack.c.h.b16 %v1701
    %v6310 = vunpack.c.l.b16 %v1702
    %v6311 = vunpack.c.h.b16 %v1702
    %v6312 = vunpack.c.l.b16 %v1703
    %v6313 = vunpack.c.h.b16 %v1703
    %v6314 = vunpack.c.l.b16 %v1704
    %v6315 = vunpack.c.h.b16 %v1704
    %v6316 = vunpack.c.l.b16 %v1705
    %v6317 = vunpack.c.h.b16 %v1705
    %v6318 = vunpack.c.l.b16 %v1706
    %v6319 = vunpack.c.h.b16 %v1706
    %v6320 = vunpack.c.l.b16 %v1707
    %v6321 = vunpack.c.h.b16 %v1707
    %v6322 = vunpack.c.l.b16 %v1708
    %v6323 = vunpack.c.h.b16 %v1708
    %v6324 = vunpack.c.l.b16 %v1709
    %v6325 = vunpack.c.h.b16 %v1709
    %v6326 = vunpack.c.l.b16 %v1710
    %v6327 = vunpack.c.h.b16 %v1710
    %v6328 = vunpack.c.l.b16 %v1711
    %v6329 = vunpack.c.h.b16 %v1711
    %v6330 = vunpack.c.l.b16 %v1712
    %v6331 = vunpack.c.h.b16 %v1712
    %v6332 = vunpack.c.l.b16 %v1713
    %v6333 = vunpack.c.h.b16 %v1713
    %v6334 = vunpack.c.l.b16 %v1714
    %v6335 = vunpack.c.h.b16 %v1714
    %v6336 = vunpack.c.l.b16 %v1715
    %v6337 = vunpack.c.h.b16 %v1715
    %v6338 = vunpack.c.l.b16 %v1716
    %v6339 = vunpack.c.h.b16 %v1716
    %v6340 = vunpack.c.l.b16 %v1717
    %v6341 = vunpack.c.h.b16 %v1717
    %v6342 = vunpack.c.l.b16 %v1718
    %v6343 = vunpack.c.h.b16 %v1718
    %v6344 = vunpack.c.l.b16 %v1719
    %v6345 = vunpack.c.h.b16 %v1719
    %v6346 = vpack.c.b16 %v3282, %v3274
    %v6347 = vpack.c.b16 %v3283, %v3275
    %v6348 = vpack.c.b16 %v3284, %v3276
    %v6349 = vpack.c.b16 %v3285, %v3277
    %v6350 = vpack.c.b16 %v3286, %v3278
    %v6351 = vpack.c.b16 %v3287, %v3279
    %v6352 = vpack.c.b16 %v3288, %v3280
    %v6353 = vpack.c.b16 %v3289, %v3281
    %v6354 = vpack.c.b16 %v3298, %v3290
    %v6355 = vpack.c.b16 %v3299, %v3291
    %v6356 = vpack.c.b16 %v3300, %v3292
    %v6357 = vpack.c.b16 %v3301, %v3293
    %v6358 = vpack.c.b16 %v3302, %v3294
    %v6359 = vpack.c.b16 %v3303, %v3295
    %v6360 = vpack.c.b16 %v3304, %v3296
    %v6361 = vpack.c.b16 %v3305, %v3297
    %v6362 = vpack.c.b16 %v3314, %v3306
    %v6363 = vpack.c.b16 %v3315, %v3307
    %v6364 = vpack.c.b16 %v3316, %v3308
    %v6365 = vpack.c.b16 %v3317, %v3309
    %v6366 = vpack.c.b16 %v3318, %v3310
    %v6367 = vpack.c.b16 %v3319, %v3311
    %v6368 = vpack.c.b16 %v3320, %v3312
    %v6369 = vpack.c.b16 %v3321, %v3313
    %v6370 = vpack.c.b16 %v3330, %v3322
    %v6371 = vpack.c.b16 %v3331, %v3323
    %v6372 = vpack.c.b16 %v3332, %v3324
    %v6373 = vpack.c.b16 %v3333, %v3325
    %v6374 = vpack.c.b16 %v3334, %v3326
    %v6375 = vpack.c.b16 %v3335, %v3327
    %v6376 = vpack.c.b16 %v3336, %v3328
    %v6377 = vpack.c.b16 %v3337, %v3329
    %v6378 = vpack.c.b16 %v3346, %v3338
    %v6379 = vpack.c.b16 %v3347, %v3339
    %v6380 = vpack.c.b16 %v3348, %v3340
    %v6381 = vpack.c.b16 %v3349, %v3341
    %v6382 = vpack.c.b16 %v3350, %v3342
    %v6383 = vpack.c.b16 %v3351, %v3343
    %v6384 = vpack.c.b16 %v3352, %v3344
    %v6385 = vpack.c.b16 %v3353, %v3345
    %v6386 = vpack.c.b16 %v3362, %v3354
    %v6387 = vpack.c.b16 %v3363, %v3355
    %v6388 = vpack.c.b16 %v3364, %v3356
    %v6389 = vpack.c.b16 %v3365, %v3357
    %v6390 = vpack.c.b16 %v3366, %v3358
    %v6391 = vpack.c.b16 %v3367, %v3359
    %v6392 = vpack.c.b16 %v3368, %v3360
    %v6393 = vpack.c.b16 %v3369, %v3361
    %v6394 = vpack.c.b16 %v3378, %v3370
    %v6395 = vpack.c.b16 %v3379, %v3371
    %v6396 = vpack.c.b16 %v3380, %v3372
    %v6397 = vpack.c.b16 %v3381, %v3373
    %v6398 = vpack.c.b16 %v3382, %v3374
    %v6399 = vpack.c.b16 %v3383, %v3375
    %v6400 = vpack.c.b16 %v3384, %v3376
    %v6401 = vpack.c.b16 %v3385, %v3377
    %v6402 = vpack.c.b16 %v3394, %v3386
    %v6403 = vpack.c.b16 %v3395, %v3387
    %v6404 = vpack.c.b16 %v3396, %v3388
    %v6405 = vpack.c.b16 %v3397, %v3389
    %v6406 = vpack.c.b16 %v3398, %v3390
    %v6407 = vpack.c.b16 %v3399, %v3391
    %v6408 = vpack.c.b16 %v3400, %v3392
    %v6409 = vpack.c.b16 %v3401, %v3393
    %v6410 = vpack.c.b16 %v3410, %v3402
    %v6411 = vpack.c.b16 %v3411, %v3403
    %v6412 = vpack.c.b16 %v3412, %v3404
    %v6413 = vpack.c.b16 %v3413, %v3405
    %v6414 = vpack.c.b16 %v3414, %v3406
    %v6415 = vpack.c.b16 %v3415, %v3407
    %v6416 = vpack.c.b16 %v3416, %v3408
    %v6417 = vpack.c.b16 %v3417, %v3409
    %v6418 = vpack.c.b16 %v3426, %v3418
    %v6419 = vpack.c.b16 %v3427, %v3419
    %v6420 = vpack.c.b16 %v3428, %v3420
    %v6421 = vpack.c.b16 %v3429, %v3421
    %v6422 = vpack.c.b16 %v3430, %v3422
    %v6423 = vpack.c.b16 %v3431, %v3423
    %v6424 = vpack.c.b16 %v3432, %v3424
    %v6425 = vpack.c.b16 %v3433, %v3425
    %v6426 = vpack.c.b16 %v3442, %v3434
    %v6427 = vpack.c.b16 %v3443, %v3435
    %v6428 = vpack.c.b16 %v3444, %v3436
    %v6429 = vpack.c.b16 %v3445, %v3437
    %v6430 = vpack.c.b16 %v3446, %v3438
    %v6431 = vpack.c.b16 %v3447, %v3439
    %v6432 = vpack.c.b16 %v3448, %v3440
    %v6433 = vpack.c.b16 %v3449, %v3441
    %v6434 = vpack.c.b16 %v3458, %v3450
    %v6435 = vpack.c.b16 %v3459, %v3451
    %v6436 = vpack.c.b16 %v3460, %v3452
    %v6437 = vpack.c.b16 %v3461, %v3453
    %v6438 = vpack.c.b16 %v3462, %v3454
    %v6439 = vpack.c.b16 %v3463, %v3455
    %v6440 = vpack.c.b16 %v3464, %v3456
    %v6441 = vpack.c.b16 %v3465, %v3457
    %v6442 = vpack.c.b16 %v3474, %v3466
    %v6443 = vpack.c.b16 %v3475, %v3467
    %v6444 = vpack.c.b16 %v3476, %v3468
    %v6445 = vpack.c.b16 %v3477, %v3469
    %v6446 = vpack.c.b16 %v3478, %v3470
    %v6447 = vpack.c.b16 %v3479, %v3471
    %v6448 = vpack.c.b16 %v3480, %v3472
    %v6449 = vpack.c.b16 %v3481, %v3473
    %v6450 = vpack.c.b16 %v3490, %v3482
    %v6451 = vpack.c.b16 %v3491, %v3483
    %v6452 = vpack.c.b16 %v3492, %v3484
    %v6453 = vpack.c.b16 %v3493, %v3485
    %v6454 = vpack.c.b16 %v3494, %v3486
    %v6455 = vpack.c.b16 %v3495, %v3487
    %v6456 = vpack.c.b16 %v3496, %v3488
    %v6457 = vpack.c.b16 %v3497, %v3489
    %v6458 = vpack.c.b16 %v3506, %v3498
    %v6459 = vpack.c.b16 %v3507, %v3499
    %v6460 = vpack.c.b16 %v3508, %v3500
    %v6461 = vpack.c.b16 %v3509, %v3501
    %v6462 = vpack.c.b16 %v3510, %v3502
    %v6463 = vpack.c.b16 %v3511, %v3503
    %v6464 = vpack.c.b16 %v3512, %v3504
    %v6465 = vpack.c.b16 %v3513, %v3505
    %v6466 = vpack.c.b16 %v3522, %v3514
    %v6467 = vpack.c.b16 %v3523, %v3515
    %v6468 = vpack.c.b16 %v3524, %v3516
    %v6469 = vpack.c.b16 %v3525, %v3517
    %v6470 = vpack.c.b16 %v3526, %v3518
    %v6471 = vpack.c.b16 %v3527, %v3519
    %v6472 = vpack.c.b16 %v3528, %v3520
    %v6473 = vpack.c.b16 %v3529, %v3521
    %v6474 = vpack.c.b16 %v3538, %v3530
    %v6475 = vpack.c.b16 %v3539, %v3531
    %v6476 = vpack.c.b16 %v3540, %v3532
    %v6477 = vpack.c.b16 %v3541, %v3533
    %v6478 = vpack.c.b16 %v3542, %v3534
    %v6479 = vpack.c.b16 %v3543, %v3535
    %v6480 = vpack.c.b16 %v3544, %v3536
    %v6481 = vpack.c.b16 %v3545, %v3537
    %v6482 = vpack.c.b16 %v3554, %v3546
    %v6483 = vpack.c.b16 %v3555, %v3547
    %v6484 = vpack.c.b16 %v3556, %v3548
    %v6485 = vpack.c.b16 %v3557, %v3549
    %v6486 = vpack.c.b16 %v3558, %v3550
    %v6487 = vpack.c.b16 %v3559, %v3551
    %v6488 = vpack.c.b16 %v3560, %v3552
    %v6489 = vpack.c.b16 %v3561, %v3553
    %v6490 = vpack.c.b16 %v3570, %v3562
    %v6491 = vpack.c.b16 %v3571, %v3563
    %v6492 = vpack.c.b16 %v3572, %v3564
    %v6493 = vpack.c.b16 %v3573, %v3565
    %v6494 = vpack.c.b16 %v3574, %v3566
    %v6495 = vpack.c.b16 %v3575, %v3567
    %v6496 = vpack.c.b16 %v3576, %v3568
    %v6497 = vpack.c.b16 %v3577, %v3569
    %v6498 = vpack.c.b16 %v3586, %v3578
    %v6499 = vpack.c.b16 %v3587, %v3579
    %v6500 = vpack.c.b16 %v3588, %v3580
    %v6501 = vpack.c.b16 %v3589, %v3581
    %v6502 = vpack.c.b16 %v3590, %v3582
    %v6503 = vpack.c.b16 %v3591, %v3583
    %v6504 = vpack.c.b16 %v3592, %v3584
    %v6505 = vpack.c.b16 %v3593, %v3585
    %v6506 = vpack.c.b16 %v3602, %v3594
    %v6507 = vpack.c.b16 %v3603, %v3595
    %v6508 = vpack.c.b16 %v3604, %v3596
    %v6509 = vpack.c.b16 %v3605, %v3597
    %v6510 = vpack.c.b16 %v3606, %v3598
    %v6511 = vpack.c.b16 %v3607, %v3599
    %v6512 = vpack.c.b16 %v3608, %v3600
    %v6513 = vpack.c.b16 %v3609, %v3601
    %v6514 = vpack.c.b16 %v3618, %v3610
    %v6515 = vpack.c.b16 %v3619, %v3611
    %v6516 = vpack.c.b16 %v3620, %v3612
    %v6517 = vpack.c.b16 %v3621, %v3613
    %v6518 = vpack.c.b16 %v3622, %v3614
    %v6519 = vpack.c.b16 %v3623, %v3615
    %v6520 = vpack.c.b16 %v3624, %v3616
    %v6521 = vpack.c.b16 %v3625, %v3617
    %v6522 = vpack.c.b16 %v3634, %v3626
    %v6523 = vpack.c.b16 %v3635, %v3627
    %v6524 = vpack.c.b16 %v3636, %v3628
    %v6525 = vpack.c.b16 %v3637, %v3629
    %v6526 = vpack.c.b16 %v3638, %v3630
    %v6527 = vpack.c.b16 %v3639, %v3631
    %v6528 = vpack.c.b16 %v3640, %v3632
    %v6529 = vpack.c.b16 %v3641, %v3633
    %v6530 = vpack.c.b16 %v3650, %v3642
    %v6531 = vpack.c.b16 %v3651, %v3643
    %v6532 = vpack.c.b16 %v3652, %v3644
    %v6533 = vpack.c.b16 %v3653, %v3645
    %v6534 = vpack.c.b16 %v3654, %v3646
    %v6535 = vpack.c.b16 %v3655, %v3647
    %v6536 = vpack.c.b16 %v3656, %v3648
    %v6537 = vpack.c.b16 %v3657, %v3649
    %v6538 = vpack.c.b16 %v3666, %v3658
    %v6539 = vpack.c.b16 %v3667, %v3659
    %v6540 = vpack.c.b16 %v3668, %v3660
    %v6541 = vpack.c.b16 %v3669, %v3661
    %v6542 = vpack.c.b16 %v3670, %v3662
    %v6543 = vpack.c.b16 %v3671, %v3663
    %v6544 = vpack.c.b16 %v3672, %v3664
    %v6545 = vpack.c.b16 %v3673, %v3665
    %v6546 = vpack.c.b16 %v3682, %v3674
    %v6547 = vpack.c.b16 %v3683, %v3675
    %v6548 = vpack.c.b16 %v3684, %v3676
    %v6549 = vpack.c.b16 %v3685, %v3677
    %v6550 = vpack.c.b16 %v3686, %v3678
    %v6551 = vpack.c.b16 %v3687, %v3679
    %v6552 = vpack.c.b16 %v3688, %v3680
    %v6553 = vpack.c.b16 %v3689, %v3681
    %v6554 = vpack.c.b16 %v3698, %v3690
    %v6555 = vpack.c.b16 %v3699, %v3691
    %v6556 = vpack.c.b16 %v3700, %v3692
    %v6557 = vpack.c.b16 %v3701, %v3693
    %v6558 = vpack.c.b16 %v3702, %v3694
    %v6559 = vpack.c.b16 %v3703, %v3695
    %v6560 = vpack.c.b16 %v3704, %v3696
    %v6561 = vpack.c.b16 %v3705, %v3697
    %v6562 = vpack.c.b16 %v3714, %v3706
    %v6563 = vpack.c.b16 %v3715, %v3707
    %v6564 = vpack.c.b16 %v3716, %v3708
    %v6565 = vpack.c.b16 %v3717, %v3709
    %v6566 = vpack.c.b16 %v3718, %v3710
    %v6567 = vpack.c.b16 %v3719, %v3711
    %v6568 = vpack.c.b16 %v3720, %v3712
    %v6569 = vpack.c.b16 %v3721, %v3713
    %v6570 = vpack.c.b16 %v3730, %v3722
    %v6571 = vpack.c.b16 %v3731, %v3723
    %v6572 = vpack.c.b16 %v3732, %v3724
    %v6573 = vpack.c.b16 %v3733, %v3725
    %v6574 = vpack.c.b16 %v3734, %v3726
    %v6575 = vpack.c.b16 %v3735, %v3727
    %v6576 = vpack.c.b16 %v3736, %v3728
    %v6577 = vpack.c.b16 %v3737, %v3729
    %v6578 = vpack.c.b16 %v3746, %v3738
    %v6579 = vpack.c.b16 %v3747, %v3739
    %v6580 = vpack.c.b16 %v3748, %v3740
    %v6581 = vpack.c.b16 %v3749, %v3741
    %v6582 = vpack.c.b16 %v3750, %v3742
    %v6583 = vpack.c.b16 %v3751, %v3743
    %v6584 = vpack.c.b16 %v3752, %v3744
    %v6585 = vpack.c.b16 %v3753, %v3745
    %v6586 = vpack.c.b16 %v3762, %v3754
    %v6587 = vpack.c.b16 %v3763, %v3755
    %v6588 = vpack.c.b16 %v3764, %v3756
    %v6589 = vpack.c.b16 %v3765, %v3757
    %v6590 = vpack.c.b16 %v3766, %v3758
    %v6591 = vpack.c.b16 %v3767, %v3759
    %v6592 = vpack.c.b16 %v3768, %v3760
    %v6593 = vpack.c.b16 %v3769, %v3761
    %v6594 = vpack.c.b16 %v3778, %v3770
    %v6595 = vpack.c.b16 %v3779, %v3771
    %v6596 = vpack.c.b16 %v3780, %v3772
    %v6597 = vpack.c.b16 %v3781, %v3773
    %v6598 = vpack.c.b16 %v3782, %v3774
    %v6599 = vpack.c.b16 %v3783, %v3775
    %v6600 = vpack.c.b16 %v3784, %v3776
    %v6601 = vpack.c.b16 %v3785, %v3777
    %v6602 = vpack.c.b16 %v3794, %v3786
    %v6603 = vpack.c.b16 %v3795, %v3787
    %v6604 = vpack.c.b16 %v3796, %v3788
    %v6605 = vpack.c.b16 %v3797, %v3789
    %v6606 = vpack.c.b16 %v3798, %v3790
    %v6607 = vpack.c.b16 %v3799, %v3791
    %v6608 = vpack.c.b16 %v3800, %v3792
    %v6609 = vpack.c.b16 %v3801, %v3793
    %v6610 = vpack.c.b16 %v3810, %v3802
    %v6611 = vpack.c.b16 %v3811, %v3803
    %v6612 = vpack.c.b16 %v3812, %v3804
    %v6613 = vpack.c.b16 %v3813, %v3805
    %v6614 = vpack.c.b16 %v3814, %v3806
    %v6615 = vpack.c.b16 %v3815, %v3807
    %v6616 = vpack.c.b16 %v3816, %v3808
    %v6617 = vpack.c.b16 %v3817, %v3809
    %v6618 = vpack.c.b16 %v3826, %v3818
    %v6619 = vpack.c.b16 %v3827, %v3819
    %v6620 = vpack.c.b16 %v3828, %v3820
    %v6621 = vpack.c.b16 %v3829, %v3821
    %v6622 = vpack.c.b16 %v3830, %v3822
    %v6623 = vpack.c.b16 %v3831, %v3823
    %v6624 = vpack.c.b16 %v3832, %v3824
    %v6625 = vpack.c.b16 %v3833, %v3825
    %v6626 = vpack.c.b16 %v3842, %v3834
    %v6627 = vpack.c.b16 %v3843, %v3835
    %v6628 = vpack.c.b16 %v3844, %v3836
    %v6629 = vpack.c.b16 %v3845, %v3837
    %v6630 = vpack.c.b16 %v3846, %v3838
    %v6631 = vpack.c.b16 %v3847, %v3839
    %v6632 = vpack.c.b16 %v3848, %v3840
    %v6633 = vpack.c.b16 %v3849, %v3841
    %v6634 = vpack.c.b16 %v3858, %v3850
    %v6635 = vpack.c.b16 %v3859, %v3851
    %v6636 = vpack.c.b16 %v3860, %v3852
    %v6637 = vpack.c.b16 %v3861, %v3853
    %v6638 = vpack.c.b16 %v3862, %v3854
    %v6639 = vpack.c.b16 %v3863, %v3855
    %v6640 = vpack.c.b16 %v3864, %v3856
    %v6641 = vpack.c.b16 %v3865, %v3857
    %v6642 = vpack.c.b16 %v3874, %v3866
    %v6643 = vpack.c.b16 %v3875, %v3867
    %v6644 = vpack.c.b16 %v3876, %v3868
    %v6645 = vpack.c.b16 %v3877, %v3869
    %v6646 = vpack.c.b16 %v3878, %v3870
    %v6647 = vpack.c.b16 %v3879, %v3871
    %v6648 = vpack.c.b16 %v3880, %v3872
    %v6649 = vpack.c.b16 %v3881, %v3873
    %v6650 = vpack.c.b16 %v3890, %v3882
    %v6651 = vpack.c.b16 %v3891, %v3883
    %v6652 = vpack.c.b16 %v3892, %v3884
    %v6653 = vpack.c.b16 %v3893, %v3885
    %v6654 = vpack.c.b16 %v3894, %v3886
    %v6655 = vpack.c.b16 %v3895, %v3887
    %v6656 = vpack.c.b16 %v3896, %v3888
    %v6657 = vpack.c.b16 %v3897, %v3889
    %v6658 = vpack.c.b16 %v3906, %v3898
    %v6659 = vpack.c.b16 %v3907, %v3899
    %v6660 = vpack.c.b16 %v3908, %v3900
    %v6661 = vpack.c.b16 %v3909, %v3901
    %v6662 = vpack.c.b16 %v3910, %v3902
    %v6663 = vpack.c.b16 %v3911, %v3903
    %v6664 = vpack.c.b16 %v3912, %v3904
    %v6665 = vpack.c.b16 %v3913, %v3905
    %v6666 = vpack.c.b16 %v3922, %v3914
    %v6667 = vpack.c.b16 %v3923, %v3915
    %v6668 = vpack.c.b16 %v3924, %v3916
    %v6669 = vpack.c.b16 %v3925, %v3917
    %v6670 = vpack.c.b16 %v3926, %v3918
    %v6671 = vpack.c.b16 %v3927, %v3919
    %v6672 = vpack.c.b16 %v3928, %v3920
    %v6673 = vpack.c.b16 %v3929, %v3921
    %v6674 = vpack.c.b16 %v3938, %v3930
    %v6675 = vpack.c.b16 %v3939, %v3931
    %v6676 = vpack.c.b16 %v3940, %v3932
    %v6677 = vpack.c.b16 %v3941, %v3933
    %v6678 = vpack.c.b16 %v3942, %v3934
    %v6679 = vpack.c.b16 %v3943, %v3935
    %v6680 = vpack.c.b16 %v3944, %v3936
    %v6681 = vpack.c.b16 %v3945, %v3937
    %v6682 = vpack.c.b16 %v3954, %v3946
    %v6683 = vpack.c.b16 %v3955, %v3947
    %v6684 = vpack.c.b16 %v3956, %v3948
    %v6685 = vpack.c.b16 %v3957, %v3949
    %v6686 = vpack.c.b16 %v3958, %v3950
    %v6687 = vpack.c.b16 %v3959, %v3951
    %v6688 = vpack.c.b16 %v3960, %v3952
    %v6689 = vpack.c.b16 %v3961, %v3953
    %v6690 = vpack.c.b16 %v3970, %v3962
    %v6691 = vpack.c.b16 %v3971, %v3963
    %v6692 = vpack.c.b16 %v3972, %v3964
    %v6693 = vpack.c.b16 %v3973, %v3965
    %v6694 = vpack.c.b16 %v3974, %v3966
    %v6695 = vpack.c.b16 %v3975, %v3967
    %v6696 = vpack.c.b16 %v3976, %v3968
    %v6697 = vpack.c.b16 %v3977, %v3969
    %v6698 = vpack.c.b16 %v3986, %v3978
    %v6699 = vpack.c.b16 %v3987, %v3979
    %v6700 = vpack.c.b16 %v3988, %v3980
    %v6701 = vpack.c.b16 %v3989, %v3981
    %v6702 = vpack.c.b16 %v3990, %v3982
    %v6703 = vpack.c.b16 %v3991, %v3983
    %v6704 = vpack.c.b16 %v3992, %v3984
    %v6705 = vpack.c.b16 %v3993, %v3985
    %v6706 = vpack.c.b16 %v4002, %v3994
    %v6707 = vpack.c.b16 %v4003, %v3995
    %v6708 = vpack.c.b16 %v4004, %v3996
    %v6709 = vpack.c.b16 %v4005, %v3997
    %v6710 = vpack.c.b16 %v4006, %v3998
    %v6711 = vpack.c.b16 %v4007, %v3999
    %v6712 = vpack.c.b16 %v4008, %v4000
    %v6713 = vpack.c.b16 %v4009, %v4001
    %v6714 = vpack.c.b16 %v4018, %v4010
    %v6715 = vpack.c.b16 %v4019, %v4011
    %v6716 = vpack.c.b16 %v4020, %v4012
    %v6717 = vpack.c.b16 %v4021, %v4013
    %v6718 = vpack.c.b16 %v4022, %v4014
    %v6719 = vpack.c.b16 %v4023, %v4015
    %v6720 = vpack.c.b16 %v4024, %v4016
    %v6721 = vpack.c.b16 %v4025, %v4017
    %v6722 = vpack.c.b16 %v4034, %v4026
    %v6723 = vpack.c.b16 %v4035, %v4027
    %v6724 = vpack.c.b16 %v4036, %v4028
    %v6725 = vpack.c.b16 %v4037, %v4029
    %v6726 = vpack.c.b16 %v4038, %v4030
    %v6727 = vpack.c.b16 %v4039, %v4031
    %v6728 = vpack.c.b16 %v4040, %v4032
    %v6729 = vpack.c.b16 %v4041, %v4033
    %v6730 = vpack.c.b16 %v4050, %v4042
    %v6731 = vpack.c.b16 %v4051, %v4043
    %v6732 = vpack.c.b16 %v4052, %v4044
    %v6733 = vpack.c.b16 %v4053, %v4045
    %v6734 = vpack.c.b16 %v4054, %v4046
    %v6735 = vpack.c.b16 %v4055, %v4047
    %v6736 = vpack.c.b16 %v4056, %v4048
    %v6737 = vpack.c.b16 %v4057, %v4049
    %v6738 = vpack.c.b16 %v4066, %v4058
    %v6739 = vpack.c.b16 %v4067, %v4059
    %v6740 = vpack.c.b16 %v4068, %v4060
    %v6741 = vpack.c.b16 %v4069, %v4061
    %v6742 = vpack.c.b16 %v4070, %v4062
    %v6743 = vpack.c.b16 %v4071, %v4063
    %v6744 = vpack.c.b16 %v4072, %v4064
    %v6745 = vpack.c.b16 %v4073, %v4065
    %v6746 = vpack.c.b16 %v4082, %v4074
    %v6747 = vpack.c.b16 %v4083, %v4075
    %v6748 = vpack.c.b16 %v4084, %v4076
    %v6749 = vpack.c.b16 %v4085, %v4077
    %v6750 = vpack.c.b16 %v4086, %v4078
    %v6751 = vpack.c.b16 %v4087, %v4079
    %v6752 = vpack.c.b16 %v4088, %v4080
    %v6753 = vpack.c.b16 %v4089, %v4081
    %v6754 = vpack.c.b16 %v4098, %v4090
    %v6755 = vpack.c.b16 %v4099, %v4091
    %v6756 = vpack.c.b16 %v4100, %v4092
    %v6757 = vpack.c.b16 %v4101, %v4093
    %v6758 = vpack.c.b16 %v4102, %v4094
    %v6759 = vpack.c.b16 %v4103, %v4095
    %v6760 = vpack.c.b16 %v4104, %v4096
    %v6761 = vpack.c.b16 %v4105, %v4097
    %v6762 = vpack.c.b16 %v4114, %v4106
    %v6763 = vpack.c.b16 %v4115, %v4107
    %v6764 = vpack.c.b16 %v4116, %v4108
    %v6765 = vpack.c.b16 %v4117, %v4109
    %v6766 = vpack.c.b16 %v4118, %v4110
    %v6767 = vpack.c.b16 %v4119, %v4111
    %v6768 = vpack.c.b16 %v4120, %v4112
    %v6769 = vpack.c.b16 %v4121, %v4113
    %v6770 = vpack.c.b16 %v4130, %v4122
    %v6771 = vpack.c.b16 %v4131, %v4123
    %v6772 = vpack.c.b16 %v4132, %v4124
    %v6773 = vpack.c.b16 %v4133, %v4125
    %v6774 = vpack.c.b16 %v4134, %v4126
    %v6775 = vpack.c.b16 %v4135, %v4127
    %v6776 = vpack.c.b16 %v4136, %v4128
    %v6777 = vpack.c.b16 %v4137, %v4129
    %v6778 = vpack.c.b16 %v4146, %v4138
    %v6779 = vpack.c.b16 %v4147, %v4139
    %v6780 = vpack.c.b16 %v4148, %v4140
    %v6781 = vpack.c.b16 %v4149, %v4141
    %v6782 = vpack.c.b16 %v4150, %v4142
    %v6783 = vpack.c.b16 %v4151, %v4143
    %v6784 = vpack.c.b16 %v4152, %v4144
    %v6785 = vpack.c.b16 %v4153, %v4145
    %v6786 = vpack.c.b16 %v4162, %v4154
    %v6787 = vpack.c.b16 %v4163, %v4155
    %v6788 = vpack.c.b16 %v4164, %v4156
    %v6789 = vpack.c.b16 %v4165, %v4157
    %v6790 = vpack.c.b16 %v4166, %v4158
    %v6791 = vpack.c.b16 %v4167, %v4159
    %v6792 = vpack.c.b16 %v4168, %v4160
    %v6793 = vpack.c.b16 %v4169, %v4161
    %v6794 = vpack.c.b16 %v4178, %v4170
    %v6795 = vpack.c.b16 %v4179, %v4171
    %v6796 = vpack.c.b16 %v4180, %v4172
    %v6797 = vpack.c.b16 %v4181, %v4173
    %v6798 = vpack.c.b16 %v4182, %v4174
    %v6799 = vpack.c.b16 %v4183, %v4175
    %v6800 = vpack.c.b16 %v4184, %v4176
    %v6801 = vpack.c.b16 %v4185, %v4177
    %v6802 = vpack.c.b16 %v4194, %v4186
    %v6803 = vpack.c.b16 %v4195, %v4187
    %v6804 = vpack.c.b16 %v4196, %v4188
    %v6805 = vpack.c.b16 %v4197, %v4189
    %v6806 = vpack.c.b16 %v4198, %v4190
    %v6807 = vpack.c.b16 %v4199, %v4191
    %v6808 = vpack.c.b16 %v4200, %v4192
    %v6809 = vpack.c.b16 %v4201, %v4193
    %v6810 = vpack.c.b16 %v4210, %v4202
    %v6811 = vpack.c.b16 %v4211, %v4203
    %v6812 = vpack.c.b16 %v4212, %v4204
    %v6813 = vpack.c.b16 %v4213, %v4205
    %v6814 = vpack.c.b16 %v4214, %v4206
    %v6815 = vpack.c.b16 %v4215, %v4207
    %v6816 = vpack.c.b16 %v4216, %v4208
    %v6817 = vpack.c.b16 %v4217, %v4209
    %v6818 = vpack.c.b16 %v4226, %v4218
    %v6819 = vpack.c.b16 %v4227, %v4219
    %v6820 = vpack.c.b16 %v4228, %v4220
    %v6821 = vpack.c.b16 %v4229, %v4221
    %v6822 = vpack.c.b16 %v4230, %v4222
    %v6823 = vpack.c.b16 %v4231, %v4223
    %v6824 = vpack.c.b16 %v4232, %v4224
    %v6825 = vpack.c.b16 %v4233, %v4225
    %v6826 = vpack.c.b16 %v4242, %v4234
    %v6827 = vpack.c.b16 %v4243, %v4235
    %v6828 = vpack.c.b16 %v4244, %v4236
    %v6829 = vpack.c.b16 %v4245, %v4237
    %v6830 = vpack.c.b16 %v4246, %v4238
    %v6831 = vpack.c.b16 %v4247, %v4239
    %v6832 = vpack.c.b16 %v4248, %v4240
    %v6833 = vpack.c.b16 %v4249, %v4241
    %v6834 = vpack.c.b16 %v4258, %v4250
    %v6835 = vpack.c.b16 %v4259, %v4251
    %v6836 = vpack.c.b16 %v4260, %v4252
    %v6837 = vpack.c.b16 %v4261, %v4253
    %v6838 = vpack.c.b16 %v4262, %v4254
    %v6839 = vpack.c.b16 %v4263, %v4255
    %v6840 = vpack.c.b16 %v4264, %v4256
    %v6841 = vpack.c.b16 %v4265, %v4257
    %v6842 = vpack.c.b16 %v4274, %v4266
    %v6843 = vpack.c.b16 %v4275, %v4267
    %v6844 = vpack.c.b16 %v4276, %v4268
    %v6845 = vpack.c.b16 %v4277, %v4269
    %v6846 = vpack.c.b16 %v4278, %v4270
    %v6847 = vpack.c.b16 %v4279, %v4271
    %v6848 = vpack.c.b16 %v4280, %v4272
    %v6849 = vpack.c.b16 %v4281, %v4273
    %v6850 = vpack.c.b16 %v4290, %v4282
    %v6851 = vpack.c.b16 %v4291, %v4283
    %v6852 = vpack.c.b16 %v4292, %v4284
    %v6853 = vpack.c.b16 %v4293, %v4285
    %v6854 = vpack.c.b16 %v4294, %v4286
    %v6855 = vpack.c.b16 %v4295, %v4287
    %v6856 = vpack.c.b16 %v4296, %v4288
    %v6857 = vpack.c.b16 %v4297, %v4289
    %v6858 = vpack.c.b16 %v4306, %v4298
    %v6859 = vpack.c.b16 %v4307, %v4299
    %v6860 = vpack.c.b16 %v4308, %v4300
    %v6861 = vpack.c.b16 %v4309, %v4301
    %v6862 = vpack.c.b16 %v4310, %v4302
    %v6863 = vpack.c.b16 %v4311, %v4303
    %v6864 = vpack.c.b16 %v4312, %v4304
    %v6865 = vpack.c.b16 %v4313, %v4305
    %v6866 = vpack.c.b16 %v4322, %v4314
    %v6867 = vpack.c.b16 %v4323, %v4315
    %v6868 = vpack.c.b16 %v4324, %v4316
    %v6869 = vpack.c.b16 %v4325, %v4317
    %v6870 = vpack.c.b16 %v4326, %v4318
    %v6871 = vpack.c.b16 %v4327, %v4319
    %v6872 = vpack.c.b16 %v4328, %v4320
    %v6873 = vpack.c.b16 %v4329, %v4321
    %v6874 = vpack.c.b16 %v4338, %v4330
    %v6875 = vpack.c.b16 %v4339, %v4331
    %v6876 = vpack.c.b16 %v4340, %v4332
    %v6877 = vpack.c.b16 %v4341, %v4333
    %v6878 = vpack.c.b16 %v4342, %v4334
    %v6879 = vpack.c.b16 %v4343, %v4335
    %v6880 = vpack.c.b16 %v4344, %v4336
    %v6881 = vpack.c.b16 %v4345, %v4337
    %v6882 = vpack.c.b16 %v4354, %v4346
    %v6883 = vpack.c.b16 %v4355, %v4347
    %v6884 = vpack.c.b16 %v4356, %v4348
    %v6885 = vpack.c.b16 %v4357, %v4349
    %v6886 = vpack.c.b16 %v4358, %v4350
    %v6887 = vpack.c.b16 %v4359, %v4351
    %v6888 = vpack.c.b16 %v4360, %v4352
    %v6889 = vpack.c.b16 %v4361, %v4353
    %v6890 = vpack.c.b16 %v4370, %v4362
    %v6891 = vpack.c.b16 %v4371, %v4363
    %v6892 = vpack.c.b16 %v4372, %v4364
    %v6893 = vpack.c.b16 %v4373, %v4365
    %v6894 = vpack.c.b16 %v4374, %v4366
    %v6895 = vpack.c.b16 %v4375, %v4367
    %v6896 = vpack.c.b16 %v4376, %v4368
    %v6897 = vpack.c.b16 %v4377, %v4369
    %v6898 = vpack.c.b16 %v4386, %v4378
    %v6899 = vpack.c.b16 %v4387, %v4379
    %v6900 = vpack.c.b16 %v4388, %v4380
    %v6901 = vpack.c.b16 %v4389, %v4381
    %v6902 = vpack.c.b16 %v4390, %v4382
    %v6903 = vpack.c.b16 %v4391, %v4383
    %v6904 = vpack.c.b16 %v4392, %v4384
    %v6905 = vpack.c.b16 %v4393, %v4385
    %v6906 = vpack.c.b16 %v4402, %v4394
    %v6907 = vpack.c.b16 %v4403, %v4395
    %v6908 = vpack.c.b16 %v4404, %v4396
    %v6909 = vpack.c.b16 %v4405, %v4397
    %v6910 = vpack.c.b16 %v4406, %v4398
    %v6911 = vpack.c.b16 %v4407, %v4399
    %v6912 = vpack.c.b16 %v4408, %v4400
    %v6913 = vpack.c.b16 %v4409, %v4401
    %v6914 = vpack.c.b16 %v4418, %v4410
    %v6915 = vpack.c.b16 %v4419, %v4411
    %v6916 = vpack.c.b16 %v4420, %v4412
    %v6917 = vpack.c.b16 %v4421, %v4413
    %v6918 = vpack.c.b16 %v4422, %v4414
    %v6919 = vpack.c.b16 %v4423, %v4415
    %v6920 = vpack.c.b16 %v4424, %v4416
    %v6921 = vpack.c.b16 %v4425, %v4417
    %v6922 = vpack.c.b16 %v4434, %v4426
    %v6923 = vpack.c.b16 %v4435, %v4427
    %v6924 = vpack.c.b16 %v4436, %v4428
    %v6925 = vpack.c.b16 %v4437, %v4429
    %v6926 = vpack.c.b16 %v4438, %v4430
    %v6927 = vpack.c.b16 %v4439, %v4431
    %v6928 = vpack.c.b16 %v4440, %v4432
    %v6929 = vpack.c.b16 %v4441, %v4433
    %v6930 = vpack.c.b16 %v4450, %v4442
    %v6931 = vpack.c.b16 %v4451, %v4443
    %v6932 = vpack.c.b16 %v4452, %v4444
    %v6933 = vpack.c.b16 %v4453, %v4445
    %v6934 = vpack.c.b16 %v4454, %v4446
    %v6935 = vpack.c.b16 %v4455, %v4447
    %v6936 = vpack.c.b16 %v4456, %v4448
    %v6937 = vpack.c.b16 %v4457, %v4449
    %v6938 = vpack.c.b16 %v4466, %v4458
    %v6939 = vpack.c.b16 %v4467, %v4459
    %v6940 = vpack.c.b16 %v4468, %v4460
    %v6941 = vpack.c.b16 %v4469, %v4461
    %v6942 = vpack.c.b16 %v4470, %v4462
    %v6943 = vpack.c.b16 %v4471, %v4463
    %v6944 = vpack.c.b16 %v4472, %v4464
    %v6945 = vpack.c.b16 %v4473, %v4465
    %v6946 = vpack.c.b16 %v4482, %v4474
    %v6947 = vpack.c.b16 %v4483, %v4475
    %v6948 = vpack.c.b16 %v4484, %v4476
    %v6949 = vpack.c.b16 %v4485, %v4477
    %v6950 = vpack.c.b16 %v4486, %v4478
    %v6951 = vpack.c.b16 %v4487, %v4479
    %v6952 = vpack.c.b16 %v4488, %v4480
    %v6953 = vpack.c.b16 %v4489, %v4481
    %v6954 = vpack.c.b16 %v4498, %v4490
    %v6955 = vpack.c.b16 %v4499, %v4491
    %v6956 = vpack.c.b16 %v4500, %v4492
    %v6957 = vpack.c.b16 %v4501, %v4493
    %v6958 = vpack.c.b16 %v4502, %v4494
    %v6959 = vpack.c.b16 %v4503, %v4495
    %v6960 = vpack.c.b16 %v4504, %v4496
    %v6961 = vpack.c.b16 %v4505, %v4497
    %v6962 = vpack.c.b16 %v4514, %v4506
    %v6963 = vpack.c.b16 %v4515, %v4507
    %v6964 = vpack.c.b16 %v4516, %v4508
    %v6965 = vpack.c.b16 %v4517, %v4509
    %v6966 = vpack.c.b16 %v4518, %v4510
    %v6967 = vpack.c.b16 %v4519, %v4511
    %v6968 = vpack.c.b16 %v4520, %v4512
    %v6969 = vpack.c.b16 %v4521, %v4513
    %v6970 = vpack.c.b16 %v4530, %v4522
    %v6971 = vpack.c.b16 %v4531, %v4523
    %v6972 = vpack.c.b16 %v4532, %v4524
    %v6973 = vpack.c.b16 %v4533, %v4525
    %v6974 = vpack.c.b16 %v4534, %v4526
    %v6975 = vpack.c.b16 %v4535, %v4527
    %v6976 = vpack.c.b16 %v4536, %v4528
    %v6977 = vpack.c.b16 %v4537, %v4529
    %v6978 = vpack.c.b16 %v4546, %v4538
    %v6979 = vpack.c.b16 %v4547, %v4539
    %v6980 = vpack.c.b16 %v4548, %v4540
    %v6981 = vpack.c.b16 %v4549, %v4541
    %v6982 = vpack.c.b16 %v4550, %v4542
    %v6983 = vpack.c.b16 %v4551, %v4543
    %v6984 = vpack.c.b16 %v4552, %v4544
    %v6985 = vpack.c.b16 %v4553, %v4545
    %v6986 = vpack.c.b16 %v4562, %v4554
    %v6987 = vpack.c.b16 %v4563, %v4555
    %v6988 = vpack.c.b16 %v4564, %v4556
    %v6989 = vpack.c.b16 %v4565, %v4557
    %v6990 = vpack.c.b16 %v4566, %v4558
    %v6991 = vpack.c.b16 %v4567, %v4559
    %v6992 = vpack.c.b16 %v4568, %v4560
    %v6993 = vpack.c.b16 %v4569, %v4561
    %v6994 = vpack.c.b16 %v4578, %v4570
    %v6995 = vpack.c.b16 %v4579, %v4571
    %v6996 = vpack.c.b16 %v4580, %v4572
    %v6997 = vpack.c.b16 %v4581, %v4573
    %v6998 = vpack.c.b16 %v4582, %v4574
    %v6999 = vpack.c.b16 %v4583, %v4575
    %v7000 = vpack.c.b16 %v4584, %v4576
    %v7001 = vpack.c.b16 %v4585, %v4577
    %v7002 = vpack.c.b16 %v4594, %v4586
    %v7003 = vpack.c.b16 %v4595, %v4587
    %v7004 = vpack.c.b16 %v4596, %v4588
    %v7005 = vpack.c.b16 %v4597, %v4589
    %v7006 = vpack.c.b16 %v4598, %v4590
    %v7007 = vpack.c.b16 %v4599, %v4591
    %v7008 = vpack.c.b16 %v4600, %v4592
    %v7009 = vpack.c.b16 %v4601, %v4593
    %v7010 = vpack.c.b16 %v4610, %v4602
    %v7011 = vpack.c.b16 %v4611, %v4603
    %v7012 = vpack.c.b16 %v4612, %v4604
    %v7013 = vpack.c.b16 %v4613, %v4605
    %v7014 = vpack.c.b16 %v4614, %v4606
    %v7015 = vpack.c.b16 %v4615, %v4607
    %v7016 = vpack.c.b16 %v4616, %v4608
    %v7017 = vpack.c.b16 %v4617, %v4609
    %v7018 = vpack.c.b16 %v4626, %v4618
    %v7019 = vpack.c.b16 %v4627, %v4619
    %v7020 = vpack.c.b16 %v4628, %v4620
    %v7021 = vpack.c.b16 %v4629, %v4621
    %v7022 = vpack.c.b16 %v4630, %v4622
    %v7023 = vpack.c.b16 %v4631, %v4623
    %v7024 = vpack.c.b16 %v4632, %v4624
    %v7025 = vpack.c.b16 %v4633, %v4625
    %v7026 = vpack.c.b16 %v4642, %v4634
    %v7027 = vpack.c.b16 %v4643, %v4635
    %v7028 = vpack.c.b16 %v4644, %v4636
    %v7029 = vpack.c.b16 %v4645, %v4637
    %v7030 = vpack.c.b16 %v4646, %v4638
    %v7031 = vpack.c.b16 %v4647, %v4639
    %v7032 = vpack.c.b16 %v4648, %v4640
    %v7033 = vpack.c.b16 %v4649, %v4641
    %v7034 = vpack.c.b16 %v4658, %v4650
    %v7035 = vpack.c.b16 %v4659, %v4651
    %v7036 = vpack.c.b16 %v4660, %v4652
    %v7037 = vpack.c.b16 %v4661, %v4653
    %v7038 = vpack.c.b16 %v4662, %v4654
    %v7039 = vpack.c.b16 %v4663, %v4655
    %v7040 = vpack.c.b16 %v4664, %v4656
    %v7041 = vpack.c.b16 %v4665, %v4657
    %v7042 = vpack.c.b16 %v4674, %v4666
    %v7043 = vpack.c.b16 %v4675, %v4667
    %v7044 = vpack.c.b16 %v4676, %v4668
    %v7045 = vpack.c.b16 %v4677, %v4669
    %v7046 = vpack.c.b16 %v4678, %v4670
    %v7047 = vpack.c.b16 %v4679, %v4671
    %v7048 = vpack.c.b16 %v4680, %v4672
    %v7049 = vpack.c.b16 %v4681, %v4673
    %v7050 = vpack.c.b16 %v4690, %v4682
    %v7051 = vpack.c.b16 %v4691, %v4683
    %v7052 = vpack.c.b16 %v4692, %v4684
    %v7053 = vpack.c.b16 %v4693, %v4685
    %v7054 = vpack.c.b16 %v4694, %v4686
    %v7055 = vpack.c.b16 %v4695, %v4687
    %v7056 = vpack.c.b16 %v4696, %v4688
    %v7057 = vpack.c.b16 %v4697, %v4689
    %v7058 = vpack.c.b16 %v4706, %v4698
    %v7059 = vpack.c.b16 %v4707, %v4699
    %v7060 = vpack.c.b16 %v4708, %v4700
    %v7061 = vpack.c.b16 %v4709, %v4701
    %v7062 = vpack.c.b16 %v4710, %v4702
    %v7063 = vpack.c.b16 %v4711, %v4703
    %v7064 = vpack.c.b16 %v4712, %v4704
    %v7065 = vpack.c.b16 %v4713, %v4705
    %v7066 = vpack.c.b16 %v4722, %v4714
    %v7067 = vpack.c.b16 %v4723, %v4715
    %v7068 = vpack.c.b16 %v4724, %v4716
    %v7069 = vpack.c.b16 %v4725, %v4717
    %v7070 = vpack.c.b16 %v4726, %v4718
    %v7071 = vpack.c.b16 %v4727, %v4719
    %v7072 = vpack.c.b16 %v4728, %v4720
    %v7073 = vpack.c.b16 %v4729, %v4721
    %v7074 = vpack.c.b16 %v4738, %v4730
    %v7075 = vpack.c.b16 %v4739, %v4731
    %v7076 = vpack.c.b16 %v4740, %v4732
    %v7077 = vpack.c.b16 %v4741, %v4733
    %v7078 = vpack.c.b16 %v4742, %v4734
    %v7079 = vpack.c.b16 %v4743, %v4735
    %v7080 = vpack.c.b16 %v4744, %v4736
    %v7081 = vpack.c.b16 %v4745, %v4737
    %v7082 = vpack.c.b16 %v4754, %v4746
    %v7083 = vpack.c.b16 %v4755, %v4747
    %v7084 = vpack.c.b16 %v4756, %v4748
    %v7085 = vpack.c.b16 %v4757, %v4749
    %v7086 = vpack.c.b16 %v4758, %v4750
    %v7087 = vpack.c.b16 %v4759, %v4751
    %v7088 = vpack.c.b16 %v4760, %v4752
    %v7089 = vpack.c.b16 %v4761, %v4753
    %v7090 = vpack.c.b16 %v4770, %v4762
    %v7091 = vpack.c.b16 %v4771, %v4763
    %v7092 = vpack.c.b16 %v4772, %v4764
    %v7093 = vpack.c.b16 %v4773, %v4765
    %v7094 = vpack.c.b16 %v4774, %v4766
    %v7095 = vpack.c.b16 %v4775, %v4767
    %v7096 = vpack.c.b16 %v4776, %v4768
    %v7097 = vpack.c.b16 %v4777, %v4769
    %v7098 = vpack.c.b16 %v4786, %v4778
    %v7099 = vpack.c.b16 %v4787, %v4779
    %v7100 = vpack.c.b16 %v4788, %v4780
    %v7101 = vpack.c.b16 %v4789, %v4781
    %v7102 = vpack.c.b16 %v4790, %v4782
    %v7103 = vpack.c.b16 %v4791, %v4783
    %v7104 = vpack.c.b16 %v4792, %v4784
    %v7105 = vpack.c.b16 %v4793, %v4785
    %v7106 = vpack.c.b16 %v4802, %v4794
    %v7107 = vpack.c.b16 %v4803, %v4795
    %v7108 = vpack.c.b16 %v4804, %v4796
    %v7109 = vpack.c.b16 %v4805, %v4797
    %v7110 = vpack.c.b16 %v4806, %v4798
    %v7111 = vpack.c.b16 %v4807, %v4799
    %v7112 = vpack.c.b16 %v4808, %v4800
    %v7113 = vpack.c.b16 %v4809, %v4801
    %v7114 = vpack.c.b16 %v4818, %v4810
    %v7115 = vpack.c.b16 %v4819, %v4811
    %v7116 = vpack.c.b16 %v4820, %v4812
    %v7117 = vpack.c.b16 %v4821, %v4813
    %v7118 = vpack.c.b16 %v4822, %v4814
    %v7119 = vpack.c.b16 %v4823, %v4815
    %v7120 = vpack.c.b16 %v4824, %v4816
    %v7121 = vpack.c.b16 %v4825, %v4817
    %v7122 = vpack.c.b16 %v4834, %v4826
    %v7123 = vpack.c.b16 %v4835, %v4827
    %v7124 = vpack.c.b16 %v4836, %v4828
    %v7125 = vpack.c.b16 %v4837, %v4829
    %v7126 = vpack.c.b16 %v4838, %v4830
    %v7127 = vpack.c.b16 %v4839, %v4831
    %v7128 = vpack.c.b16 %v4840, %v4832
    %v7129 = vpack.c.b16 %v4841, %v4833
    %v7130 = vpack.c.b16 %v4850, %v4842
    %v7131 = vpack.c.b16 %v4851, %v4843
    %v7132 = vpack.c.b16 %v4852, %v4844
    %v7133 = vpack.c.b16 %v4853, %v4845
    %v7134 = vpack.c.b16 %v4854, %v4846
    %v7135 = vpack.c.b16 %v4855, %v4847
    %v7136 = vpack.c.b16 %v4856, %v4848
    %v7137 = vpack.c.b16 %v4857, %v4849
    %v7138 = vpack.c.b16 %v4866, %v4858
    %v7139 = vpack.c.b16 %v4867, %v4859
    %v7140 = vpack.c.b16 %v4868, %v4860
    %v7141 = vpack.c.b16 %v4869, %v4861
    %v7142 = vpack.c.b16 %v4870, %v4862
    %v7143 = vpack.c.b16 %v4871, %v4863
    %v7144 = vpack.c.b16 %v4872, %v4864
    %v7145 = vpack.c.b16 %v4873, %v4865
    %v7146 = vpack.c.b16 %v4882, %v4874
    %v7147 = vpack.c.b16 %v4883, %v4875
    %v7148 = vpack.c.b16 %v4884, %v4876
    %v7149 = vpack.c.b16 %v4885, %v4877
    %v7150 = vpack.c.b16 %v4886, %v4878
    %v7151 = vpack.c.b16 %v4887, %v4879
    %v7152 = vpack.c.b16 %v4888, %v4880
    %v7153 = vpack.c.b16 %v4889, %v4881
    %v7154 = vpack.c.b16 %v4898, %v4890
    %v7155 = vpack.c.b16 %v4899, %v4891
    %v7156 = vpack.c.b16 %v4900, %v4892
    %v7157 = vpack.c.b16 %v4901, %v4893
    %v7158 = vpack.c.b16 %v4902, %v4894
    %v7159 = vpack.c.b16 %v4903, %v4895
    %v7160 = vpack.c.b16 %v4904, %v4896
    %v7161 = vpack.c.b16 %v4905, %v4897
    %v7162 = vpack.c.b16 %v4914, %v4906
    %v7163 = vpack.c.b16 %v4915, %v4907
    %v7164 = vpack.c.b16 %v4916, %v4908
    %v7165 = vpack.c.b16 %v4917, %v4909
    %v7166 = vpack.c.b16 %v4918, %v4910
    %v7167 = vpack.c.b16 %v4919, %v4911
    %v7168 = vpack.c.b16 %v4920, %v4912
    %v7169 = vpack.c.b16 %v4921, %v4913
    %v7170 = vpack.c.b16 %v4930, %v4922
    %v7171 = vpack.c.b16 %v4931, %v4923
    %v7172 = vpack.c.b16 %v4932, %v4924
    %v7173 = vpack.c.b16 %v4933, %v4925
    %v7174 = vpack.c.b16 %v4934, %v4926
    %v7175 = vpack.c.b16 %v4935, %v4927
    %v7176 = vpack.c.b16 %v4936, %v4928
    %v7177 = vpack.c.b16 %v4937, %v4929
    %v7178 = vpack.c.b16 %v4946, %v4938
    %v7179 = vpack.c.b16 %v4947, %v4939
    %v7180 = vpack.c.b16 %v4948, %v4940
    %v7181 = vpack.c.b16 %v4949, %v4941
    %v7182 = vpack.c.b16 %v4950, %v4942
    %v7183 = vpack.c.b16 %v4951, %v4943
    %v7184 = vpack.c.b16 %v4952, %v4944
    %v7185 = vpack.c.b16 %v4953, %v4945
    %v7186 = vpack.c.b16 %v4962, %v4954
    %v7187 = vpack.c.b16 %v4963, %v4955
    %v7188 = vpack.c.b16 %v4964, %v4956
    %v7189 = vpack.c.b16 %v4965, %v4957
    %v7190 = vpack.c.b16 %v4966, %v4958
    %v7191 = vpack.c.b16 %v4967, %v4959
    %v7192 = vpack.c.b16 %v4968, %v4960
    %v7193 = vpack.c.b16 %v4969, %v4961
    %v7194 = vpack.c.b16 %v4978, %v4970
    %v7195 = vpack.c.b16 %v4979, %v4971
    %v7196 = vpack.c.b16 %v4980, %v4972
    %v7197 = vpack.c.b16 %v4981, %v4973
    %v7198 = vpack.c.b16 %v4982, %v4974
    %v7199 = vpack.c.b16 %v4983, %v4975
    %v7200 = vpack.c.b16 %v4984, %v4976
    %v7201 = vpack.c.b16 %v4985, %v4977
    %v7202 = vpack.c.b16 %v4994, %v4986
    %v7203 = vpack.c.b16 %v4995, %v4987
    %v7204 = vpack.c.b16 %v4996, %v4988
    %v7205 = vpack.c.b16 %v4997, %v4989
    %v7206 = vpack.c.b16 %v4998, %v4990
    %v7207 = vpack.c.b16 %v4999, %v4991
    %v7208 = vpack.c.b16 %v5000, %v4992
    %v7209 = vpack.c.b16 %v5001, %v4993
    %v7210 = vpack.c.b16 %v5010, %v5002
    %v7211 = vpack.c.b16 %v5011, %v5003
    %v7212 = vpack.c.b16 %v5012, %v5004
    %v7213 = vpack.c.b16 %v5013, %v5005
    %v7214 = vpack.c.b16 %v5014, %v5006
    %v7215 = vpack.c.b16 %v5015, %v5007
    %v7216 = vpack.c.b16 %v5016, %v5008
    %v7217 = vpack.c.b16 %v5017, %v5009
    %v7218 = vpack.c.b16 %v5026, %v5018
    %v7219 = vpack.c.b16 %v5027, %v5019
    %v7220 = vpack.c.b16 %v5028, %v5020
    %v7221 = vpack.c.b16 %v5029, %v5021
    %v7222 = vpack.c.b16 %v5030, %v5022
    %v7223 = vpack.c.b16 %v5031, %v5023
    %v7224 = vpack.c.b16 %v5032, %v5024
    %v7225 = vpack.c.b16 %v5033, %v5025
    %v7226 = vpack.c.b16 %v5042, %v5034
    %v7227 = vpack.c.b16 %v5043, %v5035
    %v7228 = vpack.c.b16 %v5044, %v5036
    %v7229 = vpack.c.b16 %v5045, %v5037
    %v7230 = vpack.c.b16 %v5046, %v5038
    %v7231 = vpack.c.b16 %v5047, %v5039
    %v7232 = vpack.c.b16 %v5048, %v5040
    %v7233 = vpack.c.b16 %v5049, %v5041
    %v7234 = vpack.c.b16 %v5058, %v5050
    %v7235 = vpack.c.b16 %v5059, %v5051
    %v7236 = vpack.c.b16 %v5060, %v5052
    %v7237 = vpack.c.b16 %v5061, %v5053
    %v7238 = vpack.c.b16 %v5062, %v5054
    %v7239 = vpack.c.b16 %v5063, %v5055
    %v7240 = vpack.c.b16 %v5064, %v5056
    %v7241 = vpack.c.b16 %v5065, %v5057
    %v7242 = vpack.c.b16 %v5074, %v5066
    %v7243 = vpack.c.b16 %v5075, %v5067
    %v7244 = vpack.c.b16 %v5076, %v5068
    %v7245 = vpack.c.b16 %v5077, %v5069
    %v7246 = vpack.c.b16 %v5078, %v5070
    %v7247 = vpack.c.b16 %v5079, %v5071
    %v7248 = vpack.c.b16 %v5080, %v5072
    %v7249 = vpack.c.b16 %v5081, %v5073
    %v7250 = vpack.c.b16 %v5090, %v5082
    %v7251 = vpack.c.b16 %v5091, %v5083
    %v7252 = vpack.c.b16 %v5092, %v5084
    %v7253 = vpack.c.b16 %v5093, %v5085
    %v7254 = vpack.c.b16 %v5094, %v5086
    %v7255 = vpack.c.b16 %v5095, %v5087
    %v7256 = vpack.c.b16 %v5096, %v5088
    %v7257 = vpack.c.b16 %v5097, %v5089
    %v7258 = vpack.c.b16 %v5106, %v5098
    %v7259 = vpack.c.b16 %v5107, %v5099
    %v7260 = vpack.c.b16 %v5108, %v5100
    %v7261 = vpack.c.b16 %v5109, %v5101
    %v7262 = vpack.c.b16 %v5110, %v5102
    %v7263 = vpack.c.b16 %v5111, %v5103
    %v7264 = vpack.c.b16 %v5112, %v5104
    %v7265 = vpack.c.b16 %v5113, %v5105
    %v7266 = vpack.c.b16 %v5122, %v5114
    %v7267 = vpack.c.b16 %v5123, %v5115
    %v7268 = vpack.c.b16 %v5124, %v5116
    %v7269 = vpack.c.b16 %v5125, %v5117
    %v7270 = vpack.c.b16 %v5126, %v5118
    %v7271 = vpack.c.b16 %v5127, %v5119
    %v7272 = vpack.c.b16 %v5128, %v5120
    %v7273 = vpack.c.b16 %v5129, %v5121
    %v7274 = vpack.c.b16 %v5138, %v5130
    %v7275 = vpack.c.b16 %v5139, %v5131
    %v7276 = vpack.c.b16 %v5140, %v5132
    %v7277 = vpack.c.b16 %v5141, %v5133
    %v7278 = vpack.c.b16 %v5142, %v5134
    %v7279 = vpack.c.b16 %v5143, %v5135
    %v7280 = vpack.c.b16 %v5144, %v5136
    %v7281 = vpack.c.b16 %v5145, %v5137
    %v7282 = vpack.c.b16 %v5154, %v5146
    %v7283 = vpack.c.b16 %v5155, %v5147
    %v7284 = vpack.c.b16 %v5156, %v5148
    %v7285 = vpack.c.b16 %v5157, %v5149
    %v7286 = vpack.c.b16 %v5158, %v5150
    %v7287 = vpack.c.b16 %v5159, %v5151
    %v7288 = vpack.c.b16 %v5160, %v5152
    %v7289 = vpack.c.b16 %v5161, %v5153
    %v7290 = vpack.c.b16 %v5170, %v5162
    %v7291 = vpack.c.b16 %v5171, %v5163
    %v7292 = vpack.c.b16 %v5172, %v5164
    %v7293 = vpack.c.b16 %v5173, %v5165
    %v7294 = vpack.c.b16 %v5174, %v5166
    %v7295 = vpack.c.b16 %v5175, %v5167
    %v7296 = vpack.c.b16 %v5176, %v5168
    %v7297 = vpack.c.b16 %v5177, %v5169
    %v7298 = vpack.c.b16 %v5186, %v5178
    %v7299 = vpack.c.b16 %v5187, %v5179
    %v7300 = vpack.c.b16 %v5188, %v5180
    %v7301 = vpack.c.b16 %v5189, %v5181
    %v7302 = vpack.c.b16 %v5190, %v5182
    %v7303 = vpack.c.b16 %v5191, %v5183
    %v7304 = vpack.c.b16 %v5192, %v5184
    %v7305 = vpack.c.b16 %v5193, %v5185
    %v7306 = vpack.c.b16 %v5202, %v5194
    %v7307 = vpack.c.b16 %v5203, %v5195
    %v7308 = vpack.c.b16 %v5204, %v5196
    %v7309 = vpack.c.b16 %v5205, %v5197
    %v7310 = vpack.c.b16 %v5206, %v5198
    %v7311 = vpack.c.b16 %v5207, %v5199
    %v7312 = vpack.c.b16 %v5208, %v5200
    %v7313 = vpack.c.b16 %v5209, %v5201
    %v7314 = vpack.c.b16 %v5218, %v5210
    %v7315 = vpack.c.b16 %v5219, %v5211
    %v7316 = vpack.c.b16 %v5220, %v5212
    %v7317 = vpack.c.b16 %v5221, %v5213
    %v7318 = vpack.c.b16 %v5222, %v5214
    %v7319 = vpack.c.b16 %v5223, %v5215
    %v7320 = vpack.c.b16 %v5224, %v5216
    %v7321 = vpack.c.b16 %v5225, %v5217
    %v7322 = vpack.c.b16 %v5234, %v5226
    %v7323 = vpack.c.b16 %v5235, %v5227
    %v7324 = vpack.c.b16 %v5236, %v5228
    %v7325 = vpack.c.b16 %v5237, %v5229
    %v7326 = vpack.c.b16 %v5238, %v5230
    %v7327 = vpack.c.b16 %v5239, %v5231
    %v7328 = vpack.c.b16 %v5240, %v5232
    %v7329 = vpack.c.b16 %v5241, %v5233
    %v7330 = vpack.c.b16 %v5250, %v5242
    %v7331 = vpack.c.b16 %v5251, %v5243
    %v7332 = vpack.c.b16 %v5252, %v5244
    %v7333 = vpack.c.b16 %v5253, %v5245
    %v7334 = vpack.c.b16 %v5254, %v5246
    %v7335 = vpack.c.b16 %v5255, %v5247
    %v7336 = vpack.c.b16 %v5256, %v5248
    %v7337 = vpack.c.b16 %v5257, %v5249
    %v7338 = vpack.c.b16 %v5266, %v5258
    %v7339 = vpack.c.b16 %v5267, %v5259
    %v7340 = vpack.c.b16 %v5268, %v5260
    %v7341 = vpack.c.b16 %v5269, %v5261
    %v7342 = vpack.c.b16 %v5270, %v5262
    %v7343 = vpack.c.b16 %v5271, %v5263
    %v7344 = vpack.c.b16 %v5272, %v5264
    %v7345 = vpack.c.b16 %v5273, %v5265
    %v7346 = vpack.c.b16 %v5282, %v5274
    %v7347 = vpack.c.b16 %v5283, %v5275
    %v7348 = vpack.c.b16 %v5284, %v5276
    %v7349 = vpack.c.b16 %v5285, %v5277
    %v7350 = vpack.c.b16 %v5286, %v5278
    %v7351 = vpack.c.b16 %v5287, %v5279
    %v7352 = vpack.c.b16 %v5288, %v5280
    %v7353 = vpack.c.b16 %v5289, %v5281
    %v7354 = vpack.c.b16 %v5298, %v5290
    %v7355 = vpack.c.b16 %v5299, %v5291
    %v7356 = vpack.c.b16 %v5300, %v5292
    %v7357 = vpack.c.b16 %v5301, %v5293
    %v7358 = vpack.c.b16 %v5302, %v5294
    %v7359 = vpack.c.b16 %v5303, %v5295
    %v7360 = vpack.c.b16 %v5304, %v5296
    %v7361 = vpack.c.b16 %v5305, %v5297
    %v7362 = vpack.c.b16 %v5314, %v5306
    %v7363 = vpack.c.b16 %v5315, %v5307
    %v7364 = vpack.c.b16 %v5316, %v5308
    %v7365 = vpack.c.b16 %v5317, %v5309
    %v7366 = vpack.c.b16 %v5318, %v5310
    %v7367 = vpack.c.b16 %v5319, %v5311
    %v7368 = vpack.c.b16 %v5320, %v5312
    %v7369 = vpack.c.b16 %v5321, %v5313
    %v7370 = vpack.c.b16 %v5330, %v5322
    %v7371 = vpack.c.b16 %v5331, %v5323
    %v7372 = vpack.c.b16 %v5332, %v5324
    %v7373 = vpack.c.b16 %v5333, %v5325
    %v7374 = vpack.c.b16 %v5334, %v5326
    %v7375 = vpack.c.b16 %v5335, %v5327
    %v7376 = vpack.c.b16 %v5336, %v5328
    %v7377 = vpack.c.b16 %v5337, %v5329
    %v7378 = vpack.c.b16 %v5346, %v5338
    %v7379 = vpack.c.b16 %v5347, %v5339
    %v7380 = vpack.c.b16 %v5348, %v5340
    %v7381 = vpack.c.b16 %v5349, %v5341
    %v7382 = vpack.c.b16 %v5350, %v5342
    %v7383 = vpack.c.b16 %v5351, %v5343
    %v7384 = vpack.c.b16 %v5352, %v5344
    %v7385 = vpack.c.b16 %v5353, %v5345
    %v7386 = vpack.c.b16 %v5362, %v5354
    %v7387 = vpack.c.b16 %v5363, %v5355
    %v7388 = vpack.c.b16 %v5364, %v5356
    %v7389 = vpack.c.b16 %v5365, %v5357
    %v7390 = vpack.c.b16 %v5366, %v5358
    %v7391 = vpack.c.b16 %v5367, %v5359
    %v7392 = vpack.c.b16 %v5368, %v5360
    %v7393 = vpack.c.b16 %v5369, %v5361
    %v7394 = vpack.c.b16 %v5378, %v5370
    %v7395 = vpack.c.b16 %v5379, %v5371
    %v7396 = vpack.c.b16 %v5380, %v5372
    %v7397 = vpack.c.b16 %v5381, %v5373
    %v7398 = vpack.c.b16 %v5382, %v5374
    %v7399 = vpack.c.b16 %v5383, %v5375
    %v7400 = vpack.c.b16 %v5384, %v5376
    %v7401 = vpack.c.b16 %v5385, %v5377
    %v7402 = vpack.c.b16 %v5394, %v5386
    %v7403 = vpack.c.b16 %v5395, %v5387
    %v7404 = vpack.c.b16 %v5396, %v5388
    %v7405 = vpack.c.b16 %v5397, %v5389
    %v7406 = vpack.c.b16 %v5398, %v5390
    %v7407 = vpack.c.b16 %v5399, %v5391
    %v7408 = vpack.c.b16 %v5400, %v5392
    %v7409 = vpack.c.b16 %v5401, %v5393
    %v7410 = vpack.c.b16 %v5410, %v5402
    %v7411 = vpack.c.b16 %v5411, %v5403
    %v7412 = vpack.c.b16 %v5412, %v5404
    %v7413 = vpack.c.b16 %v5413, %v5405
    %v7414 = vpack.c.b16 %v5414, %v5406
    %v7415 = vpack.c.b16 %v5415, %v5407
    %v7416 = vpack.c.b16 %v5416, %v5408
    %v7417 = vpack.c.b16 %v5417, %v5409
    %v7418 = vpack.c.b16 %v5426, %v5418
    %v7419 = vpack.c.b16 %v5427, %v5419
    %v7420 = vpack.c.b16 %v5428, %v5420
    %v7421 = vpack.c.b16 %v5429, %v5421
    %v7422 = vpack.c.b16 %v5430, %v5422
    %v7423 = vpack.c.b16 %v5431, %v5423
    %v7424 = vpack.c.b16 %v5432, %v5424
    %v7425 = vpack.c.b16 %v5433, %v5425
    %v7426 = vpack.c.b16 %v5442, %v5434
    %v7427 = vpack.c.b16 %v5443, %v5435
    %v7428 = vpack.c.b16 %v5444, %v5436
    %v7429 = vpack.c.b16 %v5445, %v5437
    %v7430 = vpack.c.b16 %v5446, %v5438
    %v7431 = vpack.c.b16 %v5447, %v5439
    %v7432 = vpack.c.b16 %v5448, %v5440
    %v7433 = vpack.c.b16 %v5449, %v5441
    %v7434 = vpack.c.b16 %v5458, %v5450
    %v7435 = vpack.c.b16 %v5459, %v5451
    %v7436 = vpack.c.b16 %v5460, %v5452
    %v7437 = vpack.c.b16 %v5461, %v5453
    %v7438 = vpack.c.b16 %v5462, %v5454
    %v7439 = vpack.c.b16 %v5463, %v5455
    %v7440 = vpack.c.b16 %v5464, %v5456
    %v7441 = vpack.c.b16 %v5465, %v5457
    %v7442 = vpack.c.b16 %v5474, %v5466
    %v7443 = vpack.c.b16 %v5475, %v5467
    %v7444 = vpack.c.b16 %v5476, %v5468
    %v7445 = vpack.c.b16 %v5477, %v5469
    %v7446 = vpack.c.b16 %v5478, %v5470
    %v7447 = vpack.c.b16 %v5479, %v5471
    %v7448 = vpack.c.b16 %v5480, %v5472
    %v7449 = vpack.c.b16 %v5481, %v5473
    %v7450 = vpack.c.b16 %v5490, %v5482
    %v7451 = vpack.c.b16 %v5491, %v5483
    %v7452 = vpack.c.b16 %v5492, %v5484
    %v7453 = vpack.c.b16 %v5493, %v5485
    %v7454 = vpack.c.b16 %v5494, %v5486
    %v7455 = vpack.c.b16 %v5495, %v5487
    %v7456 = vpack.c.b16 %v5496, %v5488
    %v7457 = vpack.c.b16 %v5497, %v5489
    %v7458 = vpack.c.b16 %v5506, %v5498
    %v7459 = vpack.c.b16 %v5507, %v5499
    %v7460 = vpack.c.b16 %v5508, %v5500
    %v7461 = vpack.c.b16 %v5509, %v5501
    %v7462 = vpack.c.b16 %v5510, %v5502
    %v7463 = vpack.c.b16 %v5511, %v5503
    %v7464 = vpack.c.b16 %v5512, %v5504
    %v7465 = vpack.c.b16 %v5513, %v5505
    %v7466 = vpack.c.b16 %v5522, %v5514
    %v7467 = vpack.c.b16 %v5523, %v5515
    %v7468 = vpack.c.b16 %v5524, %v5516
    %v7469 = vpack.c.b16 %v5525, %v5517
    %v7470 = vpack.c.b16 %v5526, %v5518
    %v7471 = vpack.c.b16 %v5527, %v5519
    %v7472 = vpack.c.b16 %v5528, %v5520
    %v7473 = vpack.c.b16 %v5529, %v5521
    %v7474 = vpack.c.b16 %v5538, %v5530
    %v7475 = vpack.c.b16 %v5539, %v5531
    %v7476 = vpack.c.b16 %v5540, %v5532
    %v7477 = vpack.c.b16 %v5541, %v5533
    %v7478 = vpack.c.b16 %v5542, %v5534
    %v7479 = vpack.c.b16 %v5543, %v5535
    %v7480 = vpack.c.b16 %v5544, %v5536
    %v7481 = vpack.c.b16 %v5545, %v5537
    %v7482 = vpack.c.b16 %v5554, %v5546
    %v7483 = vpack.c.b16 %v5555, %v5547
    %v7484 = vpack.c.b16 %v5556, %v5548
    %v7485 = vpack.c.b16 %v5557, %v5549
    %v7486 = vpack.c.b16 %v5558, %v5550
    %v7487 = vpack.c.b16 %v5559, %v5551
    %v7488 = vpack.c.b16 %v5560, %v5552
    %v7489 = vpack.c.b16 %v5561, %v5553
    %v7490 = vpack.c.b16 %v5570, %v5562
    %v7491 = vpack.c.b16 %v5571, %v5563
    %v7492 = vpack.c.b16 %v5572, %v5564
    %v7493 = vpack.c.b16 %v5573, %v5565
    %v7494 = vpack.c.b16 %v5574, %v5566
    %v7495 = vpack.c.b16 %v5575, %v5567
    %v7496 = vpack.c.b16 %v5576, %v5568
    %v7497 = vpack.c.b16 %v5577, %v5569
    %v7498 = vpack.c.b16 %v5586, %v5578
    %v7499 = vpack.c.b16 %v5587, %v5579
    %v7500 = vpack.c.b16 %v5588, %v5580
    %v7501 = vpack.c.b16 %v5589, %v5581
    %v7502 = vpack.c.b16 %v5590, %v5582
    %v7503 = vpack.c.b16 %v5591, %v5583
    %v7504 = vpack.c.b16 %v5592, %v5584
    %v7505 = vpack.c.b16 %v5593, %v5585
    %v7506 = vpack.c.b16 %v5602, %v5594
    %v7507 = vpack.c.b16 %v5603, %v5595
    %v7508 = vpack.c.b16 %v5604, %v5596
    %v7509 = vpack.c.b16 %v5605, %v5597
    %v7510 = vpack.c.b16 %v5606, %v5598
    %v7511 = vpack.c.b16 %v5607, %v5599
    %v7512 = vpack.c.b16 %v5608, %v5600
    %v7513 = vpack.c.b16 %v5609, %v5601
    %v7514 = vpack.c.b16 %v5618, %v5610
    %v7515 = vpack.c.b16 %v5619, %v5611
    %v7516 = vpack.c.b16 %v5620, %v5612
    %v7517 = vpack.c.b16 %v5621, %v5613
    %v7518 = vpack.c.b16 %v5622, %v5614
    %v7519 = vpack.c.b16 %v5623, %v5615
    %v7520 = vpack.c.b16 %v5624, %v5616
    %v7521 = vpack.c.b16 %v5625, %v5617
    %v7522 = vpack.c.b16 %v5634, %v5626
    %v7523 = vpack.c.b16 %v5635, %v5627
    %v7524 = vpack.c.b16 %v5636, %v5628
    %v7525 = vpack.c.b16 %v5637, %v5629
    %v7526 = vpack.c.b16 %v5638, %v5630
    %v7527 = vpack.c.b16 %v5639, %v5631
    %v7528 = vpack.c.b16 %v5640, %v5632
    %v7529 = vpack.c.b16 %v5641, %v5633
    %v7530 = vpack.c.b16 %v5650, %v5642
    %v7531 = vpack.c.b16 %v5651, %v5643
    %v7532 = vpack.c.b16 %v5652, %v5644
    %v7533 = vpack.c.b16 %v5653, %v5645
    %v7534 = vpack.c.b16 %v5654, %v5646
    %v7535 = vpack.c.b16 %v5655, %v5647
    %v7536 = vpack.c.b16 %v5656, %v5648
    %v7537 = vpack.c.b16 %v5657, %v5649
    %v7538 = vpack.c.b16 %v5666, %v5658
    %v7539 = vpack.c.b16 %v5667, %v5659
    %v7540 = vpack.c.b16 %v5668, %v5660
    %v7541 = vpack.c.b16 %v5669, %v5661
    %v7542 = vpack.c.b16 %v5670, %v5662
    %v7543 = vpack.c.b16 %v5671, %v5663
    %v7544 = vpack.c.b16 %v5672, %v5664
    %v7545 = vpack.c.b16 %v5673, %v5665
    %v7546 = vpack.c.b16 %v5682, %v5674
    %v7547 = vpack.c.b16 %v5683, %v5675
    %v7548 = vpack.c.b16 %v5684, %v5676
    %v7549 = vpack.c.b16 %v5685, %v5677
    %v7550 = vpack.c.b16 %v5686, %v5678
    %v7551 = vpack.c.b16 %v5687, %v5679
    %v7552 = vpack.c.b16 %v5688, %v5680
    %v7553 = vpack.c.b16 %v5689, %v5681
    %v7554 = vpack.c.b16 %v5698, %v5690
    %v7555 = vpack.c.b16 %v5699, %v5691
    %v7556 = vpack.c.b16 %v5700, %v5692
    %v7557 = vpack.c.b16 %v5701, %v5693
    %v7558 = vpack.c.b16 %v5702, %v5694
    %v7559 = vpack.c.b16 %v5703, %v5695
    %v7560 = vpack.c.b16 %v5704, %v5696
    %v7561 = vpack.c.b16 %v5705, %v5697
    %v7562 = vpack.c.b16 %v5714, %v5706
    %v7563 = vpack.c.b16 %v5715, %v5707
    %v7564 = vpack.c.b16 %v5716, %v5708
    %v7565 = vpack.c.b16 %v5717, %v5709
    %v7566 = vpack.c.b16 %v5718, %v5710
    %v7567 = vpack.c.b16 %v5719, %v5711
    %v7568 = vpack.c.b16 %v5720, %v5712
    %v7569 = vpack.c.b16 %v5721, %v5713
    %v7570 = vpack.c.b16 %v5730, %v5722
    %v7571 = vpack.c.b16 %v5731, %v5723
    %v7572 = vpack.c.b16 %v5732, %v5724
    %v7573 = vpack.c.b16 %v5733, %v5725
    %v7574 = vpack.c.b16 %v5734, %v5726
    %v7575 = vpack.c.b16 %v5735, %v5727
    %v7576 = vpack.c.b16 %v5736, %v5728
    %v7577 = vpack.c.b16 %v5737, %v5729
    %v7578 = vpack.c.b16 %v5746, %v5738
    %v7579 = vpack.c.b16 %v5747, %v5739
    %v7580 = vpack.c.b16 %v5748, %v5740
    %v7581 = vpack.c.b16 %v5749, %v5741
    %v7582 = vpack.c.b16 %v5750, %v5742
    %v7583 = vpack.c.b16 %v5751, %v5743
    %v7584 = vpack.c.b16 %v5752, %v5744
    %v7585 = vpack.c.b16 %v5753, %v5745
    %v7586 = vpack.c.b16 %v5762, %v5754
    %v7587 = vpack.c.b16 %v5763, %v5755
    %v7588 = vpack.c.b16 %v5764, %v5756
    %v7589 = vpack.c.b16 %v5765, %v5757
    %v7590 = vpack.c.b16 %v5766, %v5758
    %v7591 = vpack.c.b16 %v5767, %v5759
    %v7592 = vpack.c.b16 %v5768, %v5760
    %v7593 = vpack.c.b16 %v5769, %v5761
    %v7594 = vpack.c.b16 %v5778, %v5770
    %v7595 = vpack.c.b16 %v5779, %v5771
    %v7596 = vpack.c.b16 %v5780, %v5772
    %v7597 = vpack.c.b16 %v5781, %v5773
    %v7598 = vpack.c.b16 %v5782, %v5774
    %v7599 = vpack.c.b16 %v5783, %v5775
    %v7600 = vpack.c.b16 %v5784, %v5776
    %v7601 = vpack.c.b16 %v5785, %v5777
    %v7602 = vpack.c.b16 %v5794, %v5786
    %v7603 = vpack.c.b16 %v5795, %v5787
    %v7604 = vpack.c.b16 %v5796, %v5788
    %v7605 = vpack.c.b16 %v5797, %v5789
    %v7606 = vpack.c.b16 %v5798, %v5790
    %v7607 = vpack.c.b16 %v5799, %v5791
    %v7608 = vpack.c.b16 %v5800, %v5792
    %v7609 = vpack.c.b16 %v5801, %v5793
    %v7610 = vpack.c.b16 %v5810, %v5802
    %v7611 = vpack.c.b16 %v5811, %v5803
    %v7612 = vpack.c.b16 %v5812, %v5804
    %v7613 = vpack.c.b16 %v5813, %v5805
    %v7614 = vpack.c.b16 %v5814, %v5806
    %v7615 = vpack.c.b16 %v5815, %v5807
    %v7616 = vpack.c.b16 %v5816, %v5808
    %v7617 = vpack.c.b16 %v5817, %v5809
    %v7618 = vpack.c.b16 %v5826, %v5818
    %v7619 = vpack.c.b16 %v5827, %v5819
    %v7620 = vpack.c.b16 %v5828, %v5820
    %v7621 = vpack.c.b16 %v5829, %v5821
    %v7622 = vpack.c.b16 %v5830, %v5822
    %v7623 = vpack.c.b16 %v5831, %v5823
    %v7624 = vpack.c.b16 %v5832, %v5824
    %v7625 = vpack.c.b16 %v5833, %v5825
    %v7626 = vpack.c.b16 %v5842, %v5834
    %v7627 = vpack.c.b16 %v5843, %v5835
    %v7628 = vpack.c.b16 %v5844, %v5836
    %v7629 = vpack.c.b16 %v5845, %v5837
    %v7630 = vpack.c.b16 %v5846, %v5838
    %v7631 = vpack.c.b16 %v5847, %v5839
    %v7632 = vpack.c.b16 %v5848, %v5840
    %v7633 = vpack.c.b16 %v5849, %v5841
    %v7634 = vpack.c.b16 %v5858, %v5850
    %v7635 = vpack.c.b16 %v5859, %v5851
    %v7636 = vpack.c.b16 %v5860, %v5852
    %v7637 = vpack.c.b16 %v5861, %v5853
    %v7638 = vpack.c.b16 %v5862, %v5854
    %v7639 = vpack.c.b16 %v5863, %v5855
    %v7640 = vpack.c.b16 %v5864, %v5856
    %v7641 = vpack.c.b16 %v5865, %v5857
    %v7642 = vpack.c.b16 %v5874, %v5866
    %v7643 = vpack.c.b16 %v5875, %v5867
    %v7644 = vpack.c.b16 %v5876, %v5868
    %v7645 = vpack.c.b16 %v5877, %v5869
    %v7646 = vpack.c.b16 %v5878, %v5870
    %v7647 = vpack.c.b16 %v5879, %v5871
    %v7648 = vpack.c.b16 %v5880, %v5872
    %v7649 = vpack.c.b16 %v5881, %v5873
    %v7650 = vpack.c.b16 %v5890, %v5882
    %v7651 = vpack.c.b16 %v5891, %v5883
    %v7652 = vpack.c.b16 %v5892, %v5884
    %v7653 = vpack.c.b16 %v5893, %v5885
    %v7654 = vpack.c.b16 %v5894, %v5886
    %v7655 = vpack.c.b16 %v5895, %v5887
    %v7656 = vpack.c.b16 %v5896, %v5888
    %v7657 = vpack.c.b16 %v5897, %v5889
    %v7658 = vpack.c.b16 %v5906, %v5898
    %v7659 = vpack.c.b16 %v5907, %v5899
    %v7660 = vpack.c.b16 %v5908, %v5900
    %v7661 = vpack.c.b16 %v5909, %v5901
    %v7662 = vpack.c.b16 %v5910, %v5902
    %v7663 = vpack.c.b16 %v5911, %v5903
    %v7664 = vpack.c.b16 %v5912, %v5904
    %v7665 = vpack.c.b16 %v5913, %v5905
    %v7666 = vpack.c.b16 %v5922, %v5914
    %v7667 = vpack.c.b16 %v5923, %v5915
    %v7668 = vpack.c.b16 %v5924, %v5916
    %v7669 = vpack.c.b16 %v5925, %v5917
    %v7670 = vpack.c.b16 %v5926, %v5918
    %v7671 = vpack.c.b16 %v5927, %v5919
    %v7672 = vpack.c.b16 %v5928, %v5920
    %v7673 = vpack.c.b16 %v5929, %v5921
    %v7674 = vpack.c.b16 %v5938, %v5930
    %v7675 = vpack.c.b16 %v5939, %v5931
    %v7676 = vpack.c.b16 %v5940, %v5932
    %v7677 = vpack.c.b16 %v5941, %v5933
    %v7678 = vpack.c.b16 %v5942, %v5934
    %v7679 = vpack.c.b16 %v5943, %v5935
    %v7680 = vpack.c.b16 %v5944, %v5936
    %v7681 = vpack.c.b16 %v5945, %v5937
    %v7682 = vpack.c.b16 %v5954, %v5946
    %v7683 = vpack.c.b16 %v5955, %v5947
    %v7684 = vpack.c.b16 %v5956, %v5948
    %v7685 = vpack.c.b16 %v5957, %v5949
    %v7686 = vpack.c.b16 %v5958, %v5950
    %v7687 = vpack.c.b16 %v5959, %v5951
    %v7688 = vpack.c.b16 %v5960, %v5952
    %v7689 = vpack.c.b16 %v5961, %v5953
    %v7690 = vpack.c.b16 %v5970, %v5962
    %v7691 = vpack.c.b16 %v5971, %v5963
    %v7692 = vpack.c.b16 %v5972, %v5964
    %v7693 = vpack.c.b16 %v5973, %v5965
    %v7694 = vpack.c.b16 %v5974, %v5966
    %v7695 = vpack.c.b16 %v5975, %v5967
    %v7696 = vpack.c.b16 %v5976, %v5968
    %v7697 = vpack.c.b16 %v5977, %v5969
    %v7698 = vpack.c.b16 %v5986, %v5978
    %v7699 = vpack.c.b16 %v5987, %v5979
    %v7700 = vpack.c.b16 %v5988, %v5980
    %v7701 = vpack.c.b16 %v5989, %v5981
    %v7702 = vpack.c.b16 %v5990, %v5982
    %v7703 = vpack.c.b16 %v5991, %v5983
    %v7704 = vpack.c.b16 %v5992, %v5984
    %v7705 = vpack.c.b16 %v5993, %v5985
    %v7706 = vpack.c.b16 %v6002, %v5994
    %v7707 = vpack.c.b16 %v6003, %v5995
    %v7708 = vpack.c.b16 %v6004, %v5996
    %v7709 = vpack.c.b16 %v6005, %v5997
    %v7710 = vpack.c.b16 %v6006, %v5998
    %v7711 = vpack.c.b16 %v6007, %v5999
    %v7712 = vpack.c.b16 %v6008, %v6000
    %v7713 = vpack.c.b16 %v6009, %v6001
    %v7714 = vpack.c.b16 %v6018, %v6010
    %v7715 = vpack.c.b16 %v6019, %v6011
    %v7716 = vpack.c.b16 %v6020, %v6012
    %v7717 = vpack.c.b16 %v6021, %v6013
    %v7718 = vpack.c.b16 %v6022, %v6014
    %v7719 = vpack.c.b16 %v6023, %v6015
    %v7720 = vpack.c.b16 %v6024, %v6016
    %v7721 = vpack.c.b16 %v6025, %v6017
    %v7722 = vpack.c.b16 %v6034, %v6026
    %v7723 = vpack.c.b16 %v6035, %v6027
    %v7724 = vpack.c.b16 %v6036, %v6028
    %v7725 = vpack.c.b16 %v6037, %v6029
    %v7726 = vpack.c.b16 %v6038, %v6030
    %v7727 = vpack.c.b16 %v6039, %v6031
    %v7728 = vpack.c.b16 %v6040, %v6032
    %v7729 = vpack.c.b16 %v6041, %v6033
    %v7730 = vpack.c.b16 %v6050, %v6042
    %v7731 = vpack.c.b16 %v6051, %v6043
    %v7732 = vpack.c.b16 %v6052, %v6044
    %v7733 = vpack.c.b16 %v6053, %v6045
    %v7734 = vpack.c.b16 %v6054, %v6046
    %v7735 = vpack.c.b16 %v6055, %v6047
    %v7736 = vpack.c.b16 %v6056, %v6048
    %v7737 = vpack.c.b16 %v6057, %v6049
    %v7738 = vpack.c.b16 %v6066, %v6058
    %v7739 = vpack.c.b16 %v6067, %v6059
    %v7740 = vpack.c.b16 %v6068, %v6060
    %v7741 = vpack.c.b16 %v6069, %v6061
    %v7742 = vpack.c.b16 %v6070, %v6062
    %v7743 = vpack.c.b16 %v6071, %v6063
    %v7744 = vpack.c.b16 %v6072, %v6064
    %v7745 = vpack.c.b16 %v6073, %v6065
    %v7746 = vpack.c.b16 %v6082, %v6074
    %v7747 = vpack.c.b16 %v6083, %v6075
    %v7748 = vpack.c.b16 %v6084, %v6076
    %v7749 = vpack.c.b16 %v6085, %v6077
    %v7750 = vpack.c.b16 %v6086, %v6078
    %v7751 = vpack.c.b16 %v6087, %v6079
    %v7752 = vpack.c.b16 %v6088, %v6080
    %v7753 = vpack.c.b16 %v6089, %v6081
    %v7754 = vpack.c.b16 %v6098, %v6090
    %v7755 = vpack.c.b16 %v6099, %v6091
    %v7756 = vpack.c.b16 %v6100, %v6092
    %v7757 = vpack.c.b16 %v6101, %v6093
    %v7758 = vpack.c.b16 %v6102, %v6094
    %v7759 = vpack.c.b16 %v6103, %v6095
    %v7760 = vpack.c.b16 %v6104, %v6096
    %v7761 = vpack.c.b16 %v6105, %v6097
    %v7762 = vpack.c.b16 %v6114, %v6106
    %v7763 = vpack.c.b16 %v6115, %v6107
    %v7764 = vpack.c.b16 %v6116, %v6108
    %v7765 = vpack.c.b16 %v6117, %v6109
    %v7766 = vpack.c.b16 %v6118, %v6110
    %v7767 = vpack.c.b16 %v6119, %v6111
    %v7768 = vpack.c.b16 %v6120, %v6112
    %v7769 = vpack.c.b16 %v6121, %v6113
    %v7770 = vpack.c.b16 %v6130, %v6122
    %v7771 = vpack.c.b16 %v6131, %v6123
    %v7772 = vpack.c.b16 %v6132, %v6124
    %v7773 = vpack.c.b16 %v6133, %v6125
    %v7774 = vpack.c.b16 %v6134, %v6126
    %v7775 = vpack.c.b16 %v6135, %v6127
    %v7776 = vpack.c.b16 %v6136, %v6128
    %v7777 = vpack.c.b16 %v6137, %v6129
    %v7778 = vpack.c.b16 %v6146, %v6138
    %v7779 = vpack.c.b16 %v6147, %v6139
    %v7780 = vpack.c.b16 %v6148, %v6140
    %v7781 = vpack.c.b16 %v6149, %v6141
    %v7782 = vpack.c.b16 %v6150, %v6142
    %v7783 = vpack.c.b16 %v6151, %v6143
    %v7784 = vpack.c.b16 %v6152, %v6144
    %v7785 = vpack.c.b16 %v6153, %v6145
    %v7786 = vpack.c.b16 %v6162, %v6154
    %v7787 = vpack.c.b16 %v6163, %v6155
    %v7788 = vpack.c.b16 %v6164, %v6156
    %v7789 = vpack.c.b16 %v6165, %v6157
    %v7790 = vpack.c.b16 %v6166, %v6158
    %v7791 = vpack.c.b16 %v6167, %v6159
    %v7792 = vpack.c.b16 %v6168, %v6160
    %v7793 = vpack.c.b16 %v6169, %v6161
    %v7794 = vpack.c.b16 %v6178, %v6170
    %v7795 = vpack.c.b16 %v6179, %v6171
    %v7796 = vpack.c.b16 %v6180, %v6172
    %v7797 = vpack.c.b16 %v6181, %v6173
    %v7798 = vpack.c.b16 %v6182, %v6174
    %v7799 = vpack.c.b16 %v6183, %v6175
    %v7800 = vpack.c.b16 %v6184, %v6176
    %v7801 = vpack.c.b16 %v6185, %v6177
    %v7802 = vpack.c.b16 %v6194, %v6186
    %v7803 = vpack.c.b16 %v6195, %v6187
    %v7804 = vpack.c.b16 %v6196, %v6188
    %v7805 = vpack.c.b16 %v6197, %v6189
    %v7806 = vpack.c.b16 %v6198, %v6190
    %v7807 = vpack.c.b16 %v6199, %v6191
    %v7808 = vpack.c.b16 %v6200, %v6192
    %v7809 = vpack.c.b16 %v6201, %v6193
    %v7810 = vpack.c.b16 %v6210, %v6202
    %v7811 = vpack.c.b16 %v6211, %v6203
    %v7812 = vpack.c.b16 %v6212, %v6204
    %v7813 = vpack.c.b16 %v6213, %v6205
    %v7814 = vpack.c.b16 %v6214, %v6206
    %v7815 = vpack.c.b16 %v6215, %v6207
    %v7816 = vpack.c.b16 %v6216, %v6208
    %v7817 = vpack.c.b16 %v6217, %v6209
    %v7818 = vpack.c.b16 %v6226, %v6218
    %v7819 = vpack.c.b16 %v6227, %v6219
    %v7820 = vpack.c.b16 %v6228, %v6220
    %v7821 = vpack.c.b16 %v6229, %v6221
    %v7822 = vpack.c.b16 %v6230, %v6222
    %v7823 = vpack.c.b16 %v6231, %v6223
    %v7824 = vpack.c.b16 %v6232, %v6224
    %v7825 = vpack.c.b16 %v6233, %v6225
    %v7826 = vpack.c.b16 %v6242, %v6234
    %v7827 = vpack.c.b16 %v6243, %v6235
    %v7828 = vpack.c.b16 %v6244, %v6236
    %v7829 = vpack.c.b16 %v6245, %v6237
    %v7830 = vpack.c.b16 %v6246, %v6238
    %v7831 = vpack.c.b16 %v6247, %v6239
    %v7832 = vpack.c.b16 %v6248, %v6240
    %v7833 = vpack.c.b16 %v6249, %v6241
    %v7834 = vpack.c.b16 %v6258, %v6250
    %v7835 = vpack.c.b16 %v6259, %v6251
    %v7836 = vpack.c.b16 %v6260, %v6252
    %v7837 = vpack.c.b16 %v6261, %v6253
    %v7838 = vpack.c.b16 %v6262, %v6254
    %v7839 = vpack.c.b16 %v6263, %v6255
    %v7840 = vpack.c.b16 %v6264, %v6256
    %v7841 = vpack.c.b16 %v6265, %v6257
    %v7842 = vpack.c.b16 %v6274, %v6266
    %v7843 = vpack.c.b16 %v6275, %v6267
    %v7844 = vpack.c.b16 %v6276, %v6268
    %v7845 = vpack.c.b16 %v6277, %v6269
    %v7846 = vpack.c.b16 %v6278, %v6270
    %v7847 = vpack.c.b16 %v6279, %v6271
    %v7848 = vpack.c.b16 %v6280, %v6272
    %v7849 = vpack.c.b16 %v6281, %v6273
    %v7850 = vpack.c.b16 %v6290, %v6282
    %v7851 = vpack.c.b16 %v6291, %v6283
    %v7852 = vpack.c.b16 %v6292, %v6284
    %v7853 = vpack.c.b16 %v6293, %v6285
    %v7854 = vpack.c.b16 %v6294, %v6286
    %v7855 = vpack.c.b16 %v6295, %v6287
    %v7856 = vpack.c.b16 %v6296, %v6288
    %v7857 = vpack.c.b16 %v6297, %v6289
    %v7858 = vpack.c.b16 %v6306, %v6298
    %v7859 = vpack.c.b16 %v6307, %v6299
    %v7860 = vpack.c.b16 %v6308, %v6300
    %v7861 = vpack.c.b16 %v6309, %v6301
    %v7862 = vpack.c.b16 %v6310, %v6302
    %v7863 = vpack.c.b16 %v6311, %v6303
    %v7864 = vpack.c.b16 %v6312, %v6304
    %v7865 = vpack.c.b16 %v6313, %v6305
    %v7866 = vpack.c.b16 %v6322, %v6314
    %v7867 = vpack.c.b16 %v6323, %v6315
    %v7868 = vpack.c.b16 %v6324, %v6316
    %v7869 = vpack.c.b16 %v6325, %v6317
    %v7870 = vpack.c.b16 %v6326, %v6318
    %v7871 = vpack.c.b16 %v6327, %v6319
    %v7872 = vpack.c.b16 %v6328, %v6320
    %v7873 = vpack.c.b16 %v6329, %v6321
    %v7874 = vpack.c.b16 %v6338, %v6330
    %v7875 = vpack.c.b16 %v6339, %v6331
    %v7876 = vpack.c.b16 %v6340, %v6332
    %v7877 = vpack.c.b16 %v6341, %v6333
    %v7878 = vpack.c.b16 %v6342, %v6334
    %v7879 = vpack.c.b16 %v6343, %v6335
    %v7880 = vpack.c.b16 %v6344, %v6336
    %v7881 = vpack.c.b16 %v6345, %v6337
    %9418 = vmatpush.bf16.msra.mxu0 %v6402
    %9419 = vmatpush.bf16.msra.mxu0 %v6394
    %9420 = vmatpush.bf16.msra.mxu0 %v6386
    %9421 = vmatpush.bf16.msra.mxu0 %v6378
    %9422 = vmatpush.bf16.msra.mxu0 %v6370
    %9423 = vmatpush.bf16.msra.mxu0 %v6362
    %9424 = vmatpush.bf16.msra.mxu0 %v6354
    %9425 = vmatpush.bf16.msra.mxu0 %v6346
    %9426 = vmatmul.bf16.gmra.mxu0 %v160
    %v9427 = vpop.f32.mrf.mxu0
    %v9428 = vadd.f32 %v1722, %v9427
    %v9429 = vpop.f32.mrf.mxu0
    %9430 = vdwg.mxu0
    %9431 = vmatpush.bf16.msra.mxu0 %v6466
    %9432 = vmatpush.bf16.msra.mxu0 %v6458
    %9433 = vmatpush.bf16.msra.mxu0 %v6450
    %9434 = vmatpush.bf16.msra.mxu0 %v6442
    %9435 = vmatpush.bf16.msra.mxu0 %v6434
    %9436 = vmatpush.bf16.msra.mxu0 %v6426
    %9437 = vmatpush.bf16.msra.mxu0 %v6418
    %9438 = vmatpush.bf16.msra.mxu0 %v6410
    %9439 = vmatmul.bf16.gmra.mxu0 %v161
    %v9440 = vpop.f32.mrf.mxu0
    %v9441 = vadd.f32 %v9428, %v9440
    %v9442 = vpop.f32.mrf.mxu0
    %9443 = vdwg.mxu0
    %9444 = vmatpush.bf16.msra.mxu0 %v6530
    %9445 = vmatpush.bf16.msra.mxu0 %v6522
    %9446 = vmatpush.bf16.msra.mxu0 %v6514
    %9447 = vmatpush.bf16.msra.mxu0 %v6506
    %9448 = vmatpush.bf16.msra.mxu0 %v6498
    %9449 = vmatpush.bf16.msra.mxu0 %v6490
    %9450 = vmatpush.bf16.msra.mxu0 %v6482
    %9451 = vmatpush.bf16.msra.mxu0 %v6474
    %9452 = vmatmul.bf16.gmra.mxu0 %v162
    %v9453 = vpop.f32.mrf.mxu0
    %v9454 = vadd.f32 %v9441, %v9453
    %v9455 = vpop.f32.mrf.mxu0
    %9456 = vdwg.mxu0
    %9457 = vmatpush.bf16.msra.mxu0 %v6594
    %9458 = vmatpush.bf16.msra.mxu0 %v6586
    %9459 = vmatpush.bf16.msra.mxu0 %v6578
    %9460 = vmatpush.bf16.msra.mxu0 %v6570
    %9461 = vmatpush.bf16.msra.mxu0 %v6562
    %9462 = vmatpush.bf16.msra.mxu0 %v6554
    %9463 = vmatpush.bf16.msra.mxu0 %v6546
    %9464 = vmatpush.bf16.msra.mxu0 %v6538
    %9465 = vmatmul.bf16.gmra.mxu0 %v163
    %v9466 = vpop.f32.mrf.mxu0
    %v9467 = vadd.f32 %v9454, %v9466
    %v9468 = vpop.f32.mrf.mxu0
    %9469 = vdwg.mxu0
    %9470 = vmatpush.bf16.msra.mxu0 %v6658
    %9471 = vmatpush.bf16.msra.mxu0 %v6650
    %9472 = vmatpush.bf16.msra.mxu0 %v6642
    %9473 = vmatpush.bf16.msra.mxu0 %v6634
    %9474 = vmatpush.bf16.msra.mxu0 %v6626
    %9475 = vmatpush.bf16.msra.mxu0 %v6618
    %9476 = vmatpush.bf16.msra.mxu0 %v6610
    %9477 = vmatpush.bf16.msra.mxu0 %v6602
    %9478 = vmatmul.bf16.gmra.mxu0 %v164
    %v9479 = vpop.f32.mrf.mxu0
    %v9480 = vadd.f32 %v9467, %v9479
    %v9481 = vpop.f32.mrf.mxu0
    %9482 = vdwg.mxu0
    %9483 = vmatpush.bf16.msra.mxu0 %v6722
    %9484 = vmatpush.bf16.msra.mxu0 %v6714
    %9485 = vmatpush.bf16.msra.mxu0 %v6706
    %9486 = vmatpush.bf16.msra.mxu0 %v6698
    %9487 = vmatpush.bf16.msra.mxu0 %v6690
    %9488 = vmatpush.bf16.msra.mxu0 %v6682
    %9489 = vmatpush.bf16.msra.mxu0 %v6674
    %9490 = vmatpush.bf16.msra.mxu0 %v6666
    %9491 = vmatmul.bf16.gmra.mxu0 %v165
    %v9492 = vpop.f32.mrf.mxu0
    %v9493 = vadd.f32 %v9480, %v9492
    %v9494 = vpop.f32.mrf.mxu0
    %9495 = vdwg.mxu0
    %9496 = vmatpush.bf16.msra.mxu0 %v6786
    %9497 = vmatpush.bf16.msra.mxu0 %v6778
    %9498 = vmatpush.bf16.msra.mxu0 %v6770
    %9499 = vmatpush.bf16.msra.mxu0 %v6762
    %9500 = vmatpush.bf16.msra.mxu0 %v6754
    %9501 = vmatpush.bf16.msra.mxu0 %v6746
    %9502 = vmatpush.bf16.msra.mxu0 %v6738
    %9503 = vmatpush.bf16.msra.mxu0 %v6730
    %9504 = vmatmul.bf16.gmra.mxu0 %v166
    %v9505 = vpop.f32.mrf.mxu0
    %v9506 = vadd.f32 %v9493, %v9505
    %v9507 = vpop.f32.mrf.mxu0
    %9508 = vdwg.mxu0
    %9509 = vmatpush.bf16.msra.mxu0 %v6850
    %9510 = vmatpush.bf16.msra.mxu0 %v6842
    %9511 = vmatpush.bf16.msra.mxu0 %v6834
    %9512 = vmatpush.bf16.msra.mxu0 %v6826
    %9513 = vmatpush.bf16.msra.mxu0 %v6818
    %9514 = vmatpush.bf16.msra.mxu0 %v6810
    %9515 = vmatpush.bf16.msra.mxu0 %v6802
    %9516 = vmatpush.bf16.msra.mxu0 %v6794
    %9517 = vmatmul.bf16.gmra.mxu0 %v167
    %v9518 = vpop.f32.mrf.mxu0
    %v9519 = vadd.f32 %v9506, %v9518
    %v9520 = vpop.f32.mrf.mxu0
    %9521 = vdwg.mxu0
    %9522 = vmatpush.bf16.msra.mxu0 %v6914
    %9523 = vmatpush.bf16.msra.mxu0 %v6906
    %9524 = vmatpush.bf16.msra.mxu0 %v6898
    %9525 = vmatpush.bf16.msra.mxu0 %v6890
    %9526 = vmatpush.bf16.msra.mxu0 %v6882
    %9527 = vmatpush.bf16.msra.mxu0 %v6874
    %9528 = vmatpush.bf16.msra.mxu0 %v6866
    %9529 = vmatpush.bf16.msra.mxu0 %v6858
    %9530 = vmatmul.bf16.gmra.mxu0 %v168
    %v9531 = vpop.f32.mrf.mxu0
    %v9532 = vadd.f32 %v9519, %v9531
    %v9533 = vpop.f32.mrf.mxu0
    %9534 = vdwg.mxu0
    %9535 = vmatpush.bf16.msra.mxu0 %v6978
    %9536 = vmatpush.bf16.msra.mxu0 %v6970
    %9537 = vmatpush.bf16.msra.mxu0 %v6962
    %9538 = vmatpush.bf16.msra.mxu0 %v6954
    %9539 = vmatpush.bf16.msra.mxu0 %v6946
    %9540 = vmatpush.bf16.msra.mxu0 %v6938
    %9541 = vmatpush.bf16.msra.mxu0 %v6930
    %9542 = vmatpush.bf16.msra.mxu0 %v6922
    %9543 = vmatmul.bf16.gmra.mxu0 %v169
    %v9544 = vpop.f32.mrf.mxu0
    %v9545 = vadd.f32 %v9532, %v9544
    %v9546 = vpop.f32.mrf.mxu0
    %9547 = vdwg.mxu0
    %9548 = vmatpush.bf16.msra.mxu0 %v7042
    %9549 = vmatpush.bf16.msra.mxu0 %v7034
    %9550 = vmatpush.bf16.msra.mxu0 %v7026
    %9551 = vmatpush.bf16.msra.mxu0 %v7018
    %9552 = vmatpush.bf16.msra.mxu0 %v7010
    %9553 = vmatpush.bf16.msra.mxu0 %v7002
    %9554 = vmatpush.bf16.msra.mxu0 %v6994
    %9555 = vmatpush.bf16.msra.mxu0 %v6986
    %9556 = vmatmul.bf16.gmra.mxu0 %v170
    %v9557 = vpop.f32.mrf.mxu0
    %v9558 = vadd.f32 %v9545, %v9557
    %v9559 = vpop.f32.mrf.mxu0
    %9560 = vdwg.mxu0
    %9561 = vmatpush.bf16.msra.mxu0 %v7106
    %9562 = vmatpush.bf16.msra.mxu0 %v7098
    %9563 = vmatpush.bf16.msra.mxu0 %v7090
    %9564 = vmatpush.bf16.msra.mxu0 %v7082
    %9565 = vmatpush.bf16.msra.mxu0 %v7074
    %9566 = vmatpush.bf16.msra.mxu0 %v7066
    %9567 = vmatpush.bf16.msra.mxu0 %v7058
    %9568 = vmatpush.bf16.msra.mxu0 %v7050
    %9569 = vmatmul.bf16.gmra.mxu0 %v171
    %v9570 = vpop.f32.mrf.mxu0
    %v9571 = vadd.f32 %v9558, %v9570
    %v9572 = vpop.f32.mrf.mxu0
    %9573 = vdwg.mxu0
    %9574 = vmatpush.bf16.msra.mxu0 %v7170
    %9575 = vmatpush.bf16.msra.mxu0 %v7162
    %9576 = vmatpush.bf16.msra.mxu0 %v7154
    %9577 = vmatpush.bf16.msra.mxu0 %v7146
    %9578 = vmatpush.bf16.msra.mxu0 %v7138
    %9579 = vmatpush.bf16.msra.mxu0 %v7130
    %9580 = vmatpush.bf16.msra.mxu0 %v7122
    %9581 = vmatpush.bf16.msra.mxu0 %v7114
    %9582 = vmatmul.bf16.gmra.mxu0 %v172
    %v9583 = vpop.f32.mrf.mxu0
    %v9584 = vadd.f32 %v9571, %v9583
    %v9585 = vpop.f32.mrf.mxu0
    %9586 = vdwg.mxu0
    %9587 = vmatpush.bf16.msra.mxu0 %v7234
    %9588 = vmatpush.bf16.msra.mxu0 %v7226
    %9589 = vmatpush.bf16.msra.mxu0 %v7218
    %9590 = vmatpush.bf16.msra.mxu0 %v7210
    %9591 = vmatpush.bf16.msra.mxu0 %v7202
    %9592 = vmatpush.bf16.msra.mxu0 %v7194
    %9593 = vmatpush.bf16.msra.mxu0 %v7186
    %9594 = vmatpush.bf16.msra.mxu0 %v7178
    %9595 = vmatmul.bf16.gmra.mxu0 %v173
    %v9596 = vpop.f32.mrf.mxu0
    %v9597 = vadd.f32 %v9584, %v9596
    %v9598 = vpop.f32.mrf.mxu0
    %9599 = vdwg.mxu0
    %9600 = vmatpush.bf16.msra.mxu0 %v7298
    %9601 = vmatpush.bf16.msra.mxu0 %v7290
    %9602 = vmatpush.bf16.msra.mxu0 %v7282
    %9603 = vmatpush.bf16.msra.mxu0 %v7274
    %9604 = vmatpush.bf16.msra.mxu0 %v7266
    %9605 = vmatpush.bf16.msra.mxu0 %v7258
    %9606 = vmatpush.bf16.msra.mxu0 %v7250
    %9607 = vmatpush.bf16.msra.mxu0 %v7242
    %9608 = vmatmul.bf16.gmra.mxu0 %v174
    %v9609 = vpop.f32.mrf.mxu0
    %v9610 = vadd.f32 %v9597, %v9609
    %v9611 = vpop.f32.mrf.mxu0
    %9612 = vdwg.mxu0
    %9613 = vmatpush.bf16.msra.mxu0 %v7362
    %9614 = vmatpush.bf16.msra.mxu0 %v7354
    %9615 = vmatpush.bf16.msra.mxu0 %v7346
    %9616 = vmatpush.bf16.msra.mxu0 %v7338
    %9617 = vmatpush.bf16.msra.mxu0 %v7330
    %9618 = vmatpush.bf16.msra.mxu0 %v7322
    %9619 = vmatpush.bf16.msra.mxu0 %v7314
    %9620 = vmatpush.bf16.msra.mxu0 %v7306
    %9621 = vmatmul.bf16.gmra.mxu0 %v175
    %v9622 = vpop.f32.mrf.mxu0
    %v9623 = vadd.f32 %v9610, %v9622
    %v9624 = vpop.f32.mrf.mxu0
    %9625 = vdwg.mxu0
    %9626 = vmatpush.bf16.msra.mxu0 %v7426
    %9627 = vmatpush.bf16.msra.mxu0 %v7418
    %9628 = vmatpush.bf16.msra.mxu0 %v7410
    %9629 = vmatpush.bf16.msra.mxu0 %v7402
    %9630 = vmatpush.bf16.msra.mxu0 %v7394
    %9631 = vmatpush.bf16.msra.mxu0 %v7386
    %9632 = vmatpush.bf16.msra.mxu0 %v7378
    %9633 = vmatpush.bf16.msra.mxu0 %v7370
    %9634 = vmatmul.bf16.gmra.mxu0 %v176
    %v9635 = vpop.f32.mrf.mxu0
    %v9636 = vadd.f32 %v9623, %v9635
    %v9637 = vpop.f32.mrf.mxu0
    %9638 = vdwg.mxu0
    %9639 = vmatpush.bf16.msra.mxu0 %v7490
    %9640 = vmatpush.bf16.msra.mxu0 %v7482
    %9641 = vmatpush.bf16.msra.mxu0 %v7474
    %9642 = vmatpush.bf16.msra.mxu0 %v7466
    %9643 = vmatpush.bf16.msra.mxu0 %v7458
    %9644 = vmatpush.bf16.msra.mxu0 %v7450
    %9645 = vmatpush.bf16.msra.mxu0 %v7442
    %9646 = vmatpush.bf16.msra.mxu0 %v7434
    %9647 = vmatmul.bf16.gmra.mxu0 %v177
    %v9648 = vpop.f32.mrf.mxu0
    %v9649 = vadd.f32 %v9636, %v9648
    %v9650 = vpop.f32.mrf.mxu0
    %9651 = vdwg.mxu0
    %9652 = vmatpush.bf16.msra.mxu0 %v7554
    %9653 = vmatpush.bf16.msra.mxu0 %v7546
    %9654 = vmatpush.bf16.msra.mxu0 %v7538
    %9655 = vmatpush.bf16.msra.mxu0 %v7530
    %9656 = vmatpush.bf16.msra.mxu0 %v7522
    %9657 = vmatpush.bf16.msra.mxu0 %v7514
    %9658 = vmatpush.bf16.msra.mxu0 %v7506
    %9659 = vmatpush.bf16.msra.mxu0 %v7498
    %9660 = vmatmul.bf16.gmra.mxu0 %v178
    %v9661 = vpop.f32.mrf.mxu0
    %v9662 = vadd.f32 %v9649, %v9661
    %v9663 = vpop.f32.mrf.mxu0
    %9664 = vdwg.mxu0
    %9665 = vmatpush.bf16.msra.mxu0 %v7618
    %9666 = vmatpush.bf16.msra.mxu0 %v7610
    %9667 = vmatpush.bf16.msra.mxu0 %v7602
    %9668 = vmatpush.bf16.msra.mxu0 %v7594
    %9669 = vmatpush.bf16.msra.mxu0 %v7586
    %9670 = vmatpush.bf16.msra.mxu0 %v7578
    %9671 = vmatpush.bf16.msra.mxu0 %v7570
    %9672 = vmatpush.bf16.msra.mxu0 %v7562
    %9673 = vmatmul.bf16.gmra.mxu0 %v179
    %v9674 = vpop.f32.mrf.mxu0
    %v9675 = vadd.f32 %v9662, %v9674
    %v9676 = vpop.f32.mrf.mxu0
    %9677 = vdwg.mxu0
    %9678 = vmatpush.bf16.msra.mxu0 %v7682
    %9679 = vmatpush.bf16.msra.mxu0 %v7674
    %9680 = vmatpush.bf16.msra.mxu0 %v7666
    %9681 = vmatpush.bf16.msra.mxu0 %v7658
    %9682 = vmatpush.bf16.msra.mxu0 %v7650
    %9683 = vmatpush.bf16.msra.mxu0 %v7642
    %9684 = vmatpush.bf16.msra.mxu0 %v7634
    %9685 = vmatpush.bf16.msra.mxu0 %v7626
    %9686 = vmatmul.bf16.gmra.mxu0 %v180
    %v9687 = vpop.f32.mrf.mxu0
    %v9688 = vadd.f32 %v9675, %v9687
    %v9689 = vpop.f32.mrf.mxu0
    %9690 = vdwg.mxu0
    %9691 = vmatpush.bf16.msra.mxu0 %v7746
    %9692 = vmatpush.bf16.msra.mxu0 %v7738
    %9693 = vmatpush.bf16.msra.mxu0 %v7730
    %9694 = vmatpush.bf16.msra.mxu0 %v7722
    %9695 = vmatpush.bf16.msra.mxu0 %v7714
    %9696 = vmatpush.bf16.msra.mxu0 %v7706
    %9697 = vmatpush.bf16.msra.mxu0 %v7698
    %9698 = vmatpush.bf16.msra.mxu0 %v7690
    %9699 = vmatmul.bf16.gmra.mxu0 %v181
    %v9700 = vpop.f32.mrf.mxu0
    %v9701 = vadd.f32 %v9688, %v9700
    %v9702 = vpop.f32.mrf.mxu0
    %9703 = vdwg.mxu0
    %9704 = vmatpush.bf16.msra.mxu0 %v7810
    %9705 = vmatpush.bf16.msra.mxu0 %v7802
    %9706 = vmatpush.bf16.msra.mxu0 %v7794
    %9707 = vmatpush.bf16.msra.mxu0 %v7786
    %9708 = vmatpush.bf16.msra.mxu0 %v7778
    %9709 = vmatpush.bf16.msra.mxu0 %v7770
    %9710 = vmatpush.bf16.msra.mxu0 %v7762
    %9711 = vmatpush.bf16.msra.mxu0 %v7754
    %9712 = vmatmul.bf16.gmra.mxu0 %v182
    %v9713 = vpop.f32.mrf.mxu0
    %v9714 = vadd.f32 %v9701, %v9713
    %v9715 = vpop.f32.mrf.mxu0
    %9716 = vdwg.mxu0
    %9717 = vmatpush.bf16.msra.mxu0 %v7874
    %9718 = vmatpush.bf16.msra.mxu0 %v7866
    %9719 = vmatpush.bf16.msra.mxu0 %v7858
    %9720 = vmatpush.bf16.msra.mxu0 %v7850
    %9721 = vmatpush.bf16.msra.mxu0 %v7842
    %9722 = vmatpush.bf16.msra.mxu0 %v7834
    %9723 = vmatpush.bf16.msra.mxu0 %v7826
    %9724 = vmatpush.bf16.msra.mxu0 %v7818
    %9725 = vmatmul.bf16.gmra.mxu0 %v183
    %v9726 = vpop.f32.mrf.mxu0
    %v9727 = vadd.f32 %v9714, %v9726
    %v9728 = vpop.f32.mrf.mxu0
    %9729 = vdwg.mxu0
    %9730 = vmatpush.bf16.msra.mxu0 %v6403
    %9731 = vmatpush.bf16.msra.mxu0 %v6395
    %9732 = vmatpush.bf16.msra.mxu0 %v6387
    %9733 = vmatpush.bf16.msra.mxu0 %v6379
    %9734 = vmatpush.bf16.msra.mxu0 %v6371
    %9735 = vmatpush.bf16.msra.mxu0 %v6363
    %9736 = vmatpush.bf16.msra.mxu0 %v6355
    %9737 = vmatpush.bf16.msra.mxu0 %v6347
    %9738 = vmatmul.bf16.gmra.mxu0 %v160
    %v9739 = vpop.f32.mrf.mxu0
    %v9740 = vadd.f32 %v1723, %v9739
    %v9741 = vpop.f32.mrf.mxu0
    %9742 = vdwg.mxu0
    %9743 = vmatpush.bf16.msra.mxu0 %v6467
    %9744 = vmatpush.bf16.msra.mxu0 %v6459
    %9745 = vmatpush.bf16.msra.mxu0 %v6451
    %9746 = vmatpush.bf16.msra.mxu0 %v6443
    %9747 = vmatpush.bf16.msra.mxu0 %v6435
    %9748 = vmatpush.bf16.msra.mxu0 %v6427
    %9749 = vmatpush.bf16.msra.mxu0 %v6419
    %9750 = vmatpush.bf16.msra.mxu0 %v6411
    %9751 = vmatmul.bf16.gmra.mxu0 %v161
    %v9752 = vpop.f32.mrf.mxu0
    %v9753 = vadd.f32 %v9740, %v9752
    %v9754 = vpop.f32.mrf.mxu0
    %9755 = vdwg.mxu0
    %9756 = vmatpush.bf16.msra.mxu0 %v6531
    %9757 = vmatpush.bf16.msra.mxu0 %v6523
    %9758 = vmatpush.bf16.msra.mxu0 %v6515
    %9759 = vmatpush.bf16.msra.mxu0 %v6507
    %9760 = vmatpush.bf16.msra.mxu0 %v6499
    %9761 = vmatpush.bf16.msra.mxu0 %v6491
    %9762 = vmatpush.bf16.msra.mxu0 %v6483
    %9763 = vmatpush.bf16.msra.mxu0 %v6475
    %9764 = vmatmul.bf16.gmra.mxu0 %v162
    %v9765 = vpop.f32.mrf.mxu0
    %v9766 = vadd.f32 %v9753, %v9765
    %v9767 = vpop.f32.mrf.mxu0
    %9768 = vdwg.mxu0
    %9769 = vmatpush.bf16.msra.mxu0 %v6595
    %9770 = vmatpush.bf16.msra.mxu0 %v6587
    %9771 = vmatpush.bf16.msra.mxu0 %v6579
    %9772 = vmatpush.bf16.msra.mxu0 %v6571
    %9773 = vmatpush.bf16.msra.mxu0 %v6563
    %9774 = vmatpush.bf16.msra.mxu0 %v6555
    %9775 = vmatpush.bf16.msra.mxu0 %v6547
    %9776 = vmatpush.bf16.msra.mxu0 %v6539
    %9777 = vmatmul.bf16.gmra.mxu0 %v163
    %v9778 = vpop.f32.mrf.mxu0
    %v9779 = vadd.f32 %v9766, %v9778
    %v9780 = vpop.f32.mrf.mxu0
    %9781 = vdwg.mxu0
    %9782 = vmatpush.bf16.msra.mxu0 %v6659
    %9783 = vmatpush.bf16.msra.mxu0 %v6651
    %9784 = vmatpush.bf16.msra.mxu0 %v6643
    %9785 = vmatpush.bf16.msra.mxu0 %v6635
    %9786 = vmatpush.bf16.msra.mxu0 %v6627
    %9787 = vmatpush.bf16.msra.mxu0 %v6619
    %9788 = vmatpush.bf16.msra.mxu0 %v6611
    %9789 = vmatpush.bf16.msra.mxu0 %v6603
    %9790 = vmatmul.bf16.gmra.mxu0 %v164
    %v9791 = vpop.f32.mrf.mxu0
    %v9792 = vadd.f32 %v9779, %v9791
    %v9793 = vpop.f32.mrf.mxu0
    %9794 = vdwg.mxu0
    %9795 = vmatpush.bf16.msra.mxu0 %v6723
    %9796 = vmatpush.bf16.msra.mxu0 %v6715
    %9797 = vmatpush.bf16.msra.mxu0 %v6707
    %9798 = vmatpush.bf16.msra.mxu0 %v6699
    %9799 = vmatpush.bf16.msra.mxu0 %v6691
    %9800 = vmatpush.bf16.msra.mxu0 %v6683
    %9801 = vmatpush.bf16.msra.mxu0 %v6675
    %9802 = vmatpush.bf16.msra.mxu0 %v6667
    %9803 = vmatmul.bf16.gmra.mxu0 %v165
    %v9804 = vpop.f32.mrf.mxu0
    %v9805 = vadd.f32 %v9792, %v9804
    %v9806 = vpop.f32.mrf.mxu0
    %9807 = vdwg.mxu0
    %9808 = vmatpush.bf16.msra.mxu0 %v6787
    %9809 = vmatpush.bf16.msra.mxu0 %v6779
    %9810 = vmatpush.bf16.msra.mxu0 %v6771
    %9811 = vmatpush.bf16.msra.mxu0 %v6763
    %9812 = vmatpush.bf16.msra.mxu0 %v6755
    %9813 = vmatpush.bf16.msra.mxu0 %v6747
    %9814 = vmatpush.bf16.msra.mxu0 %v6739
    %9815 = vmatpush.bf16.msra.mxu0 %v6731
    %9816 = vmatmul.bf16.gmra.mxu0 %v166
    %v9817 = vpop.f32.mrf.mxu0
    %v9818 = vadd.f32 %v9805, %v9817
    %v9819 = vpop.f32.mrf.mxu0
    %9820 = vdwg.mxu0
    %9821 = vmatpush.bf16.msra.mxu0 %v6851
    %9822 = vmatpush.bf16.msra.mxu0 %v6843
    %9823 = vmatpush.bf16.msra.mxu0 %v6835
    %9824 = vmatpush.bf16.msra.mxu0 %v6827
    %9825 = vmatpush.bf16.msra.mxu0 %v6819
    %9826 = vmatpush.bf16.msra.mxu0 %v6811
    %9827 = vmatpush.bf16.msra.mxu0 %v6803
    %9828 = vmatpush.bf16.msra.mxu0 %v6795
    %9829 = vmatmul.bf16.gmra.mxu0 %v167
    %v9830 = vpop.f32.mrf.mxu0
    %v9831 = vadd.f32 %v9818, %v9830
    %v9832 = vpop.f32.mrf.mxu0
    %9833 = vdwg.mxu0
    %9834 = vmatpush.bf16.msra.mxu0 %v6915
    %9835 = vmatpush.bf16.msra.mxu0 %v6907
    %9836 = vmatpush.bf16.msra.mxu0 %v6899
    %9837 = vmatpush.bf16.msra.mxu0 %v6891
    %9838 = vmatpush.bf16.msra.mxu0 %v6883
    %9839 = vmatpush.bf16.msra.mxu0 %v6875
    %9840 = vmatpush.bf16.msra.mxu0 %v6867
    %9841 = vmatpush.bf16.msra.mxu0 %v6859
    %9842 = vmatmul.bf16.gmra.mxu0 %v168
    %v9843 = vpop.f32.mrf.mxu0
    %v9844 = vadd.f32 %v9831, %v9843
    %v9845 = vpop.f32.mrf.mxu0
    %9846 = vdwg.mxu0
    %9847 = vmatpush.bf16.msra.mxu0 %v6979
    %9848 = vmatpush.bf16.msra.mxu0 %v6971
    %9849 = vmatpush.bf16.msra.mxu0 %v6963
    %9850 = vmatpush.bf16.msra.mxu0 %v6955
    %9851 = vmatpush.bf16.msra.mxu0 %v6947
    %9852 = vmatpush.bf16.msra.mxu0 %v6939
    %9853 = vmatpush.bf16.msra.mxu0 %v6931
    %9854 = vmatpush.bf16.msra.mxu0 %v6923
    %9855 = vmatmul.bf16.gmra.mxu0 %v169
    %v9856 = vpop.f32.mrf.mxu0
    %v9857 = vadd.f32 %v9844, %v9856
    %v9858 = vpop.f32.mrf.mxu0
    %9859 = vdwg.mxu0
    %9860 = vmatpush.bf16.msra.mxu0 %v7043
    %9861 = vmatpush.bf16.msra.mxu0 %v7035
    %9862 = vmatpush.bf16.msra.mxu0 %v7027
    %9863 = vmatpush.bf16.msra.mxu0 %v7019
    %9864 = vmatpush.bf16.msra.mxu0 %v7011
    %9865 = vmatpush.bf16.msra.mxu0 %v7003
    %9866 = vmatpush.bf16.msra.mxu0 %v6995
    %9867 = vmatpush.bf16.msra.mxu0 %v6987
    %9868 = vmatmul.bf16.gmra.mxu0 %v170
    %v9869 = vpop.f32.mrf.mxu0
    %v9870 = vadd.f32 %v9857, %v9869
    %v9871 = vpop.f32.mrf.mxu0
    %9872 = vdwg.mxu0
    %9873 = vmatpush.bf16.msra.mxu0 %v7107
    %9874 = vmatpush.bf16.msra.mxu0 %v7099
    %9875 = vmatpush.bf16.msra.mxu0 %v7091
    %9876 = vmatpush.bf16.msra.mxu0 %v7083
    %9877 = vmatpush.bf16.msra.mxu0 %v7075
    %9878 = vmatpush.bf16.msra.mxu0 %v7067
    %9879 = vmatpush.bf16.msra.mxu0 %v7059
    %9880 = vmatpush.bf16.msra.mxu0 %v7051
    %9881 = vmatmul.bf16.gmra.mxu0 %v171
    %v9882 = vpop.f32.mrf.mxu0
    %v9883 = vadd.f32 %v9870, %v9882
    %v9884 = vpop.f32.mrf.mxu0
    %9885 = vdwg.mxu0
    %9886 = vmatpush.bf16.msra.mxu0 %v7171
    %9887 = vmatpush.bf16.msra.mxu0 %v7163
    %9888 = vmatpush.bf16.msra.mxu0 %v7155
    %9889 = vmatpush.bf16.msra.mxu0 %v7147
    %9890 = vmatpush.bf16.msra.mxu0 %v7139
    %9891 = vmatpush.bf16.msra.mxu0 %v7131
    %9892 = vmatpush.bf16.msra.mxu0 %v7123
    %9893 = vmatpush.bf16.msra.mxu0 %v7115
    %9894 = vmatmul.bf16.gmra.mxu0 %v172
    %v9895 = vpop.f32.mrf.mxu0
    %v9896 = vadd.f32 %v9883, %v9895
    %v9897 = vpop.f32.mrf.mxu0
    %9898 = vdwg.mxu0
    %9899 = vmatpush.bf16.msra.mxu0 %v7235
    %9900 = vmatpush.bf16.msra.mxu0 %v7227
    %9901 = vmatpush.bf16.msra.mxu0 %v7219
    %9902 = vmatpush.bf16.msra.mxu0 %v7211
    %9903 = vmatpush.bf16.msra.mxu0 %v7203
    %9904 = vmatpush.bf16.msra.mxu0 %v7195
    %9905 = vmatpush.bf16.msra.mxu0 %v7187
    %9906 = vmatpush.bf16.msra.mxu0 %v7179
    %9907 = vmatmul.bf16.gmra.mxu0 %v173
    %v9908 = vpop.f32.mrf.mxu0
    %v9909 = vadd.f32 %v9896, %v9908
    %v9910 = vpop.f32.mrf.mxu0
    %9911 = vdwg.mxu0
    %9912 = vmatpush.bf16.msra.mxu0 %v7299
    %9913 = vmatpush.bf16.msra.mxu0 %v7291
    %9914 = vmatpush.bf16.msra.mxu0 %v7283
    %9915 = vmatpush.bf16.msra.mxu0 %v7275
    %9916 = vmatpush.bf16.msra.mxu0 %v7267
    %9917 = vmatpush.bf16.msra.mxu0 %v7259
    %9918 = vmatpush.bf16.msra.mxu0 %v7251
    %9919 = vmatpush.bf16.msra.mxu0 %v7243
    %9920 = vmatmul.bf16.gmra.mxu0 %v174
    %v9921 = vpop.f32.mrf.mxu0
    %v9922 = vadd.f32 %v9909, %v9921
    %v9923 = vpop.f32.mrf.mxu0
    %9924 = vdwg.mxu0
    %9925 = vmatpush.bf16.msra.mxu0 %v7363
    %9926 = vmatpush.bf16.msra.mxu0 %v7355
    %9927 = vmatpush.bf16.msra.mxu0 %v7347
    %9928 = vmatpush.bf16.msra.mxu0 %v7339
    %9929 = vmatpush.bf16.msra.mxu0 %v7331
    %9930 = vmatpush.bf16.msra.mxu0 %v7323
    %9931 = vmatpush.bf16.msra.mxu0 %v7315
    %9932 = vmatpush.bf16.msra.mxu0 %v7307
    %9933 = vmatmul.bf16.gmra.mxu0 %v175
    %v9934 = vpop.f32.mrf.mxu0
    %v9935 = vadd.f32 %v9922, %v9934
    %v9936 = vpop.f32.mrf.mxu0
    %9937 = vdwg.mxu0
    %9938 = vmatpush.bf16.msra.mxu0 %v7427
    %9939 = vmatpush.bf16.msra.mxu0 %v7419
    %9940 = vmatpush.bf16.msra.mxu0 %v7411
    %9941 = vmatpush.bf16.msra.mxu0 %v7403
    %9942 = vmatpush.bf16.msra.mxu0 %v7395
    %9943 = vmatpush.bf16.msra.mxu0 %v7387
    %9944 = vmatpush.bf16.msra.mxu0 %v7379
    %9945 = vmatpush.bf16.msra.mxu0 %v7371
    %9946 = vmatmul.bf16.gmra.mxu0 %v176
    %v9947 = vpop.f32.mrf.mxu0
    %v9948 = vadd.f32 %v9935, %v9947
    %v9949 = vpop.f32.mrf.mxu0
    %9950 = vdwg.mxu0
    %9951 = vmatpush.bf16.msra.mxu0 %v7491
    %9952 = vmatpush.bf16.msra.mxu0 %v7483
    %9953 = vmatpush.bf16.msra.mxu0 %v7475
    %9954 = vmatpush.bf16.msra.mxu0 %v7467
    %9955 = vmatpush.bf16.msra.mxu0 %v7459
    %9956 = vmatpush.bf16.msra.mxu0 %v7451
    %9957 = vmatpush.bf16.msra.mxu0 %v7443
    %9958 = vmatpush.bf16.msra.mxu0 %v7435
    %9959 = vmatmul.bf16.gmra.mxu0 %v177
    %v9960 = vpop.f32.mrf.mxu0
    %v9961 = vadd.f32 %v9948, %v9960
    %v9962 = vpop.f32.mrf.mxu0
    %9963 = vdwg.mxu0
    %9964 = vmatpush.bf16.msra.mxu0 %v7555
    %9965 = vmatpush.bf16.msra.mxu0 %v7547
    %9966 = vmatpush.bf16.msra.mxu0 %v7539
    %9967 = vmatpush.bf16.msra.mxu0 %v7531
    %9968 = vmatpush.bf16.msra.mxu0 %v7523
    %9969 = vmatpush.bf16.msra.mxu0 %v7515
    %9970 = vmatpush.bf16.msra.mxu0 %v7507
    %9971 = vmatpush.bf16.msra.mxu0 %v7499
    %9972 = vmatmul.bf16.gmra.mxu0 %v178
    %v9973 = vpop.f32.mrf.mxu0
    %v9974 = vadd.f32 %v9961, %v9973
    %v9975 = vpop.f32.mrf.mxu0
    %9976 = vdwg.mxu0
    %9977 = vmatpush.bf16.msra.mxu0 %v7619
    %9978 = vmatpush.bf16.msra.mxu0 %v7611
    %9979 = vmatpush.bf16.msra.mxu0 %v7603
    %9980 = vmatpush.bf16.msra.mxu0 %v7595
    %9981 = vmatpush.bf16.msra.mxu0 %v7587
    %9982 = vmatpush.bf16.msra.mxu0 %v7579
    %9983 = vmatpush.bf16.msra.mxu0 %v7571
    %9984 = vmatpush.bf16.msra.mxu0 %v7563
    %9985 = vmatmul.bf16.gmra.mxu0 %v179
    %v9986 = vpop.f32.mrf.mxu0
    %v9987 = vadd.f32 %v9974, %v9986
    %v9988 = vpop.f32.mrf.mxu0
    %9989 = vdwg.mxu0
    %9990 = vmatpush.bf16.msra.mxu0 %v7683
    %9991 = vmatpush.bf16.msra.mxu0 %v7675
    %9992 = vmatpush.bf16.msra.mxu0 %v7667
    %9993 = vmatpush.bf16.msra.mxu0 %v7659
    %9994 = vmatpush.bf16.msra.mxu0 %v7651
    %9995 = vmatpush.bf16.msra.mxu0 %v7643
    %9996 = vmatpush.bf16.msra.mxu0 %v7635
    %9997 = vmatpush.bf16.msra.mxu0 %v7627
    %9998 = vmatmul.bf16.gmra.mxu0 %v180
    %v9999 = vpop.f32.mrf.mxu0
    %v10000 = vadd.f32 %v9987, %v9999
    %v10001 = vpop.f32.mrf.mxu0
    %10002 = vdwg.mxu0
    %10003 = vmatpush.bf16.msra.mxu0 %v7747
    %10004 = vmatpush.bf16.msra.mxu0 %v7739
    %10005 = vmatpush.bf16.msra.mxu0 %v7731
    %10006 = vmatpush.bf16.msra.mxu0 %v7723
    %10007 = vmatpush.bf16.msra.mxu0 %v7715
    %10008 = vmatpush.bf16.msra.mxu0 %v7707
    %10009 = vmatpush.bf16.msra.mxu0 %v7699
    %10010 = vmatpush.bf16.msra.mxu0 %v7691
    %10011 = vmatmul.bf16.gmra.mxu0 %v181
    %v10012 = vpop.f32.mrf.mxu0
    %v10013 = vadd.f32 %v10000, %v10012
    %v10014 = vpop.f32.mrf.mxu0
    %10015 = vdwg.mxu0
    %10016 = vmatpush.bf16.msra.mxu0 %v7811
    %10017 = vmatpush.bf16.msra.mxu0 %v7803
    %10018 = vmatpush.bf16.msra.mxu0 %v7795
    %10019 = vmatpush.bf16.msra.mxu0 %v7787
    %10020 = vmatpush.bf16.msra.mxu0 %v7779
    %10021 = vmatpush.bf16.msra.mxu0 %v7771
    %10022 = vmatpush.bf16.msra.mxu0 %v7763
    %10023 = vmatpush.bf16.msra.mxu0 %v7755
    %10024 = vmatmul.bf16.gmra.mxu0 %v182
    %v10025 = vpop.f32.mrf.mxu0
    %v10026 = vadd.f32 %v10013, %v10025
    %v10027 = vpop.f32.mrf.mxu0
    %10028 = vdwg.mxu0
    %10029 = vmatpush.bf16.msra.mxu0 %v7875
    %10030 = vmatpush.bf16.msra.mxu0 %v7867
    %10031 = vmatpush.bf16.msra.mxu0 %v7859
    %10032 = vmatpush.bf16.msra.mxu0 %v7851
    %10033 = vmatpush.bf16.msra.mxu0 %v7843
    %10034 = vmatpush.bf16.msra.mxu0 %v7835
    %10035 = vmatpush.bf16.msra.mxu0 %v7827
    %10036 = vmatpush.bf16.msra.mxu0 %v7819
    %10037 = vmatmul.bf16.gmra.mxu0 %v183
    %v10038 = vpop.f32.mrf.mxu0
    %v10039 = vadd.f32 %v10026, %v10038
    %v10040 = vpop.f32.mrf.mxu0
    %10041 = vdwg.mxu0
    %10042 = vmatpush.bf16.msra.mxu0 %v6404
    %10043 = vmatpush.bf16.msra.mxu0 %v6396
    %10044 = vmatpush.bf16.msra.mxu0 %v6388
    %10045 = vmatpush.bf16.msra.mxu0 %v6380
    %10046 = vmatpush.bf16.msra.mxu0 %v6372
    %10047 = vmatpush.bf16.msra.mxu0 %v6364
    %10048 = vmatpush.bf16.msra.mxu0 %v6356
    %10049 = vmatpush.bf16.msra.mxu0 %v6348
    %10050 = vmatmul.bf16.gmra.mxu0 %v160
    %v10051 = vpop.f32.mrf.mxu0
    %v10052 = vadd.f32 %v1724, %v10051
    %v10053 = vpop.f32.mrf.mxu0
    %10054 = vdwg.mxu0
    %10055 = vmatpush.bf16.msra.mxu0 %v6468
    %10056 = vmatpush.bf16.msra.mxu0 %v6460
    %10057 = vmatpush.bf16.msra.mxu0 %v6452
    %10058 = vmatpush.bf16.msra.mxu0 %v6444
    %10059 = vmatpush.bf16.msra.mxu0 %v6436
    %10060 = vmatpush.bf16.msra.mxu0 %v6428
    %10061 = vmatpush.bf16.msra.mxu0 %v6420
    %10062 = vmatpush.bf16.msra.mxu0 %v6412
    %10063 = vmatmul.bf16.gmra.mxu0 %v161
    %v10064 = vpop.f32.mrf.mxu0
    %v10065 = vadd.f32 %v10052, %v10064
    %v10066 = vpop.f32.mrf.mxu0
    %10067 = vdwg.mxu0
    %10068 = vmatpush.bf16.msra.mxu0 %v6532
    %10069 = vmatpush.bf16.msra.mxu0 %v6524
    %10070 = vmatpush.bf16.msra.mxu0 %v6516
    %10071 = vmatpush.bf16.msra.mxu0 %v6508
    %10072 = vmatpush.bf16.msra.mxu0 %v6500
    %10073 = vmatpush.bf16.msra.mxu0 %v6492
    %10074 = vmatpush.bf16.msra.mxu0 %v6484
    %10075 = vmatpush.bf16.msra.mxu0 %v6476
    %10076 = vmatmul.bf16.gmra.mxu0 %v162
    %v10077 = vpop.f32.mrf.mxu0
    %v10078 = vadd.f32 %v10065, %v10077
    %v10079 = vpop.f32.mrf.mxu0
    %10080 = vdwg.mxu0
    %10081 = vmatpush.bf16.msra.mxu0 %v6596
    %10082 = vmatpush.bf16.msra.mxu0 %v6588
    %10083 = vmatpush.bf16.msra.mxu0 %v6580
    %10084 = vmatpush.bf16.msra.mxu0 %v6572
    %10085 = vmatpush.bf16.msra.mxu0 %v6564
    %10086 = vmatpush.bf16.msra.mxu0 %v6556
    %10087 = vmatpush.bf16.msra.mxu0 %v6548
    %10088 = vmatpush.bf16.msra.mxu0 %v6540
    %10089 = vmatmul.bf16.gmra.mxu0 %v163
    %v10090 = vpop.f32.mrf.mxu0
    %v10091 = vadd.f32 %v10078, %v10090
    %v10092 = vpop.f32.mrf.mxu0
    %10093 = vdwg.mxu0
    %10094 = vmatpush.bf16.msra.mxu0 %v6660
    %10095 = vmatpush.bf16.msra.mxu0 %v6652
    %10096 = vmatpush.bf16.msra.mxu0 %v6644
    %10097 = vmatpush.bf16.msra.mxu0 %v6636
    %10098 = vmatpush.bf16.msra.mxu0 %v6628
    %10099 = vmatpush.bf16.msra.mxu0 %v6620
    %10100 = vmatpush.bf16.msra.mxu0 %v6612
    %10101 = vmatpush.bf16.msra.mxu0 %v6604
    %10102 = vmatmul.bf16.gmra.mxu0 %v164
    %v10103 = vpop.f32.mrf.mxu0
    %v10104 = vadd.f32 %v10091, %v10103
    %v10105 = vpop.f32.mrf.mxu0
    %10106 = vdwg.mxu0
    %10107 = vmatpush.bf16.msra.mxu0 %v6724
    %10108 = vmatpush.bf16.msra.mxu0 %v6716
    %10109 = vmatpush.bf16.msra.mxu0 %v6708
    %10110 = vmatpush.bf16.msra.mxu0 %v6700
    %10111 = vmatpush.bf16.msra.mxu0 %v6692
    %10112 = vmatpush.bf16.msra.mxu0 %v6684
    %10113 = vmatpush.bf16.msra.mxu0 %v6676
    %10114 = vmatpush.bf16.msra.mxu0 %v6668
    %10115 = vmatmul.bf16.gmra.mxu0 %v165
    %v10116 = vpop.f32.mrf.mxu0
    %v10117 = vadd.f32 %v10104, %v10116
    %v10118 = vpop.f32.mrf.mxu0
    %10119 = vdwg.mxu0
    %10120 = vmatpush.bf16.msra.mxu0 %v6788
    %10121 = vmatpush.bf16.msra.mxu0 %v6780
    %10122 = vmatpush.bf16.msra.mxu0 %v6772
    %10123 = vmatpush.bf16.msra.mxu0 %v6764
    %10124 = vmatpush.bf16.msra.mxu0 %v6756
    %10125 = vmatpush.bf16.msra.mxu0 %v6748
    %10126 = vmatpush.bf16.msra.mxu0 %v6740
    %10127 = vmatpush.bf16.msra.mxu0 %v6732
    %10128 = vmatmul.bf16.gmra.mxu0 %v166
    %v10129 = vpop.f32.mrf.mxu0
    %v10130 = vadd.f32 %v10117, %v10129
    %v10131 = vpop.f32.mrf.mxu0
    %10132 = vdwg.mxu0
    %10133 = vmatpush.bf16.msra.mxu0 %v6852
    %10134 = vmatpush.bf16.msra.mxu0 %v6844
    %10135 = vmatpush.bf16.msra.mxu0 %v6836
    %10136 = vmatpush.bf16.msra.mxu0 %v6828
    %10137 = vmatpush.bf16.msra.mxu0 %v6820
    %10138 = vmatpush.bf16.msra.mxu0 %v6812
    %10139 = vmatpush.bf16.msra.mxu0 %v6804
    %10140 = vmatpush.bf16.msra.mxu0 %v6796
    %10141 = vmatmul.bf16.gmra.mxu0 %v167
    %v10142 = vpop.f32.mrf.mxu0
    %v10143 = vadd.f32 %v10130, %v10142
    %v10144 = vpop.f32.mrf.mxu0
    %10145 = vdwg.mxu0
    %10146 = vmatpush.bf16.msra.mxu0 %v6916
    %10147 = vmatpush.bf16.msra.mxu0 %v6908
    %10148 = vmatpush.bf16.msra.mxu0 %v6900
    %10149 = vmatpush.bf16.msra.mxu0 %v6892
    %10150 = vmatpush.bf16.msra.mxu0 %v6884
    %10151 = vmatpush.bf16.msra.mxu0 %v6876
    %10152 = vmatpush.bf16.msra.mxu0 %v6868
    %10153 = vmatpush.bf16.msra.mxu0 %v6860
    %10154 = vmatmul.bf16.gmra.mxu0 %v168
    %v10155 = vpop.f32.mrf.mxu0
    %v10156 = vadd.f32 %v10143, %v10155
    %v10157 = vpop.f32.mrf.mxu0
    %10158 = vdwg.mxu0
    %10159 = vmatpush.bf16.msra.mxu0 %v6980
    %10160 = vmatpush.bf16.msra.mxu0 %v6972
    %10161 = vmatpush.bf16.msra.mxu0 %v6964
    %10162 = vmatpush.bf16.msra.mxu0 %v6956
    %10163 = vmatpush.bf16.msra.mxu0 %v6948
    %10164 = vmatpush.bf16.msra.mxu0 %v6940
    %10165 = vmatpush.bf16.msra.mxu0 %v6932
    %10166 = vmatpush.bf16.msra.mxu0 %v6924
    %10167 = vmatmul.bf16.gmra.mxu0 %v169
    %v10168 = vpop.f32.mrf.mxu0
    %v10169 = vadd.f32 %v10156, %v10168
    %v10170 = vpop.f32.mrf.mxu0
    %10171 = vdwg.mxu0
    %10172 = vmatpush.bf16.msra.mxu0 %v7044
    %10173 = vmatpush.bf16.msra.mxu0 %v7036
    %10174 = vmatpush.bf16.msra.mxu0 %v7028
    %10175 = vmatpush.bf16.msra.mxu0 %v7020
    %10176 = vmatpush.bf16.msra.mxu0 %v7012
    %10177 = vmatpush.bf16.msra.mxu0 %v7004
    %10178 = vmatpush.bf16.msra.mxu0 %v6996
    %10179 = vmatpush.bf16.msra.mxu0 %v6988
    %10180 = vmatmul.bf16.gmra.mxu0 %v170
    %v10181 = vpop.f32.mrf.mxu0
    %v10182 = vadd.f32 %v10169, %v10181
    %v10183 = vpop.f32.mrf.mxu0
    %10184 = vdwg.mxu0
    %10185 = vmatpush.bf16.msra.mxu0 %v7108
    %10186 = vmatpush.bf16.msra.mxu0 %v7100
    %10187 = vmatpush.bf16.msra.mxu0 %v7092
    %10188 = vmatpush.bf16.msra.mxu0 %v7084
    %10189 = vmatpush.bf16.msra.mxu0 %v7076
    %10190 = vmatpush.bf16.msra.mxu0 %v7068
    %10191 = vmatpush.bf16.msra.mxu0 %v7060
    %10192 = vmatpush.bf16.msra.mxu0 %v7052
    %10193 = vmatmul.bf16.gmra.mxu0 %v171
    %v10194 = vpop.f32.mrf.mxu0
    %v10195 = vadd.f32 %v10182, %v10194
    %v10196 = vpop.f32.mrf.mxu0
    %10197 = vdwg.mxu0
    %10198 = vmatpush.bf16.msra.mxu0 %v7172
    %10199 = vmatpush.bf16.msra.mxu0 %v7164
    %10200 = vmatpush.bf16.msra.mxu0 %v7156
    %10201 = vmatpush.bf16.msra.mxu0 %v7148
    %10202 = vmatpush.bf16.msra.mxu0 %v7140
    %10203 = vmatpush.bf16.msra.mxu0 %v7132
    %10204 = vmatpush.bf16.msra.mxu0 %v7124
    %10205 = vmatpush.bf16.msra.mxu0 %v7116
    %10206 = vmatmul.bf16.gmra.mxu0 %v172
    %v10207 = vpop.f32.mrf.mxu0
    %v10208 = vadd.f32 %v10195, %v10207
    %v10209 = vpop.f32.mrf.mxu0
    %10210 = vdwg.mxu0
    %10211 = vmatpush.bf16.msra.mxu0 %v7236
    %10212 = vmatpush.bf16.msra.mxu0 %v7228
    %10213 = vmatpush.bf16.msra.mxu0 %v7220
    %10214 = vmatpush.bf16.msra.mxu0 %v7212
    %10215 = vmatpush.bf16.msra.mxu0 %v7204
    %10216 = vmatpush.bf16.msra.mxu0 %v7196
    %10217 = vmatpush.bf16.msra.mxu0 %v7188
    %10218 = vmatpush.bf16.msra.mxu0 %v7180
    %10219 = vmatmul.bf16.gmra.mxu0 %v173
    %v10220 = vpop.f32.mrf.mxu0
    %v10221 = vadd.f32 %v10208, %v10220
    %v10222 = vpop.f32.mrf.mxu0
    %10223 = vdwg.mxu0
    %10224 = vmatpush.bf16.msra.mxu0 %v7300
    %10225 = vmatpush.bf16.msra.mxu0 %v7292
    %10226 = vmatpush.bf16.msra.mxu0 %v7284
    %10227 = vmatpush.bf16.msra.mxu0 %v7276
    %10228 = vmatpush.bf16.msra.mxu0 %v7268
    %10229 = vmatpush.bf16.msra.mxu0 %v7260
    %10230 = vmatpush.bf16.msra.mxu0 %v7252
    %10231 = vmatpush.bf16.msra.mxu0 %v7244
    %10232 = vmatmul.bf16.gmra.mxu0 %v174
    %v10233 = vpop.f32.mrf.mxu0
    %v10234 = vadd.f32 %v10221, %v10233
    %v10235 = vpop.f32.mrf.mxu0
    %10236 = vdwg.mxu0
    %10237 = vmatpush.bf16.msra.mxu0 %v7364
    %10238 = vmatpush.bf16.msra.mxu0 %v7356
    %10239 = vmatpush.bf16.msra.mxu0 %v7348
    %10240 = vmatpush.bf16.msra.mxu0 %v7340
    %10241 = vmatpush.bf16.msra.mxu0 %v7332
    %10242 = vmatpush.bf16.msra.mxu0 %v7324
    %10243 = vmatpush.bf16.msra.mxu0 %v7316
    %10244 = vmatpush.bf16.msra.mxu0 %v7308
    %10245 = vmatmul.bf16.gmra.mxu0 %v175
    %v10246 = vpop.f32.mrf.mxu0
    %v10247 = vadd.f32 %v10234, %v10246
    %v10248 = vpop.f32.mrf.mxu0
    %10249 = vdwg.mxu0
    %10250 = vmatpush.bf16.msra.mxu0 %v7428
    %10251 = vmatpush.bf16.msra.mxu0 %v7420
    %10252 = vmatpush.bf16.msra.mxu0 %v7412
    %10253 = vmatpush.bf16.msra.mxu0 %v7404
    %10254 = vmatpush.bf16.msra.mxu0 %v7396
    %10255 = vmatpush.bf16.msra.mxu0 %v7388
    %10256 = vmatpush.bf16.msra.mxu0 %v7380
    %10257 = vmatpush.bf16.msra.mxu0 %v7372
    %10258 = vmatmul.bf16.gmra.mxu0 %v176
    %v10259 = vpop.f32.mrf.mxu0
    %v10260 = vadd.f32 %v10247, %v10259
    %v10261 = vpop.f32.mrf.mxu0
    %10262 = vdwg.mxu0
    %10263 = vmatpush.bf16.msra.mxu0 %v7492
    %10264 = vmatpush.bf16.msra.mxu0 %v7484
    %10265 = vmatpush.bf16.msra.mxu0 %v7476
    %10266 = vmatpush.bf16.msra.mxu0 %v7468
    %10267 = vmatpush.bf16.msra.mxu0 %v7460
    %10268 = vmatpush.bf16.msra.mxu0 %v7452
    %10269 = vmatpush.bf16.msra.mxu0 %v7444
    %10270 = vmatpush.bf16.msra.mxu0 %v7436
    %10271 = vmatmul.bf16.gmra.mxu0 %v177
    %v10272 = vpop.f32.mrf.mxu0
    %v10273 = vadd.f32 %v10260, %v10272
    %v10274 = vpop.f32.mrf.mxu0
    %10275 = vdwg.mxu0
    %10276 = vmatpush.bf16.msra.mxu0 %v7556
    %10277 = vmatpush.bf16.msra.mxu0 %v7548
    %10278 = vmatpush.bf16.msra.mxu0 %v7540
    %10279 = vmatpush.bf16.msra.mxu0 %v7532
    %10280 = vmatpush.bf16.msra.mxu0 %v7524
    %10281 = vmatpush.bf16.msra.mxu0 %v7516
    %10282 = vmatpush.bf16.msra.mxu0 %v7508
    %10283 = vmatpush.bf16.msra.mxu0 %v7500
    %10284 = vmatmul.bf16.gmra.mxu0 %v178
    %v10285 = vpop.f32.mrf.mxu0
    %v10286 = vadd.f32 %v10273, %v10285
    %v10287 = vpop.f32.mrf.mxu0
    %10288 = vdwg.mxu0
    %10289 = vmatpush.bf16.msra.mxu0 %v7620
    %10290 = vmatpush.bf16.msra.mxu0 %v7612
    %10291 = vmatpush.bf16.msra.mxu0 %v7604
    %10292 = vmatpush.bf16.msra.mxu0 %v7596
    %10293 = vmatpush.bf16.msra.mxu0 %v7588
    %10294 = vmatpush.bf16.msra.mxu0 %v7580
    %10295 = vmatpush.bf16.msra.mxu0 %v7572
    %10296 = vmatpush.bf16.msra.mxu0 %v7564
    %10297 = vmatmul.bf16.gmra.mxu0 %v179
    %v10298 = vpop.f32.mrf.mxu0
    %v10299 = vadd.f32 %v10286, %v10298
    %v10300 = vpop.f32.mrf.mxu0
    %10301 = vdwg.mxu0
    %10302 = vmatpush.bf16.msra.mxu0 %v7684
    %10303 = vmatpush.bf16.msra.mxu0 %v7676
    %10304 = vmatpush.bf16.msra.mxu0 %v7668
    %10305 = vmatpush.bf16.msra.mxu0 %v7660
    %10306 = vmatpush.bf16.msra.mxu0 %v7652
    %10307 = vmatpush.bf16.msra.mxu0 %v7644
    %10308 = vmatpush.bf16.msra.mxu0 %v7636
    %10309 = vmatpush.bf16.msra.mxu0 %v7628
    %10310 = vmatmul.bf16.gmra.mxu0 %v180
    %v10311 = vpop.f32.mrf.mxu0
    %v10312 = vadd.f32 %v10299, %v10311
    %v10313 = vpop.f32.mrf.mxu0
    %10314 = vdwg.mxu0
    %10315 = vmatpush.bf16.msra.mxu0 %v7748
    %10316 = vmatpush.bf16.msra.mxu0 %v7740
    %10317 = vmatpush.bf16.msra.mxu0 %v7732
    %10318 = vmatpush.bf16.msra.mxu0 %v7724
    %10319 = vmatpush.bf16.msra.mxu0 %v7716
    %10320 = vmatpush.bf16.msra.mxu0 %v7708
    %10321 = vmatpush.bf16.msra.mxu0 %v7700
    %10322 = vmatpush.bf16.msra.mxu0 %v7692
    %10323 = vmatmul.bf16.gmra.mxu0 %v181
    %v10324 = vpop.f32.mrf.mxu0
    %v10325 = vadd.f32 %v10312, %v10324
    %v10326 = vpop.f32.mrf.mxu0
    %10327 = vdwg.mxu0
    %10328 = vmatpush.bf16.msra.mxu0 %v7812
    %10329 = vmatpush.bf16.msra.mxu0 %v7804
    %10330 = vmatpush.bf16.msra.mxu0 %v7796
    %10331 = vmatpush.bf16.msra.mxu0 %v7788
    %10332 = vmatpush.bf16.msra.mxu0 %v7780
    %10333 = vmatpush.bf16.msra.mxu0 %v7772
    %10334 = vmatpush.bf16.msra.mxu0 %v7764
    %10335 = vmatpush.bf16.msra.mxu0 %v7756
    %10336 = vmatmul.bf16.gmra.mxu0 %v182
    %v10337 = vpop.f32.mrf.mxu0
    %v10338 = vadd.f32 %v10325, %v10337
    %v10339 = vpop.f32.mrf.mxu0
    %10340 = vdwg.mxu0
    %10341 = vmatpush.bf16.msra.mxu0 %v7876
    %10342 = vmatpush.bf16.msra.mxu0 %v7868
    %10343 = vmatpush.bf16.msra.mxu0 %v7860
    %10344 = vmatpush.bf16.msra.mxu0 %v7852
    %10345 = vmatpush.bf16.msra.mxu0 %v7844
    %10346 = vmatpush.bf16.msra.mxu0 %v7836
    %10347 = vmatpush.bf16.msra.mxu0 %v7828
    %10348 = vmatpush.bf16.msra.mxu0 %v7820
    %10349 = vmatmul.bf16.gmra.mxu0 %v183
    %v10350 = vpop.f32.mrf.mxu0
    %v10351 = vadd.f32 %v10338, %v10350
    %v10352 = vpop.f32.mrf.mxu0
    %10353 = vdwg.mxu0
    %10354 = vmatpush.bf16.msra.mxu0 %v6405
    %10355 = vmatpush.bf16.msra.mxu0 %v6397
    %10356 = vmatpush.bf16.msra.mxu0 %v6389
    %10357 = vmatpush.bf16.msra.mxu0 %v6381
    %10358 = vmatpush.bf16.msra.mxu0 %v6373
    %10359 = vmatpush.bf16.msra.mxu0 %v6365
    %10360 = vmatpush.bf16.msra.mxu0 %v6357
    %10361 = vmatpush.bf16.msra.mxu0 %v6349
    %10362 = vmatmul.bf16.gmra.mxu0 %v160
    %v10363 = vpop.f32.mrf.mxu0
    %v10364 = vadd.f32 %v1725, %v10363
    %v10365 = vpop.f32.mrf.mxu0
    %10366 = vdwg.mxu0
    %10367 = vmatpush.bf16.msra.mxu0 %v6469
    %10368 = vmatpush.bf16.msra.mxu0 %v6461
    %10369 = vmatpush.bf16.msra.mxu0 %v6453
    %10370 = vmatpush.bf16.msra.mxu0 %v6445
    %10371 = vmatpush.bf16.msra.mxu0 %v6437
    %10372 = vmatpush.bf16.msra.mxu0 %v6429
    %10373 = vmatpush.bf16.msra.mxu0 %v6421
    %10374 = vmatpush.bf16.msra.mxu0 %v6413
    %10375 = vmatmul.bf16.gmra.mxu0 %v161
    %v10376 = vpop.f32.mrf.mxu0
    %v10377 = vadd.f32 %v10364, %v10376
    %v10378 = vpop.f32.mrf.mxu0
    %10379 = vdwg.mxu0
    %10380 = vmatpush.bf16.msra.mxu0 %v6533
    %10381 = vmatpush.bf16.msra.mxu0 %v6525
    %10382 = vmatpush.bf16.msra.mxu0 %v6517
    %10383 = vmatpush.bf16.msra.mxu0 %v6509
    %10384 = vmatpush.bf16.msra.mxu0 %v6501
    %10385 = vmatpush.bf16.msra.mxu0 %v6493
    %10386 = vmatpush.bf16.msra.mxu0 %v6485
    %10387 = vmatpush.bf16.msra.mxu0 %v6477
    %10388 = vmatmul.bf16.gmra.mxu0 %v162
    %v10389 = vpop.f32.mrf.mxu0
    %v10390 = vadd.f32 %v10377, %v10389
    %v10391 = vpop.f32.mrf.mxu0
    %10392 = vdwg.mxu0
    %10393 = vmatpush.bf16.msra.mxu0 %v6597
    %10394 = vmatpush.bf16.msra.mxu0 %v6589
    %10395 = vmatpush.bf16.msra.mxu0 %v6581
    %10396 = vmatpush.bf16.msra.mxu0 %v6573
    %10397 = vmatpush.bf16.msra.mxu0 %v6565
    %10398 = vmatpush.bf16.msra.mxu0 %v6557
    %10399 = vmatpush.bf16.msra.mxu0 %v6549
    %10400 = vmatpush.bf16.msra.mxu0 %v6541
    %10401 = vmatmul.bf16.gmra.mxu0 %v163
    %v10402 = vpop.f32.mrf.mxu0
    %v10403 = vadd.f32 %v10390, %v10402
    %v10404 = vpop.f32.mrf.mxu0
    %10405 = vdwg.mxu0
    %10406 = vmatpush.bf16.msra.mxu0 %v6661
    %10407 = vmatpush.bf16.msra.mxu0 %v6653
    %10408 = vmatpush.bf16.msra.mxu0 %v6645
    %10409 = vmatpush.bf16.msra.mxu0 %v6637
    %10410 = vmatpush.bf16.msra.mxu0 %v6629
    %10411 = vmatpush.bf16.msra.mxu0 %v6621
    %10412 = vmatpush.bf16.msra.mxu0 %v6613
    %10413 = vmatpush.bf16.msra.mxu0 %v6605
    %10414 = vmatmul.bf16.gmra.mxu0 %v164
    %v10415 = vpop.f32.mrf.mxu0
    %v10416 = vadd.f32 %v10403, %v10415
    %v10417 = vpop.f32.mrf.mxu0
    %10418 = vdwg.mxu0
    %10419 = vmatpush.bf16.msra.mxu0 %v6725
    %10420 = vmatpush.bf16.msra.mxu0 %v6717
    %10421 = vmatpush.bf16.msra.mxu0 %v6709
    %10422 = vmatpush.bf16.msra.mxu0 %v6701
    %10423 = vmatpush.bf16.msra.mxu0 %v6693
    %10424 = vmatpush.bf16.msra.mxu0 %v6685
    %10425 = vmatpush.bf16.msra.mxu0 %v6677
    %10426 = vmatpush.bf16.msra.mxu0 %v6669
    %10427 = vmatmul.bf16.gmra.mxu0 %v165
    %v10428 = vpop.f32.mrf.mxu0
    %v10429 = vadd.f32 %v10416, %v10428
    %v10430 = vpop.f32.mrf.mxu0
    %10431 = vdwg.mxu0
    %10432 = vmatpush.bf16.msra.mxu0 %v6789
    %10433 = vmatpush.bf16.msra.mxu0 %v6781
    %10434 = vmatpush.bf16.msra.mxu0 %v6773
    %10435 = vmatpush.bf16.msra.mxu0 %v6765
    %10436 = vmatpush.bf16.msra.mxu0 %v6757
    %10437 = vmatpush.bf16.msra.mxu0 %v6749
    %10438 = vmatpush.bf16.msra.mxu0 %v6741
    %10439 = vmatpush.bf16.msra.mxu0 %v6733
    %10440 = vmatmul.bf16.gmra.mxu0 %v166
    %v10441 = vpop.f32.mrf.mxu0
    %v10442 = vadd.f32 %v10429, %v10441
    %v10443 = vpop.f32.mrf.mxu0
    %10444 = vdwg.mxu0
    %10445 = vmatpush.bf16.msra.mxu0 %v6853
    %10446 = vmatpush.bf16.msra.mxu0 %v6845
    %10447 = vmatpush.bf16.msra.mxu0 %v6837
    %10448 = vmatpush.bf16.msra.mxu0 %v6829
    %10449 = vmatpush.bf16.msra.mxu0 %v6821
    %10450 = vmatpush.bf16.msra.mxu0 %v6813
    %10451 = vmatpush.bf16.msra.mxu0 %v6805
    %10452 = vmatpush.bf16.msra.mxu0 %v6797
    %10453 = vmatmul.bf16.gmra.mxu0 %v167
    %v10454 = vpop.f32.mrf.mxu0
    %v10455 = vadd.f32 %v10442, %v10454
    %v10456 = vpop.f32.mrf.mxu0
    %10457 = vdwg.mxu0
    %10458 = vmatpush.bf16.msra.mxu0 %v6917
    %10459 = vmatpush.bf16.msra.mxu0 %v6909
    %10460 = vmatpush.bf16.msra.mxu0 %v6901
    %10461 = vmatpush.bf16.msra.mxu0 %v6893
    %10462 = vmatpush.bf16.msra.mxu0 %v6885
    %10463 = vmatpush.bf16.msra.mxu0 %v6877
    %10464 = vmatpush.bf16.msra.mxu0 %v6869
    %10465 = vmatpush.bf16.msra.mxu0 %v6861
    %10466 = vmatmul.bf16.gmra.mxu0 %v168
    %v10467 = vpop.f32.mrf.mxu0
    %v10468 = vadd.f32 %v10455, %v10467
    %v10469 = vpop.f32.mrf.mxu0
    %10470 = vdwg.mxu0
    %10471 = vmatpush.bf16.msra.mxu0 %v6981
    %10472 = vmatpush.bf16.msra.mxu0 %v6973
    %10473 = vmatpush.bf16.msra.mxu0 %v6965
    %10474 = vmatpush.bf16.msra.mxu0 %v6957
    %10475 = vmatpush.bf16.msra.mxu0 %v6949
    %10476 = vmatpush.bf16.msra.mxu0 %v6941
    %10477 = vmatpush.bf16.msra.mxu0 %v6933
    %10478 = vmatpush.bf16.msra.mxu0 %v6925
    %10479 = vmatmul.bf16.gmra.mxu0 %v169
    %v10480 = vpop.f32.mrf.mxu0
    %v10481 = vadd.f32 %v10468, %v10480
    %v10482 = vpop.f32.mrf.mxu0
    %10483 = vdwg.mxu0
    %10484 = vmatpush.bf16.msra.mxu0 %v7045
    %10485 = vmatpush.bf16.msra.mxu0 %v7037
    %10486 = vmatpush.bf16.msra.mxu0 %v7029
    %10487 = vmatpush.bf16.msra.mxu0 %v7021
    %10488 = vmatpush.bf16.msra.mxu0 %v7013
    %10489 = vmatpush.bf16.msra.mxu0 %v7005
    %10490 = vmatpush.bf16.msra.mxu0 %v6997
    %10491 = vmatpush.bf16.msra.mxu0 %v6989
    %10492 = vmatmul.bf16.gmra.mxu0 %v170
    %v10493 = vpop.f32.mrf.mxu0
    %v10494 = vadd.f32 %v10481, %v10493
    %v10495 = vpop.f32.mrf.mxu0
    %10496 = vdwg.mxu0
    %10497 = vmatpush.bf16.msra.mxu0 %v7109
    %10498 = vmatpush.bf16.msra.mxu0 %v7101
    %10499 = vmatpush.bf16.msra.mxu0 %v7093
    %10500 = vmatpush.bf16.msra.mxu0 %v7085
    %10501 = vmatpush.bf16.msra.mxu0 %v7077
    %10502 = vmatpush.bf16.msra.mxu0 %v7069
    %10503 = vmatpush.bf16.msra.mxu0 %v7061
    %10504 = vmatpush.bf16.msra.mxu0 %v7053
    %10505 = vmatmul.bf16.gmra.mxu0 %v171
    %v10506 = vpop.f32.mrf.mxu0
    %v10507 = vadd.f32 %v10494, %v10506
    %v10508 = vpop.f32.mrf.mxu0
    %10509 = vdwg.mxu0
    %10510 = vmatpush.bf16.msra.mxu0 %v7173
    %10511 = vmatpush.bf16.msra.mxu0 %v7165
    %10512 = vmatpush.bf16.msra.mxu0 %v7157
    %10513 = vmatpush.bf16.msra.mxu0 %v7149
    %10514 = vmatpush.bf16.msra.mxu0 %v7141
    %10515 = vmatpush.bf16.msra.mxu0 %v7133
    %10516 = vmatpush.bf16.msra.mxu0 %v7125
    %10517 = vmatpush.bf16.msra.mxu0 %v7117
    %10518 = vmatmul.bf16.gmra.mxu0 %v172
    %v10519 = vpop.f32.mrf.mxu0
    %v10520 = vadd.f32 %v10507, %v10519
    %v10521 = vpop.f32.mrf.mxu0
    %10522 = vdwg.mxu0
    %10523 = vmatpush.bf16.msra.mxu0 %v7237
    %10524 = vmatpush.bf16.msra.mxu0 %v7229
    %10525 = vmatpush.bf16.msra.mxu0 %v7221
    %10526 = vmatpush.bf16.msra.mxu0 %v7213
    %10527 = vmatpush.bf16.msra.mxu0 %v7205
    %10528 = vmatpush.bf16.msra.mxu0 %v7197
    %10529 = vmatpush.bf16.msra.mxu0 %v7189
    %10530 = vmatpush.bf16.msra.mxu0 %v7181
    %10531 = vmatmul.bf16.gmra.mxu0 %v173
    %v10532 = vpop.f32.mrf.mxu0
    %v10533 = vadd.f32 %v10520, %v10532
    %v10534 = vpop.f32.mrf.mxu0
    %10535 = vdwg.mxu0
    %10536 = vmatpush.bf16.msra.mxu0 %v7301
    %10537 = vmatpush.bf16.msra.mxu0 %v7293
    %10538 = vmatpush.bf16.msra.mxu0 %v7285
    %10539 = vmatpush.bf16.msra.mxu0 %v7277
    %10540 = vmatpush.bf16.msra.mxu0 %v7269
    %10541 = vmatpush.bf16.msra.mxu0 %v7261
    %10542 = vmatpush.bf16.msra.mxu0 %v7253
    %10543 = vmatpush.bf16.msra.mxu0 %v7245
    %10544 = vmatmul.bf16.gmra.mxu0 %v174
    %v10545 = vpop.f32.mrf.mxu0
    %v10546 = vadd.f32 %v10533, %v10545
    %v10547 = vpop.f32.mrf.mxu0
    %10548 = vdwg.mxu0
    %10549 = vmatpush.bf16.msra.mxu0 %v7365
    %10550 = vmatpush.bf16.msra.mxu0 %v7357
    %10551 = vmatpush.bf16.msra.mxu0 %v7349
    %10552 = vmatpush.bf16.msra.mxu0 %v7341
    %10553 = vmatpush.bf16.msra.mxu0 %v7333
    %10554 = vmatpush.bf16.msra.mxu0 %v7325
    %10555 = vmatpush.bf16.msra.mxu0 %v7317
    %10556 = vmatpush.bf16.msra.mxu0 %v7309
    %10557 = vmatmul.bf16.gmra.mxu0 %v175
    %v10558 = vpop.f32.mrf.mxu0
    %v10559 = vadd.f32 %v10546, %v10558
    %v10560 = vpop.f32.mrf.mxu0
    %10561 = vdwg.mxu0
    %10562 = vmatpush.bf16.msra.mxu0 %v7429
    %10563 = vmatpush.bf16.msra.mxu0 %v7421
    %10564 = vmatpush.bf16.msra.mxu0 %v7413
    %10565 = vmatpush.bf16.msra.mxu0 %v7405
    %10566 = vmatpush.bf16.msra.mxu0 %v7397
    %10567 = vmatpush.bf16.msra.mxu0 %v7389
    %10568 = vmatpush.bf16.msra.mxu0 %v7381
    %10569 = vmatpush.bf16.msra.mxu0 %v7373
    %10570 = vmatmul.bf16.gmra.mxu0 %v176
    %v10571 = vpop.f32.mrf.mxu0
    %v10572 = vadd.f32 %v10559, %v10571
    %v10573 = vpop.f32.mrf.mxu0
    %10574 = vdwg.mxu0
    %10575 = vmatpush.bf16.msra.mxu0 %v7493
    %10576 = vmatpush.bf16.msra.mxu0 %v7485
    %10577 = vmatpush.bf16.msra.mxu0 %v7477
    %10578 = vmatpush.bf16.msra.mxu0 %v7469
    %10579 = vmatpush.bf16.msra.mxu0 %v7461
    %10580 = vmatpush.bf16.msra.mxu0 %v7453
    %10581 = vmatpush.bf16.msra.mxu0 %v7445
    %10582 = vmatpush.bf16.msra.mxu0 %v7437
    %10583 = vmatmul.bf16.gmra.mxu0 %v177
    %v10584 = vpop.f32.mrf.mxu0
    %v10585 = vadd.f32 %v10572, %v10584
    %v10586 = vpop.f32.mrf.mxu0
    %10587 = vdwg.mxu0
    %10588 = vmatpush.bf16.msra.mxu0 %v7557
    %10589 = vmatpush.bf16.msra.mxu0 %v7549
    %10590 = vmatpush.bf16.msra.mxu0 %v7541
    %10591 = vmatpush.bf16.msra.mxu0 %v7533
    %10592 = vmatpush.bf16.msra.mxu0 %v7525
    %10593 = vmatpush.bf16.msra.mxu0 %v7517
    %10594 = vmatpush.bf16.msra.mxu0 %v7509
    %10595 = vmatpush.bf16.msra.mxu0 %v7501
    %10596 = vmatmul.bf16.gmra.mxu0 %v178
    %v10597 = vpop.f32.mrf.mxu0
    %v10598 = vadd.f32 %v10585, %v10597
    %v10599 = vpop.f32.mrf.mxu0
    %10600 = vdwg.mxu0
    %10601 = vmatpush.bf16.msra.mxu0 %v7621
    %10602 = vmatpush.bf16.msra.mxu0 %v7613
    %10603 = vmatpush.bf16.msra.mxu0 %v7605
    %10604 = vmatpush.bf16.msra.mxu0 %v7597
    %10605 = vmatpush.bf16.msra.mxu0 %v7589
    %10606 = vmatpush.bf16.msra.mxu0 %v7581
    %10607 = vmatpush.bf16.msra.mxu0 %v7573
    %10608 = vmatpush.bf16.msra.mxu0 %v7565
    %10609 = vmatmul.bf16.gmra.mxu0 %v179
    %v10610 = vpop.f32.mrf.mxu0
    %v10611 = vadd.f32 %v10598, %v10610
    %v10612 = vpop.f32.mrf.mxu0
    %10613 = vdwg.mxu0
    %10614 = vmatpush.bf16.msra.mxu0 %v7685
    %10615 = vmatpush.bf16.msra.mxu0 %v7677
    %10616 = vmatpush.bf16.msra.mxu0 %v7669
    %10617 = vmatpush.bf16.msra.mxu0 %v7661
    %10618 = vmatpush.bf16.msra.mxu0 %v7653
    %10619 = vmatpush.bf16.msra.mxu0 %v7645
    %10620 = vmatpush.bf16.msra.mxu0 %v7637
    %10621 = vmatpush.bf16.msra.mxu0 %v7629
    %10622 = vmatmul.bf16.gmra.mxu0 %v180
    %v10623 = vpop.f32.mrf.mxu0
    %v10624 = vadd.f32 %v10611, %v10623
    %v10625 = vpop.f32.mrf.mxu0
    %10626 = vdwg.mxu0
    %10627 = vmatpush.bf16.msra.mxu0 %v7749
    %10628 = vmatpush.bf16.msra.mxu0 %v7741
    %10629 = vmatpush.bf16.msra.mxu0 %v7733
    %10630 = vmatpush.bf16.msra.mxu0 %v7725
    %10631 = vmatpush.bf16.msra.mxu0 %v7717
    %10632 = vmatpush.bf16.msra.mxu0 %v7709
    %10633 = vmatpush.bf16.msra.mxu0 %v7701
    %10634 = vmatpush.bf16.msra.mxu0 %v7693
    %10635 = vmatmul.bf16.gmra.mxu0 %v181
    %v10636 = vpop.f32.mrf.mxu0
    %v10637 = vadd.f32 %v10624, %v10636
    %v10638 = vpop.f32.mrf.mxu0
    %10639 = vdwg.mxu0
    %10640 = vmatpush.bf16.msra.mxu0 %v7813
    %10641 = vmatpush.bf16.msra.mxu0 %v7805
    %10642 = vmatpush.bf16.msra.mxu0 %v7797
    %10643 = vmatpush.bf16.msra.mxu0 %v7789
    %10644 = vmatpush.bf16.msra.mxu0 %v7781
    %10645 = vmatpush.bf16.msra.mxu0 %v7773
    %10646 = vmatpush.bf16.msra.mxu0 %v7765
    %10647 = vmatpush.bf16.msra.mxu0 %v7757
    %10648 = vmatmul.bf16.gmra.mxu0 %v182
    %v10649 = vpop.f32.mrf.mxu0
    %v10650 = vadd.f32 %v10637, %v10649
    %v10651 = vpop.f32.mrf.mxu0
    %10652 = vdwg.mxu0
    %10653 = vmatpush.bf16.msra.mxu0 %v7877
    %10654 = vmatpush.bf16.msra.mxu0 %v7869
    %10655 = vmatpush.bf16.msra.mxu0 %v7861
    %10656 = vmatpush.bf16.msra.mxu0 %v7853
    %10657 = vmatpush.bf16.msra.mxu0 %v7845
    %10658 = vmatpush.bf16.msra.mxu0 %v7837
    %10659 = vmatpush.bf16.msra.mxu0 %v7829
    %10660 = vmatpush.bf16.msra.mxu0 %v7821
    %10661 = vmatmul.bf16.gmra.mxu0 %v183
    %v10662 = vpop.f32.mrf.mxu0
    %v10663 = vadd.f32 %v10650, %v10662
    %v10664 = vpop.f32.mrf.mxu0
    %10665 = vdwg.mxu0
    %10666 = vmatpush.bf16.msra.mxu0 %v6406
    %10667 = vmatpush.bf16.msra.mxu0 %v6398
    %10668 = vmatpush.bf16.msra.mxu0 %v6390
    %10669 = vmatpush.bf16.msra.mxu0 %v6382
    %10670 = vmatpush.bf16.msra.mxu0 %v6374
    %10671 = vmatpush.bf16.msra.mxu0 %v6366
    %10672 = vmatpush.bf16.msra.mxu0 %v6358
    %10673 = vmatpush.bf16.msra.mxu0 %v6350
    %10674 = vmatmul.bf16.gmra.mxu0 %v160
    %v10675 = vpop.f32.mrf.mxu0
    %v10676 = vadd.f32 %v1726, %v10675
    %v10677 = vpop.f32.mrf.mxu0
    %10678 = vdwg.mxu0
    %10679 = vmatpush.bf16.msra.mxu0 %v6470
    %10680 = vmatpush.bf16.msra.mxu0 %v6462
    %10681 = vmatpush.bf16.msra.mxu0 %v6454
    %10682 = vmatpush.bf16.msra.mxu0 %v6446
    %10683 = vmatpush.bf16.msra.mxu0 %v6438
    %10684 = vmatpush.bf16.msra.mxu0 %v6430
    %10685 = vmatpush.bf16.msra.mxu0 %v6422
    %10686 = vmatpush.bf16.msra.mxu0 %v6414
    %10687 = vmatmul.bf16.gmra.mxu0 %v161
    %v10688 = vpop.f32.mrf.mxu0
    %v10689 = vadd.f32 %v10676, %v10688
    %v10690 = vpop.f32.mrf.mxu0
    %10691 = vdwg.mxu0
    %10692 = vmatpush.bf16.msra.mxu0 %v6534
    %10693 = vmatpush.bf16.msra.mxu0 %v6526
    %10694 = vmatpush.bf16.msra.mxu0 %v6518
    %10695 = vmatpush.bf16.msra.mxu0 %v6510
    %10696 = vmatpush.bf16.msra.mxu0 %v6502
    %10697 = vmatpush.bf16.msra.mxu0 %v6494
    %10698 = vmatpush.bf16.msra.mxu0 %v6486
    %10699 = vmatpush.bf16.msra.mxu0 %v6478
    %10700 = vmatmul.bf16.gmra.mxu0 %v162
    %v10701 = vpop.f32.mrf.mxu0
    %v10702 = vadd.f32 %v10689, %v10701
    %v10703 = vpop.f32.mrf.mxu0
    %10704 = vdwg.mxu0
    %10705 = vmatpush.bf16.msra.mxu0 %v6598
    %10706 = vmatpush.bf16.msra.mxu0 %v6590
    %10707 = vmatpush.bf16.msra.mxu0 %v6582
    %10708 = vmatpush.bf16.msra.mxu0 %v6574
    %10709 = vmatpush.bf16.msra.mxu0 %v6566
    %10710 = vmatpush.bf16.msra.mxu0 %v6558
    %10711 = vmatpush.bf16.msra.mxu0 %v6550
    %10712 = vmatpush.bf16.msra.mxu0 %v6542
    %10713 = vmatmul.bf16.gmra.mxu0 %v163
    %v10714 = vpop.f32.mrf.mxu0
    %v10715 = vadd.f32 %v10702, %v10714
    %v10716 = vpop.f32.mrf.mxu0
    %10717 = vdwg.mxu0
    %10718 = vmatpush.bf16.msra.mxu0 %v6662
    %10719 = vmatpush.bf16.msra.mxu0 %v6654
    %10720 = vmatpush.bf16.msra.mxu0 %v6646
    %10721 = vmatpush.bf16.msra.mxu0 %v6638
    %10722 = vmatpush.bf16.msra.mxu0 %v6630
    %10723 = vmatpush.bf16.msra.mxu0 %v6622
    %10724 = vmatpush.bf16.msra.mxu0 %v6614
    %10725 = vmatpush.bf16.msra.mxu0 %v6606
    %10726 = vmatmul.bf16.gmra.mxu0 %v164
    %v10727 = vpop.f32.mrf.mxu0
    %v10728 = vadd.f32 %v10715, %v10727
    %v10729 = vpop.f32.mrf.mxu0
    %10730 = vdwg.mxu0
    %10731 = vmatpush.bf16.msra.mxu0 %v6726
    %10732 = vmatpush.bf16.msra.mxu0 %v6718
    %10733 = vmatpush.bf16.msra.mxu0 %v6710
    %10734 = vmatpush.bf16.msra.mxu0 %v6702
    %10735 = vmatpush.bf16.msra.mxu0 %v6694
    %10736 = vmatpush.bf16.msra.mxu0 %v6686
    %10737 = vmatpush.bf16.msra.mxu0 %v6678
    %10738 = vmatpush.bf16.msra.mxu0 %v6670
    %10739 = vmatmul.bf16.gmra.mxu0 %v165
    %v10740 = vpop.f32.mrf.mxu0
    %v10741 = vadd.f32 %v10728, %v10740
    %v10742 = vpop.f32.mrf.mxu0
    %10743 = vdwg.mxu0
    %10744 = vmatpush.bf16.msra.mxu0 %v6790
    %10745 = vmatpush.bf16.msra.mxu0 %v6782
    %10746 = vmatpush.bf16.msra.mxu0 %v6774
    %10747 = vmatpush.bf16.msra.mxu0 %v6766
    %10748 = vmatpush.bf16.msra.mxu0 %v6758
    %10749 = vmatpush.bf16.msra.mxu0 %v6750
    %10750 = vmatpush.bf16.msra.mxu0 %v6742
    %10751 = vmatpush.bf16.msra.mxu0 %v6734
    %10752 = vmatmul.bf16.gmra.mxu0 %v166
    %v10753 = vpop.f32.mrf.mxu0
    %v10754 = vadd.f32 %v10741, %v10753
    %v10755 = vpop.f32.mrf.mxu0
    %10756 = vdwg.mxu0
    %10757 = vmatpush.bf16.msra.mxu0 %v6854
    %10758 = vmatpush.bf16.msra.mxu0 %v6846
    %10759 = vmatpush.bf16.msra.mxu0 %v6838
    %10760 = vmatpush.bf16.msra.mxu0 %v6830
    %10761 = vmatpush.bf16.msra.mxu0 %v6822
    %10762 = vmatpush.bf16.msra.mxu0 %v6814
    %10763 = vmatpush.bf16.msra.mxu0 %v6806
    %10764 = vmatpush.bf16.msra.mxu0 %v6798
    %10765 = vmatmul.bf16.gmra.mxu0 %v167
    %v10766 = vpop.f32.mrf.mxu0
    %v10767 = vadd.f32 %v10754, %v10766
    %v10768 = vpop.f32.mrf.mxu0
    %10769 = vdwg.mxu0
    %10770 = vmatpush.bf16.msra.mxu0 %v6918
    %10771 = vmatpush.bf16.msra.mxu0 %v6910
    %10772 = vmatpush.bf16.msra.mxu0 %v6902
    %10773 = vmatpush.bf16.msra.mxu0 %v6894
    %10774 = vmatpush.bf16.msra.mxu0 %v6886
    %10775 = vmatpush.bf16.msra.mxu0 %v6878
    %10776 = vmatpush.bf16.msra.mxu0 %v6870
    %10777 = vmatpush.bf16.msra.mxu0 %v6862
    %10778 = vmatmul.bf16.gmra.mxu0 %v168
    %v10779 = vpop.f32.mrf.mxu0
    %v10780 = vadd.f32 %v10767, %v10779
    %v10781 = vpop.f32.mrf.mxu0
    %10782 = vdwg.mxu0
    %10783 = vmatpush.bf16.msra.mxu0 %v6982
    %10784 = vmatpush.bf16.msra.mxu0 %v6974
    %10785 = vmatpush.bf16.msra.mxu0 %v6966
    %10786 = vmatpush.bf16.msra.mxu0 %v6958
    %10787 = vmatpush.bf16.msra.mxu0 %v6950
    %10788 = vmatpush.bf16.msra.mxu0 %v6942
    %10789 = vmatpush.bf16.msra.mxu0 %v6934
    %10790 = vmatpush.bf16.msra.mxu0 %v6926
    %10791 = vmatmul.bf16.gmra.mxu0 %v169
    %v10792 = vpop.f32.mrf.mxu0
    %v10793 = vadd.f32 %v10780, %v10792
    %v10794 = vpop.f32.mrf.mxu0
    %10795 = vdwg.mxu0
    %10796 = vmatpush.bf16.msra.mxu0 %v7046
    %10797 = vmatpush.bf16.msra.mxu0 %v7038
    %10798 = vmatpush.bf16.msra.mxu0 %v7030
    %10799 = vmatpush.bf16.msra.mxu0 %v7022
    %10800 = vmatpush.bf16.msra.mxu0 %v7014
    %10801 = vmatpush.bf16.msra.mxu0 %v7006
    %10802 = vmatpush.bf16.msra.mxu0 %v6998
    %10803 = vmatpush.bf16.msra.mxu0 %v6990
    %10804 = vmatmul.bf16.gmra.mxu0 %v170
    %v10805 = vpop.f32.mrf.mxu0
    %v10806 = vadd.f32 %v10793, %v10805
    %v10807 = vpop.f32.mrf.mxu0
    %10808 = vdwg.mxu0
    %10809 = vmatpush.bf16.msra.mxu0 %v7110
    %10810 = vmatpush.bf16.msra.mxu0 %v7102
    %10811 = vmatpush.bf16.msra.mxu0 %v7094
    %10812 = vmatpush.bf16.msra.mxu0 %v7086
    %10813 = vmatpush.bf16.msra.mxu0 %v7078
    %10814 = vmatpush.bf16.msra.mxu0 %v7070
    %10815 = vmatpush.bf16.msra.mxu0 %v7062
    %10816 = vmatpush.bf16.msra.mxu0 %v7054
    %10817 = vmatmul.bf16.gmra.mxu0 %v171
    %v10818 = vpop.f32.mrf.mxu0
    %v10819 = vadd.f32 %v10806, %v10818
    %v10820 = vpop.f32.mrf.mxu0
    %10821 = vdwg.mxu0
    %10822 = vmatpush.bf16.msra.mxu0 %v7174
    %10823 = vmatpush.bf16.msra.mxu0 %v7166
    %10824 = vmatpush.bf16.msra.mxu0 %v7158
    %10825 = vmatpush.bf16.msra.mxu0 %v7150
    %10826 = vmatpush.bf16.msra.mxu0 %v7142
    %10827 = vmatpush.bf16.msra.mxu0 %v7134
    %10828 = vmatpush.bf16.msra.mxu0 %v7126
    %10829 = vmatpush.bf16.msra.mxu0 %v7118
    %10830 = vmatmul.bf16.gmra.mxu0 %v172
    %v10831 = vpop.f32.mrf.mxu0
    %v10832 = vadd.f32 %v10819, %v10831
    %v10833 = vpop.f32.mrf.mxu0
    %10834 = vdwg.mxu0
    %10835 = vmatpush.bf16.msra.mxu0 %v7238
    %10836 = vmatpush.bf16.msra.mxu0 %v7230
    %10837 = vmatpush.bf16.msra.mxu0 %v7222
    %10838 = vmatpush.bf16.msra.mxu0 %v7214
    %10839 = vmatpush.bf16.msra.mxu0 %v7206
    %10840 = vmatpush.bf16.msra.mxu0 %v7198
    %10841 = vmatpush.bf16.msra.mxu0 %v7190
    %10842 = vmatpush.bf16.msra.mxu0 %v7182
    %10843 = vmatmul.bf16.gmra.mxu0 %v173
    %v10844 = vpop.f32.mrf.mxu0
    %v10845 = vadd.f32 %v10832, %v10844
    %v10846 = vpop.f32.mrf.mxu0
    %10847 = vdwg.mxu0
    %10848 = vmatpush.bf16.msra.mxu0 %v7302
    %10849 = vmatpush.bf16.msra.mxu0 %v7294
    %10850 = vmatpush.bf16.msra.mxu0 %v7286
    %10851 = vmatpush.bf16.msra.mxu0 %v7278
    %10852 = vmatpush.bf16.msra.mxu0 %v7270
    %10853 = vmatpush.bf16.msra.mxu0 %v7262
    %10854 = vmatpush.bf16.msra.mxu0 %v7254
    %10855 = vmatpush.bf16.msra.mxu0 %v7246
    %10856 = vmatmul.bf16.gmra.mxu0 %v174
    %v10857 = vpop.f32.mrf.mxu0
    %v10858 = vadd.f32 %v10845, %v10857
    %v10859 = vpop.f32.mrf.mxu0
    %10860 = vdwg.mxu0
    %10861 = vmatpush.bf16.msra.mxu0 %v7366
    %10862 = vmatpush.bf16.msra.mxu0 %v7358
    %10863 = vmatpush.bf16.msra.mxu0 %v7350
    %10864 = vmatpush.bf16.msra.mxu0 %v7342
    %10865 = vmatpush.bf16.msra.mxu0 %v7334
    %10866 = vmatpush.bf16.msra.mxu0 %v7326
    %10867 = vmatpush.bf16.msra.mxu0 %v7318
    %10868 = vmatpush.bf16.msra.mxu0 %v7310
    %10869 = vmatmul.bf16.gmra.mxu0 %v175
    %v10870 = vpop.f32.mrf.mxu0
    %v10871 = vadd.f32 %v10858, %v10870
    %v10872 = vpop.f32.mrf.mxu0
    %10873 = vdwg.mxu0
    %10874 = vmatpush.bf16.msra.mxu0 %v7430
    %10875 = vmatpush.bf16.msra.mxu0 %v7422
    %10876 = vmatpush.bf16.msra.mxu0 %v7414
    %10877 = vmatpush.bf16.msra.mxu0 %v7406
    %10878 = vmatpush.bf16.msra.mxu0 %v7398
    %10879 = vmatpush.bf16.msra.mxu0 %v7390
    %10880 = vmatpush.bf16.msra.mxu0 %v7382
    %10881 = vmatpush.bf16.msra.mxu0 %v7374
    %10882 = vmatmul.bf16.gmra.mxu0 %v176
    %v10883 = vpop.f32.mrf.mxu0
    %v10884 = vadd.f32 %v10871, %v10883
    %v10885 = vpop.f32.mrf.mxu0
    %10886 = vdwg.mxu0
    %10887 = vmatpush.bf16.msra.mxu0 %v7494
    %10888 = vmatpush.bf16.msra.mxu0 %v7486
    %10889 = vmatpush.bf16.msra.mxu0 %v7478
    %10890 = vmatpush.bf16.msra.mxu0 %v7470
    %10891 = vmatpush.bf16.msra.mxu0 %v7462
    %10892 = vmatpush.bf16.msra.mxu0 %v7454
    %10893 = vmatpush.bf16.msra.mxu0 %v7446
    %10894 = vmatpush.bf16.msra.mxu0 %v7438
    %10895 = vmatmul.bf16.gmra.mxu0 %v177
    %v10896 = vpop.f32.mrf.mxu0
    %v10897 = vadd.f32 %v10884, %v10896
    %v10898 = vpop.f32.mrf.mxu0
    %10899 = vdwg.mxu0
    %10900 = vmatpush.bf16.msra.mxu0 %v7558
    %10901 = vmatpush.bf16.msra.mxu0 %v7550
    %10902 = vmatpush.bf16.msra.mxu0 %v7542
    %10903 = vmatpush.bf16.msra.mxu0 %v7534
    %10904 = vmatpush.bf16.msra.mxu0 %v7526
    %10905 = vmatpush.bf16.msra.mxu0 %v7518
    %10906 = vmatpush.bf16.msra.mxu0 %v7510
    %10907 = vmatpush.bf16.msra.mxu0 %v7502
    %10908 = vmatmul.bf16.gmra.mxu0 %v178
    %v10909 = vpop.f32.mrf.mxu0
    %v10910 = vadd.f32 %v10897, %v10909
    %v10911 = vpop.f32.mrf.mxu0
    %10912 = vdwg.mxu0
    %10913 = vmatpush.bf16.msra.mxu0 %v7622
    %10914 = vmatpush.bf16.msra.mxu0 %v7614
    %10915 = vmatpush.bf16.msra.mxu0 %v7606
    %10916 = vmatpush.bf16.msra.mxu0 %v7598
    %10917 = vmatpush.bf16.msra.mxu0 %v7590
    %10918 = vmatpush.bf16.msra.mxu0 %v7582
    %10919 = vmatpush.bf16.msra.mxu0 %v7574
    %10920 = vmatpush.bf16.msra.mxu0 %v7566
    %10921 = vmatmul.bf16.gmra.mxu0 %v179
    %v10922 = vpop.f32.mrf.mxu0
    %v10923 = vadd.f32 %v10910, %v10922
    %v10924 = vpop.f32.mrf.mxu0
    %10925 = vdwg.mxu0
    %10926 = vmatpush.bf16.msra.mxu0 %v7686
    %10927 = vmatpush.bf16.msra.mxu0 %v7678
    %10928 = vmatpush.bf16.msra.mxu0 %v7670
    %10929 = vmatpush.bf16.msra.mxu0 %v7662
    %10930 = vmatpush.bf16.msra.mxu0 %v7654
    %10931 = vmatpush.bf16.msra.mxu0 %v7646
    %10932 = vmatpush.bf16.msra.mxu0 %v7638
    %10933 = vmatpush.bf16.msra.mxu0 %v7630
    %10934 = vmatmul.bf16.gmra.mxu0 %v180
    %v10935 = vpop.f32.mrf.mxu0
    %v10936 = vadd.f32 %v10923, %v10935
    %v10937 = vpop.f32.mrf.mxu0
    %10938 = vdwg.mxu0
    %10939 = vmatpush.bf16.msra.mxu0 %v7750
    %10940 = vmatpush.bf16.msra.mxu0 %v7742
    %10941 = vmatpush.bf16.msra.mxu0 %v7734
    %10942 = vmatpush.bf16.msra.mxu0 %v7726
    %10943 = vmatpush.bf16.msra.mxu0 %v7718
    %10944 = vmatpush.bf16.msra.mxu0 %v7710
    %10945 = vmatpush.bf16.msra.mxu0 %v7702
    %10946 = vmatpush.bf16.msra.mxu0 %v7694
    %10947 = vmatmul.bf16.gmra.mxu0 %v181
    %v10948 = vpop.f32.mrf.mxu0
    %v10949 = vadd.f32 %v10936, %v10948
    %v10950 = vpop.f32.mrf.mxu0
    %10951 = vdwg.mxu0
    %10952 = vmatpush.bf16.msra.mxu0 %v7814
    %10953 = vmatpush.bf16.msra.mxu0 %v7806
    %10954 = vmatpush.bf16.msra.mxu0 %v7798
    %10955 = vmatpush.bf16.msra.mxu0 %v7790
    %10956 = vmatpush.bf16.msra.mxu0 %v7782
    %10957 = vmatpush.bf16.msra.mxu0 %v7774
    %10958 = vmatpush.bf16.msra.mxu0 %v7766
    %10959 = vmatpush.bf16.msra.mxu0 %v7758
    %10960 = vmatmul.bf16.gmra.mxu0 %v182
    %v10961 = vpop.f32.mrf.mxu0
    %v10962 = vadd.f32 %v10949, %v10961
    %v10963 = vpop.f32.mrf.mxu0
    %10964 = vdwg.mxu0
    %10965 = vmatpush.bf16.msra.mxu0 %v7878
    %10966 = vmatpush.bf16.msra.mxu0 %v7870
    %10967 = vmatpush.bf16.msra.mxu0 %v7862
    %10968 = vmatpush.bf16.msra.mxu0 %v7854
    %10969 = vmatpush.bf16.msra.mxu0 %v7846
    %10970 = vmatpush.bf16.msra.mxu0 %v7838
    %10971 = vmatpush.bf16.msra.mxu0 %v7830
    %10972 = vmatpush.bf16.msra.mxu0 %v7822
    %10973 = vmatmul.bf16.gmra.mxu0 %v183
    %v10974 = vpop.f32.mrf.mxu0
    %v10975 = vadd.f32 %v10962, %v10974
    %v10976 = vpop.f32.mrf.mxu0
    %10977 = vdwg.mxu0
    %10978 = vmatpush.bf16.msra.mxu0 %v6407
    %10979 = vmatpush.bf16.msra.mxu0 %v6399
    %10980 = vmatpush.bf16.msra.mxu0 %v6391
    %10981 = vmatpush.bf16.msra.mxu0 %v6383
    %10982 = vmatpush.bf16.msra.mxu0 %v6375
    %10983 = vmatpush.bf16.msra.mxu0 %v6367
    %10984 = vmatpush.bf16.msra.mxu0 %v6359
    %10985 = vmatpush.bf16.msra.mxu0 %v6351
    %10986 = vmatmul.bf16.gmra.mxu0 %v160
    %v10987 = vpop.f32.mrf.mxu0
    %v10988 = vadd.f32 %v1727, %v10987
    %v10989 = vpop.f32.mrf.mxu0
    %10990 = vdwg.mxu0
    %10991 = vmatpush.bf16.msra.mxu0 %v6471
    %10992 = vmatpush.bf16.msra.mxu0 %v6463
    %10993 = vmatpush.bf16.msra.mxu0 %v6455
    %10994 = vmatpush.bf16.msra.mxu0 %v6447
    %10995 = vmatpush.bf16.msra.mxu0 %v6439
    %10996 = vmatpush.bf16.msra.mxu0 %v6431
    %10997 = vmatpush.bf16.msra.mxu0 %v6423
    %10998 = vmatpush.bf16.msra.mxu0 %v6415
    %10999 = vmatmul.bf16.gmra.mxu0 %v161
    %v11000 = vpop.f32.mrf.mxu0
    %v11001 = vadd.f32 %v10988, %v11000
    %v11002 = vpop.f32.mrf.mxu0
    %11003 = vdwg.mxu0
    %11004 = vmatpush.bf16.msra.mxu0 %v6535
    %11005 = vmatpush.bf16.msra.mxu0 %v6527
    %11006 = vmatpush.bf16.msra.mxu0 %v6519
    %11007 = vmatpush.bf16.msra.mxu0 %v6511
    %11008 = vmatpush.bf16.msra.mxu0 %v6503
    %11009 = vmatpush.bf16.msra.mxu0 %v6495
    %11010 = vmatpush.bf16.msra.mxu0 %v6487
    %11011 = vmatpush.bf16.msra.mxu0 %v6479
    %11012 = vmatmul.bf16.gmra.mxu0 %v162
    %v11013 = vpop.f32.mrf.mxu0
    %v11014 = vadd.f32 %v11001, %v11013
    %v11015 = vpop.f32.mrf.mxu0
    %11016 = vdwg.mxu0
    %11017 = vmatpush.bf16.msra.mxu0 %v6599
    %11018 = vmatpush.bf16.msra.mxu0 %v6591
    %11019 = vmatpush.bf16.msra.mxu0 %v6583
    %11020 = vmatpush.bf16.msra.mxu0 %v6575
    %11021 = vmatpush.bf16.msra.mxu0 %v6567
    %11022 = vmatpush.bf16.msra.mxu0 %v6559
    %11023 = vmatpush.bf16.msra.mxu0 %v6551
    %11024 = vmatpush.bf16.msra.mxu0 %v6543
    %11025 = vmatmul.bf16.gmra.mxu0 %v163
    %v11026 = vpop.f32.mrf.mxu0
    %v11027 = vadd.f32 %v11014, %v11026
    %v11028 = vpop.f32.mrf.mxu0
    %11029 = vdwg.mxu0
    %11030 = vmatpush.bf16.msra.mxu0 %v6663
    %11031 = vmatpush.bf16.msra.mxu0 %v6655
    %11032 = vmatpush.bf16.msra.mxu0 %v6647
    %11033 = vmatpush.bf16.msra.mxu0 %v6639
    %11034 = vmatpush.bf16.msra.mxu0 %v6631
    %11035 = vmatpush.bf16.msra.mxu0 %v6623
    %11036 = vmatpush.bf16.msra.mxu0 %v6615
    %11037 = vmatpush.bf16.msra.mxu0 %v6607
    %11038 = vmatmul.bf16.gmra.mxu0 %v164
    %v11039 = vpop.f32.mrf.mxu0
    %v11040 = vadd.f32 %v11027, %v11039
    %v11041 = vpop.f32.mrf.mxu0
    %11042 = vdwg.mxu0
    %11043 = vmatpush.bf16.msra.mxu0 %v6727
    %11044 = vmatpush.bf16.msra.mxu0 %v6719
    %11045 = vmatpush.bf16.msra.mxu0 %v6711
    %11046 = vmatpush.bf16.msra.mxu0 %v6703
    %11047 = vmatpush.bf16.msra.mxu0 %v6695
    %11048 = vmatpush.bf16.msra.mxu0 %v6687
    %11049 = vmatpush.bf16.msra.mxu0 %v6679
    %11050 = vmatpush.bf16.msra.mxu0 %v6671
    %11051 = vmatmul.bf16.gmra.mxu0 %v165
    %v11052 = vpop.f32.mrf.mxu0
    %v11053 = vadd.f32 %v11040, %v11052
    %v11054 = vpop.f32.mrf.mxu0
    %11055 = vdwg.mxu0
    %11056 = vmatpush.bf16.msra.mxu0 %v6791
    %11057 = vmatpush.bf16.msra.mxu0 %v6783
    %11058 = vmatpush.bf16.msra.mxu0 %v6775
    %11059 = vmatpush.bf16.msra.mxu0 %v6767
    %11060 = vmatpush.bf16.msra.mxu0 %v6759
    %11061 = vmatpush.bf16.msra.mxu0 %v6751
    %11062 = vmatpush.bf16.msra.mxu0 %v6743
    %11063 = vmatpush.bf16.msra.mxu0 %v6735
    %11064 = vmatmul.bf16.gmra.mxu0 %v166
    %v11065 = vpop.f32.mrf.mxu0
    %v11066 = vadd.f32 %v11053, %v11065
    %v11067 = vpop.f32.mrf.mxu0
    %11068 = vdwg.mxu0
    %11069 = vmatpush.bf16.msra.mxu0 %v6855
    %11070 = vmatpush.bf16.msra.mxu0 %v6847
    %11071 = vmatpush.bf16.msra.mxu0 %v6839
    %11072 = vmatpush.bf16.msra.mxu0 %v6831
    %11073 = vmatpush.bf16.msra.mxu0 %v6823
    %11074 = vmatpush.bf16.msra.mxu0 %v6815
    %11075 = vmatpush.bf16.msra.mxu0 %v6807
    %11076 = vmatpush.bf16.msra.mxu0 %v6799
    %11077 = vmatmul.bf16.gmra.mxu0 %v167
    %v11078 = vpop.f32.mrf.mxu0
    %v11079 = vadd.f32 %v11066, %v11078
    %v11080 = vpop.f32.mrf.mxu0
    %11081 = vdwg.mxu0
    %11082 = vmatpush.bf16.msra.mxu0 %v6919
    %11083 = vmatpush.bf16.msra.mxu0 %v6911
    %11084 = vmatpush.bf16.msra.mxu0 %v6903
    %11085 = vmatpush.bf16.msra.mxu0 %v6895
    %11086 = vmatpush.bf16.msra.mxu0 %v6887
    %11087 = vmatpush.bf16.msra.mxu0 %v6879
    %11088 = vmatpush.bf16.msra.mxu0 %v6871
    %11089 = vmatpush.bf16.msra.mxu0 %v6863
    %11090 = vmatmul.bf16.gmra.mxu0 %v168
    %v11091 = vpop.f32.mrf.mxu0
    %v11092 = vadd.f32 %v11079, %v11091
    %v11093 = vpop.f32.mrf.mxu0
    %11094 = vdwg.mxu0
    %11095 = vmatpush.bf16.msra.mxu0 %v6983
    %11096 = vmatpush.bf16.msra.mxu0 %v6975
    %11097 = vmatpush.bf16.msra.mxu0 %v6967
    %11098 = vmatpush.bf16.msra.mxu0 %v6959
    %11099 = vmatpush.bf16.msra.mxu0 %v6951
    %11100 = vmatpush.bf16.msra.mxu0 %v6943
    %11101 = vmatpush.bf16.msra.mxu0 %v6935
    %11102 = vmatpush.bf16.msra.mxu0 %v6927
    %11103 = vmatmul.bf16.gmra.mxu0 %v169
    %v11104 = vpop.f32.mrf.mxu0
    %v11105 = vadd.f32 %v11092, %v11104
    %v11106 = vpop.f32.mrf.mxu0
    %11107 = vdwg.mxu0
    %11108 = vmatpush.bf16.msra.mxu0 %v7047
    %11109 = vmatpush.bf16.msra.mxu0 %v7039
    %11110 = vmatpush.bf16.msra.mxu0 %v7031
    %11111 = vmatpush.bf16.msra.mxu0 %v7023
    %11112 = vmatpush.bf16.msra.mxu0 %v7015
    %11113 = vmatpush.bf16.msra.mxu0 %v7007
    %11114 = vmatpush.bf16.msra.mxu0 %v6999
    %11115 = vmatpush.bf16.msra.mxu0 %v6991
    %11116 = vmatmul.bf16.gmra.mxu0 %v170
    %v11117 = vpop.f32.mrf.mxu0
    %v11118 = vadd.f32 %v11105, %v11117
    %v11119 = vpop.f32.mrf.mxu0
    %11120 = vdwg.mxu0
    %11121 = vmatpush.bf16.msra.mxu0 %v7111
    %11122 = vmatpush.bf16.msra.mxu0 %v7103
    %11123 = vmatpush.bf16.msra.mxu0 %v7095
    %11124 = vmatpush.bf16.msra.mxu0 %v7087
    %11125 = vmatpush.bf16.msra.mxu0 %v7079
    %11126 = vmatpush.bf16.msra.mxu0 %v7071
    %11127 = vmatpush.bf16.msra.mxu0 %v7063
    %11128 = vmatpush.bf16.msra.mxu0 %v7055
    %11129 = vmatmul.bf16.gmra.mxu0 %v171
    %v11130 = vpop.f32.mrf.mxu0
    %v11131 = vadd.f32 %v11118, %v11130
    %v11132 = vpop.f32.mrf.mxu0
    %11133 = vdwg.mxu0
    %11134 = vmatpush.bf16.msra.mxu0 %v7175
    %11135 = vmatpush.bf16.msra.mxu0 %v7167
    %11136 = vmatpush.bf16.msra.mxu0 %v7159
    %11137 = vmatpush.bf16.msra.mxu0 %v7151
    %11138 = vmatpush.bf16.msra.mxu0 %v7143
    %11139 = vmatpush.bf16.msra.mxu0 %v7135
    %11140 = vmatpush.bf16.msra.mxu0 %v7127
    %11141 = vmatpush.bf16.msra.mxu0 %v7119
    %11142 = vmatmul.bf16.gmra.mxu0 %v172
    %v11143 = vpop.f32.mrf.mxu0
    %v11144 = vadd.f32 %v11131, %v11143
    %v11145 = vpop.f32.mrf.mxu0
    %11146 = vdwg.mxu0
    %11147 = vmatpush.bf16.msra.mxu0 %v7239
    %11148 = vmatpush.bf16.msra.mxu0 %v7231
    %11149 = vmatpush.bf16.msra.mxu0 %v7223
    %11150 = vmatpush.bf16.msra.mxu0 %v7215
    %11151 = vmatpush.bf16.msra.mxu0 %v7207
    %11152 = vmatpush.bf16.msra.mxu0 %v7199
    %11153 = vmatpush.bf16.msra.mxu0 %v7191
    %11154 = vmatpush.bf16.msra.mxu0 %v7183
    %11155 = vmatmul.bf16.gmra.mxu0 %v173
    %v11156 = vpop.f32.mrf.mxu0
    %v11157 = vadd.f32 %v11144, %v11156
    %v11158 = vpop.f32.mrf.mxu0
    %11159 = vdwg.mxu0
    %11160 = vmatpush.bf16.msra.mxu0 %v7303
    %11161 = vmatpush.bf16.msra.mxu0 %v7295
    %11162 = vmatpush.bf16.msra.mxu0 %v7287
    %11163 = vmatpush.bf16.msra.mxu0 %v7279
    %11164 = vmatpush.bf16.msra.mxu0 %v7271
    %11165 = vmatpush.bf16.msra.mxu0 %v7263
    %11166 = vmatpush.bf16.msra.mxu0 %v7255
    %11167 = vmatpush.bf16.msra.mxu0 %v7247
    %11168 = vmatmul.bf16.gmra.mxu0 %v174
    %v11169 = vpop.f32.mrf.mxu0
    %v11170 = vadd.f32 %v11157, %v11169
    %v11171 = vpop.f32.mrf.mxu0
    %11172 = vdwg.mxu0
    %11173 = vmatpush.bf16.msra.mxu0 %v7367
    %11174 = vmatpush.bf16.msra.mxu0 %v7359
    %11175 = vmatpush.bf16.msra.mxu0 %v7351
    %11176 = vmatpush.bf16.msra.mxu0 %v7343
    %11177 = vmatpush.bf16.msra.mxu0 %v7335
    %11178 = vmatpush.bf16.msra.mxu0 %v7327
    %11179 = vmatpush.bf16.msra.mxu0 %v7319
    %11180 = vmatpush.bf16.msra.mxu0 %v7311
    %11181 = vmatmul.bf16.gmra.mxu0 %v175
    %v11182 = vpop.f32.mrf.mxu0
    %v11183 = vadd.f32 %v11170, %v11182
    %v11184 = vpop.f32.mrf.mxu0
    %11185 = vdwg.mxu0
    %11186 = vmatpush.bf16.msra.mxu0 %v7431
    %11187 = vmatpush.bf16.msra.mxu0 %v7423
    %11188 = vmatpush.bf16.msra.mxu0 %v7415
    %11189 = vmatpush.bf16.msra.mxu0 %v7407
    %11190 = vmatpush.bf16.msra.mxu0 %v7399
    %11191 = vmatpush.bf16.msra.mxu0 %v7391
    %11192 = vmatpush.bf16.msra.mxu0 %v7383
    %11193 = vmatpush.bf16.msra.mxu0 %v7375
    %11194 = vmatmul.bf16.gmra.mxu0 %v176
    %v11195 = vpop.f32.mrf.mxu0
    %v11196 = vadd.f32 %v11183, %v11195
    %v11197 = vpop.f32.mrf.mxu0
    %11198 = vdwg.mxu0
    %11199 = vmatpush.bf16.msra.mxu0 %v7495
    %11200 = vmatpush.bf16.msra.mxu0 %v7487
    %11201 = vmatpush.bf16.msra.mxu0 %v7479
    %11202 = vmatpush.bf16.msra.mxu0 %v7471
    %11203 = vmatpush.bf16.msra.mxu0 %v7463
    %11204 = vmatpush.bf16.msra.mxu0 %v7455
    %11205 = vmatpush.bf16.msra.mxu0 %v7447
    %11206 = vmatpush.bf16.msra.mxu0 %v7439
    %11207 = vmatmul.bf16.gmra.mxu0 %v177
    %v11208 = vpop.f32.mrf.mxu0
    %v11209 = vadd.f32 %v11196, %v11208
    %v11210 = vpop.f32.mrf.mxu0
    %11211 = vdwg.mxu0
    %11212 = vmatpush.bf16.msra.mxu0 %v7559
    %11213 = vmatpush.bf16.msra.mxu0 %v7551
    %11214 = vmatpush.bf16.msra.mxu0 %v7543
    %11215 = vmatpush.bf16.msra.mxu0 %v7535
    %11216 = vmatpush.bf16.msra.mxu0 %v7527
    %11217 = vmatpush.bf16.msra.mxu0 %v7519
    %11218 = vmatpush.bf16.msra.mxu0 %v7511
    %11219 = vmatpush.bf16.msra.mxu0 %v7503
    %11220 = vmatmul.bf16.gmra.mxu0 %v178
    %v11221 = vpop.f32.mrf.mxu0
    %v11222 = vadd.f32 %v11209, %v11221
    %v11223 = vpop.f32.mrf.mxu0
    %11224 = vdwg.mxu0
    %11225 = vmatpush.bf16.msra.mxu0 %v7623
    %11226 = vmatpush.bf16.msra.mxu0 %v7615
    %11227 = vmatpush.bf16.msra.mxu0 %v7607
    %11228 = vmatpush.bf16.msra.mxu0 %v7599
    %11229 = vmatpush.bf16.msra.mxu0 %v7591
    %11230 = vmatpush.bf16.msra.mxu0 %v7583
    %11231 = vmatpush.bf16.msra.mxu0 %v7575
    %11232 = vmatpush.bf16.msra.mxu0 %v7567
    %11233 = vmatmul.bf16.gmra.mxu0 %v179
    %v11234 = vpop.f32.mrf.mxu0
    %v11235 = vadd.f32 %v11222, %v11234
    %v11236 = vpop.f32.mrf.mxu0
    %11237 = vdwg.mxu0
    %11238 = vmatpush.bf16.msra.mxu0 %v7687
    %11239 = vmatpush.bf16.msra.mxu0 %v7679
    %11240 = vmatpush.bf16.msra.mxu0 %v7671
    %11241 = vmatpush.bf16.msra.mxu0 %v7663
    %11242 = vmatpush.bf16.msra.mxu0 %v7655
    %11243 = vmatpush.bf16.msra.mxu0 %v7647
    %11244 = vmatpush.bf16.msra.mxu0 %v7639
    %11245 = vmatpush.bf16.msra.mxu0 %v7631
    %11246 = vmatmul.bf16.gmra.mxu0 %v180
    %v11247 = vpop.f32.mrf.mxu0
    %v11248 = vadd.f32 %v11235, %v11247
    %v11249 = vpop.f32.mrf.mxu0
    %11250 = vdwg.mxu0
    %11251 = vmatpush.bf16.msra.mxu0 %v7751
    %11252 = vmatpush.bf16.msra.mxu0 %v7743
    %11253 = vmatpush.bf16.msra.mxu0 %v7735
    %11254 = vmatpush.bf16.msra.mxu0 %v7727
    %11255 = vmatpush.bf16.msra.mxu0 %v7719
    %11256 = vmatpush.bf16.msra.mxu0 %v7711
    %11257 = vmatpush.bf16.msra.mxu0 %v7703
    %11258 = vmatpush.bf16.msra.mxu0 %v7695
    %11259 = vmatmul.bf16.gmra.mxu0 %v181
    %v11260 = vpop.f32.mrf.mxu0
    %v11261 = vadd.f32 %v11248, %v11260
    %v11262 = vpop.f32.mrf.mxu0
    %11263 = vdwg.mxu0
    %11264 = vmatpush.bf16.msra.mxu0 %v7815
    %11265 = vmatpush.bf16.msra.mxu0 %v7807
    %11266 = vmatpush.bf16.msra.mxu0 %v7799
    %11267 = vmatpush.bf16.msra.mxu0 %v7791
    %11268 = vmatpush.bf16.msra.mxu0 %v7783
    %11269 = vmatpush.bf16.msra.mxu0 %v7775
    %11270 = vmatpush.bf16.msra.mxu0 %v7767
    %11271 = vmatpush.bf16.msra.mxu0 %v7759
    %11272 = vmatmul.bf16.gmra.mxu0 %v182
    %v11273 = vpop.f32.mrf.mxu0
    %v11274 = vadd.f32 %v11261, %v11273
    %v11275 = vpop.f32.mrf.mxu0
    %11276 = vdwg.mxu0
    %11277 = vmatpush.bf16.msra.mxu0 %v7879
    %11278 = vmatpush.bf16.msra.mxu0 %v7871
    %11279 = vmatpush.bf16.msra.mxu0 %v7863
    %11280 = vmatpush.bf16.msra.mxu0 %v7855
    %11281 = vmatpush.bf16.msra.mxu0 %v7847
    %11282 = vmatpush.bf16.msra.mxu0 %v7839
    %11283 = vmatpush.bf16.msra.mxu0 %v7831
    %11284 = vmatpush.bf16.msra.mxu0 %v7823
    %11285 = vmatmul.bf16.gmra.mxu0 %v183
    %v11286 = vpop.f32.mrf.mxu0
    %v11287 = vadd.f32 %v11274, %v11286
    %v11288 = vpop.f32.mrf.mxu0
    %11289 = vdwg.mxu0
    %11290 = vmatpush.bf16.msra.mxu0 %v6408
    %11291 = vmatpush.bf16.msra.mxu0 %v6400
    %11292 = vmatpush.bf16.msra.mxu0 %v6392
    %11293 = vmatpush.bf16.msra.mxu0 %v6384
    %11294 = vmatpush.bf16.msra.mxu0 %v6376
    %11295 = vmatpush.bf16.msra.mxu0 %v6368
    %11296 = vmatpush.bf16.msra.mxu0 %v6360
    %11297 = vmatpush.bf16.msra.mxu0 %v6352
    %11298 = vmatmul.bf16.gmra.mxu0 %v160
    %v11299 = vpop.f32.mrf.mxu0
    %v11300 = vadd.f32 %v1728, %v11299
    %v11301 = vpop.f32.mrf.mxu0
    %11302 = vdwg.mxu0
    %11303 = vmatpush.bf16.msra.mxu0 %v6472
    %11304 = vmatpush.bf16.msra.mxu0 %v6464
    %11305 = vmatpush.bf16.msra.mxu0 %v6456
    %11306 = vmatpush.bf16.msra.mxu0 %v6448
    %11307 = vmatpush.bf16.msra.mxu0 %v6440
    %11308 = vmatpush.bf16.msra.mxu0 %v6432
    %11309 = vmatpush.bf16.msra.mxu0 %v6424
    %11310 = vmatpush.bf16.msra.mxu0 %v6416
    %11311 = vmatmul.bf16.gmra.mxu0 %v161
    %v11312 = vpop.f32.mrf.mxu0
    %v11313 = vadd.f32 %v11300, %v11312
    %v11314 = vpop.f32.mrf.mxu0
    %11315 = vdwg.mxu0
    %11316 = vmatpush.bf16.msra.mxu0 %v6536
    %11317 = vmatpush.bf16.msra.mxu0 %v6528
    %11318 = vmatpush.bf16.msra.mxu0 %v6520
    %11319 = vmatpush.bf16.msra.mxu0 %v6512
    %11320 = vmatpush.bf16.msra.mxu0 %v6504
    %11321 = vmatpush.bf16.msra.mxu0 %v6496
    %11322 = vmatpush.bf16.msra.mxu0 %v6488
    %11323 = vmatpush.bf16.msra.mxu0 %v6480
    %11324 = vmatmul.bf16.gmra.mxu0 %v162
    %v11325 = vpop.f32.mrf.mxu0
    %v11326 = vadd.f32 %v11313, %v11325
    %v11327 = vpop.f32.mrf.mxu0
    %11328 = vdwg.mxu0
    %11329 = vmatpush.bf16.msra.mxu0 %v6600
    %11330 = vmatpush.bf16.msra.mxu0 %v6592
    %11331 = vmatpush.bf16.msra.mxu0 %v6584
    %11332 = vmatpush.bf16.msra.mxu0 %v6576
    %11333 = vmatpush.bf16.msra.mxu0 %v6568
    %11334 = vmatpush.bf16.msra.mxu0 %v6560
    %11335 = vmatpush.bf16.msra.mxu0 %v6552
    %11336 = vmatpush.bf16.msra.mxu0 %v6544
    %11337 = vmatmul.bf16.gmra.mxu0 %v163
    %v11338 = vpop.f32.mrf.mxu0
    %v11339 = vadd.f32 %v11326, %v11338
    %v11340 = vpop.f32.mrf.mxu0
    %11341 = vdwg.mxu0
    %11342 = vmatpush.bf16.msra.mxu0 %v6664
    %11343 = vmatpush.bf16.msra.mxu0 %v6656
    %11344 = vmatpush.bf16.msra.mxu0 %v6648
    %11345 = vmatpush.bf16.msra.mxu0 %v6640
    %11346 = vmatpush.bf16.msra.mxu0 %v6632
    %11347 = vmatpush.bf16.msra.mxu0 %v6624
    %11348 = vmatpush.bf16.msra.mxu0 %v6616
    %11349 = vmatpush.bf16.msra.mxu0 %v6608
    %11350 = vmatmul.bf16.gmra.mxu0 %v164
    %v11351 = vpop.f32.mrf.mxu0
    %v11352 = vadd.f32 %v11339, %v11351
    %v11353 = vpop.f32.mrf.mxu0
    %11354 = vdwg.mxu0
    %11355 = vmatpush.bf16.msra.mxu0 %v6728
    %11356 = vmatpush.bf16.msra.mxu0 %v6720
    %11357 = vmatpush.bf16.msra.mxu0 %v6712
    %11358 = vmatpush.bf16.msra.mxu0 %v6704
    %11359 = vmatpush.bf16.msra.mxu0 %v6696
    %11360 = vmatpush.bf16.msra.mxu0 %v6688
    %11361 = vmatpush.bf16.msra.mxu0 %v6680
    %11362 = vmatpush.bf16.msra.mxu0 %v6672
    %11363 = vmatmul.bf16.gmra.mxu0 %v165
    %v11364 = vpop.f32.mrf.mxu0
    %v11365 = vadd.f32 %v11352, %v11364
    %v11366 = vpop.f32.mrf.mxu0
    %11367 = vdwg.mxu0
    %11368 = vmatpush.bf16.msra.mxu0 %v6792
    %11369 = vmatpush.bf16.msra.mxu0 %v6784
    %11370 = vmatpush.bf16.msra.mxu0 %v6776
    %11371 = vmatpush.bf16.msra.mxu0 %v6768
    %11372 = vmatpush.bf16.msra.mxu0 %v6760
    %11373 = vmatpush.bf16.msra.mxu0 %v6752
    %11374 = vmatpush.bf16.msra.mxu0 %v6744
    %11375 = vmatpush.bf16.msra.mxu0 %v6736
    %11376 = vmatmul.bf16.gmra.mxu0 %v166
    %v11377 = vpop.f32.mrf.mxu0
    %v11378 = vadd.f32 %v11365, %v11377
    %v11379 = vpop.f32.mrf.mxu0
    %11380 = vdwg.mxu0
    %11381 = vmatpush.bf16.msra.mxu0 %v6856
    %11382 = vmatpush.bf16.msra.mxu0 %v6848
    %11383 = vmatpush.bf16.msra.mxu0 %v6840
    %11384 = vmatpush.bf16.msra.mxu0 %v6832
    %11385 = vmatpush.bf16.msra.mxu0 %v6824
    %11386 = vmatpush.bf16.msra.mxu0 %v6816
    %11387 = vmatpush.bf16.msra.mxu0 %v6808
    %11388 = vmatpush.bf16.msra.mxu0 %v6800
    %11389 = vmatmul.bf16.gmra.mxu0 %v167
    %v11390 = vpop.f32.mrf.mxu0
    %v11391 = vadd.f32 %v11378, %v11390
    %v11392 = vpop.f32.mrf.mxu0
    %11393 = vdwg.mxu0
    %11394 = vmatpush.bf16.msra.mxu0 %v6920
    %11395 = vmatpush.bf16.msra.mxu0 %v6912
    %11396 = vmatpush.bf16.msra.mxu0 %v6904
    %11397 = vmatpush.bf16.msra.mxu0 %v6896
    %11398 = vmatpush.bf16.msra.mxu0 %v6888
    %11399 = vmatpush.bf16.msra.mxu0 %v6880
    %11400 = vmatpush.bf16.msra.mxu0 %v6872
    %11401 = vmatpush.bf16.msra.mxu0 %v6864
    %11402 = vmatmul.bf16.gmra.mxu0 %v168
    %v11403 = vpop.f32.mrf.mxu0
    %v11404 = vadd.f32 %v11391, %v11403
    %v11405 = vpop.f32.mrf.mxu0
    %11406 = vdwg.mxu0
    %11407 = vmatpush.bf16.msra.mxu0 %v6984
    %11408 = vmatpush.bf16.msra.mxu0 %v6976
    %11409 = vmatpush.bf16.msra.mxu0 %v6968
    %11410 = vmatpush.bf16.msra.mxu0 %v6960
    %11411 = vmatpush.bf16.msra.mxu0 %v6952
    %11412 = vmatpush.bf16.msra.mxu0 %v6944
    %11413 = vmatpush.bf16.msra.mxu0 %v6936
    %11414 = vmatpush.bf16.msra.mxu0 %v6928
    %11415 = vmatmul.bf16.gmra.mxu0 %v169
    %v11416 = vpop.f32.mrf.mxu0
    %v11417 = vadd.f32 %v11404, %v11416
    %v11418 = vpop.f32.mrf.mxu0
    %11419 = vdwg.mxu0
    %11420 = vmatpush.bf16.msra.mxu0 %v7048
    %11421 = vmatpush.bf16.msra.mxu0 %v7040
    %11422 = vmatpush.bf16.msra.mxu0 %v7032
    %11423 = vmatpush.bf16.msra.mxu0 %v7024
    %11424 = vmatpush.bf16.msra.mxu0 %v7016
    %11425 = vmatpush.bf16.msra.mxu0 %v7008
    %11426 = vmatpush.bf16.msra.mxu0 %v7000
    %11427 = vmatpush.bf16.msra.mxu0 %v6992
    %11428 = vmatmul.bf16.gmra.mxu0 %v170
    %v11429 = vpop.f32.mrf.mxu0
    %v11430 = vadd.f32 %v11417, %v11429
    %v11431 = vpop.f32.mrf.mxu0
    %11432 = vdwg.mxu0
    %11433 = vmatpush.bf16.msra.mxu0 %v7112
    %11434 = vmatpush.bf16.msra.mxu0 %v7104
    %11435 = vmatpush.bf16.msra.mxu0 %v7096
    %11436 = vmatpush.bf16.msra.mxu0 %v7088
    %11437 = vmatpush.bf16.msra.mxu0 %v7080
    %11438 = vmatpush.bf16.msra.mxu0 %v7072
    %11439 = vmatpush.bf16.msra.mxu0 %v7064
    %11440 = vmatpush.bf16.msra.mxu0 %v7056
    %11441 = vmatmul.bf16.gmra.mxu0 %v171
    %v11442 = vpop.f32.mrf.mxu0
    %v11443 = vadd.f32 %v11430, %v11442
    %v11444 = vpop.f32.mrf.mxu0
    %11445 = vdwg.mxu0
    %11446 = vmatpush.bf16.msra.mxu0 %v7176
    %11447 = vmatpush.bf16.msra.mxu0 %v7168
    %11448 = vmatpush.bf16.msra.mxu0 %v7160
    %11449 = vmatpush.bf16.msra.mxu0 %v7152
    %11450 = vmatpush.bf16.msra.mxu0 %v7144
    %11451 = vmatpush.bf16.msra.mxu0 %v7136
    %11452 = vmatpush.bf16.msra.mxu0 %v7128
    %11453 = vmatpush.bf16.msra.mxu0 %v7120
    %11454 = vmatmul.bf16.gmra.mxu0 %v172
    %v11455 = vpop.f32.mrf.mxu0
    %v11456 = vadd.f32 %v11443, %v11455
    %v11457 = vpop.f32.mrf.mxu0
    %11458 = vdwg.mxu0
    %11459 = vmatpush.bf16.msra.mxu0 %v7240
    %11460 = vmatpush.bf16.msra.mxu0 %v7232
    %11461 = vmatpush.bf16.msra.mxu0 %v7224
    %11462 = vmatpush.bf16.msra.mxu0 %v7216
    %11463 = vmatpush.bf16.msra.mxu0 %v7208
    %11464 = vmatpush.bf16.msra.mxu0 %v7200
    %11465 = vmatpush.bf16.msra.mxu0 %v7192
    %11466 = vmatpush.bf16.msra.mxu0 %v7184
    %11467 = vmatmul.bf16.gmra.mxu0 %v173
    %v11468 = vpop.f32.mrf.mxu0
    %v11469 = vadd.f32 %v11456, %v11468
    %v11470 = vpop.f32.mrf.mxu0
    %11471 = vdwg.mxu0
    %11472 = vmatpush.bf16.msra.mxu0 %v7304
    %11473 = vmatpush.bf16.msra.mxu0 %v7296
    %11474 = vmatpush.bf16.msra.mxu0 %v7288
    %11475 = vmatpush.bf16.msra.mxu0 %v7280
    %11476 = vmatpush.bf16.msra.mxu0 %v7272
    %11477 = vmatpush.bf16.msra.mxu0 %v7264
    %11478 = vmatpush.bf16.msra.mxu0 %v7256
    %11479 = vmatpush.bf16.msra.mxu0 %v7248
    %11480 = vmatmul.bf16.gmra.mxu0 %v174
    %v11481 = vpop.f32.mrf.mxu0
    %v11482 = vadd.f32 %v11469, %v11481
    %v11483 = vpop.f32.mrf.mxu0
    %11484 = vdwg.mxu0
    %11485 = vmatpush.bf16.msra.mxu0 %v7368
    %11486 = vmatpush.bf16.msra.mxu0 %v7360
    %11487 = vmatpush.bf16.msra.mxu0 %v7352
    %11488 = vmatpush.bf16.msra.mxu0 %v7344
    %11489 = vmatpush.bf16.msra.mxu0 %v7336
    %11490 = vmatpush.bf16.msra.mxu0 %v7328
    %11491 = vmatpush.bf16.msra.mxu0 %v7320
    %11492 = vmatpush.bf16.msra.mxu0 %v7312
    %11493 = vmatmul.bf16.gmra.mxu0 %v175
    %v11494 = vpop.f32.mrf.mxu0
    %v11495 = vadd.f32 %v11482, %v11494
    %v11496 = vpop.f32.mrf.mxu0
    %11497 = vdwg.mxu0
    %11498 = vmatpush.bf16.msra.mxu0 %v7432
    %11499 = vmatpush.bf16.msra.mxu0 %v7424
    %11500 = vmatpush.bf16.msra.mxu0 %v7416
    %11501 = vmatpush.bf16.msra.mxu0 %v7408
    %11502 = vmatpush.bf16.msra.mxu0 %v7400
    %11503 = vmatpush.bf16.msra.mxu0 %v7392
    %11504 = vmatpush.bf16.msra.mxu0 %v7384
    %11505 = vmatpush.bf16.msra.mxu0 %v7376
    %11506 = vmatmul.bf16.gmra.mxu0 %v176
    %v11507 = vpop.f32.mrf.mxu0
    %v11508 = vadd.f32 %v11495, %v11507
    %v11509 = vpop.f32.mrf.mxu0
    %11510 = vdwg.mxu0
    %11511 = vmatpush.bf16.msra.mxu0 %v7496
    %11512 = vmatpush.bf16.msra.mxu0 %v7488
    %11513 = vmatpush.bf16.msra.mxu0 %v7480
    %11514 = vmatpush.bf16.msra.mxu0 %v7472
    %11515 = vmatpush.bf16.msra.mxu0 %v7464
    %11516 = vmatpush.bf16.msra.mxu0 %v7456
    %11517 = vmatpush.bf16.msra.mxu0 %v7448
    %11518 = vmatpush.bf16.msra.mxu0 %v7440
    %11519 = vmatmul.bf16.gmra.mxu0 %v177
    %v11520 = vpop.f32.mrf.mxu0
    %v11521 = vadd.f32 %v11508, %v11520
    %v11522 = vpop.f32.mrf.mxu0
    %11523 = vdwg.mxu0
    %11524 = vmatpush.bf16.msra.mxu0 %v7560
    %11525 = vmatpush.bf16.msra.mxu0 %v7552
    %11526 = vmatpush.bf16.msra.mxu0 %v7544
    %11527 = vmatpush.bf16.msra.mxu0 %v7536
    %11528 = vmatpush.bf16.msra.mxu0 %v7528
    %11529 = vmatpush.bf16.msra.mxu0 %v7520
    %11530 = vmatpush.bf16.msra.mxu0 %v7512
    %11531 = vmatpush.bf16.msra.mxu0 %v7504
    %11532 = vmatmul.bf16.gmra.mxu0 %v178
    %v11533 = vpop.f32.mrf.mxu0
    %v11534 = vadd.f32 %v11521, %v11533
    %v11535 = vpop.f32.mrf.mxu0
    %11536 = vdwg.mxu0
    %11537 = vmatpush.bf16.msra.mxu0 %v7624
    %11538 = vmatpush.bf16.msra.mxu0 %v7616
    %11539 = vmatpush.bf16.msra.mxu0 %v7608
    %11540 = vmatpush.bf16.msra.mxu0 %v7600
    %11541 = vmatpush.bf16.msra.mxu0 %v7592
    %11542 = vmatpush.bf16.msra.mxu0 %v7584
    %11543 = vmatpush.bf16.msra.mxu0 %v7576
    %11544 = vmatpush.bf16.msra.mxu0 %v7568
    %11545 = vmatmul.bf16.gmra.mxu0 %v179
    %v11546 = vpop.f32.mrf.mxu0
    %v11547 = vadd.f32 %v11534, %v11546
    %v11548 = vpop.f32.mrf.mxu0
    %11549 = vdwg.mxu0
    %11550 = vmatpush.bf16.msra.mxu0 %v7688
    %11551 = vmatpush.bf16.msra.mxu0 %v7680
    %11552 = vmatpush.bf16.msra.mxu0 %v7672
    %11553 = vmatpush.bf16.msra.mxu0 %v7664
    %11554 = vmatpush.bf16.msra.mxu0 %v7656
    %11555 = vmatpush.bf16.msra.mxu0 %v7648
    %11556 = vmatpush.bf16.msra.mxu0 %v7640
    %11557 = vmatpush.bf16.msra.mxu0 %v7632
    %11558 = vmatmul.bf16.gmra.mxu0 %v180
    %v11559 = vpop.f32.mrf.mxu0
    %v11560 = vadd.f32 %v11547, %v11559
    %v11561 = vpop.f32.mrf.mxu0
    %11562 = vdwg.mxu0
    %11563 = vmatpush.bf16.msra.mxu0 %v7752
    %11564 = vmatpush.bf16.msra.mxu0 %v7744
    %11565 = vmatpush.bf16.msra.mxu0 %v7736
    %11566 = vmatpush.bf16.msra.mxu0 %v7728
    %11567 = vmatpush.bf16.msra.mxu0 %v7720
    %11568 = vmatpush.bf16.msra.mxu0 %v7712
    %11569 = vmatpush.bf16.msra.mxu0 %v7704
    %11570 = vmatpush.bf16.msra.mxu0 %v7696
    %11571 = vmatmul.bf16.gmra.mxu0 %v181
    %v11572 = vpop.f32.mrf.mxu0
    %v11573 = vadd.f32 %v11560, %v11572
    %v11574 = vpop.f32.mrf.mxu0
    %11575 = vdwg.mxu0
    %11576 = vmatpush.bf16.msra.mxu0 %v7816
    %11577 = vmatpush.bf16.msra.mxu0 %v7808
    %11578 = vmatpush.bf16.msra.mxu0 %v7800
    %11579 = vmatpush.bf16.msra.mxu0 %v7792
    %11580 = vmatpush.bf16.msra.mxu0 %v7784
    %11581 = vmatpush.bf16.msra.mxu0 %v7776
    %11582 = vmatpush.bf16.msra.mxu0 %v7768
    %11583 = vmatpush.bf16.msra.mxu0 %v7760
    %11584 = vmatmul.bf16.gmra.mxu0 %v182
    %v11585 = vpop.f32.mrf.mxu0
    %v11586 = vadd.f32 %v11573, %v11585
    %v11587 = vpop.f32.mrf.mxu0
    %11588 = vdwg.mxu0
    %11589 = vmatpush.bf16.msra.mxu0 %v7880
    %11590 = vmatpush.bf16.msra.mxu0 %v7872
    %11591 = vmatpush.bf16.msra.mxu0 %v7864
    %11592 = vmatpush.bf16.msra.mxu0 %v7856
    %11593 = vmatpush.bf16.msra.mxu0 %v7848
    %11594 = vmatpush.bf16.msra.mxu0 %v7840
    %11595 = vmatpush.bf16.msra.mxu0 %v7832
    %11596 = vmatpush.bf16.msra.mxu0 %v7824
    %11597 = vmatmul.bf16.gmra.mxu0 %v183
    %v11598 = vpop.f32.mrf.mxu0
    %v11599 = vadd.f32 %v11586, %v11598
    %v11600 = vpop.f32.mrf.mxu0
    %11601 = vdwg.mxu0
    %11602 = vmatpush.bf16.msra.mxu0 %v6409
    %11603 = vmatpush.bf16.msra.mxu0 %v6401
    %11604 = vmatpush.bf16.msra.mxu0 %v6393
    %11605 = vmatpush.bf16.msra.mxu0 %v6385
    %11606 = vmatpush.bf16.msra.mxu0 %v6377
    %11607 = vmatpush.bf16.msra.mxu0 %v6369
    %11608 = vmatpush.bf16.msra.mxu0 %v6361
    %11609 = vmatpush.bf16.msra.mxu0 %v6353
    %11610 = vmatmul.bf16.gmra.mxu0 %v160
    %v11611 = vpop.f32.mrf.mxu0
    %v11612 = vadd.f32 %v1729, %v11611
    %v11613 = vpop.f32.mrf.mxu0
    %11614 = vdwg.mxu0
    %11615 = vmatpush.bf16.msra.mxu0 %v6473
    %11616 = vmatpush.bf16.msra.mxu0 %v6465
    %11617 = vmatpush.bf16.msra.mxu0 %v6457
    %11618 = vmatpush.bf16.msra.mxu0 %v6449
    %11619 = vmatpush.bf16.msra.mxu0 %v6441
    %11620 = vmatpush.bf16.msra.mxu0 %v6433
    %11621 = vmatpush.bf16.msra.mxu0 %v6425
    %11622 = vmatpush.bf16.msra.mxu0 %v6417
    %11623 = vmatmul.bf16.gmra.mxu0 %v161
    %v11624 = vpop.f32.mrf.mxu0
    %v11625 = vadd.f32 %v11612, %v11624
    %v11626 = vpop.f32.mrf.mxu0
    %11627 = vdwg.mxu0
    %11628 = vmatpush.bf16.msra.mxu0 %v6537
    %11629 = vmatpush.bf16.msra.mxu0 %v6529
    %11630 = vmatpush.bf16.msra.mxu0 %v6521
    %11631 = vmatpush.bf16.msra.mxu0 %v6513
    %11632 = vmatpush.bf16.msra.mxu0 %v6505
    %11633 = vmatpush.bf16.msra.mxu0 %v6497
    %11634 = vmatpush.bf16.msra.mxu0 %v6489
    %11635 = vmatpush.bf16.msra.mxu0 %v6481
    %11636 = vmatmul.bf16.gmra.mxu0 %v162
    %v11637 = vpop.f32.mrf.mxu0
    %v11638 = vadd.f32 %v11625, %v11637
    %v11639 = vpop.f32.mrf.mxu0
    %11640 = vdwg.mxu0
    %11641 = vmatpush.bf16.msra.mxu0 %v6601
    %11642 = vmatpush.bf16.msra.mxu0 %v6593
    %11643 = vmatpush.bf16.msra.mxu0 %v6585
    %11644 = vmatpush.bf16.msra.mxu0 %v6577
    %11645 = vmatpush.bf16.msra.mxu0 %v6569
    %11646 = vmatpush.bf16.msra.mxu0 %v6561
    %11647 = vmatpush.bf16.msra.mxu0 %v6553
    %11648 = vmatpush.bf16.msra.mxu0 %v6545
    %11649 = vmatmul.bf16.gmra.mxu0 %v163
    %v11650 = vpop.f32.mrf.mxu0
    %v11651 = vadd.f32 %v11638, %v11650
    %v11652 = vpop.f32.mrf.mxu0
    %11653 = vdwg.mxu0
    %11654 = vmatpush.bf16.msra.mxu0 %v6665
    %11655 = vmatpush.bf16.msra.mxu0 %v6657
    %11656 = vmatpush.bf16.msra.mxu0 %v6649
    %11657 = vmatpush.bf16.msra.mxu0 %v6641
    %11658 = vmatpush.bf16.msra.mxu0 %v6633
    %11659 = vmatpush.bf16.msra.mxu0 %v6625
    %11660 = vmatpush.bf16.msra.mxu0 %v6617
    %11661 = vmatpush.bf16.msra.mxu0 %v6609
    %11662 = vmatmul.bf16.gmra.mxu0 %v164
    %v11663 = vpop.f32.mrf.mxu0
    %v11664 = vadd.f32 %v11651, %v11663
    %v11665 = vpop.f32.mrf.mxu0
    %11666 = vdwg.mxu0
    %11667 = vmatpush.bf16.msra.mxu0 %v6729
    %11668 = vmatpush.bf16.msra.mxu0 %v6721
    %11669 = vmatpush.bf16.msra.mxu0 %v6713
    %11670 = vmatpush.bf16.msra.mxu0 %v6705
    %11671 = vmatpush.bf16.msra.mxu0 %v6697
    %11672 = vmatpush.bf16.msra.mxu0 %v6689
    %11673 = vmatpush.bf16.msra.mxu0 %v6681
    %11674 = vmatpush.bf16.msra.mxu0 %v6673
    %11675 = vmatmul.bf16.gmra.mxu0 %v165
    %v11676 = vpop.f32.mrf.mxu0
    %v11677 = vadd.f32 %v11664, %v11676
    %v11678 = vpop.f32.mrf.mxu0
    %11679 = vdwg.mxu0
    %11680 = vmatpush.bf16.msra.mxu0 %v6793
    %11681 = vmatpush.bf16.msra.mxu0 %v6785
    %11682 = vmatpush.bf16.msra.mxu0 %v6777
    %11683 = vmatpush.bf16.msra.mxu0 %v6769
    %11684 = vmatpush.bf16.msra.mxu0 %v6761
    %11685 = vmatpush.bf16.msra.mxu0 %v6753
    %11686 = vmatpush.bf16.msra.mxu0 %v6745
    %11687 = vmatpush.bf16.msra.mxu0 %v6737
    %11688 = vmatmul.bf16.gmra.mxu0 %v166
    %v11689 = vpop.f32.mrf.mxu0
    %v11690 = vadd.f32 %v11677, %v11689
    %v11691 = vpop.f32.mrf.mxu0
    %11692 = vdwg.mxu0
    %11693 = vmatpush.bf16.msra.mxu0 %v6857
    %11694 = vmatpush.bf16.msra.mxu0 %v6849
    %11695 = vmatpush.bf16.msra.mxu0 %v6841
    %11696 = vmatpush.bf16.msra.mxu0 %v6833
    %11697 = vmatpush.bf16.msra.mxu0 %v6825
    %11698 = vmatpush.bf16.msra.mxu0 %v6817
    %11699 = vmatpush.bf16.msra.mxu0 %v6809
    %11700 = vmatpush.bf16.msra.mxu0 %v6801
    %11701 = vmatmul.bf16.gmra.mxu0 %v167
    %v11702 = vpop.f32.mrf.mxu0
    %v11703 = vadd.f32 %v11690, %v11702
    %v11704 = vpop.f32.mrf.mxu0
    %11705 = vdwg.mxu0
    %11706 = vmatpush.bf16.msra.mxu0 %v6921
    %11707 = vmatpush.bf16.msra.mxu0 %v6913
    %11708 = vmatpush.bf16.msra.mxu0 %v6905
    %11709 = vmatpush.bf16.msra.mxu0 %v6897
    %11710 = vmatpush.bf16.msra.mxu0 %v6889
    %11711 = vmatpush.bf16.msra.mxu0 %v6881
    %11712 = vmatpush.bf16.msra.mxu0 %v6873
    %11713 = vmatpush.bf16.msra.mxu0 %v6865
    %11714 = vmatmul.bf16.gmra.mxu0 %v168
    %v11715 = vpop.f32.mrf.mxu0
    %v11716 = vadd.f32 %v11703, %v11715
    %v11717 = vpop.f32.mrf.mxu0
    %11718 = vdwg.mxu0
    %11719 = vmatpush.bf16.msra.mxu0 %v6985
    %11720 = vmatpush.bf16.msra.mxu0 %v6977
    %11721 = vmatpush.bf16.msra.mxu0 %v6969
    %11722 = vmatpush.bf16.msra.mxu0 %v6961
    %11723 = vmatpush.bf16.msra.mxu0 %v6953
    %11724 = vmatpush.bf16.msra.mxu0 %v6945
    %11725 = vmatpush.bf16.msra.mxu0 %v6937
    %11726 = vmatpush.bf16.msra.mxu0 %v6929
    %11727 = vmatmul.bf16.gmra.mxu0 %v169
    %v11728 = vpop.f32.mrf.mxu0
    %v11729 = vadd.f32 %v11716, %v11728
    %v11730 = vpop.f32.mrf.mxu0
    %11731 = vdwg.mxu0
    %11732 = vmatpush.bf16.msra.mxu0 %v7049
    %11733 = vmatpush.bf16.msra.mxu0 %v7041
    %11734 = vmatpush.bf16.msra.mxu0 %v7033
    %11735 = vmatpush.bf16.msra.mxu0 %v7025
    %11736 = vmatpush.bf16.msra.mxu0 %v7017
    %11737 = vmatpush.bf16.msra.mxu0 %v7009
    %11738 = vmatpush.bf16.msra.mxu0 %v7001
    %11739 = vmatpush.bf16.msra.mxu0 %v6993
    %11740 = vmatmul.bf16.gmra.mxu0 %v170
    %v11741 = vpop.f32.mrf.mxu0
    %v11742 = vadd.f32 %v11729, %v11741
    %v11743 = vpop.f32.mrf.mxu0
    %11744 = vdwg.mxu0
    %11745 = vmatpush.bf16.msra.mxu0 %v7113
    %11746 = vmatpush.bf16.msra.mxu0 %v7105
    %11747 = vmatpush.bf16.msra.mxu0 %v7097
    %11748 = vmatpush.bf16.msra.mxu0 %v7089
    %11749 = vmatpush.bf16.msra.mxu0 %v7081
    %11750 = vmatpush.bf16.msra.mxu0 %v7073
    %11751 = vmatpush.bf16.msra.mxu0 %v7065
    %11752 = vmatpush.bf16.msra.mxu0 %v7057
    %11753 = vmatmul.bf16.gmra.mxu0 %v171
    %v11754 = vpop.f32.mrf.mxu0
    %v11755 = vadd.f32 %v11742, %v11754
    %v11756 = vpop.f32.mrf.mxu0
    %11757 = vdwg.mxu0
    %11758 = vmatpush.bf16.msra.mxu0 %v7177
    %11759 = vmatpush.bf16.msra.mxu0 %v7169
    %11760 = vmatpush.bf16.msra.mxu0 %v7161
    %11761 = vmatpush.bf16.msra.mxu0 %v7153
    %11762 = vmatpush.bf16.msra.mxu0 %v7145
    %11763 = vmatpush.bf16.msra.mxu0 %v7137
    %11764 = vmatpush.bf16.msra.mxu0 %v7129
    %11765 = vmatpush.bf16.msra.mxu0 %v7121
    %11766 = vmatmul.bf16.gmra.mxu0 %v172
    %v11767 = vpop.f32.mrf.mxu0
    %v11768 = vadd.f32 %v11755, %v11767
    %v11769 = vpop.f32.mrf.mxu0
    %11770 = vdwg.mxu0
    %11771 = vmatpush.bf16.msra.mxu0 %v7241
    %11772 = vmatpush.bf16.msra.mxu0 %v7233
    %11773 = vmatpush.bf16.msra.mxu0 %v7225
    %11774 = vmatpush.bf16.msra.mxu0 %v7217
    %11775 = vmatpush.bf16.msra.mxu0 %v7209
    %11776 = vmatpush.bf16.msra.mxu0 %v7201
    %11777 = vmatpush.bf16.msra.mxu0 %v7193
    %11778 = vmatpush.bf16.msra.mxu0 %v7185
    %11779 = vmatmul.bf16.gmra.mxu0 %v173
    %v11780 = vpop.f32.mrf.mxu0
    %v11781 = vadd.f32 %v11768, %v11780
    %v11782 = vpop.f32.mrf.mxu0
    %11783 = vdwg.mxu0
    %11784 = vmatpush.bf16.msra.mxu0 %v7305
    %11785 = vmatpush.bf16.msra.mxu0 %v7297
    %11786 = vmatpush.bf16.msra.mxu0 %v7289
    %11787 = vmatpush.bf16.msra.mxu0 %v7281
    %11788 = vmatpush.bf16.msra.mxu0 %v7273
    %11789 = vmatpush.bf16.msra.mxu0 %v7265
    %11790 = vmatpush.bf16.msra.mxu0 %v7257
    %11791 = vmatpush.bf16.msra.mxu0 %v7249
    %11792 = vmatmul.bf16.gmra.mxu0 %v174
    %v11793 = vpop.f32.mrf.mxu0
    %v11794 = vadd.f32 %v11781, %v11793
    %v11795 = vpop.f32.mrf.mxu0
    %11796 = vdwg.mxu0
    %11797 = vmatpush.bf16.msra.mxu0 %v7369
    %11798 = vmatpush.bf16.msra.mxu0 %v7361
    %11799 = vmatpush.bf16.msra.mxu0 %v7353
    %11800 = vmatpush.bf16.msra.mxu0 %v7345
    %11801 = vmatpush.bf16.msra.mxu0 %v7337
    %11802 = vmatpush.bf16.msra.mxu0 %v7329
    %11803 = vmatpush.bf16.msra.mxu0 %v7321
    %11804 = vmatpush.bf16.msra.mxu0 %v7313
    %11805 = vmatmul.bf16.gmra.mxu0 %v175
    %v11806 = vpop.f32.mrf.mxu0
    %v11807 = vadd.f32 %v11794, %v11806
    %v11808 = vpop.f32.mrf.mxu0
    %11809 = vdwg.mxu0
    %11810 = vmatpush.bf16.msra.mxu0 %v7433
    %11811 = vmatpush.bf16.msra.mxu0 %v7425
    %11812 = vmatpush.bf16.msra.mxu0 %v7417
    %11813 = vmatpush.bf16.msra.mxu0 %v7409
    %11814 = vmatpush.bf16.msra.mxu0 %v7401
    %11815 = vmatpush.bf16.msra.mxu0 %v7393
    %11816 = vmatpush.bf16.msra.mxu0 %v7385
    %11817 = vmatpush.bf16.msra.mxu0 %v7377
    %11818 = vmatmul.bf16.gmra.mxu0 %v176
    %v11819 = vpop.f32.mrf.mxu0
    %v11820 = vadd.f32 %v11807, %v11819
    %v11821 = vpop.f32.mrf.mxu0
    %11822 = vdwg.mxu0
    %11823 = vmatpush.bf16.msra.mxu0 %v7497
    %11824 = vmatpush.bf16.msra.mxu0 %v7489
    %11825 = vmatpush.bf16.msra.mxu0 %v7481
    %11826 = vmatpush.bf16.msra.mxu0 %v7473
    %11827 = vmatpush.bf16.msra.mxu0 %v7465
    %11828 = vmatpush.bf16.msra.mxu0 %v7457
    %11829 = vmatpush.bf16.msra.mxu0 %v7449
    %11830 = vmatpush.bf16.msra.mxu0 %v7441
    %11831 = vmatmul.bf16.gmra.mxu0 %v177
    %v11832 = vpop.f32.mrf.mxu0
    %v11833 = vadd.f32 %v11820, %v11832
    %v11834 = vpop.f32.mrf.mxu0
    %11835 = vdwg.mxu0
    %11836 = vmatpush.bf16.msra.mxu0 %v7561
    %11837 = vmatpush.bf16.msra.mxu0 %v7553
    %11838 = vmatpush.bf16.msra.mxu0 %v7545
    %11839 = vmatpush.bf16.msra.mxu0 %v7537
    %11840 = vmatpush.bf16.msra.mxu0 %v7529
    %11841 = vmatpush.bf16.msra.mxu0 %v7521
    %11842 = vmatpush.bf16.msra.mxu0 %v7513
    %11843 = vmatpush.bf16.msra.mxu0 %v7505
    %11844 = vmatmul.bf16.gmra.mxu0 %v178
    %v11845 = vpop.f32.mrf.mxu0
    %v11846 = vadd.f32 %v11833, %v11845
    %v11847 = vpop.f32.mrf.mxu0
    %11848 = vdwg.mxu0
    %11849 = vmatpush.bf16.msra.mxu0 %v7625
    %11850 = vmatpush.bf16.msra.mxu0 %v7617
    %11851 = vmatpush.bf16.msra.mxu0 %v7609
    %11852 = vmatpush.bf16.msra.mxu0 %v7601
    %11853 = vmatpush.bf16.msra.mxu0 %v7593
    %11854 = vmatpush.bf16.msra.mxu0 %v7585
    %11855 = vmatpush.bf16.msra.mxu0 %v7577
    %11856 = vmatpush.bf16.msra.mxu0 %v7569
    %11857 = vmatmul.bf16.gmra.mxu0 %v179
    %v11858 = vpop.f32.mrf.mxu0
    %v11859 = vadd.f32 %v11846, %v11858
    %v11860 = vpop.f32.mrf.mxu0
    %11861 = vdwg.mxu0
    %11862 = vmatpush.bf16.msra.mxu0 %v7689
    %11863 = vmatpush.bf16.msra.mxu0 %v7681
    %11864 = vmatpush.bf16.msra.mxu0 %v7673
    %11865 = vmatpush.bf16.msra.mxu0 %v7665
    %11866 = vmatpush.bf16.msra.mxu0 %v7657
    %11867 = vmatpush.bf16.msra.mxu0 %v7649
    %11868 = vmatpush.bf16.msra.mxu0 %v7641
    %11869 = vmatpush.bf16.msra.mxu0 %v7633
    %11870 = vmatmul.bf16.gmra.mxu0 %v180
    %v11871 = vpop.f32.mrf.mxu0
    %v11872 = vadd.f32 %v11859, %v11871
    %v11873 = vpop.f32.mrf.mxu0
    %11874 = vdwg.mxu0
    %11875 = vmatpush.bf16.msra.mxu0 %v7753
    %11876 = vmatpush.bf16.msra.mxu0 %v7745
    %11877 = vmatpush.bf16.msra.mxu0 %v7737
    %11878 = vmatpush.bf16.msra.mxu0 %v7729
    %11879 = vmatpush.bf16.msra.mxu0 %v7721
    %11880 = vmatpush.bf16.msra.mxu0 %v7713
    %11881 = vmatpush.bf16.msra.mxu0 %v7705
    %11882 = vmatpush.bf16.msra.mxu0 %v7697
    %11883 = vmatmul.bf16.gmra.mxu0 %v181
    %v11884 = vpop.f32.mrf.mxu0
    %v11885 = vadd.f32 %v11872, %v11884
    %v11886 = vpop.f32.mrf.mxu0
    %11887 = vdwg.mxu0
    %11888 = vmatpush.bf16.msra.mxu0 %v7817
    %11889 = vmatpush.bf16.msra.mxu0 %v7809
    %11890 = vmatpush.bf16.msra.mxu0 %v7801
    %11891 = vmatpush.bf16.msra.mxu0 %v7793
    %11892 = vmatpush.bf16.msra.mxu0 %v7785
    %11893 = vmatpush.bf16.msra.mxu0 %v7777
    %11894 = vmatpush.bf16.msra.mxu0 %v7769
    %11895 = vmatpush.bf16.msra.mxu0 %v7761
    %11896 = vmatmul.bf16.gmra.mxu0 %v182
    %v11897 = vpop.f32.mrf.mxu0
    %v11898 = vadd.f32 %v11885, %v11897
    %v11899 = vpop.f32.mrf.mxu0
    %11900 = vdwg.mxu0
    %11901 = vmatpush.bf16.msra.mxu0 %v7881
    %11902 = vmatpush.bf16.msra.mxu0 %v7873
    %11903 = vmatpush.bf16.msra.mxu0 %v7865
    %11904 = vmatpush.bf16.msra.mxu0 %v7857
    %11905 = vmatpush.bf16.msra.mxu0 %v7849
    %11906 = vmatpush.bf16.msra.mxu0 %v7841
    %11907 = vmatpush.bf16.msra.mxu0 %v7833
    %11908 = vmatpush.bf16.msra.mxu0 %v7825
    %11909 = vmatmul.bf16.gmra.mxu0 %v183
    %v11910 = vpop.f32.mrf.mxu0
    %v11911 = vadd.f32 %v11898, %v11910
    %v11912 = vpop.f32.mrf.mxu0
    %11913 = vdwg.mxu0
    %v11914 = vmax.f32 %v9727, 0.0
    %v11915 = vmax.f32 %v10039, 0.0
    %v11916 = vmax.f32 %v10351, 0.0
    %v11917 = vmax.f32 %v10663, 0.0
    %v11918 = vmax.f32 %v10975, 0.0
    %v11919 = vmax.f32 %v11287, 0.0
    %v11920 = vmax.f32 %v11599, 0.0
    %v11921 = vmax.f32 %v11911, 0.0
    %v11922 = vpack.c.bf16 %v11914, %v11914
    %v11923 = vpack.c.bf16 %v11915, %v11915
    %v11924 = vpack.c.bf16 %v11916, %v11916
    %v11925 = vpack.c.bf16 %v11917, %v11917
    %v11926 = vpack.c.bf16 %v11918, %v11918
    %v11927 = vpack.c.bf16 %v11919, %v11919
    %v11928 = vpack.c.bf16 %v11920, %v11920
    %v11929 = vpack.c.bf16 %v11921, %v11921
    %v11930 = vld [vmem:[#allocation4] sm:$0xff]
    %v11931 = vld [vmem:[#allocation4 + $0x8] sm:$0xff]
    %v11932 = vld [vmem:[#allocation4 + $0x10] sm:$0xff]
    %v11933 = vld [vmem:[#allocation4 + $0x18] sm:$0xff]
    %v11934 = vld [vmem:[#allocation4 + $0x20] sm:$0xff]
    %v11935 = vld [vmem:[#allocation4 + $0x28] sm:$0xff]
    %v11936 = vld [vmem:[#allocation4 + $0x30] sm:$0xff]
    %v11937 = vld [vmem:[#allocation4 + $0x38] sm:$0xff]
    %v11938 = vld [vmem:[#allocation4 + $0x40] sm:$0xff]
    %v11939 = vld [vmem:[#allocation4 + $0x48] sm:$0xff]
    %v11940 = vld [vmem:[#allocation4 + $0x50] sm:$0xff]
    %v11941 = vld [vmem:[#allocation4 + $0x58] sm:$0xff]
    %v11942 = vld [vmem:[#allocation4 + $0x60] sm:$0xff]
    %v11943 = vld [vmem:[#allocation4 + $0x68] sm:$0xff]
    %v11944 = vld [vmem:[#allocation4 + $0x70] sm:$0xff]
    %v11945 = vld [vmem:[#allocation4 + $0x78] sm:$0xff]
    %v11946 = vld [vmem:[#allocation4 + $0x80] sm:$0xff]
    %v11947 = vld [vmem:[#allocation4 + $0x88] sm:$0xff]
    %v11948 = vld [vmem:[#allocation4 + $0x90] sm:$0xff]
    %v11949 = vld [vmem:[#allocation4 + $0x98] sm:$0xff]
    %v11950 = vld [vmem:[#allocation4 + $0xa0] sm:$0xff]
    %v11951 = vld [vmem:[#allocation4 + $0xa8] sm:$0xff]
    %v11952 = vld [vmem:[#allocation4 + $0xb0] sm:$0xff]
    %v11953 = vld [vmem:[#allocation4 + $0xb8] sm:$0xff]
    %v11954 = vld [vmem:[#allocation4 + $0xc0] sm:$0xff]
    %v11955 = vld [vmem:[#allocation4 + $0xc8] sm:$0xff]
    %v11956 = vld [vmem:[#allocation4 + $0xd0] sm:$0xff]
    %v11957 = vld [vmem:[#allocation4 + $0xd8] sm:$0xff]
    %v11958 = vld [vmem:[#allocation4 + $0xe0] sm:$0xff]
    %v11959 = vld [vmem:[#allocation4 + $0xe8] sm:$0xff]
    %v11960 = vld [vmem:[#allocation4 + $0xf0] sm:$0xff]
    %v11961 = vld [vmem:[#allocation4 + $0xf8] sm:$0xff]
    %v11962 = vld [vmem:[#allocation4 + $0x100] sm:$0xff]
    %v11963 = vld [vmem:[#allocation4 + $0x108] sm:$0xff]
    %v11964 = vld [vmem:[#allocation4 + $0x110] sm:$0xff]
    %v11965 = vld [vmem:[#allocation4 + $0x118] sm:$0xff]
    %v11966 = vld [vmem:[#allocation4 + $0x120] sm:$0xff]
    %v11967 = vld [vmem:[#allocation4 + $0x128] sm:$0xff]
    %v11968 = vld [vmem:[#allocation4 + $0x130] sm:$0xff]
    %v11969 = vld [vmem:[#allocation4 + $0x138] sm:$0xff]
    %v11970 = vld [vmem:[#allocation4 + $0x140] sm:$0xff]
    %v11971 = vld [vmem:[#allocation4 + $0x148] sm:$0xff]
    %v11972 = vld [vmem:[#allocation4 + $0x150] sm:$0xff]
    %v11973 = vld [vmem:[#allocation4 + $0x158] sm:$0xff]
    %v11974 = vld [vmem:[#allocation4 + $0x160] sm:$0xff]
    %v11975 = vld [vmem:[#allocation4 + $0x168] sm:$0xff]
    %v11976 = vld [vmem:[#allocation4 + $0x170] sm:$0xff]
    %v11977 = vld [vmem:[#allocation4 + $0x178] sm:$0xff]
    %v11978 = vld [vmem:[#allocation4 + $0x180] sm:$0xff]
    %v11979 = vld [vmem:[#allocation4 + $0x188] sm:$0xff]
    %v11980 = vld [vmem:[#allocation4 + $0x190] sm:$0xff]
    %v11981 = vld [vmem:[#allocation4 + $0x198] sm:$0xff]
    %v11982 = vld [vmem:[#allocation4 + $0x1a0] sm:$0xff]
    %v11983 = vld [vmem:[#allocation4 + $0x1a8] sm:$0xff]
    %v11984 = vld [vmem:[#allocation4 + $0x1b0] sm:$0xff]
    %v11985 = vld [vmem:[#allocation4 + $0x1b8] sm:$0xff]
    %v11986 = vld [vmem:[#allocation4 + $0x1c0] sm:$0xff]
    %v11987 = vld [vmem:[#allocation4 + $0x1c8] sm:$0xff]
    %v11988 = vld [vmem:[#allocation4 + $0x1d0] sm:$0xff]
    %v11989 = vld [vmem:[#allocation4 + $0x1d8] sm:$0xff]
    %v11990 = vld [vmem:[#allocation4 + $0x1e0] sm:$0xff]
    %v11991 = vld [vmem:[#allocation4 + $0x1e8] sm:$0xff]
    %v11992 = vld [vmem:[#allocation4 + $0x1f0] sm:$0xff]
    %v11993 = vld [vmem:[#allocation4 + $0x1f8] sm:$0xff]
    %v11994 = vld [vmem:[#allocation4 + $0x200] sm:$0xff]
    %v11995 = vld [vmem:[#allocation4 + $0x208] sm:$0xff]
    %v11996 = vld [vmem:[#allocation4 + $0x210] sm:$0xff]
    %v11997 = vld [vmem:[#allocation4 + $0x218] sm:$0xff]
    %v11998 = vld [vmem:[#allocation4 + $0x220] sm:$0xff]
    %v11999 = vld [vmem:[#allocation4 + $0x228] sm:$0xff]
    %v12000 = vld [vmem:[#allocation4 + $0x230] sm:$0xff]
    %v12001 = vld [vmem:[#allocation4 + $0x238] sm:$0xff]
    %v12002 = vld [vmem:[#allocation4 + $0x240] sm:$0xff]
    %v12003 = vld [vmem:[#allocation4 + $0x248] sm:$0xff]
    %v12004 = vld [vmem:[#allocation4 + $0x250] sm:$0xff]
    %v12005 = vld [vmem:[#allocation4 + $0x258] sm:$0xff]
    %v12006 = vld [vmem:[#allocation4 + $0x260] sm:$0xff]
    %v12007 = vld [vmem:[#allocation4 + $0x268] sm:$0xff]
    %v12008 = vld [vmem:[#allocation4 + $0x270] sm:$0xff]
    %v12009 = vld [vmem:[#allocation4 + $0x278] sm:$0xff]
    %v12010 = vld [vmem:[#allocation4 + $0x280] sm:$0xff]
    %v12011 = vld [vmem:[#allocation4 + $0x288] sm:$0xff]
    %v12012 = vld [vmem:[#allocation4 + $0x290] sm:$0xff]
    %v12013 = vld [vmem:[#allocation4 + $0x298] sm:$0xff]
    %v12014 = vld [vmem:[#allocation4 + $0x2a0] sm:$0xff]
    %v12015 = vld [vmem:[#allocation4 + $0x2a8] sm:$0xff]
    %v12016 = vld [vmem:[#allocation4 + $0x2b0] sm:$0xff]
    %v12017 = vld [vmem:[#allocation4 + $0x2b8] sm:$0xff]
    %v12018 = vld [vmem:[#allocation4 + $0x2c0] sm:$0xff]
    %v12019 = vld [vmem:[#allocation4 + $0x2c8] sm:$0xff]
    %v12020 = vld [vmem:[#allocation4 + $0x2d0] sm:$0xff]
    %v12021 = vld [vmem:[#allocation4 + $0x2d8] sm:$0xff]
    %v12022 = vld [vmem:[#allocation4 + $0x2e0] sm:$0xff]
    %v12023 = vld [vmem:[#allocation4 + $0x2e8] sm:$0xff]
    %v12024 = vld [vmem:[#allocation4 + $0x2f0] sm:$0xff]
    %v12025 = vld [vmem:[#allocation4 + $0x2f8] sm:$0xff]
    %v12026 = vld [vmem:[#allocation4 + $0x300] sm:$0xff]
    %v12027 = vld [vmem:[#allocation4 + $0x308] sm:$0xff]
    %v12028 = vld [vmem:[#allocation4 + $0x310] sm:$0xff]
    %v12029 = vld [vmem:[#allocation4 + $0x318] sm:$0xff]
    %v12030 = vld [vmem:[#allocation4 + $0x320] sm:$0xff]
    %v12031 = vld [vmem:[#allocation4 + $0x328] sm:$0xff]
    %v12032 = vld [vmem:[#allocation4 + $0x330] sm:$0xff]
    %v12033 = vld [vmem:[#allocation4 + $0x338] sm:$0xff]
    %v12034 = vld [vmem:[#allocation4 + $0x340] sm:$0xff]
    %v12035 = vld [vmem:[#allocation4 + $0x348] sm:$0xff]
    %v12036 = vld [vmem:[#allocation4 + $0x350] sm:$0xff]
    %v12037 = vld [vmem:[#allocation4 + $0x358] sm:$0xff]
    %v12038 = vld [vmem:[#allocation4 + $0x360] sm:$0xff]
    %v12039 = vld [vmem:[#allocation4 + $0x368] sm:$0xff]
    %v12040 = vld [vmem:[#allocation4 + $0x370] sm:$0xff]
    %v12041 = vld [vmem:[#allocation4 + $0x378] sm:$0xff]
    %v12042 = vld [vmem:[#allocation4 + $0x380] sm:$0xff]
    %v12043 = vld [vmem:[#allocation4 + $0x388] sm:$0xff]
    %v12044 = vld [vmem:[#allocation4 + $0x390] sm:$0xff]
    %v12045 = vld [vmem:[#allocation4 + $0x398] sm:$0xff]
    %v12046 = vld [vmem:[#allocation4 + $0x3a0] sm:$0xff]
    %v12047 = vld [vmem:[#allocation4 + $0x3a8] sm:$0xff]
    %v12048 = vld [vmem:[#allocation4 + $0x3b0] sm:$0xff]
    %v12049 = vld [vmem:[#allocation4 + $0x3b8] sm:$0xff]
    %v12050 = vld [vmem:[#allocation4 + $0x3c0] sm:$0xff]
    %v12051 = vld [vmem:[#allocation4 + $0x3c8] sm:$0xff]
    %v12052 = vld [vmem:[#allocation4 + $0x3d0] sm:$0xff]
    %v12053 = vld [vmem:[#allocation4 + $0x3d8] sm:$0xff]
    %v12054 = vld [vmem:[#allocation4 + $0x3e0] sm:$0xff]
    %v12055 = vld [vmem:[#allocation4 + $0x3e8] sm:$0xff]
    %v12056 = vld [vmem:[#allocation4 + $0x3f0] sm:$0xff]
    %v12057 = vld [vmem:[#allocation4 + $0x3f8] sm:$0xff]
    %v12058 = vld [vmem:[#allocation4 + $0x400] sm:$0xff]
    %v12059 = vld [vmem:[#allocation4 + $0x408] sm:$0xff]
    %v12060 = vld [vmem:[#allocation4 + $0x410] sm:$0xff]
    %v12061 = vld [vmem:[#allocation4 + $0x418] sm:$0xff]
    %v12062 = vld [vmem:[#allocation4 + $0x420] sm:$0xff]
    %v12063 = vld [vmem:[#allocation4 + $0x428] sm:$0xff]
    %v12064 = vld [vmem:[#allocation4 + $0x430] sm:$0xff]
    %v12065 = vld [vmem:[#allocation4 + $0x438] sm:$0xff]
    %v12066 = vld [vmem:[#allocation4 + $0x440] sm:$0xff]
    %v12067 = vld [vmem:[#allocation4 + $0x448] sm:$0xff]
    %v12068 = vld [vmem:[#allocation4 + $0x450] sm:$0xff]
    %v12069 = vld [vmem:[#allocation4 + $0x458] sm:$0xff]
    %v12070 = vld [vmem:[#allocation4 + $0x460] sm:$0xff]
    %v12071 = vld [vmem:[#allocation4 + $0x468] sm:$0xff]
    %v12072 = vld [vmem:[#allocation4 + $0x470] sm:$0xff]
    %v12073 = vld [vmem:[#allocation4 + $0x478] sm:$0xff]
    %v12074 = vld [vmem:[#allocation4 + $0x480] sm:$0xff]
    %v12075 = vld [vmem:[#allocation4 + $0x488] sm:$0xff]
    %v12076 = vld [vmem:[#allocation4 + $0x490] sm:$0xff]
    %v12077 = vld [vmem:[#allocation4 + $0x498] sm:$0xff]
    %v12078 = vld [vmem:[#allocation4 + $0x4a0] sm:$0xff]
    %v12079 = vld [vmem:[#allocation4 + $0x4a8] sm:$0xff]
    %v12080 = vld [vmem:[#allocation4 + $0x4b0] sm:$0xff]
    %v12081 = vld [vmem:[#allocation4 + $0x4b8] sm:$0xff]
    %v12082 = vld [vmem:[#allocation4 + $0x4c0] sm:$0xff]
    %v12083 = vld [vmem:[#allocation4 + $0x4c8] sm:$0xff]
    %v12084 = vld [vmem:[#allocation4 + $0x4d0] sm:$0xff]
    %v12085 = vld [vmem:[#allocation4 + $0x4d8] sm:$0xff]
    %v12086 = vld [vmem:[#allocation4 + $0x4e0] sm:$0xff]
    %v12087 = vld [vmem:[#allocation4 + $0x4e8] sm:$0xff]
    %v12088 = vld [vmem:[#allocation4 + $0x4f0] sm:$0xff]
    %v12089 = vld [vmem:[#allocation4 + $0x4f8] sm:$0xff]
    %v12090 = vld [vmem:[#allocation4 + $0x500] sm:$0xff]
    %v12091 = vld [vmem:[#allocation4 + $0x508] sm:$0xff]
    %v12092 = vld [vmem:[#allocation4 + $0x510] sm:$0xff]
    %v12093 = vld [vmem:[#allocation4 + $0x518] sm:$0xff]
    %v12094 = vld [vmem:[#allocation4 + $0x520] sm:$0xff]
    %v12095 = vld [vmem:[#allocation4 + $0x528] sm:$0xff]
    %v12096 = vld [vmem:[#allocation4 + $0x530] sm:$0xff]
    %v12097 = vld [vmem:[#allocation4 + $0x538] sm:$0xff]
    %v12098 = vld [vmem:[#allocation4 + $0x540] sm:$0xff]
    %v12099 = vld [vmem:[#allocation4 + $0x548] sm:$0xff]
    %v12100 = vld [vmem:[#allocation4 + $0x550] sm:$0xff]
    %v12101 = vld [vmem:[#allocation4 + $0x558] sm:$0xff]
    %v12102 = vld [vmem:[#allocation4 + $0x560] sm:$0xff]
    %v12103 = vld [vmem:[#allocation4 + $0x568] sm:$0xff]
    %v12104 = vld [vmem:[#allocation4 + $0x570] sm:$0xff]
    %v12105 = vld [vmem:[#allocation4 + $0x578] sm:$0xff]
    %v12106 = vld [vmem:[#allocation4 + $0x580] sm:$0xff]
    %v12107 = vld [vmem:[#allocation4 + $0x588] sm:$0xff]
    %v12108 = vld [vmem:[#allocation4 + $0x590] sm:$0xff]
    %v12109 = vld [vmem:[#allocation4 + $0x598] sm:$0xff]
    %v12110 = vld [vmem:[#allocation4 + $0x5a0] sm:$0xff]
    %v12111 = vld [vmem:[#allocation4 + $0x5a8] sm:$0xff]
    %v12112 = vld [vmem:[#allocation4 + $0x5b0] sm:$0xff]
    %v12113 = vld [vmem:[#allocation4 + $0x5b8] sm:$0xff]
    %v12114 = vld [vmem:[#allocation4 + $0x5c0] sm:$0xff]
    %v12115 = vld [vmem:[#allocation4 + $0x5c8] sm:$0xff]
    %v12116 = vld [vmem:[#allocation4 + $0x5d0] sm:$0xff]
    %v12117 = vld [vmem:[#allocation4 + $0x5d8] sm:$0xff]
    %v12118 = vld [vmem:[#allocation4 + $0x5e0] sm:$0xff]
    %v12119 = vld [vmem:[#allocation4 + $0x5e8] sm:$0xff]
    %v12120 = vld [vmem:[#allocation4 + $0x5f0] sm:$0xff]
    %v12121 = vld [vmem:[#allocation4 + $0x5f8] sm:$0xff]
    %v12122 = vld [vmem:[#allocation4 + $0x600] sm:$0xff]
    %v12123 = vld [vmem:[#allocation4 + $0x608] sm:$0xff]
    %v12124 = vld [vmem:[#allocation4 + $0x610] sm:$0xff]
    %v12125 = vld [vmem:[#allocation4 + $0x618] sm:$0xff]
    %v12126 = vld [vmem:[#allocation4 + $0x620] sm:$0xff]
    %v12127 = vld [vmem:[#allocation4 + $0x628] sm:$0xff]
    %v12128 = vld [vmem:[#allocation4 + $0x630] sm:$0xff]
    %v12129 = vld [vmem:[#allocation4 + $0x638] sm:$0xff]
    %v12130 = vld [vmem:[#allocation4 + $0x640] sm:$0xff]
    %v12131 = vld [vmem:[#allocation4 + $0x648] sm:$0xff]
    %v12132 = vld [vmem:[#allocation4 + $0x650] sm:$0xff]
    %v12133 = vld [vmem:[#allocation4 + $0x658] sm:$0xff]
    %v12134 = vld [vmem:[#allocation4 + $0x660] sm:$0xff]
    %v12135 = vld [vmem:[#allocation4 + $0x668] sm:$0xff]
    %v12136 = vld [vmem:[#allocation4 + $0x670] sm:$0xff]
    %v12137 = vld [vmem:[#allocation4 + $0x678] sm:$0xff]
    %v12138 = vld [vmem:[#allocation4 + $0x680] sm:$0xff]
    %v12139 = vld [vmem:[#allocation4 + $0x688] sm:$0xff]
    %v12140 = vld [vmem:[#allocation4 + $0x690] sm:$0xff]
    %v12141 = vld [vmem:[#allocation4 + $0x698] sm:$0xff]
    %v12142 = vld [vmem:[#allocation4 + $0x6a0] sm:$0xff]
    %v12143 = vld [vmem:[#allocation4 + $0x6a8] sm:$0xff]
    %v12144 = vld [vmem:[#allocation4 + $0x6b0] sm:$0xff]
    %v12145 = vld [vmem:[#allocation4 + $0x6b8] sm:$0xff]
    %v12146 = vld [vmem:[#allocation4 + $0x6c0] sm:$0xff]
    %v12147 = vld [vmem:[#allocation4 + $0x6c8] sm:$0xff]
    %v12148 = vld [vmem:[#allocation4 + $0x6d0] sm:$0xff]
    %v12149 = vld [vmem:[#allocation4 + $0x6d8] sm:$0xff]
    %v12150 = vld [vmem:[#allocation4 + $0x6e0] sm:$0xff]
    %v12151 = vld [vmem:[#allocation4 + $0x6e8] sm:$0xff]
    %v12152 = vld [vmem:[#allocation4 + $0x6f0] sm:$0xff]
    %v12153 = vld [vmem:[#allocation4 + $0x6f8] sm:$0xff]
    %v12154 = vld [vmem:[#allocation4 + $0x700] sm:$0xff]
    %v12155 = vld [vmem:[#allocation4 + $0x708] sm:$0xff]
    %v12156 = vld [vmem:[#allocation4 + $0x710] sm:$0xff]
    %v12157 = vld [vmem:[#allocation4 + $0x718] sm:$0xff]
    %v12158 = vld [vmem:[#allocation4 + $0x720] sm:$0xff]
    %v12159 = vld [vmem:[#allocation4 + $0x728] sm:$0xff]
    %v12160 = vld [vmem:[#allocation4 + $0x730] sm:$0xff]
    %v12161 = vld [vmem:[#allocation4 + $0x738] sm:$0xff]
    %v12162 = vld [vmem:[#allocation4 + $0x740] sm:$0xff]
    %v12163 = vld [vmem:[#allocation4 + $0x748] sm:$0xff]
    %v12164 = vld [vmem:[#allocation4 + $0x750] sm:$0xff]
    %v12165 = vld [vmem:[#allocation4 + $0x758] sm:$0xff]
    %v12166 = vld [vmem:[#allocation4 + $0x760] sm:$0xff]
    %v12167 = vld [vmem:[#allocation4 + $0x768] sm:$0xff]
    %v12168 = vld [vmem:[#allocation4 + $0x770] sm:$0xff]
    %v12169 = vld [vmem:[#allocation4 + $0x778] sm:$0xff]
    %v12170 = vld [vmem:[#allocation4 + $0x780] sm:$0xff]
    %v12171 = vld [vmem:[#allocation4 + $0x788] sm:$0xff]
    %v12172 = vld [vmem:[#allocation4 + $0x790] sm:$0xff]
    %v12173 = vld [vmem:[#allocation4 + $0x798] sm:$0xff]
    %v12174 = vld [vmem:[#allocation4 + $0x7a0] sm:$0xff]
    %v12175 = vld [vmem:[#allocation4 + $0x7a8] sm:$0xff]
    %v12176 = vld [vmem:[#allocation4 + $0x7b0] sm:$0xff]
    %v12177 = vld [vmem:[#allocation4 + $0x7b8] sm:$0xff]
    %v12178 = vld [vmem:[#allocation4 + $0x7c0] sm:$0xff]
    %v12179 = vld [vmem:[#allocation4 + $0x7c8] sm:$0xff]
    %v12180 = vld [vmem:[#allocation4 + $0x7d0] sm:$0xff]
    %v12181 = vld [vmem:[#allocation4 + $0x7d8] sm:$0xff]
    %v12182 = vld [vmem:[#allocation4 + $0x7e0] sm:$0xff]
    %v12183 = vld [vmem:[#allocation4 + $0x7e8] sm:$0xff]
    %v12184 = vld [vmem:[#allocation4 + $0x7f0] sm:$0xff]
    %v12185 = vld [vmem:[#allocation4 + $0x7f8] sm:$0xff]
    %v12186 = vld [vmem:[#allocation12 + $0x8] sm:$0xf]
    %v12188 = vperm.slane %v12186, 0
    %v12189 = vperm.slane %v12186, 1
    %v12190 = vperm.slane %v12186, 2
    %v12191 = vperm.slane %v12186, 3
    %v12452 = vunpack.c.l.b16 %v11930
    %v12453 = vunpack.c.h.b16 %v11930
    %v12454 = vunpack.c.l.b16 %v11931
    %v12455 = vunpack.c.h.b16 %v11931
    %v12456 = vunpack.c.l.b16 %v11932
    %v12457 = vunpack.c.h.b16 %v11932
    %v12458 = vunpack.c.l.b16 %v11933
    %v12459 = vunpack.c.h.b16 %v11933
    %v12460 = vunpack.c.l.b16 %v11934
    %v12461 = vunpack.c.h.b16 %v11934
    %v12462 = vunpack.c.l.b16 %v11935
    %v12463 = vunpack.c.h.b16 %v11935
    %v12464 = vunpack.c.l.b16 %v11936
    %v12465 = vunpack.c.h.b16 %v11936
    %v12466 = vunpack.c.l.b16 %v11937
    %v12467 = vunpack.c.h.b16 %v11937
    %v12468 = vunpack.c.l.b16 %v11938
    %v12469 = vunpack.c.h.b16 %v11938
    %v12470 = vunpack.c.l.b16 %v11939
    %v12471 = vunpack.c.h.b16 %v11939
    %v12472 = vunpack.c.l.b16 %v11940
    %v12473 = vunpack.c.h.b16 %v11940
    %v12474 = vunpack.c.l.b16 %v11941
    %v12475 = vunpack.c.h.b16 %v11941
    %v12476 = vunpack.c.l.b16 %v11942
    %v12477 = vunpack.c.h.b16 %v11942
    %v12478 = vunpack.c.l.b16 %v11943
    %v12479 = vunpack.c.h.b16 %v11943
    %v12480 = vunpack.c.l.b16 %v11944
    %v12481 = vunpack.c.h.b16 %v11944
    %v12482 = vunpack.c.l.b16 %v11945
    %v12483 = vunpack.c.h.b16 %v11945
    %v12484 = vunpack.c.l.b16 %v11946
    %v12485 = vunpack.c.h.b16 %v11946
    %v12486 = vunpack.c.l.b16 %v11947
    %v12487 = vunpack.c.h.b16 %v11947
    %v12488 = vunpack.c.l.b16 %v11948
    %v12489 = vunpack.c.h.b16 %v11948
    %v12490 = vunpack.c.l.b16 %v11949
    %v12491 = vunpack.c.h.b16 %v11949
    %v12492 = vunpack.c.l.b16 %v11950
    %v12493 = vunpack.c.h.b16 %v11950
    %v12494 = vunpack.c.l.b16 %v11951
    %v12495 = vunpack.c.h.b16 %v11951
    %v12496 = vunpack.c.l.b16 %v11952
    %v12497 = vunpack.c.h.b16 %v11952
    %v12498 = vunpack.c.l.b16 %v11953
    %v12499 = vunpack.c.h.b16 %v11953
    %v12500 = vunpack.c.l.b16 %v11954
    %v12501 = vunpack.c.h.b16 %v11954
    %v12502 = vunpack.c.l.b16 %v11955
    %v12503 = vunpack.c.h.b16 %v11955
    %v12504 = vunpack.c.l.b16 %v11956
    %v12505 = vunpack.c.h.b16 %v11956
    %v12506 = vunpack.c.l.b16 %v11957
    %v12507 = vunpack.c.h.b16 %v11957
    %v12508 = vunpack.c.l.b16 %v11958
    %v12509 = vunpack.c.h.b16 %v11958
    %v12510 = vunpack.c.l.b16 %v11959
    %v12511 = vunpack.c.h.b16 %v11959
    %v12512 = vunpack.c.l.b16 %v11960
    %v12513 = vunpack.c.h.b16 %v11960
    %v12514 = vunpack.c.l.b16 %v11961
    %v12515 = vunpack.c.h.b16 %v11961
    %v12516 = vunpack.c.l.b16 %v11962
    %v12517 = vunpack.c.h.b16 %v11962
    %v12518 = vunpack.c.l.b16 %v11963
    %v12519 = vunpack.c.h.b16 %v11963
    %v12520 = vunpack.c.l.b16 %v11964
    %v12521 = vunpack.c.h.b16 %v11964
    %v12522 = vunpack.c.l.b16 %v11965
    %v12523 = vunpack.c.h.b16 %v11965
    %v12524 = vunpack.c.l.b16 %v11966
    %v12525 = vunpack.c.h.b16 %v11966
    %v12526 = vunpack.c.l.b16 %v11967
    %v12527 = vunpack.c.h.b16 %v11967
    %v12528 = vunpack.c.l.b16 %v11968
    %v12529 = vunpack.c.h.b16 %v11968
    %v12530 = vunpack.c.l.b16 %v11969
    %v12531 = vunpack.c.h.b16 %v11969
    %v12532 = vunpack.c.l.b16 %v11970
    %v12533 = vunpack.c.h.b16 %v11970
    %v12534 = vunpack.c.l.b16 %v11971
    %v12535 = vunpack.c.h.b16 %v11971
    %v12536 = vunpack.c.l.b16 %v11972
    %v12537 = vunpack.c.h.b16 %v11972
    %v12538 = vunpack.c.l.b16 %v11973
    %v12539 = vunpack.c.h.b16 %v11973
    %v12540 = vunpack.c.l.b16 %v11974
    %v12541 = vunpack.c.h.b16 %v11974
    %v12542 = vunpack.c.l.b16 %v11975
    %v12543 = vunpack.c.h.b16 %v11975
    %v12544 = vunpack.c.l.b16 %v11976
    %v12545 = vunpack.c.h.b16 %v11976
    %v12546 = vunpack.c.l.b16 %v11977
    %v12547 = vunpack.c.h.b16 %v11977
    %v12548 = vunpack.c.l.b16 %v11978
    %v12549 = vunpack.c.h.b16 %v11978
    %v12550 = vunpack.c.l.b16 %v11979
    %v12551 = vunpack.c.h.b16 %v11979
    %v12552 = vunpack.c.l.b16 %v11980
    %v12553 = vunpack.c.h.b16 %v11980
    %v12554 = vunpack.c.l.b16 %v11981
    %v12555 = vunpack.c.h.b16 %v11981
    %v12556 = vunpack.c.l.b16 %v11982
    %v12557 = vunpack.c.h.b16 %v11982
    %v12558 = vunpack.c.l.b16 %v11983
    %v12559 = vunpack.c.h.b16 %v11983
    %v12560 = vunpack.c.l.b16 %v11984
    %v12561 = vunpack.c.h.b16 %v11984
    %v12562 = vunpack.c.l.b16 %v11985
    %v12563 = vunpack.c.h.b16 %v11985
    %v12564 = vunpack.c.l.b16 %v11986
    %v12565 = vunpack.c.h.b16 %v11986
    %v12566 = vunpack.c.l.b16 %v11987
    %v12567 = vunpack.c.h.b16 %v11987
    %v12568 = vunpack.c.l.b16 %v11988
    %v12569 = vunpack.c.h.b16 %v11988
    %v12570 = vunpack.c.l.b16 %v11989
    %v12571 = vunpack.c.h.b16 %v11989
    %v12572 = vunpack.c.l.b16 %v11990
    %v12573 = vunpack.c.h.b16 %v11990
    %v12574 = vunpack.c.l.b16 %v11991
    %v12575 = vunpack.c.h.b16 %v11991
    %v12576 = vunpack.c.l.b16 %v11992
    %v12577 = vunpack.c.h.b16 %v11992
    %v12578 = vunpack.c.l.b16 %v11993
    %v12579 = vunpack.c.h.b16 %v11993
    %v12580 = vunpack.c.l.b16 %v11994
    %v12581 = vunpack.c.h.b16 %v11994
    %v12582 = vunpack.c.l.b16 %v11995
    %v12583 = vunpack.c.h.b16 %v11995
    %v12584 = vunpack.c.l.b16 %v11996
    %v12585 = vunpack.c.h.b16 %v11996
    %v12586 = vunpack.c.l.b16 %v11997
    %v12587 = vunpack.c.h.b16 %v11997
    %v12588 = vunpack.c.l.b16 %v11998
    %v12589 = vunpack.c.h.b16 %v11998
    %v12590 = vunpack.c.l.b16 %v11999
    %v12591 = vunpack.c.h.b16 %v11999
    %v12592 = vunpack.c.l.b16 %v12000
    %v12593 = vunpack.c.h.b16 %v12000
    %v12594 = vunpack.c.l.b16 %v12001
    %v12595 = vunpack.c.h.b16 %v12001
    %v12596 = vunpack.c.l.b16 %v12002
    %v12597 = vunpack.c.h.b16 %v12002
    %v12598 = vunpack.c.l.b16 %v12003
    %v12599 = vunpack.c.h.b16 %v12003
    %v12600 = vunpack.c.l.b16 %v12004
    %v12601 = vunpack.c.h.b16 %v12004
    %v12602 = vunpack.c.l.b16 %v12005
    %v12603 = vunpack.c.h.b16 %v12005
    %v12604 = vunpack.c.l.b16 %v12006
    %v12605 = vunpack.c.h.b16 %v12006
    %v12606 = vunpack.c.l.b16 %v12007
    %v12607 = vunpack.c.h.b16 %v12007
    %v12608 = vunpack.c.l.b16 %v12008
    %v12609 = vunpack.c.h.b16 %v12008
    %v12610 = vunpack.c.l.b16 %v12009
    %v12611 = vunpack.c.h.b16 %v12009
    %v12612 = vunpack.c.l.b16 %v12010
    %v12613 = vunpack.c.h.b16 %v12010
    %v12614 = vunpack.c.l.b16 %v12011
    %v12615 = vunpack.c.h.b16 %v12011
    %v12616 = vunpack.c.l.b16 %v12012
    %v12617 = vunpack.c.h.b16 %v12012
    %v12618 = vunpack.c.l.b16 %v12013
    %v12619 = vunpack.c.h.b16 %v12013
    %v12620 = vunpack.c.l.b16 %v12014
    %v12621 = vunpack.c.h.b16 %v12014
    %v12622 = vunpack.c.l.b16 %v12015
    %v12623 = vunpack.c.h.b16 %v12015
    %v12624 = vunpack.c.l.b16 %v12016
    %v12625 = vunpack.c.h.b16 %v12016
    %v12626 = vunpack.c.l.b16 %v12017
    %v12627 = vunpack.c.h.b16 %v12017
    %v12628 = vunpack.c.l.b16 %v12018
    %v12629 = vunpack.c.h.b16 %v12018
    %v12630 = vunpack.c.l.b16 %v12019
    %v12631 = vunpack.c.h.b16 %v12019
    %v12632 = vunpack.c.l.b16 %v12020
    %v12633 = vunpack.c.h.b16 %v12020
    %v12634 = vunpack.c.l.b16 %v12021
    %v12635 = vunpack.c.h.b16 %v12021
    %v12636 = vunpack.c.l.b16 %v12022
    %v12637 = vunpack.c.h.b16 %v12022
    %v12638 = vunpack.c.l.b16 %v12023
    %v12639 = vunpack.c.h.b16 %v12023
    %v12640 = vunpack.c.l.b16 %v12024
    %v12641 = vunpack.c.h.b16 %v12024
    %v12642 = vunpack.c.l.b16 %v12025
    %v12643 = vunpack.c.h.b16 %v12025
    %v12644 = vunpack.c.l.b16 %v12026
    %v12645 = vunpack.c.h.b16 %v12026
    %v12646 = vunpack.c.l.b16 %v12027
    %v12647 = vunpack.c.h.b16 %v12027
    %v12648 = vunpack.c.l.b16 %v12028
    %v12649 = vunpack.c.h.b16 %v12028
    %v12650 = vunpack.c.l.b16 %v12029
    %v12651 = vunpack.c.h.b16 %v12029
    %v12652 = vunpack.c.l.b16 %v12030
    %v12653 = vunpack.c.h.b16 %v12030
    %v12654 = vunpack.c.l.b16 %v12031
    %v12655 = vunpack.c.h.b16 %v12031
    %v12656 = vunpack.c.l.b16 %v12032
    %v12657 = vunpack.c.h.b16 %v12032
    %v12658 = vunpack.c.l.b16 %v12033
    %v12659 = vunpack.c.h.b16 %v12033
    %v12660 = vunpack.c.l.b16 %v12034
    %v12661 = vunpack.c.h.b16 %v12034
    %v12662 = vunpack.c.l.b16 %v12035
    %v12663 = vunpack.c.h.b16 %v12035
    %v12664 = vunpack.c.l.b16 %v12036
    %v12665 = vunpack.c.h.b16 %v12036
    %v12666 = vunpack.c.l.b16 %v12037
    %v12667 = vunpack.c.h.b16 %v12037
    %v12668 = vunpack.c.l.b16 %v12038
    %v12669 = vunpack.c.h.b16 %v12038
    %v12670 = vunpack.c.l.b16 %v12039
    %v12671 = vunpack.c.h.b16 %v12039
    %v12672 = vunpack.c.l.b16 %v12040
    %v12673 = vunpack.c.h.b16 %v12040
    %v12674 = vunpack.c.l.b16 %v12041
    %v12675 = vunpack.c.h.b16 %v12041
    %v12676 = vunpack.c.l.b16 %v12042
    %v12677 = vunpack.c.h.b16 %v12042
    %v12678 = vunpack.c.l.b16 %v12043
    %v12679 = vunpack.c.h.b16 %v12043
    %v12680 = vunpack.c.l.b16 %v12044
    %v12681 = vunpack.c.h.b16 %v12044
    %v12682 = vunpack.c.l.b16 %v12045
    %v12683 = vunpack.c.h.b16 %v12045
    %v12684 = vunpack.c.l.b16 %v12046
    %v12685 = vunpack.c.h.b16 %v12046
    %v12686 = vunpack.c.l.b16 %v12047
    %v12687 = vunpack.c.h.b16 %v12047
    %v12688 = vunpack.c.l.b16 %v12048
    %v12689 = vunpack.c.h.b16 %v12048
    %v12690 = vunpack.c.l.b16 %v12049
    %v12691 = vunpack.c.h.b16 %v12049
    %v12692 = vunpack.c.l.b16 %v12050
    %v12693 = vunpack.c.h.b16 %v12050
    %v12694 = vunpack.c.l.b16 %v12051
    %v12695 = vunpack.c.h.b16 %v12051
    %v12696 = vunpack.c.l.b16 %v12052
    %v12697 = vunpack.c.h.b16 %v12052
    %v12698 = vunpack.c.l.b16 %v12053
    %v12699 = vunpack.c.h.b16 %v12053
    %v12700 = vunpack.c.l.b16 %v12054
    %v12701 = vunpack.c.h.b16 %v12054
    %v12702 = vunpack.c.l.b16 %v12055
    %v12703 = vunpack.c.h.b16 %v12055
    %v12704 = vunpack.c.l.b16 %v12056
    %v12705 = vunpack.c.h.b16 %v12056
    %v12706 = vunpack.c.l.b16 %v12057
    %v12707 = vunpack.c.h.b16 %v12057
    %v12708 = vunpack.c.l.b16 %v12058
    %v12709 = vunpack.c.h.b16 %v12058
    %v12710 = vunpack.c.l.b16 %v12059
    %v12711 = vunpack.c.h.b16 %v12059
    %v12712 = vunpack.c.l.b16 %v12060
    %v12713 = vunpack.c.h.b16 %v12060
    %v12714 = vunpack.c.l.b16 %v12061
    %v12715 = vunpack.c.h.b16 %v12061
    %v12716 = vunpack.c.l.b16 %v12062
    %v12717 = vunpack.c.h.b16 %v12062
    %v12718 = vunpack.c.l.b16 %v12063
    %v12719 = vunpack.c.h.b16 %v12063
    %v12720 = vunpack.c.l.b16 %v12064
    %v12721 = vunpack.c.h.b16 %v12064
    %v12722 = vunpack.c.l.b16 %v12065
    %v12723 = vunpack.c.h.b16 %v12065
    %v12724 = vunpack.c.l.b16 %v12066
    %v12725 = vunpack.c.h.b16 %v12066
    %v12726 = vunpack.c.l.b16 %v12067
    %v12727 = vunpack.c.h.b16 %v12067
    %v12728 = vunpack.c.l.b16 %v12068
    %v12729 = vunpack.c.h.b16 %v12068
    %v12730 = vunpack.c.l.b16 %v12069
    %v12731 = vunpack.c.h.b16 %v12069
    %v12732 = vunpack.c.l.b16 %v12070
    %v12733 = vunpack.c.h.b16 %v12070
    %v12734 = vunpack.c.l.b16 %v12071
    %v12735 = vunpack.c.h.b16 %v12071
    %v12736 = vunpack.c.l.b16 %v12072
    %v12737 = vunpack.c.h.b16 %v12072
    %v12738 = vunpack.c.l.b16 %v12073
    %v12739 = vunpack.c.h.b16 %v12073
    %v12740 = vunpack.c.l.b16 %v12074
    %v12741 = vunpack.c.h.b16 %v12074
    %v12742 = vunpack.c.l.b16 %v12075
    %v12743 = vunpack.c.h.b16 %v12075
    %v12744 = vunpack.c.l.b16 %v12076
    %v12745 = vunpack.c.h.b16 %v12076
    %v12746 = vunpack.c.l.b16 %v12077
    %v12747 = vunpack.c.h.b16 %v12077
    %v12748 = vunpack.c.l.b16 %v12078
    %v12749 = vunpack.c.h.b16 %v12078
    %v12750 = vunpack.c.l.b16 %v12079
    %v12751 = vunpack.c.h.b16 %v12079
    %v12752 = vunpack.c.l.b16 %v12080
    %v12753 = vunpack.c.h.b16 %v12080
    %v12754 = vunpack.c.l.b16 %v12081
    %v12755 = vunpack.c.h.b16 %v12081
    %v12756 = vunpack.c.l.b16 %v12082
    %v12757 = vunpack.c.h.b16 %v12082
    %v12758 = vunpack.c.l.b16 %v12083
    %v12759 = vunpack.c.h.b16 %v12083
    %v12760 = vunpack.c.l.b16 %v12084
    %v12761 = vunpack.c.h.b16 %v12084
    %v12762 = vunpack.c.l.b16 %v12085
    %v12763 = vunpack.c.h.b16 %v12085
    %v12764 = vunpack.c.l.b16 %v12086
    %v12765 = vunpack.c.h.b16 %v12086
    %v12766 = vunpack.c.l.b16 %v12087
    %v12767 = vunpack.c.h.b16 %v12087
    %v12768 = vunpack.c.l.b16 %v12088
    %v12769 = vunpack.c.h.b16 %v12088
    %v12770 = vunpack.c.l.b16 %v12089
    %v12771 = vunpack.c.h.b16 %v12089
    %v12772 = vunpack.c.l.b16 %v12090
    %v12773 = vunpack.c.h.b16 %v12090
    %v12774 = vunpack.c.l.b16 %v12091
    %v12775 = vunpack.c.h.b16 %v12091
    %v12776 = vunpack.c.l.b16 %v12092
    %v12777 = vunpack.c.h.b16 %v12092
    %v12778 = vunpack.c.l.b16 %v12093
    %v12779 = vunpack.c.h.b16 %v12093
    %v12780 = vunpack.c.l.b16 %v12094
    %v12781 = vunpack.c.h.b16 %v12094
    %v12782 = vunpack.c.l.b16 %v12095
    %v12783 = vunpack.c.h.b16 %v12095
    %v12784 = vunpack.c.l.b16 %v12096
    %v12785 = vunpack.c.h.b16 %v12096
    %v12786 = vunpack.c.l.b16 %v12097
    %v12787 = vunpack.c.h.b16 %v12097
    %v12788 = vunpack.c.l.b16 %v12098
    %v12789 = vunpack.c.h.b16 %v12098
    %v12790 = vunpack.c.l.b16 %v12099
    %v12791 = vunpack.c.h.b16 %v12099
    %v12792 = vunpack.c.l.b16 %v12100
    %v12793 = vunpack.c.h.b16 %v12100
    %v12794 = vunpack.c.l.b16 %v12101
    %v12795 = vunpack.c.h.b16 %v12101
    %v12796 = vunpack.c.l.b16 %v12102
    %v12797 = vunpack.c.h.b16 %v12102
    %v12798 = vunpack.c.l.b16 %v12103
    %v12799 = vunpack.c.h.b16 %v12103
    %v12800 = vunpack.c.l.b16 %v12104
    %v12801 = vunpack.c.h.b16 %v12104
    %v12802 = vunpack.c.l.b16 %v12105
    %v12803 = vunpack.c.h.b16 %v12105
    %v12804 = vunpack.c.l.b16 %v12106
    %v12805 = vunpack.c.h.b16 %v12106
    %v12806 = vunpack.c.l.b16 %v12107
    %v12807 = vunpack.c.h.b16 %v12107
    %v12808 = vunpack.c.l.b16 %v12108
    %v12809 = vunpack.c.h.b16 %v12108
    %v12810 = vunpack.c.l.b16 %v12109
    %v12811 = vunpack.c.h.b16 %v12109
    %v12812 = vunpack.c.l.b16 %v12110
    %v12813 = vunpack.c.h.b16 %v12110
    %v12814 = vunpack.c.l.b16 %v12111
    %v12815 = vunpack.c.h.b16 %v12111
    %v12816 = vunpack.c.l.b16 %v12112
    %v12817 = vunpack.c.h.b16 %v12112
    %v12818 = vunpack.c.l.b16 %v12113
    %v12819 = vunpack.c.h.b16 %v12113
    %v12820 = vunpack.c.l.b16 %v12114
    %v12821 = vunpack.c.h.b16 %v12114
    %v12822 = vunpack.c.l.b16 %v12115
    %v12823 = vunpack.c.h.b16 %v12115
    %v12824 = vunpack.c.l.b16 %v12116
    %v12825 = vunpack.c.h.b16 %v12116
    %v12826 = vunpack.c.l.b16 %v12117
    %v12827 = vunpack.c.h.b16 %v12117
    %v12828 = vunpack.c.l.b16 %v12118
    %v12829 = vunpack.c.h.b16 %v12118
    %v12830 = vunpack.c.l.b16 %v12119
    %v12831 = vunpack.c.h.b16 %v12119
    %v12832 = vunpack.c.l.b16 %v12120
    %v12833 = vunpack.c.h.b16 %v12120
    %v12834 = vunpack.c.l.b16 %v12121
    %v12835 = vunpack.c.h.b16 %v12121
    %v12836 = vunpack.c.l.b16 %v12122
    %v12837 = vunpack.c.h.b16 %v12122
    %v12838 = vunpack.c.l.b16 %v12123
    %v12839 = vunpack.c.h.b16 %v12123
    %v12840 = vunpack.c.l.b16 %v12124
    %v12841 = vunpack.c.h.b16 %v12124
    %v12842 = vunpack.c.l.b16 %v12125
    %v12843 = vunpack.c.h.b16 %v12125
    %v12844 = vunpack.c.l.b16 %v12126
    %v12845 = vunpack.c.h.b16 %v12126
    %v12846 = vunpack.c.l.b16 %v12127
    %v12847 = vunpack.c.h.b16 %v12127
    %v12848 = vunpack.c.l.b16 %v12128
    %v12849 = vunpack.c.h.b16 %v12128
    %v12850 = vunpack.c.l.b16 %v12129
    %v12851 = vunpack.c.h.b16 %v12129
    %v12852 = vunpack.c.l.b16 %v12130
    %v12853 = vunpack.c.h.b16 %v12130
    %v12854 = vunpack.c.l.b16 %v12131
    %v12855 = vunpack.c.h.b16 %v12131
    %v12856 = vunpack.c.l.b16 %v12132
    %v12857 = vunpack.c.h.b16 %v12132
    %v12858 = vunpack.c.l.b16 %v12133
    %v12859 = vunpack.c.h.b16 %v12133
    %v12860 = vunpack.c.l.b16 %v12134
    %v12861 = vunpack.c.h.b16 %v12134
    %v12862 = vunpack.c.l.b16 %v12135
    %v12863 = vunpack.c.h.b16 %v12135
    %v12864 = vunpack.c.l.b16 %v12136
    %v12865 = vunpack.c.h.b16 %v12136
    %v12866 = vunpack.c.l.b16 %v12137
    %v12867 = vunpack.c.h.b16 %v12137
    %v12868 = vunpack.c.l.b16 %v12138
    %v12869 = vunpack.c.h.b16 %v12138
    %v12870 = vunpack.c.l.b16 %v12139
    %v12871 = vunpack.c.h.b16 %v12139
    %v12872 = vunpack.c.l.b16 %v12140
    %v12873 = vunpack.c.h.b16 %v12140
    %v12874 = vunpack.c.l.b16 %v12141
    %v12875 = vunpack.c.h.b16 %v12141
    %v12876 = vunpack.c.l.b16 %v12142
    %v12877 = vunpack.c.h.b16 %v12142
    %v12878 = vunpack.c.l.b16 %v12143
    %v12879 = vunpack.c.h.b16 %v12143
    %v12880 = vunpack.c.l.b16 %v12144
    %v12881 = vunpack.c.h.b16 %v12144
    %v12882 = vunpack.c.l.b16 %v12145
    %v12883 = vunpack.c.h.b16 %v12145
    %v12884 = vunpack.c.l.b16 %v12146
    %v12885 = vunpack.c.h.b16 %v12146
    %v12886 = vunpack.c.l.b16 %v12147
    %v12887 = vunpack.c.h.b16 %v12147
    %v12888 = vunpack.c.l.b16 %v12148
    %v12889 = vunpack.c.h.b16 %v12148
    %v12890 = vunpack.c.l.b16 %v12149
    %v12891 = vunpack.c.h.b16 %v12149
    %v12892 = vunpack.c.l.b16 %v12150
    %v12893 = vunpack.c.h.b16 %v12150
    %v12894 = vunpack.c.l.b16 %v12151
    %v12895 = vunpack.c.h.b16 %v12151
    %v12896 = vunpack.c.l.b16 %v12152
    %v12897 = vunpack.c.h.b16 %v12152
    %v12898 = vunpack.c.l.b16 %v12153
    %v12899 = vunpack.c.h.b16 %v12153
    %v12900 = vunpack.c.l.b16 %v12154
    %v12901 = vunpack.c.h.b16 %v12154
    %v12902 = vunpack.c.l.b16 %v12155
    %v12903 = vunpack.c.h.b16 %v12155
    %v12904 = vunpack.c.l.b16 %v12156
    %v12905 = vunpack.c.h.b16 %v12156
    %v12906 = vunpack.c.l.b16 %v12157
    %v12907 = vunpack.c.h.b16 %v12157
    %v12908 = vunpack.c.l.b16 %v12158
    %v12909 = vunpack.c.h.b16 %v12158
    %v12910 = vunpack.c.l.b16 %v12159
    %v12911 = vunpack.c.h.b16 %v12159
    %v12912 = vunpack.c.l.b16 %v12160
    %v12913 = vunpack.c.h.b16 %v12160
    %v12914 = vunpack.c.l.b16 %v12161
    %v12915 = vunpack.c.h.b16 %v12161
    %v12916 = vunpack.c.l.b16 %v12162
    %v12917 = vunpack.c.h.b16 %v12162
    %v12918 = vunpack.c.l.b16 %v12163
    %v12919 = vunpack.c.h.b16 %v12163
    %v12920 = vunpack.c.l.b16 %v12164
    %v12921 = vunpack.c.h.b16 %v12164
    %v12922 = vunpack.c.l.b16 %v12165
    %v12923 = vunpack.c.h.b16 %v12165
    %v12924 = vunpack.c.l.b16 %v12166
    %v12925 = vunpack.c.h.b16 %v12166
    %v12926 = vunpack.c.l.b16 %v12167
    %v12927 = vunpack.c.h.b16 %v12167
    %v12928 = vunpack.c.l.b16 %v12168
    %v12929 = vunpack.c.h.b16 %v12168
    %v12930 = vunpack.c.l.b16 %v12169
    %v12931 = vunpack.c.h.b16 %v12169
    %v12932 = vunpack.c.l.b16 %v12170
    %v12933 = vunpack.c.h.b16 %v12170
    %v12934 = vunpack.c.l.b16 %v12171
    %v12935 = vunpack.c.h.b16 %v12171
    %v12936 = vunpack.c.l.b16 %v12172
    %v12937 = vunpack.c.h.b16 %v12172
    %v12938 = vunpack.c.l.b16 %v12173
    %v12939 = vunpack.c.h.b16 %v12173
    %v12940 = vunpack.c.l.b16 %v12174
    %v12941 = vunpack.c.h.b16 %v12174
    %v12942 = vunpack.c.l.b16 %v12175
    %v12943 = vunpack.c.h.b16 %v12175
    %v12944 = vunpack.c.l.b16 %v12176
    %v12945 = vunpack.c.h.b16 %v12176
    %v12946 = vunpack.c.l.b16 %v12177
    %v12947 = vunpack.c.h.b16 %v12177
    %v12948 = vunpack.c.l.b16 %v12178
    %v12949 = vunpack.c.h.b16 %v12178
    %v12950 = vunpack.c.l.b16 %v12179
    %v12951 = vunpack.c.h.b16 %v12179
    %v12952 = vunpack.c.l.b16 %v12180
    %v12953 = vunpack.c.h.b16 %v12180
    %v12954 = vunpack.c.l.b16 %v12181
    %v12955 = vunpack.c.h.b16 %v12181
    %v12956 = vunpack.c.l.b16 %v12182
    %v12957 = vunpack.c.h.b16 %v12182
    %v12958 = vunpack.c.l.b16 %v12183
    %v12959 = vunpack.c.h.b16 %v12183
    %v12960 = vunpack.c.l.b16 %v12184
    %v12961 = vunpack.c.h.b16 %v12184
    %v12962 = vunpack.c.l.b16 %v12185
    %v12963 = vunpack.c.h.b16 %v12185
    %v12964 = vpack.c.b16 %v12456, %v12452
    %v12965 = vpack.c.b16 %v12457, %v12453
    %v12966 = vpack.c.b16 %v12458, %v12454
    %v12967 = vpack.c.b16 %v12459, %v12455
    %v12968 = vpack.c.b16 %v12464, %v12460
    %v12969 = vpack.c.b16 %v12465, %v12461
    %v12970 = vpack.c.b16 %v12466, %v12462
    %v12971 = vpack.c.b16 %v12467, %v12463
    %v12972 = vpack.c.b16 %v12472, %v12468
    %v12973 = vpack.c.b16 %v12473, %v12469
    %v12974 = vpack.c.b16 %v12474, %v12470
    %v12975 = vpack.c.b16 %v12475, %v12471
    %v12976 = vpack.c.b16 %v12480, %v12476
    %v12977 = vpack.c.b16 %v12481, %v12477
    %v12978 = vpack.c.b16 %v12482, %v12478
    %v12979 = vpack.c.b16 %v12483, %v12479
    %v12980 = vpack.c.b16 %v12488, %v12484
    %v12981 = vpack.c.b16 %v12489, %v12485
    %v12982 = vpack.c.b16 %v12490, %v12486
    %v12983 = vpack.c.b16 %v12491, %v12487
    %v12984 = vpack.c.b16 %v12496, %v12492
    %v12985 = vpack.c.b16 %v12497, %v12493
    %v12986 = vpack.c.b16 %v12498, %v12494
    %v12987 = vpack.c.b16 %v12499, %v12495
    %v12988 = vpack.c.b16 %v12504, %v12500
    %v12989 = vpack.c.b16 %v12505, %v12501
    %v12990 = vpack.c.b16 %v12506, %v12502
    %v12991 = vpack.c.b16 %v12507, %v12503
    %v12992 = vpack.c.b16 %v12512, %v12508
    %v12993 = vpack.c.b16 %v12513, %v12509
    %v12994 = vpack.c.b16 %v12514, %v12510
    %v12995 = vpack.c.b16 %v12515, %v12511
    %v12996 = vpack.c.b16 %v12520, %v12516
    %v12997 = vpack.c.b16 %v12521, %v12517
    %v12998 = vpack.c.b16 %v12522, %v12518
    %v12999 = vpack.c.b16 %v12523, %v12519
    %v13000 = vpack.c.b16 %v12528, %v12524
    %v13001 = vpack.c.b16 %v12529, %v12525
    %v13002 = vpack.c.b16 %v12530, %v12526
    %v13003 = vpack.c.b16 %v12531, %v12527
    %v13004 = vpack.c.b16 %v12536, %v12532
    %v13005 = vpack.c.b16 %v12537, %v12533
    %v13006 = vpack.c.b16 %v12538, %v12534
    %v13007 = vpack.c.b16 %v12539, %v12535
    %v13008 = vpack.c.b16 %v12544, %v12540
    %v13009 = vpack.c.b16 %v12545, %v12541
    %v13010 = vpack.c.b16 %v12546, %v12542
    %v13011 = vpack.c.b16 %v12547, %v12543
    %v13012 = vpack.c.b16 %v12552, %v12548
    %v13013 = vpack.c.b16 %v12553, %v12549
    %v13014 = vpack.c.b16 %v12554, %v12550
    %v13015 = vpack.c.b16 %v12555, %v12551
    %v13016 = vpack.c.b16 %v12560, %v12556
    %v13017 = vpack.c.b16 %v12561, %v12557
    %v13018 = vpack.c.b16 %v12562, %v12558
    %v13019 = vpack.c.b16 %v12563, %v12559
    %v13020 = vpack.c.b16 %v12568, %v12564
    %v13021 = vpack.c.b16 %v12569, %v12565
    %v13022 = vpack.c.b16 %v12570, %v12566
    %v13023 = vpack.c.b16 %v12571, %v12567
    %v13024 = vpack.c.b16 %v12576, %v12572
    %v13025 = vpack.c.b16 %v12577, %v12573
    %v13026 = vpack.c.b16 %v12578, %v12574
    %v13027 = vpack.c.b16 %v12579, %v12575
    %v13028 = vpack.c.b16 %v12584, %v12580
    %v13029 = vpack.c.b16 %v12585, %v12581
    %v13030 = vpack.c.b16 %v12586, %v12582
    %v13031 = vpack.c.b16 %v12587, %v12583
    %v13032 = vpack.c.b16 %v12592, %v12588
    %v13033 = vpack.c.b16 %v12593, %v12589
    %v13034 = vpack.c.b16 %v12594, %v12590
    %v13035 = vpack.c.b16 %v12595, %v12591
    %v13036 = vpack.c.b16 %v12600, %v12596
    %v13037 = vpack.c.b16 %v12601, %v12597
    %v13038 = vpack.c.b16 %v12602, %v12598
    %v13039 = vpack.c.b16 %v12603, %v12599
    %v13040 = vpack.c.b16 %v12608, %v12604
    %v13041 = vpack.c.b16 %v12609, %v12605
    %v13042 = vpack.c.b16 %v12610, %v12606
    %v13043 = vpack.c.b16 %v12611, %v12607
    %v13044 = vpack.c.b16 %v12616, %v12612
    %v13045 = vpack.c.b16 %v12617, %v12613
    %v13046 = vpack.c.b16 %v12618, %v12614
    %v13047 = vpack.c.b16 %v12619, %v12615
    %v13048 = vpack.c.b16 %v12624, %v12620
    %v13049 = vpack.c.b16 %v12625, %v12621
    %v13050 = vpack.c.b16 %v12626, %v12622
    %v13051 = vpack.c.b16 %v12627, %v12623
    %v13052 = vpack.c.b16 %v12632, %v12628
    %v13053 = vpack.c.b16 %v12633, %v12629
    %v13054 = vpack.c.b16 %v12634, %v12630
    %v13055 = vpack.c.b16 %v12635, %v12631
    %v13056 = vpack.c.b16 %v12640, %v12636
    %v13057 = vpack.c.b16 %v12641, %v12637
    %v13058 = vpack.c.b16 %v12642, %v12638
    %v13059 = vpack.c.b16 %v12643, %v12639
    %v13060 = vpack.c.b16 %v12648, %v12644
    %v13061 = vpack.c.b16 %v12649, %v12645
    %v13062 = vpack.c.b16 %v12650, %v12646
    %v13063 = vpack.c.b16 %v12651, %v12647
    %v13064 = vpack.c.b16 %v12656, %v12652
    %v13065 = vpack.c.b16 %v12657, %v12653
    %v13066 = vpack.c.b16 %v12658, %v12654
    %v13067 = vpack.c.b16 %v12659, %v12655
    %v13068 = vpack.c.b16 %v12664, %v12660
    %v13069 = vpack.c.b16 %v12665, %v12661
    %v13070 = vpack.c.b16 %v12666, %v12662
    %v13071 = vpack.c.b16 %v12667, %v12663
    %v13072 = vpack.c.b16 %v12672, %v12668
    %v13073 = vpack.c.b16 %v12673, %v12669
    %v13074 = vpack.c.b16 %v12674, %v12670
    %v13075 = vpack.c.b16 %v12675, %v12671
    %v13076 = vpack.c.b16 %v12680, %v12676
    %v13077 = vpack.c.b16 %v12681, %v12677
    %v13078 = vpack.c.b16 %v12682, %v12678
    %v13079 = vpack.c.b16 %v12683, %v12679
    %v13080 = vpack.c.b16 %v12688, %v12684
    %v13081 = vpack.c.b16 %v12689, %v12685
    %v13082 = vpack.c.b16 %v12690, %v12686
    %v13083 = vpack.c.b16 %v12691, %v12687
    %v13084 = vpack.c.b16 %v12696, %v12692
    %v13085 = vpack.c.b16 %v12697, %v12693
    %v13086 = vpack.c.b16 %v12698, %v12694
    %v13087 = vpack.c.b16 %v12699, %v12695
    %v13088 = vpack.c.b16 %v12704, %v12700
    %v13089 = vpack.c.b16 %v12705, %v12701
    %v13090 = vpack.c.b16 %v12706, %v12702
    %v13091 = vpack.c.b16 %v12707, %v12703
    %v13092 = vpack.c.b16 %v12712, %v12708
    %v13093 = vpack.c.b16 %v12713, %v12709
    %v13094 = vpack.c.b16 %v12714, %v12710
    %v13095 = vpack.c.b16 %v12715, %v12711
    %v13096 = vpack.c.b16 %v12720, %v12716
    %v13097 = vpack.c.b16 %v12721, %v12717
    %v13098 = vpack.c.b16 %v12722, %v12718
    %v13099 = vpack.c.b16 %v12723, %v12719
    %v13100 = vpack.c.b16 %v12728, %v12724
    %v13101 = vpack.c.b16 %v12729, %v12725
    %v13102 = vpack.c.b16 %v12730, %v12726
    %v13103 = vpack.c.b16 %v12731, %v12727
    %v13104 = vpack.c.b16 %v12736, %v12732
    %v13105 = vpack.c.b16 %v12737, %v12733
    %v13106 = vpack.c.b16 %v12738, %v12734
    %v13107 = vpack.c.b16 %v12739, %v12735
    %v13108 = vpack.c.b16 %v12744, %v12740
    %v13109 = vpack.c.b16 %v12745, %v12741
    %v13110 = vpack.c.b16 %v12746, %v12742
    %v13111 = vpack.c.b16 %v12747, %v12743
    %v13112 = vpack.c.b16 %v12752, %v12748
    %v13113 = vpack.c.b16 %v12753, %v12749
    %v13114 = vpack.c.b16 %v12754, %v12750
    %v13115 = vpack.c.b16 %v12755, %v12751
    %v13116 = vpack.c.b16 %v12760, %v12756
    %v13117 = vpack.c.b16 %v12761, %v12757
    %v13118 = vpack.c.b16 %v12762, %v12758
    %v13119 = vpack.c.b16 %v12763, %v12759
    %v13120 = vpack.c.b16 %v12768, %v12764
    %v13121 = vpack.c.b16 %v12769, %v12765
    %v13122 = vpack.c.b16 %v12770, %v12766
    %v13123 = vpack.c.b16 %v12771, %v12767
    %v13124 = vpack.c.b16 %v12776, %v12772
    %v13125 = vpack.c.b16 %v12777, %v12773
    %v13126 = vpack.c.b16 %v12778, %v12774
    %v13127 = vpack.c.b16 %v12779, %v12775
    %v13128 = vpack.c.b16 %v12784, %v12780
    %v13129 = vpack.c.b16 %v12785, %v12781
    %v13130 = vpack.c.b16 %v12786, %v12782
    %v13131 = vpack.c.b16 %v12787, %v12783
    %v13132 = vpack.c.b16 %v12792, %v12788
    %v13133 = vpack.c.b16 %v12793, %v12789
    %v13134 = vpack.c.b16 %v12794, %v12790
    %v13135 = vpack.c.b16 %v12795, %v12791
    %v13136 = vpack.c.b16 %v12800, %v12796
    %v13137 = vpack.c.b16 %v12801, %v12797
    %v13138 = vpack.c.b16 %v12802, %v12798
    %v13139 = vpack.c.b16 %v12803, %v12799
    %v13140 = vpack.c.b16 %v12808, %v12804
    %v13141 = vpack.c.b16 %v12809, %v12805
    %v13142 = vpack.c.b16 %v12810, %v12806
    %v13143 = vpack.c.b16 %v12811, %v12807
    %v13144 = vpack.c.b16 %v12816, %v12812
    %v13145 = vpack.c.b16 %v12817, %v12813
    %v13146 = vpack.c.b16 %v12818, %v12814
    %v13147 = vpack.c.b16 %v12819, %v12815
    %v13148 = vpack.c.b16 %v12824, %v12820
    %v13149 = vpack.c.b16 %v12825, %v12821
    %v13150 = vpack.c.b16 %v12826, %v12822
    %v13151 = vpack.c.b16 %v12827, %v12823
    %v13152 = vpack.c.b16 %v12832, %v12828
    %v13153 = vpack.c.b16 %v12833, %v12829
    %v13154 = vpack.c.b16 %v12834, %v12830
    %v13155 = vpack.c.b16 %v12835, %v12831
    %v13156 = vpack.c.b16 %v12840, %v12836
    %v13157 = vpack.c.b16 %v12841, %v12837
    %v13158 = vpack.c.b16 %v12842, %v12838
    %v13159 = vpack.c.b16 %v12843, %v12839
    %v13160 = vpack.c.b16 %v12848, %v12844
    %v13161 = vpack.c.b16 %v12849, %v12845
    %v13162 = vpack.c.b16 %v12850, %v12846
    %v13163 = vpack.c.b16 %v12851, %v12847
    %v13164 = vpack.c.b16 %v12856, %v12852
    %v13165 = vpack.c.b16 %v12857, %v12853
    %v13166 = vpack.c.b16 %v12858, %v12854
    %v13167 = vpack.c.b16 %v12859, %v12855
    %v13168 = vpack.c.b16 %v12864, %v12860
    %v13169 = vpack.c.b16 %v12865, %v12861
    %v13170 = vpack.c.b16 %v12866, %v12862
    %v13171 = vpack.c.b16 %v12867, %v12863
    %v13172 = vpack.c.b16 %v12872, %v12868
    %v13173 = vpack.c.b16 %v12873, %v12869
    %v13174 = vpack.c.b16 %v12874, %v12870
    %v13175 = vpack.c.b16 %v12875, %v12871
    %v13176 = vpack.c.b16 %v12880, %v12876
    %v13177 = vpack.c.b16 %v12881, %v12877
    %v13178 = vpack.c.b16 %v12882, %v12878
    %v13179 = vpack.c.b16 %v12883, %v12879
    %v13180 = vpack.c.b16 %v12888, %v12884
    %v13181 = vpack.c.b16 %v12889, %v12885
    %v13182 = vpack.c.b16 %v12890, %v12886
    %v13183 = vpack.c.b16 %v12891, %v12887
    %v13184 = vpack.c.b16 %v12896, %v12892
    %v13185 = vpack.c.b16 %v12897, %v12893
    %v13186 = vpack.c.b16 %v12898, %v12894
    %v13187 = vpack.c.b16 %v12899, %v12895
    %v13188 = vpack.c.b16 %v12904, %v12900
    %v13189 = vpack.c.b16 %v12905, %v12901
    %v13190 = vpack.c.b16 %v12906, %v12902
    %v13191 = vpack.c.b16 %v12907, %v12903
    %v13192 = vpack.c.b16 %v12912, %v12908
    %v13193 = vpack.c.b16 %v12913, %v12909
    %v13194 = vpack.c.b16 %v12914, %v12910
    %v13195 = vpack.c.b16 %v12915, %v12911
    %v13196 = vpack.c.b16 %v12920, %v12916
    %v13197 = vpack.c.b16 %v12921, %v12917
    %v13198 = vpack.c.b16 %v12922, %v12918
    %v13199 = vpack.c.b16 %v12923, %v12919
    %v13200 = vpack.c.b16 %v12928, %v12924
    %v13201 = vpack.c.b16 %v12929, %v12925
    %v13202 = vpack.c.b16 %v12930, %v12926
    %v13203 = vpack.c.b16 %v12931, %v12927
    %v13204 = vpack.c.b16 %v12936, %v12932
    %v13205 = vpack.c.b16 %v12937, %v12933
    %v13206 = vpack.c.b16 %v12938, %v12934
    %v13207 = vpack.c.b16 %v12939, %v12935
    %v13208 = vpack.c.b16 %v12944, %v12940
    %v13209 = vpack.c.b16 %v12945, %v12941
    %v13210 = vpack.c.b16 %v12946, %v12942
    %v13211 = vpack.c.b16 %v12947, %v12943
    %v13212 = vpack.c.b16 %v12952, %v12948
    %v13213 = vpack.c.b16 %v12953, %v12949
    %v13214 = vpack.c.b16 %v12954, %v12950
    %v13215 = vpack.c.b16 %v12955, %v12951
    %v13216 = vpack.c.b16 %v12960, %v12956
    %v13217 = vpack.c.b16 %v12961, %v12957
    %v13218 = vpack.c.b16 %v12962, %v12958
    %v13219 = vpack.c.b16 %v12963, %v12959
    %13476 = vmatpush.bf16.msra.mxu0 %v12992
    %13477 = vmatpush.bf16.msra.mxu0 %v12988
    %13478 = vmatpush.bf16.msra.mxu0 %v12984
    %13479 = vmatpush.bf16.msra.mxu0 %v12980
    %13480 = vmatpush.bf16.msra.mxu0 %v12976
    %13481 = vmatpush.bf16.msra.mxu0 %v12972
    %13482 = vmatpush.bf16.msra.mxu0 %v12968
    %13483 = vmatpush.bf16.msra.mxu0 %v12964
    %13484 = vmatmul.bf16.gmra.mxu0 %v11922
    %v13485 = vpop.f32.mrf.mxu0
    %v13486 = vadd.f32 %v12188, %v13485
    %v13487 = vpop.f32.mrf.mxu0
    %13488 = vdwg.mxu0
    %13489 = vmatpush.bf16.msra.mxu0 %v13024
    %13490 = vmatpush.bf16.msra.mxu0 %v13020
    %13491 = vmatpush.bf16.msra.mxu0 %v13016
    %13492 = vmatpush.bf16.msra.mxu0 %v13012
    %13493 = vmatpush.bf16.msra.mxu0 %v13008
    %13494 = vmatpush.bf16.msra.mxu0 %v13004
    %13495 = vmatpush.bf16.msra.mxu0 %v13000
    %13496 = vmatpush.bf16.msra.mxu0 %v12996
    %13497 = vmatmul.bf16.gmra.mxu0 %v11923
    %v13498 = vpop.f32.mrf.mxu0
    %v13499 = vadd.f32 %v13486, %v13498
    %v13500 = vpop.f32.mrf.mxu0
    %13501 = vdwg.mxu0
    %13502 = vmatpush.bf16.msra.mxu0 %v13056
    %13503 = vmatpush.bf16.msra.mxu0 %v13052
    %13504 = vmatpush.bf16.msra.mxu0 %v13048
    %13505 = vmatpush.bf16.msra.mxu0 %v13044
    %13506 = vmatpush.bf16.msra.mxu0 %v13040
    %13507 = vmatpush.bf16.msra.mxu0 %v13036
    %13508 = vmatpush.bf16.msra.mxu0 %v13032
    %13509 = vmatpush.bf16.msra.mxu0 %v13028
    %13510 = vmatmul.bf16.gmra.mxu0 %v11924
    %v13511 = vpop.f32.mrf.mxu0
    %v13512 = vadd.f32 %v13499, %v13511
    %v13513 = vpop.f32.mrf.mxu0
    %13514 = vdwg.mxu0
    %13515 = vmatpush.bf16.msra.mxu0 %v13088
    %13516 = vmatpush.bf16.msra.mxu0 %v13084
    %13517 = vmatpush.bf16.msra.mxu0 %v13080
    %13518 = vmatpush.bf16.msra.mxu0 %v13076
    %13519 = vmatpush.bf16.msra.mxu0 %v13072
    %13520 = vmatpush.bf16.msra.mxu0 %v13068
    %13521 = vmatpush.bf16.msra.mxu0 %v13064
    %13522 = vmatpush.bf16.msra.mxu0 %v13060
    %13523 = vmatmul.bf16.gmra.mxu0 %v11925
    %v13524 = vpop.f32.mrf.mxu0
    %v13525 = vadd.f32 %v13512, %v13524
    %v13526 = vpop.f32.mrf.mxu0
    %13527 = vdwg.mxu0
    %13528 = vmatpush.bf16.msra.mxu0 %v13120
    %13529 = vmatpush.bf16.msra.mxu0 %v13116
    %13530 = vmatpush.bf16.msra.mxu0 %v13112
    %13531 = vmatpush.bf16.msra.mxu0 %v13108
    %13532 = vmatpush.bf16.msra.mxu0 %v13104
    %13533 = vmatpush.bf16.msra.mxu0 %v13100
    %13534 = vmatpush.bf16.msra.mxu0 %v13096
    %13535 = vmatpush.bf16.msra.mxu0 %v13092
    %13536 = vmatmul.bf16.gmra.mxu0 %v11926
    %v13537 = vpop.f32.mrf.mxu0
    %v13538 = vadd.f32 %v13525, %v13537
    %v13539 = vpop.f32.mrf.mxu0
    %13540 = vdwg.mxu0
    %13541 = vmatpush.bf16.msra.mxu0 %v13152
    %13542 = vmatpush.bf16.msra.mxu0 %v13148
    %13543 = vmatpush.bf16.msra.mxu0 %v13144
    %13544 = vmatpush.bf16.msra.mxu0 %v13140
    %13545 = vmatpush.bf16.msra.mxu0 %v13136
    %13546 = vmatpush.bf16.msra.mxu0 %v13132
    %13547 = vmatpush.bf16.msra.mxu0 %v13128
    %13548 = vmatpush.bf16.msra.mxu0 %v13124
    %13549 = vmatmul.bf16.gmra.mxu0 %v11927
    %v13550 = vpop.f32.mrf.mxu0
    %v13551 = vadd.f32 %v13538, %v13550
    %v13552 = vpop.f32.mrf.mxu0
    %13553 = vdwg.mxu0
    %13554 = vmatpush.bf16.msra.mxu0 %v13184
    %13555 = vmatpush.bf16.msra.mxu0 %v13180
    %13556 = vmatpush.bf16.msra.mxu0 %v13176
    %13557 = vmatpush.bf16.msra.mxu0 %v13172
    %13558 = vmatpush.bf16.msra.mxu0 %v13168
    %13559 = vmatpush.bf16.msra.mxu0 %v13164
    %13560 = vmatpush.bf16.msra.mxu0 %v13160
    %13561 = vmatpush.bf16.msra.mxu0 %v13156
    %13562 = vmatmul.bf16.gmra.mxu0 %v11928
    %v13563 = vpop.f32.mrf.mxu0
    %v13564 = vadd.f32 %v13551, %v13563
    %v13565 = vpop.f32.mrf.mxu0
    %13566 = vdwg.mxu0
    %13567 = vmatpush.bf16.msra.mxu0 %v13216
    %13568 = vmatpush.bf16.msra.mxu0 %v13212
    %13569 = vmatpush.bf16.msra.mxu0 %v13208
    %13570 = vmatpush.bf16.msra.mxu0 %v13204
    %13571 = vmatpush.bf16.msra.mxu0 %v13200
    %13572 = vmatpush.bf16.msra.mxu0 %v13196
    %13573 = vmatpush.bf16.msra.mxu0 %v13192
    %13574 = vmatpush.bf16.msra.mxu0 %v13188
    %13575 = vmatmul.bf16.gmra.mxu0 %v11929
    %v13576 = vpop.f32.mrf.mxu0
    %v13577 = vadd.f32 %v13564, %v13576
    %v13578 = vpop.f32.mrf.mxu0
    %13579 = vdwg.mxu0
    %13580 = vmatpush.bf16.msra.mxu0 %v12993
    %13581 = vmatpush.bf16.msra.mxu0 %v12989
    %13582 = vmatpush.bf16.msra.mxu0 %v12985
    %13583 = vmatpush.bf16.msra.mxu0 %v12981
    %13584 = vmatpush.bf16.msra.mxu0 %v12977
    %13585 = vmatpush.bf16.msra.mxu0 %v12973
    %13586 = vmatpush.bf16.msra.mxu0 %v12969
    %13587 = vmatpush.bf16.msra.mxu0 %v12965
    %13588 = vmatmul.bf16.gmra.mxu0 %v11922
    %v13589 = vpop.f32.mrf.mxu0
    %v13590 = vadd.f32 %v12189, %v13589
    %v13591 = vpop.f32.mrf.mxu0
    %13592 = vdwg.mxu0
    %13593 = vmatpush.bf16.msra.mxu0 %v13025
    %13594 = vmatpush.bf16.msra.mxu0 %v13021
    %13595 = vmatpush.bf16.msra.mxu0 %v13017
    %13596 = vmatpush.bf16.msra.mxu0 %v13013
    %13597 = vmatpush.bf16.msra.mxu0 %v13009
    %13598 = vmatpush.bf16.msra.mxu0 %v13005
    %13599 = vmatpush.bf16.msra.mxu0 %v13001
    %13600 = vmatpush.bf16.msra.mxu0 %v12997
    %13601 = vmatmul.bf16.gmra.mxu0 %v11923
    %v13602 = vpop.f32.mrf.mxu0
    %v13603 = vadd.f32 %v13590, %v13602
    %v13604 = vpop.f32.mrf.mxu0
    %13605 = vdwg.mxu0
    %13606 = vmatpush.bf16.msra.mxu0 %v13057
    %13607 = vmatpush.bf16.msra.mxu0 %v13053
    %13608 = vmatpush.bf16.msra.mxu0 %v13049
    %13609 = vmatpush.bf16.msra.mxu0 %v13045
    %13610 = vmatpush.bf16.msra.mxu0 %v13041
    %13611 = vmatpush.bf16.msra.mxu0 %v13037
    %13612 = vmatpush.bf16.msra.mxu0 %v13033
    %13613 = vmatpush.bf16.msra.mxu0 %v13029
    %13614 = vmatmul.bf16.gmra.mxu0 %v11924
    %v13615 = vpop.f32.mrf.mxu0
    %v13616 = vadd.f32 %v13603, %v13615
    %v13617 = vpop.f32.mrf.mxu0
    %13618 = vdwg.mxu0
    %13619 = vmatpush.bf16.msra.mxu0 %v13089
    %13620 = vmatpush.bf16.msra.mxu0 %v13085
    %13621 = vmatpush.bf16.msra.mxu0 %v13081
    %13622 = vmatpush.bf16.msra.mxu0 %v13077
    %13623 = vmatpush.bf16.msra.mxu0 %v13073
    %13624 = vmatpush.bf16.msra.mxu0 %v13069
    %13625 = vmatpush.bf16.msra.mxu0 %v13065
    %13626 = vmatpush.bf16.msra.mxu0 %v13061
    %13627 = vmatmul.bf16.gmra.mxu0 %v11925
    %v13628 = vpop.f32.mrf.mxu0
    %v13629 = vadd.f32 %v13616, %v13628
    %v13630 = vpop.f32.mrf.mxu0
    %13631 = vdwg.mxu0
    %13632 = vmatpush.bf16.msra.mxu0 %v13121
    %13633 = vmatpush.bf16.msra.mxu0 %v13117
    %13634 = vmatpush.bf16.msra.mxu0 %v13113
    %13635 = vmatpush.bf16.msra.mxu0 %v13109
    %13636 = vmatpush.bf16.msra.mxu0 %v13105
    %13637 = vmatpush.bf16.msra.mxu0 %v13101
    %13638 = vmatpush.bf16.msra.mxu0 %v13097
    %13639 = vmatpush.bf16.msra.mxu0 %v13093
    %13640 = vmatmul.bf16.gmra.mxu0 %v11926
    %v13641 = vpop.f32.mrf.mxu0
    %v13642 = vadd.f32 %v13629, %v13641
    %v13643 = vpop.f32.mrf.mxu0
    %13644 = vdwg.mxu0
    %13645 = vmatpush.bf16.msra.mxu0 %v13153
    %13646 = vmatpush.bf16.msra.mxu0 %v13149
    %13647 = vmatpush.bf16.msra.mxu0 %v13145
    %13648 = vmatpush.bf16.msra.mxu0 %v13141
    %13649 = vmatpush.bf16.msra.mxu0 %v13137
    %13650 = vmatpush.bf16.msra.mxu0 %v13133
    %13651 = vmatpush.bf16.msra.mxu0 %v13129
    %13652 = vmatpush.bf16.msra.mxu0 %v13125
    %13653 = vmatmul.bf16.gmra.mxu0 %v11927
    %v13654 = vpop.f32.mrf.mxu0
    %v13655 = vadd.f32 %v13642, %v13654
    %v13656 = vpop.f32.mrf.mxu0
    %13657 = vdwg.mxu0
    %13658 = vmatpush.bf16.msra.mxu0 %v13185
    %13659 = vmatpush.bf16.msra.mxu0 %v13181
    %13660 = vmatpush.bf16.msra.mxu0 %v13177
    %13661 = vmatpush.bf16.msra.mxu0 %v13173
    %13662 = vmatpush.bf16.msra.mxu0 %v13169
    %13663 = vmatpush.bf16.msra.mxu0 %v13165
    %13664 = vmatpush.bf16.msra.mxu0 %v13161
    %13665 = vmatpush.bf16.msra.mxu0 %v13157
    %13666 = vmatmul.bf16.gmra.mxu0 %v11928
    %v13667 = vpop.f32.mrf.mxu0
    %v13668 = vadd.f32 %v13655, %v13667
    %v13669 = vpop.f32.mrf.mxu0
    %13670 = vdwg.mxu0
    %13671 = vmatpush.bf16.msra.mxu0 %v13217
    %13672 = vmatpush.bf16.msra.mxu0 %v13213
    %13673 = vmatpush.bf16.msra.mxu0 %v13209
    %13674 = vmatpush.bf16.msra.mxu0 %v13205
    %13675 = vmatpush.bf16.msra.mxu0 %v13201
    %13676 = vmatpush.bf16.msra.mxu0 %v13197
    %13677 = vmatpush.bf16.msra.mxu0 %v13193
    %13678 = vmatpush.bf16.msra.mxu0 %v13189
    %13679 = vmatmul.bf16.gmra.mxu0 %v11929
    %v13680 = vpop.f32.mrf.mxu0
    %v13681 = vadd.f32 %v13668, %v13680
    %v13682 = vpop.f32.mrf.mxu0
    %13683 = vdwg.mxu0
    %13684 = vmatpush.bf16.msra.mxu0 %v12994
    %13685 = vmatpush.bf16.msra.mxu0 %v12990
    %13686 = vmatpush.bf16.msra.mxu0 %v12986
    %13687 = vmatpush.bf16.msra.mxu0 %v12982
    %13688 = vmatpush.bf16.msra.mxu0 %v12978
    %13689 = vmatpush.bf16.msra.mxu0 %v12974
    %13690 = vmatpush.bf16.msra.mxu0 %v12970
    %13691 = vmatpush.bf16.msra.mxu0 %v12966
    %13692 = vmatmul.bf16.gmra.mxu0 %v11922
    %v13693 = vpop.f32.mrf.mxu0
    %v13694 = vadd.f32 %v12190, %v13693
    %v13695 = vpop.f32.mrf.mxu0
    %13696 = vdwg.mxu0
    %13697 = vmatpush.bf16.msra.mxu0 %v13026
    %13698 = vmatpush.bf16.msra.mxu0 %v13022
    %13699 = vmatpush.bf16.msra.mxu0 %v13018
    %13700 = vmatpush.bf16.msra.mxu0 %v13014
    %13701 = vmatpush.bf16.msra.mxu0 %v13010
    %13702 = vmatpush.bf16.msra.mxu0 %v13006
    %13703 = vmatpush.bf16.msra.mxu0 %v13002
    %13704 = vmatpush.bf16.msra.mxu0 %v12998
    %13705 = vmatmul.bf16.gmra.mxu0 %v11923
    %v13706 = vpop.f32.mrf.mxu0
    %v13707 = vadd.f32 %v13694, %v13706
    %v13708 = vpop.f32.mrf.mxu0
    %13709 = vdwg.mxu0
    %13710 = vmatpush.bf16.msra.mxu0 %v13058
    %13711 = vmatpush.bf16.msra.mxu0 %v13054
    %13712 = vmatpush.bf16.msra.mxu0 %v13050
    %13713 = vmatpush.bf16.msra.mxu0 %v13046
    %13714 = vmatpush.bf16.msra.mxu0 %v13042
    %13715 = vmatpush.bf16.msra.mxu0 %v13038
    %13716 = vmatpush.bf16.msra.mxu0 %v13034
    %13717 = vmatpush.bf16.msra.mxu0 %v13030
    %13718 = vmatmul.bf16.gmra.mxu0 %v11924
    %v13719 = vpop.f32.mrf.mxu0
    %v13720 = vadd.f32 %v13707, %v13719
    %v13721 = vpop.f32.mrf.mxu0
    %13722 = vdwg.mxu0
    %13723 = vmatpush.bf16.msra.mxu0 %v13090
    %13724 = vmatpush.bf16.msra.mxu0 %v13086
    %13725 = vmatpush.bf16.msra.mxu0 %v13082
    %13726 = vmatpush.bf16.msra.mxu0 %v13078
    %13727 = vmatpush.bf16.msra.mxu0 %v13074
    %13728 = vmatpush.bf16.msra.mxu0 %v13070
    %13729 = vmatpush.bf16.msra.mxu0 %v13066
    %13730 = vmatpush.bf16.msra.mxu0 %v13062
    %13731 = vmatmul.bf16.gmra.mxu0 %v11925
    %v13732 = vpop.f32.mrf.mxu0
    %v13733 = vadd.f32 %v13720, %v13732
    %v13734 = vpop.f32.mrf.mxu0
    %13735 = vdwg.mxu0
    %13736 = vmatpush.bf16.msra.mxu0 %v13122
    %13737 = vmatpush.bf16.msra.mxu0 %v13118
    %13738 = vmatpush.bf16.msra.mxu0 %v13114
    %13739 = vmatpush.bf16.msra.mxu0 %v13110
    %13740 = vmatpush.bf16.msra.mxu0 %v13106
    %13741 = vmatpush.bf16.msra.mxu0 %v13102
    %13742 = vmatpush.bf16.msra.mxu0 %v13098
    %13743 = vmatpush.bf16.msra.mxu0 %v13094
    %13744 = vmatmul.bf16.gmra.mxu0 %v11926
    %v13745 = vpop.f32.mrf.mxu0
    %v13746 = vadd.f32 %v13733, %v13745
    %v13747 = vpop.f32.mrf.mxu0
    %13748 = vdwg.mxu0
    %13749 = vmatpush.bf16.msra.mxu0 %v13154
    %13750 = vmatpush.bf16.msra.mxu0 %v13150
    %13751 = vmatpush.bf16.msra.mxu0 %v13146
    %13752 = vmatpush.bf16.msra.mxu0 %v13142
    %13753 = vmatpush.bf16.msra.mxu0 %v13138
    %13754 = vmatpush.bf16.msra.mxu0 %v13134
    %13755 = vmatpush.bf16.msra.mxu0 %v13130
    %13756 = vmatpush.bf16.msra.mxu0 %v13126
    %13757 = vmatmul.bf16.gmra.mxu0 %v11927
    %v13758 = vpop.f32.mrf.mxu0
    %v13759 = vadd.f32 %v13746, %v13758
    %v13760 = vpop.f32.mrf.mxu0
    %13761 = vdwg.mxu0
    %13762 = vmatpush.bf16.msra.mxu0 %v13186
    %13763 = vmatpush.bf16.msra.mxu0 %v13182
    %13764 = vmatpush.bf16.msra.mxu0 %v13178
    %13765 = vmatpush.bf16.msra.mxu0 %v13174
    %13766 = vmatpush.bf16.msra.mxu0 %v13170
    %13767 = vmatpush.bf16.msra.mxu0 %v13166
    %13768 = vmatpush.bf16.msra.mxu0 %v13162
    %13769 = vmatpush.bf16.msra.mxu0 %v13158
    %13770 = vmatmul.bf16.gmra.mxu0 %v11928
    %v13771 = vpop.f32.mrf.mxu0
    %v13772 = vadd.f32 %v13759, %v13771
    %v13773 = vpop.f32.mrf.mxu0
    %13774 = vdwg.mxu0
    %13775 = vmatpush.bf16.msra.mxu0 %v13218
    %13776 = vmatpush.bf16.msra.mxu0 %v13214
    %13777 = vmatpush.bf16.msra.mxu0 %v13210
    %13778 = vmatpush.bf16.msra.mxu0 %v13206
    %13779 = vmatpush.bf16.msra.mxu0 %v13202
    %13780 = vmatpush.bf16.msra.mxu0 %v13198
    %13781 = vmatpush.bf16.msra.mxu0 %v13194
    %13782 = vmatpush.bf16.msra.mxu0 %v13190
    %13783 = vmatmul.bf16.gmra.mxu0 %v11929
    %v13784 = vpop.f32.mrf.mxu0
    %v13785 = vadd.f32 %v13772, %v13784
    %v13786 = vpop.f32.mrf.mxu0
    %13787 = vdwg.mxu0
    %13788 = vmatpush.bf16.msra.mxu0 %v12995
    %13789 = vmatpush.bf16.msra.mxu0 %v12991
    %13790 = vmatpush.bf16.msra.mxu0 %v12987
    %13791 = vmatpush.bf16.msra.mxu0 %v12983
    %13792 = vmatpush.bf16.msra.mxu0 %v12979
    %13793 = vmatpush.bf16.msra.mxu0 %v12975
    %13794 = vmatpush.bf16.msra.mxu0 %v12971
    %13795 = vmatpush.bf16.msra.mxu0 %v12967
    %13796 = vmatmul.bf16.gmra.mxu0 %v11922
    %v13797 = vpop.f32.mrf.mxu0
    %v13798 = vadd.f32 %v12191, %v13797
    %v13799 = vpop.f32.mrf.mxu0
    %13800 = vdwg.mxu0
    %13801 = vmatpush.bf16.msra.mxu0 %v13027
    %13802 = vmatpush.bf16.msra.mxu0 %v13023
    %13803 = vmatpush.bf16.msra.mxu0 %v13019
    %13804 = vmatpush.bf16.msra.mxu0 %v13015
    %13805 = vmatpush.bf16.msra.mxu0 %v13011
    %13806 = vmatpush.bf16.msra.mxu0 %v13007
    %13807 = vmatpush.bf16.msra.mxu0 %v13003
    %13808 = vmatpush.bf16.msra.mxu0 %v12999
    %13809 = vmatmul.bf16.gmra.mxu0 %v11923
    %v13810 = vpop.f32.mrf.mxu0
    %v13811 = vadd.f32 %v13798, %v13810
    %v13812 = vpop.f32.mrf.mxu0
    %13813 = vdwg.mxu0
    %13814 = vmatpush.bf16.msra.mxu0 %v13059
    %13815 = vmatpush.bf16.msra.mxu0 %v13055
    %13816 = vmatpush.bf16.msra.mxu0 %v13051
    %13817 = vmatpush.bf16.msra.mxu0 %v13047
    %13818 = vmatpush.bf16.msra.mxu0 %v13043
    %13819 = vmatpush.bf16.msra.mxu0 %v13039
    %13820 = vmatpush.bf16.msra.mxu0 %v13035
    %13821 = vmatpush.bf16.msra.mxu0 %v13031
    %13822 = vmatmul.bf16.gmra.mxu0 %v11924
    %v13823 = vpop.f32.mrf.mxu0
    %v13824 = vadd.f32 %v13811, %v13823
    %v13825 = vpop.f32.mrf.mxu0
    %13826 = vdwg.mxu0
    %13827 = vmatpush.bf16.msra.mxu0 %v13091
    %13828 = vmatpush.bf16.msra.mxu0 %v13087
    %13829 = vmatpush.bf16.msra.mxu0 %v13083
    %13830 = vmatpush.bf16.msra.mxu0 %v13079
    %13831 = vmatpush.bf16.msra.mxu0 %v13075
    %13832 = vmatpush.bf16.msra.mxu0 %v13071
    %13833 = vmatpush.bf16.msra.mxu0 %v13067
    %13834 = vmatpush.bf16.msra.mxu0 %v13063
    %13835 = vmatmul.bf16.gmra.mxu0 %v11925
    %v13836 = vpop.f32.mrf.mxu0
    %v13837 = vadd.f32 %v13824, %v13836
    %v13838 = vpop.f32.mrf.mxu0
    %13839 = vdwg.mxu0
    %13840 = vmatpush.bf16.msra.mxu0 %v13123
    %13841 = vmatpush.bf16.msra.mxu0 %v13119
    %13842 = vmatpush.bf16.msra.mxu0 %v13115
    %13843 = vmatpush.bf16.msra.mxu0 %v13111
    %13844 = vmatpush.bf16.msra.mxu0 %v13107
    %13845 = vmatpush.bf16.msra.mxu0 %v13103
    %13846 = vmatpush.bf16.msra.mxu0 %v13099
    %13847 = vmatpush.bf16.msra.mxu0 %v13095
    %13848 = vmatmul.bf16.gmra.mxu0 %v11926
    %v13849 = vpop.f32.mrf.mxu0
    %v13850 = vadd.f32 %v13837, %v13849
    %v13851 = vpop.f32.mrf.mxu0
    %13852 = vdwg.mxu0
    %13853 = vmatpush.bf16.msra.mxu0 %v13155
    %13854 = vmatpush.bf16.msra.mxu0 %v13151
    %13855 = vmatpush.bf16.msra.mxu0 %v13147
    %13856 = vmatpush.bf16.msra.mxu0 %v13143
    %13857 = vmatpush.bf16.msra.mxu0 %v13139
    %13858 = vmatpush.bf16.msra.mxu0 %v13135
    %13859 = vmatpush.bf16.msra.mxu0 %v13131
    %13860 = vmatpush.bf16.msra.mxu0 %v13127
    %13861 = vmatmul.bf16.gmra.mxu0 %v11927
    %v13862 = vpop.f32.mrf.mxu0
    %v13863 = vadd.f32 %v13850, %v13862
    %v13864 = vpop.f32.mrf.mxu0
    %13865 = vdwg.mxu0
    %13866 = vmatpush.bf16.msra.mxu0 %v13187
    %13867 = vmatpush.bf16.msra.mxu0 %v13183
    %13868 = vmatpush.bf16.msra.mxu0 %v13179
    %13869 = vmatpush.bf16.msra.mxu0 %v13175
    %13870 = vmatpush.bf16.msra.mxu0 %v13171
    %13871 = vmatpush.bf16.msra.mxu0 %v13167
    %13872 = vmatpush.bf16.msra.mxu0 %v13163
    %13873 = vmatpush.bf16.msra.mxu0 %v13159
    %13874 = vmatmul.bf16.gmra.mxu0 %v11928
    %v13875 = vpop.f32.mrf.mxu0
    %v13876 = vadd.f32 %v13863, %v13875
    %v13877 = vpop.f32.mrf.mxu0
    %13878 = vdwg.mxu0
    %13879 = vmatpush.bf16.msra.mxu0 %v13219
    %13880 = vmatpush.bf16.msra.mxu0 %v13215
    %13881 = vmatpush.bf16.msra.mxu0 %v13211
    %13882 = vmatpush.bf16.msra.mxu0 %v13207
    %13883 = vmatpush.bf16.msra.mxu0 %v13203
    %13884 = vmatpush.bf16.msra.mxu0 %v13199
    %13885 = vmatpush.bf16.msra.mxu0 %v13195
    %13886 = vmatpush.bf16.msra.mxu0 %v13191
    %13887 = vmatmul.bf16.gmra.mxu0 %v11929
    %v13888 = vpop.f32.mrf.mxu0
    %v13889 = vadd.f32 %v13876, %v13888
    %v13890 = vpop.f32.mrf.mxu0
    %13891 = vdwg.mxu0
    %v13892 = vmax.f32 %v13577, 0.0
    %v13893 = vmax.f32 %v13681, 0.0
    %v13894 = vmax.f32 %v13785, 0.0
    %v13895 = vmax.f32 %v13889, 0.0
    %v13896 = vpack.c.bf16 %v13892, %v13892
    %v13897 = vpack.c.bf16 %v13893, %v13893
    %v13898 = vpack.c.bf16 %v13894, %v13894
    %v13899 = vpack.c.bf16 %v13895, %v13895
    %v13900 = vld [vmem:[#allocation6] sm:$0xff]
    %v13901 = vld [vmem:[#allocation6 + $0x8] sm:$0xff]
    %v13902 = vld [vmem:[#allocation6 + $0x10] sm:$0xff]
    %v13903 = vld [vmem:[#allocation6 + $0x18] sm:$0xff]
    %v13904 = vld [vmem:[#allocation6 + $0x20] sm:$0xff]
    %v13905 = vld [vmem:[#allocation6 + $0x28] sm:$0xff]
    %v13906 = vld [vmem:[#allocation6 + $0x30] sm:$0xff]
    %v13907 = vld [vmem:[#allocation6 + $0x38] sm:$0xff]
    %v13908 = vld [vmem:[#allocation6 + $0x40] sm:$0xff]
    %v13909 = vld [vmem:[#allocation6 + $0x48] sm:$0xff]
    %v13910 = vld [vmem:[#allocation6 + $0x50] sm:$0xff]
    %v13911 = vld [vmem:[#allocation6 + $0x58] sm:$0xff]
    %v13912 = vld [vmem:[#allocation6 + $0x60] sm:$0xff]
    %v13913 = vld [vmem:[#allocation6 + $0x68] sm:$0xff]
    %v13914 = vld [vmem:[#allocation6 + $0x70] sm:$0xff]
    %v13915 = vld [vmem:[#allocation6 + $0x78] sm:$0xff]
    %v13916 = vld [vmem:[#allocation6 + $0x80] sm:$0xff]
    %v13917 = vld [vmem:[#allocation6 + $0x88] sm:$0xff]
    %v13918 = vld [vmem:[#allocation6 + $0x90] sm:$0xff]
    %v13919 = vld [vmem:[#allocation6 + $0x98] sm:$0xff]
    %v13920 = vld [vmem:[#allocation6 + $0xa0] sm:$0xff]
    %v13921 = vld [vmem:[#allocation6 + $0xa8] sm:$0xff]
    %v13922 = vld [vmem:[#allocation6 + $0xb0] sm:$0xff]
    %v13923 = vld [vmem:[#allocation6 + $0xb8] sm:$0xff]
    %v13924 = vld [vmem:[#allocation6 + $0xc0] sm:$0xff]
    %v13925 = vld [vmem:[#allocation6 + $0xc8] sm:$0xff]
    %v13926 = vld [vmem:[#allocation6 + $0xd0] sm:$0xff]
    %v13927 = vld [vmem:[#allocation6 + $0xd8] sm:$0xff]
    %v13928 = vld [vmem:[#allocation6 + $0xe0] sm:$0xff]
    %v13929 = vld [vmem:[#allocation6 + $0xe8] sm:$0xff]
    %v13930 = vld [vmem:[#allocation6 + $0xf0] sm:$0xff]
    %v13931 = vld [vmem:[#allocation6 + $0xf8] sm:$0xff]
    %v13932 = vld [vmem:[#allocation6 + $0x100] sm:$0xff]
    %v13933 = vld [vmem:[#allocation6 + $0x108] sm:$0xff]
    %v13934 = vld [vmem:[#allocation6 + $0x110] sm:$0xff]
    %v13935 = vld [vmem:[#allocation6 + $0x118] sm:$0xff]
    %v13936 = vld [vmem:[#allocation6 + $0x120] sm:$0xff]
    %v13937 = vld [vmem:[#allocation6 + $0x128] sm:$0xff]
    %v13938 = vld [vmem:[#allocation6 + $0x130] sm:$0xff]
    %v13939 = vld [vmem:[#allocation6 + $0x138] sm:$0xff]
    %v13940 = vld [vmem:[#allocation6 + $0x140] sm:$0xff]
    %v13941 = vld [vmem:[#allocation6 + $0x148] sm:$0xff]
    %v13942 = vld [vmem:[#allocation6 + $0x150] sm:$0xff]
    %v13943 = vld [vmem:[#allocation6 + $0x158] sm:$0xff]
    %v13944 = vld [vmem:[#allocation6 + $0x160] sm:$0xff]
    %v13945 = vld [vmem:[#allocation6 + $0x168] sm:$0xff]
    %v13946 = vld [vmem:[#allocation6 + $0x170] sm:$0xff]
    %v13947 = vld [vmem:[#allocation6 + $0x178] sm:$0xff]
    %v13948 = vld [vmem:[#allocation6 + $0x180] sm:$0xff]
    %v13949 = vld [vmem:[#allocation6 + $0x188] sm:$0xff]
    %v13950 = vld [vmem:[#allocation6 + $0x190] sm:$0xff]
    %v13951 = vld [vmem:[#allocation6 + $0x198] sm:$0xff]
    %v13952 = vld [vmem:[#allocation6 + $0x1a0] sm:$0xff]
    %v13953 = vld [vmem:[#allocation6 + $0x1a8] sm:$0xff]
    %v13954 = vld [vmem:[#allocation6 + $0x1b0] sm:$0xff]
    %v13955 = vld [vmem:[#allocation6 + $0x1b8] sm:$0xff]
    %v13956 = vld [vmem:[#allocation6 + $0x1c0] sm:$0xff]
    %v13957 = vld [vmem:[#allocation6 + $0x1c8] sm:$0xff]
    %v13958 = vld [vmem:[#allocation6 + $0x1d0] sm:$0xff]
    %v13959 = vld [vmem:[#allocation6 + $0x1d8] sm:$0xff]
    %v13960 = vld [vmem:[#allocation6 + $0x1e0] sm:$0xff]
    %v13961 = vld [vmem:[#allocation6 + $0x1e8] sm:$0xff]
    %v13962 = vld [vmem:[#allocation6 + $0x1f0] sm:$0xff]
    %v13963 = vld [vmem:[#allocation6 + $0x1f8] sm:$0xff]
    %v13964 = vld [vmem:[#allocation12 + $0xc] sm:$0x3]
    %v13966 = vperm.slane %v13964, 0
    %v13967 = vperm.slane %v13964, 1
    %v14034 = vunpack.c.l.b16 %v13900
    %v14035 = vunpack.c.h.b16 %v13900
    %v14036 = vunpack.c.l.b16 %v13901
    %v14037 = vunpack.c.h.b16 %v13901
    %v14038 = vunpack.c.l.b16 %v13902
    %v14039 = vunpack.c.h.b16 %v13902
    %v14040 = vunpack.c.l.b16 %v13903
    %v14041 = vunpack.c.h.b16 %v13903
    %v14042 = vunpack.c.l.b16 %v13904
    %v14043 = vunpack.c.h.b16 %v13904
    %v14044 = vunpack.c.l.b16 %v13905
    %v14045 = vunpack.c.h.b16 %v13905
    %v14046 = vunpack.c.l.b16 %v13906
    %v14047 = vunpack.c.h.b16 %v13906
    %v14048 = vunpack.c.l.b16 %v13907
    %v14049 = vunpack.c.h.b16 %v13907
    %v14050 = vunpack.c.l.b16 %v13908
    %v14051 = vunpack.c.h.b16 %v13908
    %v14052 = vunpack.c.l.b16 %v13909
    %v14053 = vunpack.c.h.b16 %v13909
    %v14054 = vunpack.c.l.b16 %v13910
    %v14055 = vunpack.c.h.b16 %v13910
    %v14056 = vunpack.c.l.b16 %v13911
    %v14057 = vunpack.c.h.b16 %v13911
    %v14058 = vunpack.c.l.b16 %v13912
    %v14059 = vunpack.c.h.b16 %v13912
    %v14060 = vunpack.c.l.b16 %v13913
    %v14061 = vunpack.c.h.b16 %v13913
    %v14062 = vunpack.c.l.b16 %v13914
    %v14063 = vunpack.c.h.b16 %v13914
    %v14064 = vunpack.c.l.b16 %v13915
    %v14065 = vunpack.c.h.b16 %v13915
    %v14066 = vunpack.c.l.b16 %v13916
    %v14067 = vunpack.c.h.b16 %v13916
    %v14068 = vunpack.c.l.b16 %v13917
    %v14069 = vunpack.c.h.b16 %v13917
    %v14070 = vunpack.c.l.b16 %v13918
    %v14071 = vunpack.c.h.b16 %v13918
    %v14072 = vunpack.c.l.b16 %v13919
    %v14073 = vunpack.c.h.b16 %v13919
    %v14074 = vunpack.c.l.b16 %v13920
    %v14075 = vunpack.c.h.b16 %v13920
    %v14076 = vunpack.c.l.b16 %v13921
    %v14077 = vunpack.c.h.b16 %v13921
    %v14078 = vunpack.c.l.b16 %v13922
    %v14079 = vunpack.c.h.b16 %v13922
    %v14080 = vunpack.c.l.b16 %v13923
    %v14081 = vunpack.c.h.b16 %v13923
    %v14082 = vunpack.c.l.b16 %v13924
    %v14083 = vunpack.c.h.b16 %v13924
    %v14084 = vunpack.c.l.b16 %v13925
    %v14085 = vunpack.c.h.b16 %v13925
    %v14086 = vunpack.c.l.b16 %v13926
    %v14087 = vunpack.c.h.b16 %v13926
    %v14088 = vunpack.c.l.b16 %v13927
    %v14089 = vunpack.c.h.b16 %v13927
    %v14090 = vunpack.c.l.b16 %v13928
    %v14091 = vunpack.c.h.b16 %v13928
    %v14092 = vunpack.c.l.b16 %v13929
    %v14093 = vunpack.c.h.b16 %v13929
    %v14094 = vunpack.c.l.b16 %v13930
    %v14095 = vunpack.c.h.b16 %v13930
    %v14096 = vunpack.c.l.b16 %v13931
    %v14097 = vunpack.c.h.b16 %v13931
    %v14098 = vunpack.c.l.b16 %v13932
    %v14099 = vunpack.c.h.b16 %v13932
    %v14100 = vunpack.c.l.b16 %v13933
    %v14101 = vunpack.c.h.b16 %v13933
    %v14102 = vunpack.c.l.b16 %v13934
    %v14103 = vunpack.c.h.b16 %v13934
    %v14104 = vunpack.c.l.b16 %v13935
    %v14105 = vunpack.c.h.b16 %v13935
    %v14106 = vunpack.c.l.b16 %v13936
    %v14107 = vunpack.c.h.b16 %v13936
    %v14108 = vunpack.c.l.b16 %v13937
    %v14109 = vunpack.c.h.b16 %v13937
    %v14110 = vunpack.c.l.b16 %v13938
    %v14111 = vunpack.c.h.b16 %v13938
    %v14112 = vunpack.c.l.b16 %v13939
    %v14113 = vunpack.c.h.b16 %v13939
    %v14114 = vunpack.c.l.b16 %v13940
    %v14115 = vunpack.c.h.b16 %v13940
    %v14116 = vunpack.c.l.b16 %v13941
    %v14117 = vunpack.c.h.b16 %v13941
    %v14118 = vunpack.c.l.b16 %v13942
    %v14119 = vunpack.c.h.b16 %v13942
    %v14120 = vunpack.c.l.b16 %v13943
    %v14121 = vunpack.c.h.b16 %v13943
    %v14122 = vunpack.c.l.b16 %v13944
    %v14123 = vunpack.c.h.b16 %v13944
    %v14124 = vunpack.c.l.b16 %v13945
    %v14125 = vunpack.c.h.b16 %v13945
    %v14126 = vunpack.c.l.b16 %v13946
    %v14127 = vunpack.c.h.b16 %v13946
    %v14128 = vunpack.c.l.b16 %v13947
    %v14129 = vunpack.c.h.b16 %v13947
    %v14130 = vunpack.c.l.b16 %v13948
    %v14131 = vunpack.c.h.b16 %v13948
    %v14132 = vunpack.c.l.b16 %v13949
    %v14133 = vunpack.c.h.b16 %v13949
    %v14134 = vunpack.c.l.b16 %v13950
    %v14135 = vunpack.c.h.b16 %v13950
    %v14136 = vunpack.c.l.b16 %v13951
    %v14137 = vunpack.c.h.b16 %v13951
    %v14138 = vunpack.c.l.b16 %v13952
    %v14139 = vunpack.c.h.b16 %v13952
    %v14140 = vunpack.c.l.b16 %v13953
    %v14141 = vunpack.c.h.b16 %v13953
    %v14142 = vunpack.c.l.b16 %v13954
    %v14143 = vunpack.c.h.b16 %v13954
    %v14144 = vunpack.c.l.b16 %v13955
    %v14145 = vunpack.c.h.b16 %v13955
    %v14146 = vunpack.c.l.b16 %v13956
    %v14147 = vunpack.c.h.b16 %v13956
    %v14148 = vunpack.c.l.b16 %v13957
    %v14149 = vunpack.c.h.b16 %v13957
    %v14150 = vunpack.c.l.b16 %v13958
    %v14151 = vunpack.c.h.b16 %v13958
    %v14152 = vunpack.c.l.b16 %v13959
    %v14153 = vunpack.c.h.b16 %v13959
    %v14154 = vunpack.c.l.b16 %v13960
    %v14155 = vunpack.c.h.b16 %v13960
    %v14156 = vunpack.c.l.b16 %v13961
    %v14157 = vunpack.c.h.b16 %v13961
    %v14158 = vunpack.c.l.b16 %v13962
    %v14159 = vunpack.c.h.b16 %v13962
    %v14160 = vunpack.c.l.b16 %v13963
    %v14161 = vunpack.c.h.b16 %v13963
    %v14162 = vpack.c.b16 %v14036, %v14034
    %v14163 = vpack.c.b16 %v14037, %v14035
    %v14164 = vpack.c.b16 %v14040, %v14038
    %v14165 = vpack.c.b16 %v14041, %v14039
    %v14166 = vpack.c.b16 %v14044, %v14042
    %v14167 = vpack.c.b16 %v14045, %v14043
    %v14168 = vpack.c.b16 %v14048, %v14046
    %v14169 = vpack.c.b16 %v14049, %v14047
    %v14170 = vpack.c.b16 %v14052, %v14050
    %v14171 = vpack.c.b16 %v14053, %v14051
    %v14172 = vpack.c.b16 %v14056, %v14054
    %v14173 = vpack.c.b16 %v14057, %v14055
    %v14174 = vpack.c.b16 %v14060, %v14058
    %v14175 = vpack.c.b16 %v14061, %v14059
    %v14176 = vpack.c.b16 %v14064, %v14062
    %v14177 = vpack.c.b16 %v14065, %v14063
    %v14178 = vpack.c.b16 %v14068, %v14066
    %v14179 = vpack.c.b16 %v14069, %v14067
    %v14180 = vpack.c.b16 %v14072, %v14070
    %v14181 = vpack.c.b16 %v14073, %v14071
    %v14182 = vpack.c.b16 %v14076, %v14074
    %v14183 = vpack.c.b16 %v14077, %v14075
    %v14184 = vpack.c.b16 %v14080, %v14078
    %v14185 = vpack.c.b16 %v14081, %v14079
    %v14186 = vpack.c.b16 %v14084, %v14082
    %v14187 = vpack.c.b16 %v14085, %v14083
    %v14188 = vpack.c.b16 %v14088, %v14086
    %v14189 = vpack.c.b16 %v14089, %v14087
    %v14190 = vpack.c.b16 %v14092, %v14090
    %v14191 = vpack.c.b16 %v14093, %v14091
    %v14192 = vpack.c.b16 %v14096, %v14094
    %v14193 = vpack.c.b16 %v14097, %v14095
    %v14194 = vpack.c.b16 %v14100, %v14098
    %v14195 = vpack.c.b16 %v14101, %v14099
    %v14196 = vpack.c.b16 %v14104, %v14102
    %v14197 = vpack.c.b16 %v14105, %v14103
    %v14198 = vpack.c.b16 %v14108, %v14106
    %v14199 = vpack.c.b16 %v14109, %v14107
    %v14200 = vpack.c.b16 %v14112, %v14110
    %v14201 = vpack.c.b16 %v14113, %v14111
    %v14202 = vpack.c.b16 %v14116, %v14114
    %v14203 = vpack.c.b16 %v14117, %v14115
    %v14204 = vpack.c.b16 %v14120, %v14118
    %v14205 = vpack.c.b16 %v14121, %v14119
    %v14206 = vpack.c.b16 %v14124, %v14122
    %v14207 = vpack.c.b16 %v14125, %v14123
    %v14208 = vpack.c.b16 %v14128, %v14126
    %v14209 = vpack.c.b16 %v14129, %v14127
    %v14210 = vpack.c.b16 %v14132, %v14130
    %v14211 = vpack.c.b16 %v14133, %v14131
    %v14212 = vpack.c.b16 %v14136, %v14134
    %v14213 = vpack.c.b16 %v14137, %v14135
    %v14214 = vpack.c.b16 %v14140, %v14138
    %v14215 = vpack.c.b16 %v14141, %v14139
    %v14216 = vpack.c.b16 %v14144, %v14142
    %v14217 = vpack.c.b16 %v14145, %v14143
    %v14218 = vpack.c.b16 %v14148, %v14146
    %v14219 = vpack.c.b16 %v14149, %v14147
    %v14220 = vpack.c.b16 %v14152, %v14150
    %v14221 = vpack.c.b16 %v14153, %v14151
    %v14222 = vpack.c.b16 %v14156, %v14154
    %v14223 = vpack.c.b16 %v14157, %v14155
    %v14224 = vpack.c.b16 %v14160, %v14158
    %v14225 = vpack.c.b16 %v14161, %v14159
    %14290 = vmatpush.bf16.msra.mxu0 %v14176
    %14291 = vmatpush.bf16.msra.mxu0 %v14174
    %14292 = vmatpush.bf16.msra.mxu0 %v14172
    %14293 = vmatpush.bf16.msra.mxu0 %v14170
    %14294 = vmatpush.bf16.msra.mxu0 %v14168
    %14295 = vmatpush.bf16.msra.mxu0 %v14166
    %14296 = vmatpush.bf16.msra.mxu0 %v14164
    %14297 = vmatpush.bf16.msra.mxu0 %v14162
    %14298 = vmatmul.bf16.gmra.mxu0 %v13896
    %v14299 = vpop.f32.mrf.mxu0
    %v14300 = vadd.f32 %v13966, %v14299
    %v14301 = vpop.f32.mrf.mxu0
    %14302 = vdwg.mxu0
    %14303 = vmatpush.bf16.msra.mxu0 %v14192
    %14304 = vmatpush.bf16.msra.mxu0 %v14190
    %14305 = vmatpush.bf16.msra.mxu0 %v14188
    %14306 = vmatpush.bf16.msra.mxu0 %v14186
    %14307 = vmatpush.bf16.msra.mxu0 %v14184
    %14308 = vmatpush.bf16.msra.mxu0 %v14182
    %14309 = vmatpush.bf16.msra.mxu0 %v14180
    %14310 = vmatpush.bf16.msra.mxu0 %v14178
    %14311 = vmatmul.bf16.gmra.mxu0 %v13897
    %v14312 = vpop.f32.mrf.mxu0
    %v14313 = vadd.f32 %v14300, %v14312
    %v14314 = vpop.f32.mrf.mxu0
    %14315 = vdwg.mxu0
    %14316 = vmatpush.bf16.msra.mxu0 %v14208
    %14317 = vmatpush.bf16.msra.mxu0 %v14206
    %14318 = vmatpush.bf16.msra.mxu0 %v14204
    %14319 = vmatpush.bf16.msra.mxu0 %v14202
    %14320 = vmatpush.bf16.msra.mxu0 %v14200
    %14321 = vmatpush.bf16.msra.mxu0 %v14198
    %14322 = vmatpush.bf16.msra.mxu0 %v14196
    %14323 = vmatpush.bf16.msra.mxu0 %v14194
    %14324 = vmatmul.bf16.gmra.mxu0 %v13898
    %v14325 = vpop.f32.mrf.mxu0
    %v14326 = vadd.f32 %v14313, %v14325
    %v14327 = vpop.f32.mrf.mxu0
    %14328 = vdwg.mxu0
    %14329 = vmatpush.bf16.msra.mxu0 %v14224
    %14330 = vmatpush.bf16.msra.mxu0 %v14222
    %14331 = vmatpush.bf16.msra.mxu0 %v14220
    %14332 = vmatpush.bf16.msra.mxu0 %v14218
    %14333 = vmatpush.bf16.msra.mxu0 %v14216
    %14334 = vmatpush.bf16.msra.mxu0 %v14214
    %14335 = vmatpush.bf16.msra.mxu0 %v14212
    %14336 = vmatpush.bf16.msra.mxu0 %v14210
    %14337 = vmatmul.bf16.gmra.mxu0 %v13899
    %v14338 = vpop.f32.mrf.mxu0
    %v14339 = vadd.f32 %v14326, %v14338
    %v14340 = vpop.f32.mrf.mxu0
    %14341 = vdwg.mxu0
    %14342 = vmatpush.bf16.msra.mxu0 %v14177
    %14343 = vmatpush.bf16.msra.mxu0 %v14175
    %14344 = vmatpush.bf16.msra.mxu0 %v14173
    %14345 = vmatpush.bf16.msra.mxu0 %v14171
    %14346 = vmatpush.bf16.msra.mxu0 %v14169
    %14347 = vmatpush.bf16.msra.mxu0 %v14167
    %14348 = vmatpush.bf16.msra.mxu0 %v14165
    %14349 = vmatpush.bf16.msra.mxu0 %v14163
    %14350 = vmatmul.bf16.gmra.mxu0 %v13896
    %v14351 = vpop.f32.mrf.mxu0
    %v14352 = vadd.f32 %v13967, %v14351
    %v14353 = vpop.f32.mrf.mxu0
    %14354 = vdwg.mxu0
    %14355 = vmatpush.bf16.msra.mxu0 %v14193
    %14356 = vmatpush.bf16.msra.mxu0 %v14191
    %14357 = vmatpush.bf16.msra.mxu0 %v14189
    %14358 = vmatpush.bf16.msra.mxu0 %v14187
    %14359 = vmatpush.bf16.msra.mxu0 %v14185
    %14360 = vmatpush.bf16.msra.mxu0 %v14183
    %14361 = vmatpush.bf16.msra.mxu0 %v14181
    %14362 = vmatpush.bf16.msra.mxu0 %v14179
    %14363 = vmatmul.bf16.gmra.mxu0 %v13897
    %v14364 = vpop.f32.mrf.mxu0
    %v14365 = vadd.f32 %v14352, %v14364
    %v14366 = vpop.f32.mrf.mxu0
    %14367 = vdwg.mxu0
    %14368 = vmatpush.bf16.msra.mxu0 %v14209
    %14369 = vmatpush.bf16.msra.mxu0 %v14207
    %14370 = vmatpush.bf16.msra.mxu0 %v14205
    %14371 = vmatpush.bf16.msra.mxu0 %v14203
    %14372 = vmatpush.bf16.msra.mxu0 %v14201
    %14373 = vmatpush.bf16.msra.mxu0 %v14199
    %14374 = vmatpush.bf16.msra.mxu0 %v14197
    %14375 = vmatpush.bf16.msra.mxu0 %v14195
    %14376 = vmatmul.bf16.gmra.mxu0 %v13898
    %v14377 = vpop.f32.mrf.mxu0
    %v14378 = vadd.f32 %v14365, %v14377
    %v14379 = vpop.f32.mrf.mxu0
    %14380 = vdwg.mxu0
    %14381 = vmatpush.bf16.msra.mxu0 %v14225
    %14382 = vmatpush.bf16.msra.mxu0 %v14223
    %14383 = vmatpush.bf16.msra.mxu0 %v14221
    %14384 = vmatpush.bf16.msra.mxu0 %v14219
    %14385 = vmatpush.bf16.msra.mxu0 %v14217
    %14386 = vmatpush.bf16.msra.mxu0 %v14215
    %14387 = vmatpush.bf16.msra.mxu0 %v14213
    %14388 = vmatpush.bf16.msra.mxu0 %v14211
    %14389 = vmatmul.bf16.gmra.mxu0 %v13899
    %v14390 = vpop.f32.mrf.mxu0
    %v14391 = vadd.f32 %v14378, %v14390
    %v14392 = vpop.f32.mrf.mxu0
    %14393 = vdwg.mxu0
    %v14394 = vmax.f32 %v14339, 0.0
    %v14395 = vmax.f32 %v14391, 0.0
    %v14396 = vpack.c.bf16 %v14394, %v14394
    %v14397 = vpack.c.bf16 %v14395, %v14395
    %v14398 = vld [vmem:[#allocation7] sm:$0xf]
    %v14399 = vld [vmem:[#allocation7 + $0x4] sm:$0xf]
    %v14400 = vld [vmem:[#allocation7 + $0x8] sm:$0xf]
    %v14401 = vld [vmem:[#allocation7 + $0xc] sm:$0xf]
    %v14402 = vld [vmem:[#allocation7 + $0x10] sm:$0xf]
    %v14403 = vld [vmem:[#allocation7 + $0x14] sm:$0xf]
    %v14404 = vld [vmem:[#allocation7 + $0x18] sm:$0xf]
    %v14405 = vld [vmem:[#allocation7 + $0x1c] sm:$0xf]
    %v14406 = vld [vmem:[#allocation7 + $0x20] sm:$0xf]
    %v14407 = vld [vmem:[#allocation7 + $0x24] sm:$0xf]
    %v14408 = vld [vmem:[#allocation7 + $0x28] sm:$0xf]
    %v14409 = vld [vmem:[#allocation7 + $0x2c] sm:$0xf]
    %v14410 = vld [vmem:[#allocation7 + $0x30] sm:$0xf]
    %v14411 = vld [vmem:[#allocation7 + $0x34] sm:$0xf]
    %v14412 = vld [vmem:[#allocation7 + $0x38] sm:$0xf]
    %v14413 = vld [vmem:[#allocation7 + $0x3c] sm:$0xf]
    %v14414 = vld [vmem:[#allocation7 + $0x40] sm:$0xf]
    %v14415 = vld [vmem:[#allocation7 + $0x44] sm:$0xf]
    %v14416 = vld [vmem:[#allocation7 + $0x48] sm:$0xf]
    %v14417 = vld [vmem:[#allocation7 + $0x4c] sm:$0xf]
    %v14418 = vld [vmem:[#allocation7 + $0x50] sm:$0xf]
    %v14419 = vld [vmem:[#allocation7 + $0x54] sm:$0xf]
    %v14420 = vld [vmem:[#allocation7 + $0x58] sm:$0xf]
    %v14421 = vld [vmem:[#allocation7 + $0x5c] sm:$0xf]
    %v14422 = vld [vmem:[#allocation7 + $0x60] sm:$0xf]
    %v14423 = vld [vmem:[#allocation7 + $0x64] sm:$0xf]
    %v14424 = vld [vmem:[#allocation7 + $0x68] sm:$0xf]
    %v14425 = vld [vmem:[#allocation7 + $0x6c] sm:$0xf]
    %v14426 = vld [vmem:[#allocation7 + $0x70] sm:$0xf]
    %v14427 = vld [vmem:[#allocation7 + $0x74] sm:$0xf]
    %v14428 = vld [vmem:[#allocation7 + $0x78] sm:$0xf]
    %v14429 = vld [vmem:[#allocation7 + $0x7c] sm:$0xf]
    %v14430 = vld [vmem:[#allocation12 + $0xe] sm:$0x1]
    %v14432 = vperm.slane %v14430, 0
    %v14466 = vunpack.c.l.b16 %v14398
    %v14467 = vunpack.c.l.b16 %v14399
    %v14468 = vunpack.c.l.b16 %v14400
    %v14469 = vunpack.c.l.b16 %v14401
    %v14470 = vunpack.c.l.b16 %v14402
    %v14471 = vunpack.c.l.b16 %v14403
    %v14472 = vunpack.c.l.b16 %v14404
    %v14473 = vunpack.c.l.b16 %v14405
    %v14474 = vunpack.c.l.b16 %v14406
    %v14475 = vunpack.c.l.b16 %v14407
    %v14476 = vunpack.c.l.b16 %v14408
    %v14477 = vunpack.c.l.b16 %v14409
    %v14478 = vunpack.c.l.b16 %v14410
    %v14479 = vunpack.c.l.b16 %v14411
    %v14480 = vunpack.c.l.b16 %v14412
    %v14481 = vunpack.c.l.b16 %v14413
    %v14482 = vunpack.c.l.b16 %v14414
    %v14483 = vunpack.c.l.b16 %v14415
    %v14484 = vunpack.c.l.b16 %v14416
    %v14485 = vunpack.c.l.b16 %v14417
    %v14486 = vunpack.c.l.b16 %v14418
    %v14487 = vunpack.c.l.b16 %v14419
    %v14488 = vunpack.c.l.b16 %v14420
    %v14489 = vunpack.c.l.b16 %v14421
    %v14490 = vunpack.c.l.b16 %v14422
    %v14491 = vunpack.c.l.b16 %v14423
    %v14492 = vunpack.c.l.b16 %v14424
    %v14493 = vunpack.c.l.b16 %v14425
    %v14494 = vunpack.c.l.b16 %v14426
    %v14495 = vunpack.c.l.b16 %v14427
    %v14496 = vunpack.c.l.b16 %v14428
    %v14497 = vunpack.c.l.b16 %v14429
    %v14498 = vpack.c.b16 %v14467, %v14466
    %v14499 = vpack.c.b16 %v14469, %v14468
    %v14500 = vpack.c.b16 %v14471, %v14470
    %v14501 = vpack.c.b16 %v14473, %v14472
    %v14502 = vpack.c.b16 %v14475, %v14474
    %v14503 = vpack.c.b16 %v14477, %v14476
    %v14504 = vpack.c.b16 %v14479, %v14478
    %v14505 = vpack.c.b16 %v14481, %v14480
    %v14506 = vpack.c.b16 %v14483, %v14482
    %v14507 = vpack.c.b16 %v14485, %v14484
    %v14508 = vpack.c.b16 %v14487, %v14486
    %v14509 = vpack.c.b16 %v14489, %v14488
    %v14510 = vpack.c.b16 %v14491, %v14490
    %v14511 = vpack.c.b16 %v14493, %v14492
    %v14512 = vpack.c.b16 %v14495, %v14494
    %v14513 = vpack.c.b16 %v14497, %v14496
    %14530 = vmatpush.bf16.msra.mxu0 %v14505
    %14531 = vmatpush.bf16.msra.mxu0 %v14504
    %14532 = vmatpush.bf16.msra.mxu0 %v14503
    %14533 = vmatpush.bf16.msra.mxu0 %v14502
    %14534 = vmatpush.bf16.msra.mxu0 %v14501
    %14535 = vmatpush.bf16.msra.mxu0 %v14500
    %14536 = vmatpush.bf16.msra.mxu0 %v14499
    %14537 = vmatpush.bf16.msra.mxu0 %v14498
    %14538 = vmatmul.bf16.gmra.mxu0 %v14396
    %v14539 = vpop.f32.mrf.mxu0
    %v14540 = vadd.f32 %v14432, %v14539
    %v14541 = vpop.f32.mrf.mxu0
    %14542 = vdwg.mxu0
    %14543 = vmatpush.bf16.msra.mxu0 %v14513
    %14544 = vmatpush.bf16.msra.mxu0 %v14512
    %14545 = vmatpush.bf16.msra.mxu0 %v14511
    %14546 = vmatpush.bf16.msra.mxu0 %v14510
    %14547 = vmatpush.bf16.msra.mxu0 %v14509
    %14548 = vmatpush.bf16.msra.mxu0 %v14508
    %14549 = vmatpush.bf16.msra.mxu0 %v14507
    %14550 = vmatpush.bf16.msra.mxu0 %v14506
    %14551 = vmatmul.bf16.gmra.mxu0 %v14397
    %v14552 = vpop.f32.mrf.mxu0
    %v14553 = vadd.f32 %v14540, %v14552
    %v14554 = vpop.f32.mrf.mxu0
    %14555 = vdwg.mxu0
    %v14556 = vmax.f32 %v14553, 0.0
    %v14557 = vpack.c.bf16 %v14556, %v14556
    %v14558 = vld [vmem:[#allocation9] sm:$0xf]
    %v14559 = vld [vmem:[#allocation9 + $0x4] sm:$0xf]
    %v14560 = vld [vmem:[#allocation9 + $0x8] sm:$0xf]
    %v14561 = vld [vmem:[#allocation9 + $0xc] sm:$0xf]
    %v14562 = vld [vmem:[#allocation9 + $0x10] sm:$0xf]
    %v14563 = vld [vmem:[#allocation9 + $0x14] sm:$0xf]
    %v14564 = vld [vmem:[#allocation9 + $0x18] sm:$0xf]
    %v14565 = vld [vmem:[#allocation9 + $0x1c] sm:$0xf]
    %v14566 = vld [vmem:[#allocation9 + $0x20] sm:$0xf]
    %v14567 = vld [vmem:[#allocation9 + $0x24] sm:$0xf]
    %v14568 = vld [vmem:[#allocation9 + $0x28] sm:$0xf]
    %v14569 = vld [vmem:[#allocation9 + $0x2c] sm:$0xf]
    %v14570 = vld [vmem:[#allocation9 + $0x30] sm:$0xf]
    %v14571 = vld [vmem:[#allocation9 + $0x34] sm:$0xf]
    %v14572 = vld [vmem:[#allocation9 + $0x38] sm:$0xf]
    %v14573 = vld [vmem:[#allocation9 + $0x3c] sm:$0xf]
    %v14574 = vld [vmem:[#allocation12 + $0xf] sm:$0x1]
    %v14576 = vperm.slane %v14574, 0
    %v14594 = vunpack.c.l.b16 %v14558
    %v14595 = vunpack.c.l.b16 %v14559
    %v14596 = vunpack.c.l.b16 %v14560
    %v14597 = vunpack.c.l.b16 %v14561
    %v14598 = vunpack.c.l.b16 %v14562
    %v14599 = vunpack.c.l.b16 %v14563
    %v14600 = vunpack.c.l.b16 %v14564
    %v14601 = vunpack.c.l.b16 %v14565
    %v14602 = vunpack.c.l.b16 %v14566
    %v14603 = vunpack.c.l.b16 %v14567
    %v14604 = vunpack.c.l.b16 %v14568
    %v14605 = vunpack.c.l.b16 %v14569
    %v14606 = vunpack.c.l.b16 %v14570
    %v14607 = vunpack.c.l.b16 %v14571
    %v14608 = vunpack.c.l.b16 %v14572
    %v14609 = vunpack.c.l.b16 %v14573
    %v14610 = vpack.c.b16 %v14595, %v14594
    %v14611 = vpack.c.b16 %v14597, %v14596
    %v14612 = vpack.c.b16 %v14599, %v14598
    %v14613 = vpack.c.b16 %v14601, %v14600
    %v14614 = vpack.c.b16 %v14603, %v14602
    %v14615 = vpack.c.b16 %v14605, %v14604
    %v14616 = vpack.c.b16 %v14607, %v14606
    %v14617 = vpack.c.b16 %v14609, %v14608
    %14626 = vmatpush.bf16.msra.mxu0 %v14617
    %14627 = vmatpush.bf16.msra.mxu0 %v14616
    %14628 = vmatpush.bf16.msra.mxu0 %v14615
    %14629 = vmatpush.bf16.msra.mxu0 %v14614
    %14630 = vmatpush.bf16.msra.mxu0 %v14613
    %14631 = vmatpush.bf16.msra.mxu0 %v14612
    %14632 = vmatpush.bf16.msra.mxu0 %v14611
    %14633 = vmatpush.bf16.msra.mxu0 %v14610
    %14634 = vmatmul.bf16.gmra.mxu0 %v14557
    %v14635 = vpop.f32.mrf.mxu0
    %v14636 = vadd.f32 %v14576, %v14635
    %v14637 = vpop.f32.mrf.mxu0
    %14638 = vdwg.mxu0
    %v14639 = vmax.f32 %v14636, 0.0
    %v14640 = vpack.c.bf16 %v14639, %v14639
    %v14641 = vld [vmem:[#allocation10] sm:$0xf]
    %v14642 = vld [vmem:[#allocation10 + $0x4] sm:$0xf]
    %v14643 = vld [vmem:[#allocation10 + $0x8] sm:$0xf]
    %v14644 = vld [vmem:[#allocation10 + $0xc] sm:$0xf]
    %v14645 = vld [vmem:[#allocation10 + $0x10] sm:$0xf]
    %v14646 = vld [vmem:[#allocation10 + $0x14] sm:$0xf]
    %v14647 = vld [vmem:[#allocation10 + $0x18] sm:$0xf]
    %v14648 = vld [vmem:[#allocation10 + $0x1c] sm:$0xf]
    %v14649 = vld [vmem:[#allocation10 + $0x20] sm:$0xf]
    %v14650 = vld [vmem:[#allocation10 + $0x24] sm:$0xf]
    %v14651 = vld [vmem:[#allocation10 + $0x28] sm:$0xf]
    %v14652 = vld [vmem:[#allocation10 + $0x2c] sm:$0xf]
    %v14653 = vld [vmem:[#allocation10 + $0x30] sm:$0xf]
    %v14654 = vld [vmem:[#allocation10 + $0x34] sm:$0xf]
    %v14655 = vld [vmem:[#allocation10 + $0x38] sm:$0xf]
    %v14656 = vld [vmem:[#allocation10 + $0x3c] sm:$0xf]
    %v14657 = vld [vmem:[#allocation12 + $0x10] sm:$0x1]
    %v14659 = vperm.slane %v14657, 0
    %v14677 = vunpack.c.l.b16 %v14641
    %v14678 = vunpack.c.l.b16 %v14642
    %v14679 = vunpack.c.l.b16 %v14643
    %v14680 = vunpack.c.l.b16 %v14644
    %v14681 = vunpack.c.l.b16 %v14645
    %v14682 = vunpack.c.l.b16 %v14646
    %v14683 = vunpack.c.l.b16 %v14647
    %v14684 = vunpack.c.l.b16 %v14648
    %v14685 = vunpack.c.l.b16 %v14649
    %v14686 = vunpack.c.l.b16 %v14650
    %v14687 = vunpack.c.l.b16 %v14651
    %v14688 = vunpack.c.l.b16 %v14652
    %v14689 = vunpack.c.l.b16 %v14653
    %v14690 = vunpack.c.l.b16 %v14654
    %v14691 = vunpack.c.l.b16 %v14655
    %v14692 = vunpack.c.l.b16 %v14656
    %v14693 = vpack.c.b16 %v14678, %v14677
    %v14694 = vpack.c.b16 %v14680, %v14679
    %v14695 = vpack.c.b16 %v14682, %v14681
    %v14696 = vpack.c.b16 %v14684, %v14683
    %v14697 = vpack.c.b16 %v14686, %v14685
    %v14698 = vpack.c.b16 %v14688, %v14687
    %v14699 = vpack.c.b16 %v14690, %v14689
    %v14700 = vpack.c.b16 %v14692, %v14691
    %14709 = vmatpush.bf16.msra.mxu0 %v14700
    %14710 = vmatpush.bf16.msra.mxu0 %v14699
    %14711 = vmatpush.bf16.msra.mxu0 %v14698
    %14712 = vmatpush.bf16.msra.mxu0 %v14697
    %14713 = vmatpush.bf16.msra.mxu0 %v14696
    %14714 = vmatpush.bf16.msra.mxu0 %v14695
    %14715 = vmatpush.bf16.msra.mxu0 %v14694
    %14716 = vmatpush.bf16.msra.mxu0 %v14693
    %14717 = vmatmul.bf16.gmra.mxu0 %v14640
    %v14718 = vpop.f32.mrf.mxu0
    %v14719 = vadd.f32 %v14659, %v14718
    %v14720 = vpop.f32.mrf.mxu0
    %14721 = vdwg.mxu0
    %14722 = vst [vmem:[%s8] sm:$0xff] %v14719
    // Predicated region
    $region62: #{fully_connected_nn_forward.1} parent=1 // pred_check
      _
    $region63: #{fully_connected_nn_forward.1} parent=1 // pred_check_branch
      %14724 = sbr.rel (0) target = $region65
    $region64: #{fully_connected_nn_forward.1} parent=1 // pred_region
      _
    $region65: #{fully_connected_nn_forward.1} parent=1 // pred_fallthru
      _
    // Predicated region
    $region66: #{fully_connected_nn_forward.1} parent=1 // pred_check
      _
    $region67: #{fully_connected_nn_forward.1} parent=1 // pred_check_branch
      %14726 = sbr.rel (0) target = $region69
    $region68: #{fully_connected_nn_forward.1} parent=1 // pred_region
      _
    $region69: #{fully_connected_nn_forward.1} parent=1 // pred_fallthru
      _
    %14727 = vsyncpa [#allocation3], 1
    %14728 = vsyncpa [#allocation5], 1
    %14729 = vsyncpa [#allocation8], 1
    %14730 = vsyncpa [#allocation11], 1

</llo_original>
